<compile_context>
chip_gen: v6e
topology: v6e:2x2x1
jax: 0.10.0
libtpu: 0.0.40
codegen_flags: <defaults>
</compile_context>

<pallas_src>
import functools
import math

import jax
import jax.numpy as jnp
from jax.experimental import pallas as pl
from jax.experimental.pallas import tpu as pltpu


def _round_up(x, m):
    return (x + m - 1) // m * m


def _leaky_relu(x, slope=0.2):
    return jnp.where(x > 0, x, slope * x)


def _bn_leaky(h, gamma, beta, eps, slope=0.2):
    """Train-mode BatchNorm1d (biased variance), single-pass stats, then LeakyReLU."""
    inv_n = jnp.float32(1.0 / h.shape[0])
    s1 = jnp.sum(h, axis=0, keepdims=True)
    s2 = jnp.sum(h * h, axis=0, keepdims=True)
    mean = s1 * inv_n
    var = s2 * inv_n - mean * mean                    # E[x^2] - mean^2 (eps=0.8 >> cancellation)
    scale = gamma * jax.lax.rsqrt(var + eps)          # (1, F)
    shift = beta - mean * scale                       # (1, F)
    return _leaky_relu(h * scale + shift, slope)


def generator_kernel(
    x_ref,                       # (B, K_pad)        bf16   (includes the "ones" bias column)
    w1_ref,                      # (K_pad, 128)      bf16   (row K holds b1)
    w2_ref,                      # (128, 256)        bf16
    w3_ref,                      # (256, 512)        bf16
    w4_ref,                      # (512, 1024)       bf16
    w5_ref,                      # (1024, out_pad)   bf16
    vec_ref,                     # (1, 3584+out_pad) f32: [g2|be2|g3|be3|g4|be4|b5]
    out_ref,                     # (B, out_pad)      f32
    *, bn_eps, out_pad,
):
    x = x_ref[...]

    # Block 1: Linear (bias folded into w1 via the ones column) + LeakyReLU.
    h = jnp.dot(x, w1_ref[...], preferred_element_type=jnp.float32)
    h = _leaky_relu(h)

    # Block 2: Linear (bias cancelled by train-mode BN) + BN + LeakyReLU.
    h = jnp.dot(h.astype(jnp.bfloat16), w2_ref[...], preferred_element_type=jnp.float32)
    h = _bn_leaky(h, vec_ref[:, 0:256], vec_ref[:, 256:512], bn_eps)

    # Block 3
    h = jnp.dot(h.astype(jnp.bfloat16), w3_ref[...], preferred_element_type=jnp.float32)
    h = _bn_leaky(h, vec_ref[:, 512:1024], vec_ref[:, 1024:1536], bn_eps)

    # Block 4
    h = jnp.dot(h.astype(jnp.bfloat16), w4_ref[...], preferred_element_type=jnp.float32)
    h = _bn_leaky(h, vec_ref[:, 1536:2560], vec_ref[:, 2560:3584], bn_eps)

    # Output layer: Linear + bias + Tanh (lane-dense padded out dim).
    h = jnp.dot(h.astype(jnp.bfloat16), w5_ref[...], preferred_element_type=jnp.float32)
    out_ref[...] = jnp.tanh(h + vec_ref[:, 3584:3584 + out_pad])


def prepare_params(params, shape):
    """ONE-TIME conversion (at model setup) to the kernel's padded bf16/f32 layout.

    Called once outside the per-step path; its outputs are passed to the jitted forward.
    """
    out_dim = math.prod(shape)
    K = params["w1"].shape[0]
    K_pad = _round_up(K + 1, 128)      # +1 spare column used for the folded b1
    out_pad = _round_up(out_dim, 128)

    pw = {}
    pw["emb"] = params["emb"].astype(jnp.float32)

    # w1 padded on K, with b1 folded into the dedicated bias row K.
    w1 = jnp.zeros((K_pad, 128), jnp.bfloat16)
    w1 = w1.at[:K, :].set(params["w1"].astype(jnp.bfloat16))
    w1 = w1.at[K, :].set(params["b1"][0].astype(jnp.bfloat16))
    pw["w1"] = w1

    # b2/b3/b4 intentionally dropped: exactly cancelled by train-mode BatchNorm.
    pw["w2"] = params["w2"].astype(jnp.bfloat16)
    pw["w3"] = params["w3"].astype(jnp.bfloat16)
    pw["w4"] = params["w4"].astype(jnp.bfloat16)

    w5 = jnp.zeros((1024, out_pad), jnp.bfloat16)
    pw["w5"] = w5.at[:, :out_dim].set(params["w5"].astype(jnp.bfloat16))

    # Pack all small per-feature f32 vectors into one lane-aligned flat input.
    b5 = jnp.zeros((1, out_pad), jnp.float32).at[:, :out_dim].set(
        params["b5"].astype(jnp.float32))
    pw["vec"] = jnp.concatenate(
        [params["g2"], params["be2"],
         params["g3"], params["be3"],
         params["g4"], params["be4"], b5], axis=-1).astype(jnp.float32)

    meta = {"K": K, "K_pad": K_pad, "out_dim": out_dim, "out_pad": out_pad}
    return pw, meta


@functools.partial(jax.jit, static_argnames=("K", "out_dim", "shape", "bn_eps"))
def generator_forward(noise, labels, pw, *, K, out_dim, shape, bn_eps=0.8):
    """noise: (B, dims) f32, labels: (B,) int32, pw: prepared params. Returns (B, *shape) f32."""
    K_pad = pw["w1"].shape[0]
    out_pad = pw["w5"].shape[1]

    # Glue (fused by jit around the custom call): embedding lookup + concat, then
    # zero-pad the contraction dim and set the bias column to 1.
    emb = jnp.take(pw["emb"], labels, axis=0)                     # (B, num_classes)
    gen_input = jnp.concatenate([emb, noise], axis=-1)            # (B, K)
    B = gen_input.shape[0]
    x = jnp.zeros((B, K_pad), jnp.bfloat16)
    x = x.at[:, :K].set(gen_input.astype(jnp.bfloat16))
    x = x.at[:, K].set(1.0)                                       # bias column for folded b1

    flat_ins = [x, pw["w1"], pw["w2"], pw["w3"], pw["w4"], pw["w5"], pw["vec"]]
    vmem_spec = pl.BlockSpec(memory_space=pltpu.MemorySpace.VMEM)

    flops = 2 * B * (K_pad * 128 + 128 * 256 + 256 * 512 + 512 * 1024 + 1024 * out_pad)
    transcendentals = B * out_pad + (256 + 512 + 1024)            # tanh + per-feature rsqrt
    bytes_accessed = sum(a.size * a.dtype.itemsize for a in flat_ins) + B * out_pad * 4
    cost = pl.CostEstimate(
        flops=int(flops),
        transcendentals=int(transcendentals),
        bytes_accessed=int(bytes_accessed),
    )

    img_flat = pl.pallas_call(
        functools.partial(generator_kernel, bn_eps=bn_eps, out_pad=out_pad),
        out_shape=jax.ShapeDtypeStruct((B, out_pad), jnp.float32),
        in_specs=[vmem_spec] * len(flat_ins),
        out_specs=vmem_spec,
        compiler_params=pltpu.CompilerParams(vmem_limit_bytes=32 << 20),
        cost_estimate=cost,
    )(*flat_ins)

    return img_flat[:, :out_dim].reshape((B,) + tuple(shape))


def generator_reference(noise, labels, params, shape, bn_eps=0.8):
    """Pure-JAX f32 reference matching the PyTorch module (train-mode BN, biased var)."""
    emb = jnp.take(params["emb"], labels, axis=0)
    h = jnp.concatenate([emb, noise], axis=-1)
    h = h @ params["w1"] + params["b1"]
    h = jnp.where(h > 0, h, 0.2 * h)
    for li in (2, 3, 4):
        h = h @ params[f"w{li}"] + params[f"b{li}"]
        mean = jnp.mean(h, axis=0, keepdims=True)
        var = jnp.mean((h - mean) ** 2, axis=0, keepdims=True)
        h = (h - mean) / jnp.sqrt(var + bn_eps) * params[f"g{li}"] + params[f"be{li}"]
        h = jnp.where(h > 0, h, 0.2 * h)
    h = h @ params["w5"] + params["b5"]
    return jnp.tanh(h).reshape((noise.shape[0],) + tuple(shape))


def init_params(key, num_classes, dims, shape):
    """Matches PyTorch default inits (f32 master copies)."""
    out_dim = math.prod(shape)
    in_dim = dims + num_classes

    dims_chain = [(in_dim, 128), (128, 256), (256, 512), (512, 1024), (1024, out_dim)]
    keys = jax.random.split(key, 2 * len(dims_chain) + 1)

    params = {}
    # Embedding table (num_classes, num_classes), N(0,1) like nn.Embedding default.
    params["emb"] = jax.random.normal(keys[0], (num_classes, num_classes), jnp.float32)

    for li, (fi, fo) in enumerate(dims_chain, start=1):
        bound = 1.0 / (fi ** 0.5)  # nn.Linear default uniform(-1/sqrt(fan_in), +)
        params[f"w{li}"] = jax.random.uniform(
            keys[2 * li - 1], (fi, fo), jnp.float32, -bound, bound)
        params[f"b{li}"] = jax.random.uniform(
            keys[2 * li], (1, fo), jnp.float32, -bound, bound)

    # BatchNorm affine params for blocks 2..4 (gamma=1, beta=0 as in fresh nn.BatchNorm1d).
    for li, fo in zip((2, 3, 4), (256, 512, 1024)):
        params[f"g{li}"] = jnp.ones((1, fo), jnp.float32)
        params[f"be{li}"] = jnp.zeros((1, fo), jnp.float32)

    return params


if __name__ == "__main__":
    num_classes = 10
    dims = 32            # latent dimension
    shape = (1, 8, 8)    # generated image shape (C, H, W) -> prod = 64
    batch = 256          # multiple of 16; near the weight-DMA/compute crossover

    key = jax.random.PRNGKey(0)
    k_params, k_noise, k_labels = jax.random.split(key, 3)

    params = init_params(k_params, num_classes, dims, shape)
    # One-time weight prep (hoisted out of the per-call path).
    pw, meta = prepare_params(params, shape)

    noise = jax.random.normal(k_noise, (batch, dims), jnp.float32)
    labels = jax.random.randint(k_labels, (batch,), 0, num_classes, jnp.int32)

    img = generator_forward(noise, labels, pw,
                            K=meta["K"], out_dim=meta["out_dim"], shape=shape)
    img = jax.block_until_ready(img)

    assert img.shape == (batch,) + shape, img.shape
    assert bool(jnp.all(jnp.isfinite(img)))
    assert bool(jnp.all(jnp.abs(img) <= 1.0))   # tanh range

    # Loose tolerance vs. the f32 reference (bf16 activations/weights -> ~1e-2 noise).
    ref = generator_reference(noise, labels, params, shape)
    max_err = float(jnp.max(jnp.abs(img - ref)))
    assert max_err < 0.1, f"max abs err vs f32 reference: {max_err}"

    print("KERNEL_OK")
</pallas_src>

<mosaic_0001>
module attributes {stable_mosaic.version = 11 : i64} {
  func.func @generator_kernel(%arg0: memref<256x128xbf16, #tpu.memory_space<vmem>>, %arg1: memref<128x128xbf16, #tpu.memory_space<vmem>>, %arg2: memref<128x256xbf16, #tpu.memory_space<vmem>>, %arg3: memref<256x512xbf16, #tpu.memory_space<vmem>>, %arg4: memref<512x1024xbf16, #tpu.memory_space<vmem>>, %arg5: memref<1024x128xbf16, #tpu.memory_space<vmem>>, %arg6: memref<1x3712xf32, #tpu.memory_space<vmem>>, %arg7: memref<256x128xf32, #tpu.memory_space<vmem>>) attributes {dimension_semantics = [], scalar_prefetch = 0 : i64, scratch_operands = 0 : i64, tpu.core_type = #tpu.core_type<tc>} {
    %c0 = arith.constant 0 : index
    %c0_0 = arith.constant 0 : index
    %0 = vector.load %arg0[%c0, %c0_0] : memref<256x128xbf16, #tpu.memory_space<vmem>>, vector<256x128xbf16>
    %c0_1 = arith.constant 0 : index
    %c0_2 = arith.constant 0 : index
    %1 = vector.load %arg1[%c0_1, %c0_2] : memref<128x128xbf16, #tpu.memory_space<vmem>>, vector<128x128xbf16>
    %cst = arith.constant dense<0.000000e+00> : vector<256x128xf32>
    %2 = tpu.matmul %0, %1, %cst {dimension_numbers = #tpu.dot_dimension_numbers<[1], [0], [0], [1], [0, 0, 1, 1], [], []>} : vector<256x128xbf16>, vector<128x128xbf16>, vector<256x128xf32> -> vector<256x128xf32>
    %cst_3 = arith.constant 0.000000e+00 : f32
    %3 = vector.broadcast %cst_3 : f32 to vector<256x128xf32>
    %4 = arith.cmpf ogt, %2, %3 : vector<256x128xf32>
    %cst_4 = arith.constant 2.000000e-01 : f32
    %5 = vector.broadcast %cst_4 : f32 to vector<256x128xf32>
    %6 = arith.mulf %5, %2 : vector<256x128xf32>
    %7 = arith.select %4, %2, %6 : vector<256x128xi1>, vector<256x128xf32>
    %8 = arith.truncf %7 : vector<256x128xf32> to vector<256x128xbf16>
    %c0_5 = arith.constant 0 : index
    %c0_6 = arith.constant 0 : index
    %9 = vector.load %arg2[%c0_5, %c0_6] : memref<128x256xbf16, #tpu.memory_space<vmem>>, vector<128x256xbf16>
    %cst_7 = arith.constant dense<0.000000e+00> : vector<256x256xf32>
    %10 = tpu.matmul %8, %9, %cst_7 {dimension_numbers = #tpu.dot_dimension_numbers<[1], [0], [0], [1], [0, 0, 1, 1], [], []>} : vector<256x128xbf16>, vector<128x256xbf16>, vector<256x256xf32> -> vector<256x256xf32>
    %c0_8 = arith.constant 0 : index
    %c0_9 = arith.constant 0 : index
    %11 = vector.load %arg6[%c0_8, %c0_9] : memref<1x3712xf32, #tpu.memory_space<vmem>>, vector<1x256xf32>
    %c0_10 = arith.constant 0 : index
    %c256 = arith.constant 256 : index
    %12 = vector.load %arg6[%c0_10, %c256] : memref<1x3712xf32, #tpu.memory_space<vmem>>, vector<1x256xf32>
    %cst_11 = arith.constant dense<0.000000e+00> : vector<256xf32>
    %13 = vector.multi_reduction <add>, %10, %cst_11 [0] : vector<256x256xf32> to vector<256xf32>
    %14 = vector.shape_cast %13 : vector<256xf32> to vector<1x256xf32>
    %15 = arith.mulf %10, %10 : vector<256x256xf32>
    %cst_12 = arith.constant dense<0.000000e+00> : vector<256xf32>
    %16 = vector.multi_reduction <add>, %15, %cst_12 [0] : vector<256x256xf32> to vector<256xf32>
    %17 = vector.shape_cast %16 : vector<256xf32> to vector<1x256xf32>
    %cst_13 = arith.constant 3.906250e-03 : f32
    %18 = vector.broadcast %cst_13 : f32 to vector<1x256xf32>
    %19 = arith.mulf %14, %18 : vector<1x256xf32>
    %cst_14 = arith.constant 3.906250e-03 : f32
    %20 = vector.broadcast %cst_14 : f32 to vector<1x256xf32>
    %21 = arith.mulf %17, %20 : vector<1x256xf32>
    %22 = arith.mulf %19, %19 : vector<1x256xf32>
    %23 = arith.subf %21, %22 : vector<1x256xf32>
    %cst_15 = arith.constant 8.000000e-01 : f32
    %24 = vector.broadcast %cst_15 : f32 to vector<1x256xf32>
    %25 = arith.addf %23, %24 : vector<1x256xf32>
    %26 = math.rsqrt %25 : vector<1x256xf32>
    %27 = arith.mulf %11, %26 : vector<1x256xf32>
    %28 = arith.mulf %19, %27 : vector<1x256xf32>
    %29 = arith.subf %12, %28 : vector<1x256xf32>
    %30 = vector.broadcast %27 : vector<1x256xf32> to vector<256x256xf32>
    %31 = arith.mulf %10, %30 : vector<256x256xf32>
    %32 = vector.broadcast %29 : vector<1x256xf32> to vector<256x256xf32>
    %33 = arith.addf %31, %32 : vector<256x256xf32>
    %cst_16 = arith.constant 0.000000e+00 : f32
    %34 = vector.broadcast %cst_16 : f32 to vector<256x256xf32>
    %35 = arith.cmpf ogt, %33, %34 : vector<256x256xf32>
    %cst_17 = arith.constant 2.000000e-01 : f32
    %36 = vector.broadcast %cst_17 : f32 to vector<256x256xf32>
    %37 = arith.mulf %36, %33 : vector<256x256xf32>
    %38 = arith.select %35, %33, %37 : vector<256x256xi1>, vector<256x256xf32>
    %39 = arith.truncf %38 : vector<256x256xf32> to vector<256x256xbf16>
    %c0_18 = arith.constant 0 : index
    %c0_19 = arith.constant 0 : index
    %40 = vector.load %arg3[%c0_18, %c0_19] : memref<256x512xbf16, #tpu.memory_space<vmem>>, vector<256x512xbf16>
    %cst_20 = arith.constant dense<0.000000e+00> : vector<256x512xf32>
    %41 = tpu.matmul %39, %40, %cst_20 {dimension_numbers = #tpu.dot_dimension_numbers<[1], [0], [0], [1], [0, 0, 1, 1], [], []>} : vector<256x256xbf16>, vector<256x512xbf16>, vector<256x512xf32> -> vector<256x512xf32>
    %c0_21 = arith.constant 0 : index
    %c512 = arith.constant 512 : index
    %42 = vector.load %arg6[%c0_21, %c512] : memref<1x3712xf32, #tpu.memory_space<vmem>>, vector<1x512xf32>
    %c0_22 = arith.constant 0 : index
    %c1024 = arith.constant 1024 : index
    %43 = vector.load %arg6[%c0_22, %c1024] : memref<1x3712xf32, #tpu.memory_space<vmem>>, vector<1x512xf32>
    %cst_23 = arith.constant dense<0.000000e+00> : vector<512xf32>
    %44 = vector.multi_reduction <add>, %41, %cst_23 [0] : vector<256x512xf32> to vector<512xf32>
    %45 = vector.shape_cast %44 : vector<512xf32> to vector<1x512xf32>
    %46 = arith.mulf %41, %41 : vector<256x512xf32>
    %cst_24 = arith.constant dense<0.000000e+00> : vector<512xf32>
    %47 = vector.multi_reduction <add>, %46, %cst_24 [0] : vector<256x512xf32> to vector<512xf32>
    %48 = vector.shape_cast %47 : vector<512xf32> to vector<1x512xf32>
    %cst_25 = arith.constant 3.906250e-03 : f32
    %49 = vector.broadcast %cst_25 : f32 to vector<1x512xf32>
    %50 = arith.mulf %45, %49 : vector<1x512xf32>
    %cst_26 = arith.constant 3.906250e-03 : f32
    %51 = vector.broadcast %cst_26 : f32 to vector<1x512xf32>
    %52 = arith.mulf %48, %51 : vector<1x512xf32>
    %53 = arith.mulf %50, %50 : vector<1x512xf32>
    %54 = arith.subf %52, %53 : vector<1x512xf32>
    %cst_27 = arith.constant 8.000000e-01 : f32
    %55 = vector.broadcast %cst_27 : f32 to vector<1x512xf32>
    %56 = arith.addf %54, %55 : vector<1x512xf32>
    %57 = math.rsqrt %56 : vector<1x512xf32>
    %58 = arith.mulf %42, %57 : vector<1x512xf32>
    %59 = arith.mulf %50, %58 : vector<1x512xf32>
    %60 = arith.subf %43, %59 : vector<1x512xf32>
    %61 = vector.broadcast %58 : vector<1x512xf32> to vector<256x512xf32>
    %62 = arith.mulf %41, %61 : vector<256x512xf32>
    %63 = vector.broadcast %60 : vector<1x512xf32> to vector<256x512xf32>
    %64 = arith.addf %62, %63 : vector<256x512xf32>
    %cst_28 = arith.constant 0.000000e+00 : f32
    %65 = vector.broadcast %cst_28 : f32 to vector<256x512xf32>
    %66 = arith.cmpf ogt, %64, %65 : vector<256x512xf32>
    %cst_29 = arith.constant 2.000000e-01 : f32
    %67 = vector.broadcast %cst_29 : f32 to vector<256x512xf32>
    %68 = arith.mulf %67, %64 : vector<256x512xf32>
    %69 = arith.select %66, %64, %68 : vector<256x512xi1>, vector<256x512xf32>
    %70 = arith.truncf %69 : vector<256x512xf32> to vector<256x512xbf16>
    %c0_30 = arith.constant 0 : index
    %c0_31 = arith.constant 0 : index
    %71 = vector.load %arg4[%c0_30, %c0_31] : memref<512x1024xbf16, #tpu.memory_space<vmem>>, vector<512x1024xbf16>
    %cst_32 = arith.constant dense<0.000000e+00> : vector<256x1024xf32>
    %72 = tpu.matmul %70, %71, %cst_32 {dimension_numbers = #tpu.dot_dimension_numbers<[1], [0], [0], [1], [0, 0, 1, 1], [], []>} : vector<256x512xbf16>, vector<512x1024xbf16>, vector<256x1024xf32> -> vector<256x1024xf32>
    %c0_33 = arith.constant 0 : index
    %c1536 = arith.constant 1536 : index
    %73 = vector.load %arg6[%c0_33, %c1536] : memref<1x3712xf32, #tpu.memory_space<vmem>>, vector<1x1024xf32>
    %c0_34 = arith.constant 0 : index
    %c2560 = arith.constant 2560 : index
    %74 = vector.load %arg6[%c0_34, %c2560] : memref<1x3712xf32, #tpu.memory_space<vmem>>, vector<1x1024xf32>
    %cst_35 = arith.constant dense<0.000000e+00> : vector<1024xf32>
    %75 = vector.multi_reduction <add>, %72, %cst_35 [0] : vector<256x1024xf32> to vector<1024xf32>
    %76 = vector.shape_cast %75 : vector<1024xf32> to vector<1x1024xf32>
    %77 = arith.mulf %72, %72 : vector<256x1024xf32>
    %cst_36 = arith.constant dense<0.000000e+00> : vector<1024xf32>
    %78 = vector.multi_reduction <add>, %77, %cst_36 [0] : vector<256x1024xf32> to vector<1024xf32>
    %79 = vector.shape_cast %78 : vector<1024xf32> to vector<1x1024xf32>
    %cst_37 = arith.constant 3.906250e-03 : f32
    %80 = vector.broadcast %cst_37 : f32 to vector<1x1024xf32>
    %81 = arith.mulf %76, %80 : vector<1x1024xf32>
    %cst_38 = arith.constant 3.906250e-03 : f32
    %82 = vector.broadcast %cst_38 : f32 to vector<1x1024xf32>
    %83 = arith.mulf %79, %82 : vector<1x1024xf32>
    %84 = arith.mulf %81, %81 : vector<1x1024xf32>
    %85 = arith.subf %83, %84 : vector<1x1024xf32>
    %cst_39 = arith.constant 8.000000e-01 : f32
    %86 = vector.broadcast %cst_39 : f32 to vector<1x1024xf32>
    %87 = arith.addf %85, %86 : vector<1x1024xf32>
    %88 = math.rsqrt %87 : vector<1x1024xf32>
    %89 = arith.mulf %73, %88 : vector<1x1024xf32>
    %90 = arith.mulf %81, %89 : vector<1x1024xf32>
    %91 = arith.subf %74, %90 : vector<1x1024xf32>
    %92 = vector.broadcast %89 : vector<1x1024xf32> to vector<256x1024xf32>
    %93 = arith.mulf %72, %92 : vector<256x1024xf32>
    %94 = vector.broadcast %91 : vector<1x1024xf32> to vector<256x1024xf32>
    %95 = arith.addf %93, %94 : vector<256x1024xf32>
    %cst_40 = arith.constant 0.000000e+00 : f32
    %96 = vector.broadcast %cst_40 : f32 to vector<256x1024xf32>
    %97 = arith.cmpf ogt, %95, %96 : vector<256x1024xf32>
    %cst_41 = arith.constant 2.000000e-01 : f32
    %98 = vector.broadcast %cst_41 : f32 to vector<256x1024xf32>
    %99 = arith.mulf %98, %95 : vector<256x1024xf32>
    %100 = arith.select %97, %95, %99 : vector<256x1024xi1>, vector<256x1024xf32>
    %101 = arith.truncf %100 : vector<256x1024xf32> to vector<256x1024xbf16>
    %c0_42 = arith.constant 0 : index
    %c0_43 = arith.constant 0 : index
    %102 = vector.load %arg5[%c0_42, %c0_43] : memref<1024x128xbf16, #tpu.memory_space<vmem>>, vector<1024x128xbf16>
    %cst_44 = arith.constant dense<0.000000e+00> : vector<256x128xf32>
    %103 = tpu.matmul %101, %102, %cst_44 {dimension_numbers = #tpu.dot_dimension_numbers<[1], [0], [0], [1], [0, 0, 1, 1], [], []>} : vector<256x1024xbf16>, vector<1024x128xbf16>, vector<256x128xf32> -> vector<256x128xf32>
    %c0_45 = arith.constant 0 : index
    %c3584 = arith.constant 3584 : index
    %104 = vector.load %arg6[%c0_45, %c3584] : memref<1x3712xf32, #tpu.memory_space<vmem>>, vector<1x128xf32>
    %105 = vector.broadcast %104 : vector<1x128xf32> to vector<256x128xf32>
    %106 = arith.addf %103, %105 : vector<256x128xf32>
    %107 = math.tanh %106 : vector<256x128xf32>
    %c0_46 = arith.constant 0 : index
    %c0_47 = arith.constant 0 : index
    %108 = vector.load %arg7[%c0_46, %c0_47] : memref<256x128xf32, #tpu.memory_space<vmem>>, vector<256x128xf32>
    tpu.vector_store %arg7[%c0_46, %c0_47], %107 {strides = array<i32>} : memref<256x128xf32, #tpu.memory_space<vmem>>, vector<256x128xf32>,
    return
  }
}

</mosaic_0001>

<llo_original>
// kernel: generator_forward.1
$region0: #{generator_forward.1}
  #allocation0 [shape = 'u32[]', space=smem, size = 0x4, offset = 0x4, fixed_abs, tag = 'smem constant byte address 0x4 - core index']
  #allocation1 [shape = 'u32[144,128]{1,0:T(1,128)}', space=vmem, size = 0x12000, scoped, tag = 'internal scratch']
  %s0 = inlined_call_operand.vmem [shape: bf16[256,128], index: 0, kind: input, shape index: {}]
  %s1 = inlined_call_operand.vmem [shape: bf16[128,128], index: 1, kind: input, shape index: {}]
  %s2 = inlined_call_operand.vmem [shape: bf16[128,256], index: 2, kind: input, shape index: {}]
  %s3 = inlined_call_operand.vmem [shape: bf16[256,512], index: 3, kind: input, shape index: {}]
  %s4 = inlined_call_operand.vmem [shape: bf16[512,1024], index: 4, kind: input, shape index: {}]
  %s5 = inlined_call_operand.hbm [shape: bf16[1024,128], index: 5, kind: input, shape index: {}]
  %s6 = inlined_call_operand.vmem [shape: f32[1,3712], index: 6, kind: input, shape index: {}]
  %s7 = inlined_call_operand.vmem [shape: f32[256,128], index: 7, kind: output, shape index: {}]
  %s8 = sld [smem:[#allocation0]]
  $region42: #{generator_forward.1} parent=0
    _
  %s10 = ssub.s32 1, %s8
  %s11 = scalar_select 0, %s10, %s8
  $region1: #{generator_forward.1} parent=0
    #allocation2 [shape = 'u8[262144]{0}', space=vmem, size = 0x40000, scoped, tag = 'input window, operand 5, single buffered']
    #allocation3 [shape = 's32[1]{0}', space=sflag, size = 0x4, scoped, tag = 'scoped memory for generator_forward.1']
    %12 = vsyncpa [#allocation3], 0
    // Predicated region
    $region2: #{generator_forward.1} parent=1 // pred_check
      _
    $region3: #{generator_forward.1} parent=1 // pred_check_branch
      %14 = sbr.rel (0) target = $region5
    $region4: #{generator_forward.1} parent=1 // pred_region
      _
    $region5: #{generator_forward.1} parent=1 // pred_fallthru
      _
    // Predicated region
    $region6: #{generator_forward.1} parent=1 // pred_check
      _
    $region7: #{generator_forward.1} parent=1 // pred_check_branch
      %16 = sbr.rel (0) target = $region9
    $region8: #{generator_forward.1} parent=1 // pred_region
      _
    $region9: #{generator_forward.1} parent=1 // pred_fallthru
      _
    // Predicated region
    $region10: #{generator_forward.1} parent=1 // pred_check
      _
    $region11: #{generator_forward.1} parent=1 // pred_check_branch
      %18 = sbr.rel (0) target = $region13
    $region12: #{generator_forward.1} parent=1 // pred_region
      _
    $region13: #{generator_forward.1} parent=1 // pred_fallthru
      _
    // Predicated region
    $region14: #{generator_forward.1} parent=1 // pred_check
      _
    $region15: #{generator_forward.1} parent=1 // pred_check_branch
      %20 = sbr.rel (0) target = $region17
    $region16: #{generator_forward.1} parent=1 // pred_region
      _
    $region17: #{generator_forward.1} parent=1 // pred_fallthru
      _
    // Predicated region
    $region18: #{generator_forward.1} parent=1 // pred_check
      _
    $region19: #{generator_forward.1} parent=1 // pred_check_branch
      %22 = sbr.rel (0) target = $region21
    $region20: #{generator_forward.1} parent=1 // pred_region
      _
    $region21: #{generator_forward.1} parent=1 // pred_fallthru
      _
    // Predicated region
    $region22: #{generator_forward.1} parent=1 // pred_check
      _
    $region23: #{generator_forward.1} parent=1 // pred_check_branch
      %24 = sbr.rel (0) target = $region25
    $region24: #{generator_forward.1} parent=1 // pred_region
      %s26 = ssub.s32 8192, 8192
      %27 = vsyncadd [#allocation3], %s26
      %s28 = sshll.u32 [#allocation2], 4
      %s29 = int_to_ptr.vmem [resolvable:$true] %s28
      %34 = dma.hbm_to_vmem [thread:$0]  %s5, 8192, %s29, [#allocation3], 64, 64, 4
    $region25: #{generator_forward.1} parent=1 // pred_fallthru
      _
    // Predicated region
    $region26: #{generator_forward.1} parent=1 // pred_check
      _
    $region27: #{generator_forward.1} parent=1 // pred_check_branch
      %36 = sbr.rel (0) target = $region29
    $region28: #{generator_forward.1} parent=1 // pred_region
      _
    $region29: #{generator_forward.1} parent=1 // pred_fallthru
      _
    // Predicated region
    $region30: #{generator_forward.1} parent=1 // pred_check
      _
    $region31: #{generator_forward.1} parent=1 // pred_check_branch
      %38 = sbr.rel (0) target = $region33
    $region32: #{generator_forward.1} parent=1 // pred_region
      %39 = dma.done [#allocation3], 8192
    $region33: #{generator_forward.1} parent=1 // pred_fallthru
      _
    %v41 = vld [vmem:[%s0] sm:$0xf]
    %v42 = vld [vmem:[%s0 + $0x4] sm:$0xf]
    %v43 = vld [vmem:[%s0 + $0x8] sm:$0xf]
    %v44 = vld [vmem:[%s0 + $0xc] sm:$0xf]
    %v45 = vld [vmem:[%s0 + $0x10] sm:$0xf]
    %v46 = vld [vmem:[%s0 + $0x14] sm:$0xf]
    %v47 = vld [vmem:[%s0 + $0x18] sm:$0xf]
    %v48 = vld [vmem:[%s0 + $0x1c] sm:$0xf]
    %v49 = vld [vmem:[%s0 + $0x20] sm:$0xf]
    %v50 = vld [vmem:[%s0 + $0x24] sm:$0xf]
    %v51 = vld [vmem:[%s0 + $0x28] sm:$0xf]
    %v52 = vld [vmem:[%s0 + $0x2c] sm:$0xf]
    %v53 = vld [vmem:[%s0 + $0x30] sm:$0xf]
    %v54 = vld [vmem:[%s0 + $0x34] sm:$0xf]
    %v55 = vld [vmem:[%s0 + $0x38] sm:$0xf]
    %v56 = vld [vmem:[%s0 + $0x3c] sm:$0xf]
    %v57 = vld [vmem:[%s0 + $0x40] sm:$0xf]
    %v58 = vld [vmem:[%s0 + $0x44] sm:$0xf]
    %v59 = vld [vmem:[%s0 + $0x48] sm:$0xf]
    %v60 = vld [vmem:[%s0 + $0x4c] sm:$0xf]
    %v61 = vld [vmem:[%s0 + $0x50] sm:$0xf]
    %v62 = vld [vmem:[%s0 + $0x54] sm:$0xf]
    %v63 = vld [vmem:[%s0 + $0x58] sm:$0xf]
    %v64 = vld [vmem:[%s0 + $0x5c] sm:$0xf]
    %v65 = vld [vmem:[%s0 + $0x60] sm:$0xf]
    %v66 = vld [vmem:[%s0 + $0x64] sm:$0xf]
    %v67 = vld [vmem:[%s0 + $0x68] sm:$0xf]
    %v68 = vld [vmem:[%s0 + $0x6c] sm:$0xf]
    %v69 = vld [vmem:[%s0 + $0x70] sm:$0xf]
    %v70 = vld [vmem:[%s0 + $0x74] sm:$0xf]
    %v71 = vld [vmem:[%s0 + $0x78] sm:$0xf]
    %v72 = vld [vmem:[%s0 + $0x7c] sm:$0xf]
    %v73 = vld [vmem:[%s1] sm:$0xf]
    %v74 = vld [vmem:[%s1 + $0x4] sm:$0xf]
    %v75 = vld [vmem:[%s1 + $0x8] sm:$0xf]
    %v76 = vld [vmem:[%s1 + $0xc] sm:$0xf]
    %v77 = vld [vmem:[%s1 + $0x10] sm:$0xf]
    %v78 = vld [vmem:[%s1 + $0x14] sm:$0xf]
    %v79 = vld [vmem:[%s1 + $0x18] sm:$0xf]
    %v80 = vld [vmem:[%s1 + $0x1c] sm:$0xf]
    %v81 = vld [vmem:[%s1 + $0x20] sm:$0xf]
    %v82 = vld [vmem:[%s1 + $0x24] sm:$0xf]
    %v83 = vld [vmem:[%s1 + $0x28] sm:$0xf]
    %v84 = vld [vmem:[%s1 + $0x2c] sm:$0xf]
    %v85 = vld [vmem:[%s1 + $0x30] sm:$0xf]
    %v86 = vld [vmem:[%s1 + $0x34] sm:$0xf]
    %v87 = vld [vmem:[%s1 + $0x38] sm:$0xf]
    %v88 = vld [vmem:[%s1 + $0x3c] sm:$0xf]
    %v121 = vunpack.c.l.b16 %v41
    %v122 = vunpack.c.l.b16 %v42
    %v123 = vunpack.c.l.b16 %v43
    %v124 = vunpack.c.l.b16 %v44
    %v125 = vunpack.c.l.b16 %v45
    %v126 = vunpack.c.l.b16 %v46
    %v127 = vunpack.c.l.b16 %v47
    %v128 = vunpack.c.l.b16 %v48
    %v129 = vunpack.c.l.b16 %v49
    %v130 = vunpack.c.l.b16 %v50
    %v131 = vunpack.c.l.b16 %v51
    %v132 = vunpack.c.l.b16 %v52
    %v133 = vunpack.c.l.b16 %v53
    %v134 = vunpack.c.l.b16 %v54
    %v135 = vunpack.c.l.b16 %v55
    %v136 = vunpack.c.l.b16 %v56
    %v137 = vunpack.c.l.b16 %v57
    %v138 = vunpack.c.l.b16 %v58
    %v139 = vunpack.c.l.b16 %v59
    %v140 = vunpack.c.l.b16 %v60
    %v141 = vunpack.c.l.b16 %v61
    %v142 = vunpack.c.l.b16 %v62
    %v143 = vunpack.c.l.b16 %v63
    %v144 = vunpack.c.l.b16 %v64
    %v145 = vunpack.c.l.b16 %v65
    %v146 = vunpack.c.l.b16 %v66
    %v147 = vunpack.c.l.b16 %v67
    %v148 = vunpack.c.l.b16 %v68
    %v149 = vunpack.c.l.b16 %v69
    %v150 = vunpack.c.l.b16 %v70
    %v151 = vunpack.c.l.b16 %v71
    %v152 = vunpack.c.l.b16 %v72
    %v153 = vpack.c.b16 %v122, %v121
    %v154 = vpack.c.b16 %v124, %v123
    %v155 = vpack.c.b16 %v126, %v125
    %v156 = vpack.c.b16 %v128, %v127
    %v157 = vpack.c.b16 %v130, %v129
    %v158 = vpack.c.b16 %v132, %v131
    %v159 = vpack.c.b16 %v134, %v133
    %v160 = vpack.c.b16 %v136, %v135
    %v161 = vpack.c.b16 %v138, %v137
    %v162 = vpack.c.b16 %v140, %v139
    %v163 = vpack.c.b16 %v142, %v141
    %v164 = vpack.c.b16 %v144, %v143
    %v165 = vpack.c.b16 %v146, %v145
    %v166 = vpack.c.b16 %v148, %v147
    %v167 = vpack.c.b16 %v150, %v149
    %v168 = vpack.c.b16 %v152, %v151
    %v201 = vunpack.c.l.b16 %v73
    %v202 = vunpack.c.l.b16 %v74
    %v203 = vunpack.c.l.b16 %v75
    %v204 = vunpack.c.l.b16 %v76
    %v205 = vunpack.c.l.b16 %v77
    %v206 = vunpack.c.l.b16 %v78
    %v207 = vunpack.c.l.b16 %v79
    %v208 = vunpack.c.l.b16 %v80
    %v209 = vunpack.c.l.b16 %v81
    %v210 = vunpack.c.l.b16 %v82
    %v211 = vunpack.c.l.b16 %v83
    %v212 = vunpack.c.l.b16 %v84
    %v213 = vunpack.c.l.b16 %v85
    %v214 = vunpack.c.l.b16 %v86
    %v215 = vunpack.c.l.b16 %v87
    %v216 = vunpack.c.l.b16 %v88
    %v217 = vpack.c.b16 %v202, %v201
    %v218 = vpack.c.b16 %v204, %v203
    %v219 = vpack.c.b16 %v206, %v205
    %v220 = vpack.c.b16 %v208, %v207
    %v221 = vpack.c.b16 %v210, %v209
    %v222 = vpack.c.b16 %v212, %v211
    %v223 = vpack.c.b16 %v214, %v213
    %v224 = vpack.c.b16 %v216, %v215
    %233 = vmatprep.subr.bf16.mxu0 0
    %234 = vmatpush1.bf16.msra.mxu0 %v224
    %235 = vmatprep.subr.bf16.mxu0 0
    %236 = vmatpush1.bf16.msra.mxu0 %v223
    %237 = vmatprep.subr.bf16.mxu0 0
    %238 = vmatpush1.bf16.msra.mxu0 %v222
    %239 = vmatprep.subr.bf16.mxu0 0
    %240 = vmatpush1.bf16.msra.mxu0 %v221
    %241 = vmatprep.subr.bf16.mxu0 0
    %242 = vmatpush1.bf16.msra.mxu0 %v220
    %243 = vmatprep.subr.bf16.mxu0 0
    %244 = vmatpush1.bf16.msra.mxu0 %v219
    %245 = vmatprep.subr.bf16.mxu0 0
    %246 = vmatpush1.bf16.msra.mxu0 %v218
    %247 = vmatprep.subr.bf16.mxu0 0
    %248 = vmatpush1.bf16.msra.mxu0 %v217
    %249 = vmatprep.subr.bf16.mxu0 0
    %250 = vmatpush2.bf16.msra.mxu0 0
    %251 = vmatprep.subr.bf16.mxu0 0
    %252 = vmatpush2.bf16.msra.mxu0 0
    %253 = vmatprep.subr.bf16.mxu0 0
    %254 = vmatpush2.bf16.msra.mxu0 0
    %255 = vmatprep.subr.bf16.mxu0 0
    %256 = vmatpush2.bf16.msra.mxu0 0
    %257 = vmatprep.subr.bf16.mxu0 0
    %258 = vmatpush2.bf16.msra.mxu0 0
    %259 = vmatprep.subr.bf16.mxu0 0
    %260 = vmatpush2.bf16.msra.mxu0 0
    %261 = vmatprep.subr.bf16.mxu0 0
    %262 = vmatpush2.bf16.msra.mxu0 0
    %263 = vmatprep.subr.bf16.mxu0 0
    %264 = vmatpush2.bf16.msra.mxu0 0
    %265 = vmatprep.mubr.bf16.mxu0 0
    %266 = vmatmul.mubr.bf16.gmra.mxu0 %v153
    %v267 = vpop.f32.mrf.mxu0
    %v268 = vadd.f32 0.0, %v267
    %v269 = vpop.f32.mrf.mxu0
    %v270 = vpop.f32.mrf.mxu0
    %v271 = vadd.f32 0.0, %v270
    %v272 = vpop.f32.mrf.mxu0
    %273 = vmatprep.mubr.bf16.mxu0 0
    %274 = vmatmul.mubr.bf16.gmra.mxu0 %v154
    %v275 = vpop.f32.mrf.mxu0
    %v276 = vadd.f32 0.0, %v275
    %v277 = vpop.f32.mrf.mxu0
    %v278 = vpop.f32.mrf.mxu0
    %v279 = vadd.f32 0.0, %v278
    %v280 = vpop.f32.mrf.mxu0
    %281 = vmatprep.mubr.bf16.mxu0 0
    %282 = vmatmul.mubr.bf16.gmra.mxu0 %v155
    %v283 = vpop.f32.mrf.mxu0
    %v284 = vadd.f32 0.0, %v283
    %v285 = vpop.f32.mrf.mxu0
    %v286 = vpop.f32.mrf.mxu0
    %v287 = vadd.f32 0.0, %v286
    %v288 = vpop.f32.mrf.mxu0
    %289 = vmatprep.mubr.bf16.mxu0 0
    %290 = vmatmul.mubr.bf16.gmra.mxu0 %v156
    %v291 = vpop.f32.mrf.mxu0
    %v292 = vadd.f32 0.0, %v291
    %v293 = vpop.f32.mrf.mxu0
    %v294 = vpop.f32.mrf.mxu0
    %v295 = vadd.f32 0.0, %v294
    %v296 = vpop.f32.mrf.mxu0
    %297 = vmatprep.mubr.bf16.mxu0 0
    %298 = vmatmul.mubr.bf16.gmra.mxu0 %v157
    %v299 = vpop.f32.mrf.mxu0
    %v300 = vadd.f32 0.0, %v299
    %v301 = vpop.f32.mrf.mxu0
    %v302 = vpop.f32.mrf.mxu0
    %v303 = vadd.f32 0.0, %v302
    %v304 = vpop.f32.mrf.mxu0
    %305 = vmatprep.mubr.bf16.mxu0 0
    %306 = vmatmul.mubr.bf16.gmra.mxu0 %v158
    %v307 = vpop.f32.mrf.mxu0
    %v308 = vadd.f32 0.0, %v307
    %v309 = vpop.f32.mrf.mxu0
    %v310 = vpop.f32.mrf.mxu0
    %v311 = vadd.f32 0.0, %v310
    %v312 = vpop.f32.mrf.mxu0
    %313 = vmatprep.mubr.bf16.mxu0 0
    %314 = vmatmul.mubr.bf16.gmra.mxu0 %v159
    %v315 = vpop.f32.mrf.mxu0
    %v316 = vadd.f32 0.0, %v315
    %v317 = vpop.f32.mrf.mxu0
    %v318 = vpop.f32.mrf.mxu0
    %v319 = vadd.f32 0.0, %v318
    %v320 = vpop.f32.mrf.mxu0
    %321 = vmatprep.mubr.bf16.mxu0 0
    %322 = vmatmul.mubr.bf16.gmra.mxu0 %v160
    %v323 = vpop.f32.mrf.mxu0
    %v324 = vadd.f32 0.0, %v323
    %v325 = vpop.f32.mrf.mxu0
    %v326 = vpop.f32.mrf.mxu0
    %v327 = vadd.f32 0.0, %v326
    %v328 = vpop.f32.mrf.mxu0
    %329 = vmatprep.mubr.bf16.mxu0 0
    %330 = vmatmul.mubr.bf16.gmra.mxu0 %v161
    %v331 = vpop.f32.mrf.mxu0
    %v332 = vadd.f32 0.0, %v331
    %v333 = vpop.f32.mrf.mxu0
    %v334 = vpop.f32.mrf.mxu0
    %v335 = vadd.f32 0.0, %v334
    %v336 = vpop.f32.mrf.mxu0
    %337 = vmatprep.mubr.bf16.mxu0 0
    %338 = vmatmul.mubr.bf16.gmra.mxu0 %v162
    %v339 = vpop.f32.mrf.mxu0
    %v340 = vadd.f32 0.0, %v339
    %v341 = vpop.f32.mrf.mxu0
    %v342 = vpop.f32.mrf.mxu0
    %v343 = vadd.f32 0.0, %v342
    %v344 = vpop.f32.mrf.mxu0
    %345 = vmatprep.mubr.bf16.mxu0 0
    %346 = vmatmul.mubr.bf16.gmra.mxu0 %v163
    %v347 = vpop.f32.mrf.mxu0
    %v348 = vadd.f32 0.0, %v347
    %v349 = vpop.f32.mrf.mxu0
    %v350 = vpop.f32.mrf.mxu0
    %v351 = vadd.f32 0.0, %v350
    %v352 = vpop.f32.mrf.mxu0
    %353 = vmatprep.mubr.bf16.mxu0 0
    %354 = vmatmul.mubr.bf16.gmra.mxu0 %v164
    %v355 = vpop.f32.mrf.mxu0
    %v356 = vadd.f32 0.0, %v355
    %v357 = vpop.f32.mrf.mxu0
    %v358 = vpop.f32.mrf.mxu0
    %v359 = vadd.f32 0.0, %v358
    %v360 = vpop.f32.mrf.mxu0
    %361 = vmatprep.mubr.bf16.mxu0 0
    %362 = vmatmul.mubr.bf16.gmra.mxu0 %v165
    %v363 = vpop.f32.mrf.mxu0
    %v364 = vadd.f32 0.0, %v363
    %v365 = vpop.f32.mrf.mxu0
    %v366 = vpop.f32.mrf.mxu0
    %v367 = vadd.f32 0.0, %v366
    %v368 = vpop.f32.mrf.mxu0
    %369 = vmatprep.mubr.bf16.mxu0 0
    %370 = vmatmul.mubr.bf16.gmra.mxu0 %v166
    %v371 = vpop.f32.mrf.mxu0
    %v372 = vadd.f32 0.0, %v371
    %v373 = vpop.f32.mrf.mxu0
    %v374 = vpop.f32.mrf.mxu0
    %v375 = vadd.f32 0.0, %v374
    %v376 = vpop.f32.mrf.mxu0
    %377 = vmatprep.mubr.bf16.mxu0 0
    %378 = vmatmul.mubr.bf16.gmra.mxu0 %v167
    %v379 = vpop.f32.mrf.mxu0
    %v380 = vadd.f32 0.0, %v379
    %v381 = vpop.f32.mrf.mxu0
    %v382 = vpop.f32.mrf.mxu0
    %v383 = vadd.f32 0.0, %v382
    %v384 = vpop.f32.mrf.mxu0
    %385 = vmatprep.mubr.bf16.mxu0 0
    %386 = vmatmul.mubr.bf16.gmra.mxu0 %v168
    %v387 = vpop.f32.mrf.mxu0
    %v388 = vadd.f32 0.0, %v387
    %v389 = vpop.f32.mrf.mxu0
    %v390 = vpop.f32.mrf.mxu0
    %v391 = vadd.f32 0.0, %v390
    %v392 = vpop.f32.mrf.mxu0
    %393 = vdwg.mxu0
    %vm394 = vcmp.gt.f32.partialorder %v268, 0.0
    %vm395 = vcmp.gt.f32.partialorder %v271, 0.0
    %vm396 = vcmp.gt.f32.partialorder %v276, 0.0
    %vm397 = vcmp.gt.f32.partialorder %v279, 0.0
    %vm398 = vcmp.gt.f32.partialorder %v284, 0.0
    %vm399 = vcmp.gt.f32.partialorder %v287, 0.0
    %vm400 = vcmp.gt.f32.partialorder %v292, 0.0
    %vm401 = vcmp.gt.f32.partialorder %v295, 0.0
    %vm402 = vcmp.gt.f32.partialorder %v300, 0.0
    %vm403 = vcmp.gt.f32.partialorder %v303, 0.0
    %vm404 = vcmp.gt.f32.partialorder %v308, 0.0
    %vm405 = vcmp.gt.f32.partialorder %v311, 0.0
    %vm406 = vcmp.gt.f32.partialorder %v316, 0.0
    %vm407 = vcmp.gt.f32.partialorder %v319, 0.0
    %vm408 = vcmp.gt.f32.partialorder %v324, 0.0
    %vm409 = vcmp.gt.f32.partialorder %v327, 0.0
    %vm410 = vcmp.gt.f32.partialorder %v332, 0.0
    %vm411 = vcmp.gt.f32.partialorder %v335, 0.0
    %vm412 = vcmp.gt.f32.partialorder %v340, 0.0
    %vm413 = vcmp.gt.f32.partialorder %v343, 0.0
    %vm414 = vcmp.gt.f32.partialorder %v348, 0.0
    %vm415 = vcmp.gt.f32.partialorder %v351, 0.0
    %vm416 = vcmp.gt.f32.partialorder %v356, 0.0
    %vm417 = vcmp.gt.f32.partialorder %v359, 0.0
    %vm418 = vcmp.gt.f32.partialorder %v364, 0.0
    %vm419 = vcmp.gt.f32.partialorder %v367, 0.0
    %vm420 = vcmp.gt.f32.partialorder %v372, 0.0
    %vm421 = vcmp.gt.f32.partialorder %v375, 0.0
    %vm422 = vcmp.gt.f32.partialorder %v380, 0.0
    %vm423 = vcmp.gt.f32.partialorder %v383, 0.0
    %vm424 = vcmp.gt.f32.partialorder %v388, 0.0
    %vm425 = vcmp.gt.f32.partialorder %v391, 0.0
    %v426 = vmul.f32 %v268, 0.2
    %v427 = vmul.f32 %v271, 0.2
    %v428 = vmul.f32 %v276, 0.2
    %v429 = vmul.f32 %v279, 0.2
    %v430 = vmul.f32 %v284, 0.2
    %v431 = vmul.f32 %v287, 0.2
    %v432 = vmul.f32 %v292, 0.2
    %v433 = vmul.f32 %v295, 0.2
    %v434 = vmul.f32 %v300, 0.2
    %v435 = vmul.f32 %v303, 0.2
    %v436 = vmul.f32 %v308, 0.2
    %v437 = vmul.f32 %v311, 0.2
    %v438 = vmul.f32 %v316, 0.2
    %v439 = vmul.f32 %v319, 0.2
    %v440 = vmul.f32 %v324, 0.2
    %v441 = vmul.f32 %v327, 0.2
    %v442 = vmul.f32 %v332, 0.2
    %v443 = vmul.f32 %v335, 0.2
    %v444 = vmul.f32 %v340, 0.2
    %v445 = vmul.f32 %v343, 0.2
    %v446 = vmul.f32 %v348, 0.2
    %v447 = vmul.f32 %v351, 0.2
    %v448 = vmul.f32 %v356, 0.2
    %v449 = vmul.f32 %v359, 0.2
    %v450 = vmul.f32 %v364, 0.2
    %v451 = vmul.f32 %v367, 0.2
    %v452 = vmul.f32 %v372, 0.2
    %v453 = vmul.f32 %v375, 0.2
    %v454 = vmul.f32 %v380, 0.2
    %v455 = vmul.f32 %v383, 0.2
    %v456 = vmul.f32 %v388, 0.2
    %v457 = vmul.f32 %v391, 0.2
    %v458 = vsel %vm394, %v268, %v426
    %v459 = vsel %vm395, %v271, %v427
    %v460 = vsel %vm396, %v276, %v428
    %v461 = vsel %vm397, %v279, %v429
    %v462 = vsel %vm398, %v284, %v430
    %v463 = vsel %vm399, %v287, %v431
    %v464 = vsel %vm400, %v292, %v432
    %v465 = vsel %vm401, %v295, %v433
    %v466 = vsel %vm402, %v300, %v434
    %v467 = vsel %vm403, %v303, %v435
    %v468 = vsel %vm404, %v308, %v436
    %v469 = vsel %vm405, %v311, %v437
    %v470 = vsel %vm406, %v316, %v438
    %v471 = vsel %vm407, %v319, %v439
    %v472 = vsel %vm408, %v324, %v440
    %v473 = vsel %vm409, %v327, %v441
    %v474 = vsel %vm410, %v332, %v442
    %v475 = vsel %vm411, %v335, %v443
    %v476 = vsel %vm412, %v340, %v444
    %v477 = vsel %vm413, %v343, %v445
    %v478 = vsel %vm414, %v348, %v446
    %v479 = vsel %vm415, %v351, %v447
    %v480 = vsel %vm416, %v356, %v448
    %v481 = vsel %vm417, %v359, %v449
    %v482 = vsel %vm418, %v364, %v450
    %v483 = vsel %vm419, %v367, %v451
    %v484 = vsel %vm420, %v372, %v452
    %v485 = vsel %vm421, %v375, %v453
    %v486 = vsel %vm422, %v380, %v454
    %v487 = vsel %vm423, %v383, %v455
    %v488 = vsel %vm424, %v388, %v456
    %v489 = vsel %vm425, %v391, %v457
    %v490 = vpack.c.bf16 %v459, %v458
    %v491 = vpack.c.bf16 %v461, %v460
    %v492 = vpack.c.bf16 %v463, %v462
    %v493 = vpack.c.bf16 %v465, %v464
    %v494 = vpack.c.bf16 %v467, %v466
    %v495 = vpack.c.bf16 %v469, %v468
    %v496 = vpack.c.bf16 %v471, %v470
    %v497 = vpack.c.bf16 %v473, %v472
    %v498 = vpack.c.bf16 %v475, %v474
    %v499 = vpack.c.bf16 %v477, %v476
    %v500 = vpack.c.bf16 %v479, %v478
    %v501 = vpack.c.bf16 %v481, %v480
    %v502 = vpack.c.bf16 %v483, %v482
    %v503 = vpack.c.bf16 %v485, %v484
    %v504 = vpack.c.bf16 %v487, %v486
    %v505 = vpack.c.bf16 %v489, %v488
    %v506 = vld [vmem:[%s2] sm:$0xff]
    %v507 = vld [vmem:[%s2 + $0x8] sm:$0xff]
    %v508 = vld [vmem:[%s2 + $0x10] sm:$0xff]
    %v509 = vld [vmem:[%s2 + $0x18] sm:$0xff]
    %v510 = vld [vmem:[%s2 + $0x20] sm:$0xff]
    %v511 = vld [vmem:[%s2 + $0x28] sm:$0xff]
    %v512 = vld [vmem:[%s2 + $0x30] sm:$0xff]
    %v513 = vld [vmem:[%s2 + $0x38] sm:$0xff]
    %v514 = vld [vmem:[%s2 + $0x40] sm:$0xff]
    %v515 = vld [vmem:[%s2 + $0x48] sm:$0xff]
    %v516 = vld [vmem:[%s2 + $0x50] sm:$0xff]
    %v517 = vld [vmem:[%s2 + $0x58] sm:$0xff]
    %v518 = vld [vmem:[%s2 + $0x60] sm:$0xff]
    %v519 = vld [vmem:[%s2 + $0x68] sm:$0xff]
    %v520 = vld [vmem:[%s2 + $0x70] sm:$0xff]
    %v521 = vld [vmem:[%s2 + $0x78] sm:$0xff]
    %v538 = vunpack.c.l.b16 %v506
    %v539 = vunpack.c.h.b16 %v506
    %v540 = vunpack.c.l.b16 %v507
    %v541 = vunpack.c.h.b16 %v507
    %v542 = vunpack.c.l.b16 %v508
    %v543 = vunpack.c.h.b16 %v508
    %v544 = vunpack.c.l.b16 %v509
    %v545 = vunpack.c.h.b16 %v509
    %v546 = vunpack.c.l.b16 %v510
    %v547 = vunpack.c.h.b16 %v510
    %v548 = vunpack.c.l.b16 %v511
    %v549 = vunpack.c.h.b16 %v511
    %v550 = vunpack.c.l.b16 %v512
    %v551 = vunpack.c.h.b16 %v512
    %v552 = vunpack.c.l.b16 %v513
    %v553 = vunpack.c.h.b16 %v513
    %v554 = vunpack.c.l.b16 %v514
    %v555 = vunpack.c.h.b16 %v514
    %v556 = vunpack.c.l.b16 %v515
    %v557 = vunpack.c.h.b16 %v515
    %v558 = vunpack.c.l.b16 %v516
    %v559 = vunpack.c.h.b16 %v516
    %v560 = vunpack.c.l.b16 %v517
    %v561 = vunpack.c.h.b16 %v517
    %v562 = vunpack.c.l.b16 %v518
    %v563 = vunpack.c.h.b16 %v518
    %v564 = vunpack.c.l.b16 %v519
    %v565 = vunpack.c.h.b16 %v519
    %v566 = vunpack.c.l.b16 %v520
    %v567 = vunpack.c.h.b16 %v520
    %v568 = vunpack.c.l.b16 %v521
    %v569 = vunpack.c.h.b16 %v521
    %v570 = vpack.c.b16 %v540, %v538
    %v571 = vpack.c.b16 %v541, %v539
    %v572 = vpack.c.b16 %v544, %v542
    %v573 = vpack.c.b16 %v545, %v543
    %v574 = vpack.c.b16 %v548, %v546
    %v575 = vpack.c.b16 %v549, %v547
    %v576 = vpack.c.b16 %v552, %v550
    %v577 = vpack.c.b16 %v553, %v551
    %v578 = vpack.c.b16 %v556, %v554
    %v579 = vpack.c.b16 %v557, %v555
    %v580 = vpack.c.b16 %v560, %v558
    %v581 = vpack.c.b16 %v561, %v559
    %v582 = vpack.c.b16 %v564, %v562
    %v583 = vpack.c.b16 %v565, %v563
    %v584 = vpack.c.b16 %v568, %v566
    %v585 = vpack.c.b16 %v569, %v567
    %602 = vmatprep.subr.bf16.mxu0 %v585
    %603 = vmatpush1.bf16.msra.mxu0 %v584
    %604 = vmatprep.subr.bf16.mxu0 %v583
    %605 = vmatpush1.bf16.msra.mxu0 %v582
    %606 = vmatprep.subr.bf16.mxu0 %v581
    %607 = vmatpush1.bf16.msra.mxu0 %v580
    %608 = vmatprep.subr.bf16.mxu0 %v579
    %609 = vmatpush1.bf16.msra.mxu0 %v578
    %610 = vmatprep.subr.bf16.mxu0 %v577
    %611 = vmatpush1.bf16.msra.mxu0 %v576
    %612 = vmatprep.subr.bf16.mxu0 %v575
    %613 = vmatpush1.bf16.msra.mxu0 %v574
    %614 = vmatprep.subr.bf16.mxu0 %v573
    %615 = vmatpush1.bf16.msra.mxu0 %v572
    %616 = vmatprep.subr.bf16.mxu0 %v571
    %617 = vmatpush1.bf16.msra.mxu0 %v570
    %618 = vmatprep.subr.bf16.mxu0 0
    %619 = vmatpush2.bf16.msra.mxu0 0
    %620 = vmatprep.subr.bf16.mxu0 0
    %621 = vmatpush2.bf16.msra.mxu0 0
    %622 = vmatprep.subr.bf16.mxu0 0
    %623 = vmatpush2.bf16.msra.mxu0 0
    %624 = vmatprep.subr.bf16.mxu0 0
    %625 = vmatpush2.bf16.msra.mxu0 0
    %626 = vmatprep.subr.bf16.mxu0 0
    %627 = vmatpush2.bf16.msra.mxu0 0
    %628 = vmatprep.subr.bf16.mxu0 0
    %629 = vmatpush2.bf16.msra.mxu0 0
    %630 = vmatprep.subr.bf16.mxu0 0
    %631 = vmatpush2.bf16.msra.mxu0 0
    %632 = vmatprep.subr.bf16.mxu0 0
    %633 = vmatpush2.bf16.msra.mxu0 0
    %634 = vmatprep.mubr.bf16.mxu0 0
    %635 = vmatmul.mubr.bf16.gmra.mxu0 %v490
    %v636 = vpop.f32.mrf.mxu0
    %v637 = vadd.f32 0.0, %v636
    %v638 = vpop.f32.mrf.mxu0
    %v639 = vadd.f32 0.0, %v638
    %v640 = vpop.f32.mrf.mxu0
    %v641 = vadd.f32 0.0, %v640
    %v642 = vpop.f32.mrf.mxu0
    %v643 = vadd.f32 0.0, %v642
    %644 = vmatprep.mubr.bf16.mxu0 0
    %645 = vmatmul.mubr.bf16.gmra.mxu0 %v491
    %v646 = vpop.f32.mrf.mxu0
    %v647 = vadd.f32 0.0, %v646
    %v648 = vpop.f32.mrf.mxu0
    %v649 = vadd.f32 0.0, %v648
    %v650 = vpop.f32.mrf.mxu0
    %v651 = vadd.f32 0.0, %v650
    %v652 = vpop.f32.mrf.mxu0
    %v653 = vadd.f32 0.0, %v652
    %654 = vmatprep.mubr.bf16.mxu0 0
    %655 = vmatmul.mubr.bf16.gmra.mxu0 %v492
    %v656 = vpop.f32.mrf.mxu0
    %v657 = vadd.f32 0.0, %v656
    %v658 = vpop.f32.mrf.mxu0
    %v659 = vadd.f32 0.0, %v658
    %v660 = vpop.f32.mrf.mxu0
    %v661 = vadd.f32 0.0, %v660
    %v662 = vpop.f32.mrf.mxu0
    %v663 = vadd.f32 0.0, %v662
    %664 = vmatprep.mubr.bf16.mxu0 0
    %665 = vmatmul.mubr.bf16.gmra.mxu0 %v493
    %v666 = vpop.f32.mrf.mxu0
    %v667 = vadd.f32 0.0, %v666
    %v668 = vpop.f32.mrf.mxu0
    %v669 = vadd.f32 0.0, %v668
    %v670 = vpop.f32.mrf.mxu0
    %v671 = vadd.f32 0.0, %v670
    %v672 = vpop.f32.mrf.mxu0
    %v673 = vadd.f32 0.0, %v672
    %674 = vmatprep.mubr.bf16.mxu0 0
    %675 = vmatmul.mubr.bf16.gmra.mxu0 %v494
    %v676 = vpop.f32.mrf.mxu0
    %v677 = vadd.f32 0.0, %v676
    %v678 = vpop.f32.mrf.mxu0
    %v679 = vadd.f32 0.0, %v678
    %v680 = vpop.f32.mrf.mxu0
    %v681 = vadd.f32 0.0, %v680
    %v682 = vpop.f32.mrf.mxu0
    %v683 = vadd.f32 0.0, %v682
    %684 = vmatprep.mubr.bf16.mxu0 0
    %685 = vmatmul.mubr.bf16.gmra.mxu0 %v495
    %v686 = vpop.f32.mrf.mxu0
    %v687 = vadd.f32 0.0, %v686
    %v688 = vpop.f32.mrf.mxu0
    %v689 = vadd.f32 0.0, %v688
    %v690 = vpop.f32.mrf.mxu0
    %v691 = vadd.f32 0.0, %v690
    %v692 = vpop.f32.mrf.mxu0
    %v693 = vadd.f32 0.0, %v692
    %694 = vmatprep.mubr.bf16.mxu0 0
    %695 = vmatmul.mubr.bf16.gmra.mxu0 %v496
    %v696 = vpop.f32.mrf.mxu0
    %v697 = vadd.f32 0.0, %v696
    %v698 = vpop.f32.mrf.mxu0
    %v699 = vadd.f32 0.0, %v698
    %v700 = vpop.f32.mrf.mxu0
    %v701 = vadd.f32 0.0, %v700
    %v702 = vpop.f32.mrf.mxu0
    %v703 = vadd.f32 0.0, %v702
    %704 = vmatprep.mubr.bf16.mxu0 0
    %705 = vmatmul.mubr.bf16.gmra.mxu0 %v497
    %v706 = vpop.f32.mrf.mxu0
    %v707 = vadd.f32 0.0, %v706
    %v708 = vpop.f32.mrf.mxu0
    %v709 = vadd.f32 0.0, %v708
    %v710 = vpop.f32.mrf.mxu0
    %v711 = vadd.f32 0.0, %v710
    %v712 = vpop.f32.mrf.mxu0
    %v713 = vadd.f32 0.0, %v712
    %714 = vmatprep.mubr.bf16.mxu0 0
    %715 = vmatmul.mubr.bf16.gmra.mxu0 %v498
    %v716 = vpop.f32.mrf.mxu0
    %v717 = vadd.f32 0.0, %v716
    %v718 = vpop.f32.mrf.mxu0
    %v719 = vadd.f32 0.0, %v718
    %v720 = vpop.f32.mrf.mxu0
    %v721 = vadd.f32 0.0, %v720
    %v722 = vpop.f32.mrf.mxu0
    %v723 = vadd.f32 0.0, %v722
    %724 = vmatprep.mubr.bf16.mxu0 0
    %725 = vmatmul.mubr.bf16.gmra.mxu0 %v499
    %v726 = vpop.f32.mrf.mxu0
    %v727 = vadd.f32 0.0, %v726
    %v728 = vpop.f32.mrf.mxu0
    %v729 = vadd.f32 0.0, %v728
    %v730 = vpop.f32.mrf.mxu0
    %v731 = vadd.f32 0.0, %v730
    %v732 = vpop.f32.mrf.mxu0
    %v733 = vadd.f32 0.0, %v732
    %734 = vmatprep.mubr.bf16.mxu0 0
    %735 = vmatmul.mubr.bf16.gmra.mxu0 %v500
    %v736 = vpop.f32.mrf.mxu0
    %v737 = vadd.f32 0.0, %v736
    %v738 = vpop.f32.mrf.mxu0
    %v739 = vadd.f32 0.0, %v738
    %v740 = vpop.f32.mrf.mxu0
    %v741 = vadd.f32 0.0, %v740
    %v742 = vpop.f32.mrf.mxu0
    %v743 = vadd.f32 0.0, %v742
    %744 = vmatprep.mubr.bf16.mxu0 0
    %745 = vmatmul.mubr.bf16.gmra.mxu0 %v501
    %v746 = vpop.f32.mrf.mxu0
    %v747 = vadd.f32 0.0, %v746
    %v748 = vpop.f32.mrf.mxu0
    %v749 = vadd.f32 0.0, %v748
    %v750 = vpop.f32.mrf.mxu0
    %v751 = vadd.f32 0.0, %v750
    %v752 = vpop.f32.mrf.mxu0
    %v753 = vadd.f32 0.0, %v752
    %754 = vmatprep.mubr.bf16.mxu0 0
    %755 = vmatmul.mubr.bf16.gmra.mxu0 %v502
    %v756 = vpop.f32.mrf.mxu0
    %v757 = vadd.f32 0.0, %v756
    %v758 = vpop.f32.mrf.mxu0
    %v759 = vadd.f32 0.0, %v758
    %v760 = vpop.f32.mrf.mxu0
    %v761 = vadd.f32 0.0, %v760
    %v762 = vpop.f32.mrf.mxu0
    %v763 = vadd.f32 0.0, %v762
    %764 = vmatprep.mubr.bf16.mxu0 0
    %765 = vmatmul.mubr.bf16.gmra.mxu0 %v503
    %v766 = vpop.f32.mrf.mxu0
    %v767 = vadd.f32 0.0, %v766
    %v768 = vpop.f32.mrf.mxu0
    %v769 = vadd.f32 0.0, %v768
    %v770 = vpop.f32.mrf.mxu0
    %v771 = vadd.f32 0.0, %v770
    %v772 = vpop.f32.mrf.mxu0
    %v773 = vadd.f32 0.0, %v772
    %774 = vmatprep.mubr.bf16.mxu0 0
    %775 = vmatmul.mubr.bf16.gmra.mxu0 %v504
    %v776 = vpop.f32.mrf.mxu0
    %v777 = vadd.f32 0.0, %v776
    %v778 = vpop.f32.mrf.mxu0
    %v779 = vadd.f32 0.0, %v778
    %v780 = vpop.f32.mrf.mxu0
    %v781 = vadd.f32 0.0, %v780
    %v782 = vpop.f32.mrf.mxu0
    %v783 = vadd.f32 0.0, %v782
    %784 = vmatprep.mubr.bf16.mxu0 0
    %785 = vmatmul.mubr.bf16.gmra.mxu0 %v505
    %v786 = vpop.f32.mrf.mxu0
    %v787 = vadd.f32 0.0, %v786
    %v788 = vpop.f32.mrf.mxu0
    %v789 = vadd.f32 0.0, %v788
    %v790 = vpop.f32.mrf.mxu0
    %v791 = vadd.f32 0.0, %v790
    %v792 = vpop.f32.mrf.mxu0
    %v793 = vadd.f32 0.0, %v792
    %794 = vdwg.mxu0
    %v795 = vld [vmem:[%s6] sm:$0x3]
    %v796 = vld [vmem:[%s6 + $0x2] sm:$0x3]
    %v797 = vadd.f32 %v637, %v641
    %v798 = vadd.f32 %v797, %v647
    %v799 = vadd.f32 %v798, %v651
    %v800 = vadd.f32 %v799, %v657
    %v801 = vadd.f32 %v800, %v661
    %v802 = vadd.f32 %v801, %v667
    %v803 = vadd.f32 %v802, %v671
    %v804 = vadd.f32 %v803, %v677
    %v805 = vadd.f32 %v804, %v681
    %v806 = vadd.f32 %v805, %v687
    %v807 = vadd.f32 %v806, %v691
    %v808 = vadd.f32 %v807, %v697
    %v809 = vadd.f32 %v808, %v701
    %v810 = vadd.f32 %v809, %v707
    %v811 = vadd.f32 %v810, %v711
    %v812 = vadd.f32 %v811, %v717
    %v813 = vadd.f32 %v812, %v721
    %v814 = vadd.f32 %v813, %v727
    %v815 = vadd.f32 %v814, %v731
    %v816 = vadd.f32 %v815, %v737
    %v817 = vadd.f32 %v816, %v741
    %v818 = vadd.f32 %v817, %v747
    %v819 = vadd.f32 %v818, %v751
    %v820 = vadd.f32 %v819, %v757
    %v821 = vadd.f32 %v820, %v761
    %v822 = vadd.f32 %v821, %v767
    %v823 = vadd.f32 %v822, %v771
    %v824 = vadd.f32 %v823, %v777
    %v825 = vadd.f32 %v824, %v781
    %v826 = vadd.f32 %v825, %v787
    %v827 = vadd.f32 %v826, %v791
    %v828 = vrot.slane %v827, 4
    %v829 = vadd.f32 %v827, %v828
    %v830 = vrot.slane %v829, 2
    %v831 = vadd.f32 %v829, %v830
    %v832 = vrot.slane %v831, 1
    %v833 = vadd.f32 %v831, %v832
    %v834 = vadd.f32 %v639, %v643
    %v835 = vadd.f32 %v834, %v649
    %v836 = vadd.f32 %v835, %v653
    %v837 = vadd.f32 %v836, %v659
    %v838 = vadd.f32 %v837, %v663
    %v839 = vadd.f32 %v838, %v669
    %v840 = vadd.f32 %v839, %v673
    %v841 = vadd.f32 %v840, %v679
    %v842 = vadd.f32 %v841, %v683
    %v843 = vadd.f32 %v842, %v689
    %v844 = vadd.f32 %v843, %v693
    %v845 = vadd.f32 %v844, %v699
    %v846 = vadd.f32 %v845, %v703
    %v847 = vadd.f32 %v846, %v709
    %v848 = vadd.f32 %v847, %v713
    %v849 = vadd.f32 %v848, %v719
    %v850 = vadd.f32 %v849, %v723
    %v851 = vadd.f32 %v850, %v729
    %v852 = vadd.f32 %v851, %v733
    %v853 = vadd.f32 %v852, %v739
    %v854 = vadd.f32 %v853, %v743
    %v855 = vadd.f32 %v854, %v749
    %v856 = vadd.f32 %v855, %v753
    %v857 = vadd.f32 %v856, %v759
    %v858 = vadd.f32 %v857, %v763
    %v859 = vadd.f32 %v858, %v769
    %v860 = vadd.f32 %v859, %v773
    %v861 = vadd.f32 %v860, %v779
    %v862 = vadd.f32 %v861, %v783
    %v863 = vadd.f32 %v862, %v789
    %v864 = vadd.f32 %v863, %v793
    %v865 = vrot.slane %v864, 4
    %v866 = vadd.f32 %v864, %v865
    %v867 = vrot.slane %v866, 2
    %v868 = vadd.f32 %v866, %v867
    %v869 = vrot.slane %v868, 1
    %v870 = vadd.f32 %v868, %v869
    %v871 = vmul.f32 %v637, %v637
    %v872 = vmul.f32 %v639, %v639
    %v873 = vmul.f32 %v641, %v641
    %v874 = vmul.f32 %v643, %v643
    %v875 = vmul.f32 %v647, %v647
    %v876 = vmul.f32 %v649, %v649
    %v877 = vmul.f32 %v651, %v651
    %v878 = vmul.f32 %v653, %v653
    %v879 = vmul.f32 %v657, %v657
    %v880 = vmul.f32 %v659, %v659
    %v881 = vmul.f32 %v661, %v661
    %v882 = vmul.f32 %v663, %v663
    %v883 = vmul.f32 %v667, %v667
    %v884 = vmul.f32 %v669, %v669
    %v885 = vmul.f32 %v671, %v671
    %v886 = vmul.f32 %v673, %v673
    %v887 = vmul.f32 %v677, %v677
    %v888 = vmul.f32 %v679, %v679
    %v889 = vmul.f32 %v681, %v681
    %v890 = vmul.f32 %v683, %v683
    %v891 = vmul.f32 %v687, %v687
    %v892 = vmul.f32 %v689, %v689
    %v893 = vmul.f32 %v691, %v691
    %v894 = vmul.f32 %v693, %v693
    %v895 = vmul.f32 %v697, %v697
    %v896 = vmul.f32 %v699, %v699
    %v897 = vmul.f32 %v701, %v701
    %v898 = vmul.f32 %v703, %v703
    %v899 = vmul.f32 %v707, %v707
    %v900 = vmul.f32 %v709, %v709
    %v901 = vmul.f32 %v711, %v711
    %v902 = vmul.f32 %v713, %v713
    %v903 = vmul.f32 %v717, %v717
    %v904 = vmul.f32 %v719, %v719
    %v905 = vmul.f32 %v721, %v721
    %v906 = vmul.f32 %v723, %v723
    %v907 = vmul.f32 %v727, %v727
    %v908 = vmul.f32 %v729, %v729
    %v909 = vmul.f32 %v731, %v731
    %v910 = vmul.f32 %v733, %v733
    %v911 = vmul.f32 %v737, %v737
    %v912 = vmul.f32 %v739, %v739
    %v913 = vmul.f32 %v741, %v741
    %v914 = vmul.f32 %v743, %v743
    %v915 = vmul.f32 %v747, %v747
    %v916 = vmul.f32 %v749, %v749
    %v917 = vmul.f32 %v751, %v751
    %v918 = vmul.f32 %v753, %v753
    %v919 = vmul.f32 %v757, %v757
    %v920 = vmul.f32 %v759, %v759
    %v921 = vmul.f32 %v761, %v761
    %v922 = vmul.f32 %v763, %v763
    %v923 = vmul.f32 %v767, %v767
    %v924 = vmul.f32 %v769, %v769
    %v925 = vmul.f32 %v771, %v771
    %v926 = vmul.f32 %v773, %v773
    %v927 = vmul.f32 %v777, %v777
    %v928 = vmul.f32 %v779, %v779
    %v929 = vmul.f32 %v781, %v781
    %v930 = vmul.f32 %v783, %v783
    %v931 = vmul.f32 %v787, %v787
    %v932 = vmul.f32 %v789, %v789
    %v933 = vmul.f32 %v791, %v791
    %v934 = vmul.f32 %v793, %v793
    %v935 = vadd.f32 %v871, %v873
    %v936 = vadd.f32 %v935, %v875
    %v937 = vadd.f32 %v936, %v877
    %v938 = vadd.f32 %v937, %v879
    %v939 = vadd.f32 %v938, %v881
    %v940 = vadd.f32 %v939, %v883
    %v941 = vadd.f32 %v940, %v885
    %v942 = vadd.f32 %v941, %v887
    %v943 = vadd.f32 %v942, %v889
    %v944 = vadd.f32 %v943, %v891
    %v945 = vadd.f32 %v944, %v893
    %v946 = vadd.f32 %v945, %v895
    %v947 = vadd.f32 %v946, %v897
    %v948 = vadd.f32 %v947, %v899
    %v949 = vadd.f32 %v948, %v901
    %v950 = vadd.f32 %v949, %v903
    %v951 = vadd.f32 %v950, %v905
    %v952 = vadd.f32 %v951, %v907
    %v953 = vadd.f32 %v952, %v909
    %v954 = vadd.f32 %v953, %v911
    %v955 = vadd.f32 %v954, %v913
    %v956 = vadd.f32 %v955, %v915
    %v957 = vadd.f32 %v956, %v917
    %v958 = vadd.f32 %v957, %v919
    %v959 = vadd.f32 %v958, %v921
    %v960 = vadd.f32 %v959, %v923
    %v961 = vadd.f32 %v960, %v925
    %v962 = vadd.f32 %v961, %v927
    %v963 = vadd.f32 %v962, %v929
    %v964 = vadd.f32 %v963, %v931
    %v965 = vadd.f32 %v964, %v933
    %v966 = vrot.slane %v965, 4
    %v967 = vadd.f32 %v965, %v966
    %v968 = vrot.slane %v967, 2
    %v969 = vadd.f32 %v967, %v968
    %v970 = vrot.slane %v969, 1
    %v971 = vadd.f32 %v969, %v970
    %v972 = vadd.f32 %v872, %v874
    %v973 = vadd.f32 %v972, %v876
    %v974 = vadd.f32 %v973, %v878
    %v975 = vadd.f32 %v974, %v880
    %v976 = vadd.f32 %v975, %v882
    %v977 = vadd.f32 %v976, %v884
    %v978 = vadd.f32 %v977, %v886
    %v979 = vadd.f32 %v978, %v888
    %v980 = vadd.f32 %v979, %v890
    %v981 = vadd.f32 %v980, %v892
    %v982 = vadd.f32 %v981, %v894
    %v983 = vadd.f32 %v982, %v896
    %v984 = vadd.f32 %v983, %v898
    %v985 = vadd.f32 %v984, %v900
    %v986 = vadd.f32 %v985, %v902
    %v987 = vadd.f32 %v986, %v904
    %v988 = vadd.f32 %v987, %v906
    %v989 = vadd.f32 %v988, %v908
    %v990 = vadd.f32 %v989, %v910
    %v991 = vadd.f32 %v990, %v912
    %v992 = vadd.f32 %v991, %v914
    %v993 = vadd.f32 %v992, %v916
    %v994 = vadd.f32 %v993, %v918
    %v995 = vadd.f32 %v994, %v920
    %v996 = vadd.f32 %v995, %v922
    %v997 = vadd.f32 %v996, %v924
    %v998 = vadd.f32 %v997, %v926
    %v999 = vadd.f32 %v998, %v928
    %v1000 = vadd.f32 %v999, %v930
    %v1001 = vadd.f32 %v1000, %v932
    %v1002 = vadd.f32 %v1001, %v934
    %v1003 = vrot.slane %v1002, 4
    %v1004 = vadd.f32 %v1002, %v1003
    %v1005 = vrot.slane %v1004, 2
    %v1006 = vadd.f32 %v1004, %v1005
    %v1007 = vrot.slane %v1006, 1
    %v1008 = vadd.f32 %v1006, %v1007
    %v1009 = vmul.f32 %v833, 0.00390625
    %v1010 = vmul.f32 %v870, 0.00390625
    %v1011 = vmul.f32 %v971, 0.00390625
    %v1012 = vmul.f32 %v1008, 0.00390625
    %v1013 = vmul.f32 %v1009, %v1009
    %v1014 = vmul.f32 %v1010, %v1010
    %v1015 = vsub.f32 %v1011, %v1013
    %v1016 = vsub.f32 %v1012, %v1014
    %v1017 = vadd.f32 %v1015, 0.8
    %v1018 = vadd.f32 %v1016, 0.8
    %v1019 = vrsqrt.pop %v1017
    %v1020 = vrsqrt.pop %v1018
    %v1023 = vcombine.low %v1019, %v1020
    %v1025 = vunpack.c.l.s4 1966171168
    %v1026 = vunpack.c.0.s8 %v1025
    %v1027 = vlaneseq
    %v1028 = vshrl.u32 %v1027, 7
    %v1029 = vsub.s32 %v1026, %v1028
    %v1030 = vrot.slane %v1023, %v1029
    %v1032 = vunpack.c.l.s4 1966171168
    %v1033 = vunpack.c.0.s8 %v1032
    %v1034 = vlaneseq
    %v1035 = vshrl.u32 %v1034, 7
    %v1036 = vsub.s32 %v1033, %v1035
    %v1037 = vrot.slane %v1030, %v1036
    %v1039 = vmul.f32 %v795, %v1037
    %v1041 = vlaneseq
    %v1042 = vshrl.u32 %v1041, 7
    %v1043 = vsub.s32 0, %v1042
    %v1044 = vrot.slane %v1039, %v1043
    %v1045 = vlaneseq
    %v1046 = vshrl.u32 %v1045, 7
    %v1047 = vsub.s32 1, %v1046
    %v1048 = vrot.slane %v1039, %v1047
    %v1051 = vmul.f32 %v1009, %v1044
    %v1052 = vmul.f32 %v1010, %v1048
    %v1055 = vcombine.low %v1051, %v1052
    %v1057 = vunpack.c.l.s4 1966171168
    %v1058 = vunpack.c.0.s8 %v1057
    %v1059 = vlaneseq
    %v1060 = vshrl.u32 %v1059, 7
    %v1061 = vsub.s32 %v1058, %v1060
    %v1062 = vrot.slane %v1055, %v1061
    %v1064 = vunpack.c.l.s4 1966171168
    %v1065 = vunpack.c.0.s8 %v1064
    %v1066 = vlaneseq
    %v1067 = vshrl.u32 %v1066, 7
    %v1068 = vsub.s32 %v1065, %v1067
    %v1069 = vrot.slane %v1062, %v1068
    %v1071 = vsub.f32 %v796, %v1069
    %v1072 = vmul.f32 %v637, %v1044
    %v1073 = vmul.f32 %v639, %v1048
    %v1074 = vmul.f32 %v641, %v1044
    %v1075 = vmul.f32 %v643, %v1048
    %v1076 = vmul.f32 %v647, %v1044
    %v1077 = vmul.f32 %v649, %v1048
    %v1078 = vmul.f32 %v651, %v1044
    %v1079 = vmul.f32 %v653, %v1048
    %v1080 = vmul.f32 %v657, %v1044
    %v1081 = vmul.f32 %v659, %v1048
    %v1082 = vmul.f32 %v661, %v1044
    %v1083 = vmul.f32 %v663, %v1048
    %v1084 = vmul.f32 %v667, %v1044
    %v1085 = vmul.f32 %v669, %v1048
    %v1086 = vmul.f32 %v671, %v1044
    %v1087 = vmul.f32 %v673, %v1048
    %v1088 = vmul.f32 %v677, %v1044
    %v1089 = vmul.f32 %v679, %v1048
    %v1090 = vmul.f32 %v681, %v1044
    %v1091 = vmul.f32 %v683, %v1048
    %v1092 = vmul.f32 %v687, %v1044
    %v1093 = vmul.f32 %v689, %v1048
    %v1094 = vmul.f32 %v691, %v1044
    %v1095 = vmul.f32 %v693, %v1048
    %v1096 = vmul.f32 %v697, %v1044
    %v1097 = vmul.f32 %v699, %v1048
    %v1098 = vmul.f32 %v701, %v1044
    %v1099 = vmul.f32 %v703, %v1048
    %v1100 = vmul.f32 %v707, %v1044
    %v1101 = vmul.f32 %v709, %v1048
    %v1102 = vmul.f32 %v711, %v1044
    %v1103 = vmul.f32 %v713, %v1048
    %v1104 = vmul.f32 %v717, %v1044
    %v1105 = vmul.f32 %v719, %v1048
    %v1106 = vmul.f32 %v721, %v1044
    %v1107 = vmul.f32 %v723, %v1048
    %v1108 = vmul.f32 %v727, %v1044
    %v1109 = vmul.f32 %v729, %v1048
    %v1110 = vmul.f32 %v731, %v1044
    %v1111 = vmul.f32 %v733, %v1048
    %v1112 = vmul.f32 %v737, %v1044
    %v1113 = vmul.f32 %v739, %v1048
    %v1114 = vmul.f32 %v741, %v1044
    %v1115 = vmul.f32 %v743, %v1048
    %v1116 = vmul.f32 %v747, %v1044
    %v1117 = vmul.f32 %v749, %v1048
    %v1118 = vmul.f32 %v751, %v1044
    %v1119 = vmul.f32 %v753, %v1048
    %v1120 = vmul.f32 %v757, %v1044
    %v1121 = vmul.f32 %v759, %v1048
    %v1122 = vmul.f32 %v761, %v1044
    %v1123 = vmul.f32 %v763, %v1048
    %v1124 = vmul.f32 %v767, %v1044
    %v1125 = vmul.f32 %v769, %v1048
    %v1126 = vmul.f32 %v771, %v1044
    %v1127 = vmul.f32 %v773, %v1048
    %v1128 = vmul.f32 %v777, %v1044
    %v1129 = vmul.f32 %v779, %v1048
    %v1130 = vmul.f32 %v781, %v1044
    %v1131 = vmul.f32 %v783, %v1048
    %v1132 = vmul.f32 %v787, %v1044
    %v1133 = vmul.f32 %v789, %v1048
    %v1134 = vmul.f32 %v791, %v1044
    %v1135 = vmul.f32 %v793, %v1048
    %v1137 = vlaneseq
    %v1138 = vshrl.u32 %v1137, 7
    %v1139 = vsub.s32 0, %v1138
    %v1140 = vrot.slane %v1071, %v1139
    %v1141 = vlaneseq
    %v1142 = vshrl.u32 %v1141, 7
    %v1143 = vsub.s32 1, %v1142
    %v1144 = vrot.slane %v1071, %v1143
    %v1147 = vadd.f32 %v1072, %v1140
    %v1148 = vadd.f32 %v1073, %v1144
    %v1149 = vadd.f32 %v1074, %v1140
    %v1150 = vadd.f32 %v1075, %v1144
    %v1151 = vadd.f32 %v1076, %v1140
    %v1152 = vadd.f32 %v1077, %v1144
    %v1153 = vadd.f32 %v1078, %v1140
    %v1154 = vadd.f32 %v1079, %v1144
    %v1155 = vadd.f32 %v1080, %v1140
    %v1156 = vadd.f32 %v1081, %v1144
    %v1157 = vadd.f32 %v1082, %v1140
    %v1158 = vadd.f32 %v1083, %v1144
    %v1159 = vadd.f32 %v1084, %v1140
    %v1160 = vadd.f32 %v1085, %v1144
    %v1161 = vadd.f32 %v1086, %v1140
    %v1162 = vadd.f32 %v1087, %v1144
    %v1163 = vadd.f32 %v1088, %v1140
    %v1164 = vadd.f32 %v1089, %v1144
    %v1165 = vadd.f32 %v1090, %v1140
    %v1166 = vadd.f32 %v1091, %v1144
    %v1167 = vadd.f32 %v1092, %v1140
    %v1168 = vadd.f32 %v1093, %v1144
    %v1169 = vadd.f32 %v1094, %v1140
    %v1170 = vadd.f32 %v1095, %v1144
    %v1171 = vadd.f32 %v1096, %v1140
    %v1172 = vadd.f32 %v1097, %v1144
    %v1173 = vadd.f32 %v1098, %v1140
    %v1174 = vadd.f32 %v1099, %v1144
    %v1175 = vadd.f32 %v1100, %v1140
    %v1176 = vadd.f32 %v1101, %v1144
    %v1177 = vadd.f32 %v1102, %v1140
    %v1178 = vadd.f32 %v1103, %v1144
    %v1179 = vadd.f32 %v1104, %v1140
    %v1180 = vadd.f32 %v1105, %v1144
    %v1181 = vadd.f32 %v1106, %v1140
    %v1182 = vadd.f32 %v1107, %v1144
    %v1183 = vadd.f32 %v1108, %v1140
    %v1184 = vadd.f32 %v1109, %v1144
    %v1185 = vadd.f32 %v1110, %v1140
    %v1186 = vadd.f32 %v1111, %v1144
    %v1187 = vadd.f32 %v1112, %v1140
    %v1188 = vadd.f32 %v1113, %v1144
    %v1189 = vadd.f32 %v1114, %v1140
    %v1190 = vadd.f32 %v1115, %v1144
    %v1191 = vadd.f32 %v1116, %v1140
    %v1192 = vadd.f32 %v1117, %v1144
    %v1193 = vadd.f32 %v1118, %v1140
    %v1194 = vadd.f32 %v1119, %v1144
    %v1195 = vadd.f32 %v1120, %v1140
    %v1196 = vadd.f32 %v1121, %v1144
    %v1197 = vadd.f32 %v1122, %v1140
    %v1198 = vadd.f32 %v1123, %v1144
    %v1199 = vadd.f32 %v1124, %v1140
    %v1200 = vadd.f32 %v1125, %v1144
    %v1201 = vadd.f32 %v1126, %v1140
    %v1202 = vadd.f32 %v1127, %v1144
    %v1203 = vadd.f32 %v1128, %v1140
    %v1204 = vadd.f32 %v1129, %v1144
    %v1205 = vadd.f32 %v1130, %v1140
    %v1206 = vadd.f32 %v1131, %v1144
    %v1207 = vadd.f32 %v1132, %v1140
    %v1208 = vadd.f32 %v1133, %v1144
    %v1209 = vadd.f32 %v1134, %v1140
    %v1210 = vadd.f32 %v1135, %v1144
    %vm1211 = vcmp.gt.f32.partialorder %v1147, 0.0
    %vm1212 = vcmp.gt.f32.partialorder %v1148, 0.0
    %vm1213 = vcmp.gt.f32.partialorder %v1149, 0.0
    %vm1214 = vcmp.gt.f32.partialorder %v1150, 0.0
    %vm1215 = vcmp.gt.f32.partialorder %v1151, 0.0
    %vm1216 = vcmp.gt.f32.partialorder %v1152, 0.0
    %vm1217 = vcmp.gt.f32.partialorder %v1153, 0.0
    %vm1218 = vcmp.gt.f32.partialorder %v1154, 0.0
    %vm1219 = vcmp.gt.f32.partialorder %v1155, 0.0
    %vm1220 = vcmp.gt.f32.partialorder %v1156, 0.0
    %vm1221 = vcmp.gt.f32.partialorder %v1157, 0.0
    %vm1222 = vcmp.gt.f32.partialorder %v1158, 0.0
    %vm1223 = vcmp.gt.f32.partialorder %v1159, 0.0
    %vm1224 = vcmp.gt.f32.partialorder %v1160, 0.0
    %vm1225 = vcmp.gt.f32.partialorder %v1161, 0.0
    %vm1226 = vcmp.gt.f32.partialorder %v1162, 0.0
    %vm1227 = vcmp.gt.f32.partialorder %v1163, 0.0
    %vm1228 = vcmp.gt.f32.partialorder %v1164, 0.0
    %vm1229 = vcmp.gt.f32.partialorder %v1165, 0.0
    %vm1230 = vcmp.gt.f32.partialorder %v1166, 0.0
    %vm1231 = vcmp.gt.f32.partialorder %v1167, 0.0
    %vm1232 = vcmp.gt.f32.partialorder %v1168, 0.0
    %vm1233 = vcmp.gt.f32.partialorder %v1169, 0.0
    %vm1234 = vcmp.gt.f32.partialorder %v1170, 0.0
    %vm1235 = vcmp.gt.f32.partialorder %v1171, 0.0
    %vm1236 = vcmp.gt.f32.partialorder %v1172, 0.0
    %vm1237 = vcmp.gt.f32.partialorder %v1173, 0.0
    %vm1238 = vcmp.gt.f32.partialorder %v1174, 0.0
    %vm1239 = vcmp.gt.f32.partialorder %v1175, 0.0
    %vm1240 = vcmp.gt.f32.partialorder %v1176, 0.0
    %vm1241 = vcmp.gt.f32.partialorder %v1177, 0.0
    %vm1242 = vcmp.gt.f32.partialorder %v1178, 0.0
    %vm1243 = vcmp.gt.f32.partialorder %v1179, 0.0
    %vm1244 = vcmp.gt.f32.partialorder %v1180, 0.0
    %vm1245 = vcmp.gt.f32.partialorder %v1181, 0.0
    %vm1246 = vcmp.gt.f32.partialorder %v1182, 0.0
    %vm1247 = vcmp.gt.f32.partialorder %v1183, 0.0
    %vm1248 = vcmp.gt.f32.partialorder %v1184, 0.0
    %vm1249 = vcmp.gt.f32.partialorder %v1185, 0.0
    %vm1250 = vcmp.gt.f32.partialorder %v1186, 0.0
    %vm1251 = vcmp.gt.f32.partialorder %v1187, 0.0
    %vm1252 = vcmp.gt.f32.partialorder %v1188, 0.0
    %vm1253 = vcmp.gt.f32.partialorder %v1189, 0.0
    %vm1254 = vcmp.gt.f32.partialorder %v1190, 0.0
    %vm1255 = vcmp.gt.f32.partialorder %v1191, 0.0
    %vm1256 = vcmp.gt.f32.partialorder %v1192, 0.0
    %vm1257 = vcmp.gt.f32.partialorder %v1193, 0.0
    %vm1258 = vcmp.gt.f32.partialorder %v1194, 0.0
    %vm1259 = vcmp.gt.f32.partialorder %v1195, 0.0
    %vm1260 = vcmp.gt.f32.partialorder %v1196, 0.0
    %vm1261 = vcmp.gt.f32.partialorder %v1197, 0.0
    %vm1262 = vcmp.gt.f32.partialorder %v1198, 0.0
    %vm1263 = vcmp.gt.f32.partialorder %v1199, 0.0
    %vm1264 = vcmp.gt.f32.partialorder %v1200, 0.0
    %vm1265 = vcmp.gt.f32.partialorder %v1201, 0.0
    %vm1266 = vcmp.gt.f32.partialorder %v1202, 0.0
    %vm1267 = vcmp.gt.f32.partialorder %v1203, 0.0
    %vm1268 = vcmp.gt.f32.partialorder %v1204, 0.0
    %vm1269 = vcmp.gt.f32.partialorder %v1205, 0.0
    %vm1270 = vcmp.gt.f32.partialorder %v1206, 0.0
    %vm1271 = vcmp.gt.f32.partialorder %v1207, 0.0
    %vm1272 = vcmp.gt.f32.partialorder %v1208, 0.0
    %vm1273 = vcmp.gt.f32.partialorder %v1209, 0.0
    %vm1274 = vcmp.gt.f32.partialorder %v1210, 0.0
    %v1275 = vmul.f32 %v1147, 0.2
    %v1276 = vmul.f32 %v1148, 0.2
    %v1277 = vmul.f32 %v1149, 0.2
    %v1278 = vmul.f32 %v1150, 0.2
    %v1279 = vmul.f32 %v1151, 0.2
    %v1280 = vmul.f32 %v1152, 0.2
    %v1281 = vmul.f32 %v1153, 0.2
    %v1282 = vmul.f32 %v1154, 0.2
    %v1283 = vmul.f32 %v1155, 0.2
    %v1284 = vmul.f32 %v1156, 0.2
    %v1285 = vmul.f32 %v1157, 0.2
    %v1286 = vmul.f32 %v1158, 0.2
    %v1287 = vmul.f32 %v1159, 0.2
    %v1288 = vmul.f32 %v1160, 0.2
    %v1289 = vmul.f32 %v1161, 0.2
    %v1290 = vmul.f32 %v1162, 0.2
    %v1291 = vmul.f32 %v1163, 0.2
    %v1292 = vmul.f32 %v1164, 0.2
    %v1293 = vmul.f32 %v1165, 0.2
    %v1294 = vmul.f32 %v1166, 0.2
    %v1295 = vmul.f32 %v1167, 0.2
    %v1296 = vmul.f32 %v1168, 0.2
    %v1297 = vmul.f32 %v1169, 0.2
    %v1298 = vmul.f32 %v1170, 0.2
    %v1299 = vmul.f32 %v1171, 0.2
    %v1300 = vmul.f32 %v1172, 0.2
    %v1301 = vmul.f32 %v1173, 0.2
    %v1302 = vmul.f32 %v1174, 0.2
    %v1303 = vmul.f32 %v1175, 0.2
    %v1304 = vmul.f32 %v1176, 0.2
    %v1305 = vmul.f32 %v1177, 0.2
    %v1306 = vmul.f32 %v1178, 0.2
    %v1307 = vmul.f32 %v1179, 0.2
    %v1308 = vmul.f32 %v1180, 0.2
    %v1309 = vmul.f32 %v1181, 0.2
    %v1310 = vmul.f32 %v1182, 0.2
    %v1311 = vmul.f32 %v1183, 0.2
    %v1312 = vmul.f32 %v1184, 0.2
    %v1313 = vmul.f32 %v1185, 0.2
    %v1314 = vmul.f32 %v1186, 0.2
    %v1315 = vmul.f32 %v1187, 0.2
    %v1316 = vmul.f32 %v1188, 0.2
    %v1317 = vmul.f32 %v1189, 0.2
    %v1318 = vmul.f32 %v1190, 0.2
    %v1319 = vmul.f32 %v1191, 0.2
    %v1320 = vmul.f32 %v1192, 0.2
    %v1321 = vmul.f32 %v1193, 0.2
    %v1322 = vmul.f32 %v1194, 0.2
    %v1323 = vmul.f32 %v1195, 0.2
    %v1324 = vmul.f32 %v1196, 0.2
    %v1325 = vmul.f32 %v1197, 0.2
    %v1326 = vmul.f32 %v1198, 0.2
    %v1327 = vmul.f32 %v1199, 0.2
    %v1328 = vmul.f32 %v1200, 0.2
    %v1329 = vmul.f32 %v1201, 0.2
    %v1330 = vmul.f32 %v1202, 0.2
    %v1331 = vmul.f32 %v1203, 0.2
    %v1332 = vmul.f32 %v1204, 0.2
    %v1333 = vmul.f32 %v1205, 0.2
    %v1334 = vmul.f32 %v1206, 0.2
    %v1335 = vmul.f32 %v1207, 0.2
    %v1336 = vmul.f32 %v1208, 0.2
    %v1337 = vmul.f32 %v1209, 0.2
    %v1338 = vmul.f32 %v1210, 0.2
    %v1339 = vsel %vm1211, %v1147, %v1275
    %v1340 = vsel %vm1212, %v1148, %v1276
    %v1341 = vsel %vm1213, %v1149, %v1277
    %v1342 = vsel %vm1214, %v1150, %v1278
    %v1343 = vsel %vm1215, %v1151, %v1279
    %v1344 = vsel %vm1216, %v1152, %v1280
    %v1345 = vsel %vm1217, %v1153, %v1281
    %v1346 = vsel %vm1218, %v1154, %v1282
    %v1347 = vsel %vm1219, %v1155, %v1283
    %v1348 = vsel %vm1220, %v1156, %v1284
    %v1349 = vsel %vm1221, %v1157, %v1285
    %v1350 = vsel %vm1222, %v1158, %v1286
    %v1351 = vsel %vm1223, %v1159, %v1287
    %v1352 = vsel %vm1224, %v1160, %v1288
    %v1353 = vsel %vm1225, %v1161, %v1289
    %v1354 = vsel %vm1226, %v1162, %v1290
    %v1355 = vsel %vm1227, %v1163, %v1291
    %v1356 = vsel %vm1228, %v1164, %v1292
    %v1357 = vsel %vm1229, %v1165, %v1293
    %v1358 = vsel %vm1230, %v1166, %v1294
    %v1359 = vsel %vm1231, %v1167, %v1295
    %v1360 = vsel %vm1232, %v1168, %v1296
    %v1361 = vsel %vm1233, %v1169, %v1297
    %v1362 = vsel %vm1234, %v1170, %v1298
    %v1363 = vsel %vm1235, %v1171, %v1299
    %v1364 = vsel %vm1236, %v1172, %v1300
    %v1365 = vsel %vm1237, %v1173, %v1301
    %v1366 = vsel %vm1238, %v1174, %v1302
    %v1367 = vsel %vm1239, %v1175, %v1303
    %v1368 = vsel %vm1240, %v1176, %v1304
    %v1369 = vsel %vm1241, %v1177, %v1305
    %v1370 = vsel %vm1242, %v1178, %v1306
    %v1371 = vsel %vm1243, %v1179, %v1307
    %v1372 = vsel %vm1244, %v1180, %v1308
    %v1373 = vsel %vm1245, %v1181, %v1309
    %v1374 = vsel %vm1246, %v1182, %v1310
    %v1375 = vsel %vm1247, %v1183, %v1311
    %v1376 = vsel %vm1248, %v1184, %v1312
    %v1377 = vsel %vm1249, %v1185, %v1313
    %v1378 = vsel %vm1250, %v1186, %v1314
    %v1379 = vsel %vm1251, %v1187, %v1315
    %v1380 = vsel %vm1252, %v1188, %v1316
    %v1381 = vsel %vm1253, %v1189, %v1317
    %v1382 = vsel %vm1254, %v1190, %v1318
    %v1383 = vsel %vm1255, %v1191, %v1319
    %v1384 = vsel %vm1256, %v1192, %v1320
    %v1385 = vsel %vm1257, %v1193, %v1321
    %v1386 = vsel %vm1258, %v1194, %v1322
    %v1387 = vsel %vm1259, %v1195, %v1323
    %v1388 = vsel %vm1260, %v1196, %v1324
    %v1389 = vsel %vm1261, %v1197, %v1325
    %v1390 = vsel %vm1262, %v1198, %v1326
    %v1391 = vsel %vm1263, %v1199, %v1327
    %v1392 = vsel %vm1264, %v1200, %v1328
    %v1393 = vsel %vm1265, %v1201, %v1329
    %v1394 = vsel %vm1266, %v1202, %v1330
    %v1395 = vsel %vm1267, %v1203, %v1331
    %v1396 = vsel %vm1268, %v1204, %v1332
    %v1397 = vsel %vm1269, %v1205, %v1333
    %v1398 = vsel %vm1270, %v1206, %v1334
    %v1399 = vsel %vm1271, %v1207, %v1335
    %v1400 = vsel %vm1272, %v1208, %v1336
    %v1401 = vsel %vm1273, %v1209, %v1337
    %v1402 = vsel %vm1274, %v1210, %v1338
    %v1403 = vpack.c.bf16 %v1341, %v1339
    %v1404 = vpack.c.bf16 %v1342, %v1340
    %v1405 = vpack.c.bf16 %v1345, %v1343
    %v1406 = vpack.c.bf16 %v1346, %v1344
    %v1407 = vpack.c.bf16 %v1349, %v1347
    %v1408 = vpack.c.bf16 %v1350, %v1348
    %v1409 = vpack.c.bf16 %v1353, %v1351
    %v1410 = vpack.c.bf16 %v1354, %v1352
    %v1411 = vpack.c.bf16 %v1357, %v1355
    %v1412 = vpack.c.bf16 %v1358, %v1356
    %v1413 = vpack.c.bf16 %v1361, %v1359
    %v1414 = vpack.c.bf16 %v1362, %v1360
    %v1415 = vpack.c.bf16 %v1365, %v1363
    %v1416 = vpack.c.bf16 %v1366, %v1364
    %v1417 = vpack.c.bf16 %v1369, %v1367
    %v1418 = vpack.c.bf16 %v1370, %v1368
    %v1419 = vpack.c.bf16 %v1373, %v1371
    %v1420 = vpack.c.bf16 %v1374, %v1372
    %v1421 = vpack.c.bf16 %v1377, %v1375
    %v1422 = vpack.c.bf16 %v1378, %v1376
    %v1423 = vpack.c.bf16 %v1381, %v1379
    %v1424 = vpack.c.bf16 %v1382, %v1380
    %v1425 = vpack.c.bf16 %v1385, %v1383
    %v1426 = vpack.c.bf16 %v1386, %v1384
    %v1427 = vpack.c.bf16 %v1389, %v1387
    %v1428 = vpack.c.bf16 %v1390, %v1388
    %v1429 = vpack.c.bf16 %v1393, %v1391
    %v1430 = vpack.c.bf16 %v1394, %v1392
    %v1431 = vpack.c.bf16 %v1397, %v1395
    %v1432 = vpack.c.bf16 %v1398, %v1396
    %v1433 = vpack.c.bf16 %v1401, %v1399
    %v1434 = vpack.c.bf16 %v1402, %v1400
    %v1435 = vld [vmem:[%s3] sm:$0xff]
    %v1436 = vld [vmem:[%s3 + $0x8] sm:$0xff]
    %v1437 = vld [vmem:[%s3 + $0x10] sm:$0xff]
    %v1438 = vld [vmem:[%s3 + $0x18] sm:$0xff]
    %v1439 = vld [vmem:[%s3 + $0x20] sm:$0xff]
    %v1440 = vld [vmem:[%s3 + $0x28] sm:$0xff]
    %v1441 = vld [vmem:[%s3 + $0x30] sm:$0xff]
    %v1442 = vld [vmem:[%s3 + $0x38] sm:$0xff]
    %v1443 = vld [vmem:[%s3 + $0x40] sm:$0xff]
    %v1444 = vld [vmem:[%s3 + $0x48] sm:$0xff]
    %v1445 = vld [vmem:[%s3 + $0x50] sm:$0xff]
    %v1446 = vld [vmem:[%s3 + $0x58] sm:$0xff]
    %v1447 = vld [vmem:[%s3 + $0x60] sm:$0xff]
    %v1448 = vld [vmem:[%s3 + $0x68] sm:$0xff]
    %v1449 = vld [vmem:[%s3 + $0x70] sm:$0xff]
    %v1450 = vld [vmem:[%s3 + $0x78] sm:$0xff]
    %v1451 = vld [vmem:[%s3 + $0x80] sm:$0xff]
    %v1452 = vld [vmem:[%s3 + $0x88] sm:$0xff]
    %v1453 = vld [vmem:[%s3 + $0x90] sm:$0xff]
    %v1454 = vld [vmem:[%s3 + $0x98] sm:$0xff]
    %v1455 = vld [vmem:[%s3 + $0xa0] sm:$0xff]
    %v1456 = vld [vmem:[%s3 + $0xa8] sm:$0xff]
    %v1457 = vld [vmem:[%s3 + $0xb0] sm:$0xff]
    %v1458 = vld [vmem:[%s3 + $0xb8] sm:$0xff]
    %v1459 = vld [vmem:[%s3 + $0xc0] sm:$0xff]
    %v1460 = vld [vmem:[%s3 + $0xc8] sm:$0xff]
    %v1461 = vld [vmem:[%s3 + $0xd0] sm:$0xff]
    %v1462 = vld [vmem:[%s3 + $0xd8] sm:$0xff]
    %v1463 = vld [vmem:[%s3 + $0xe0] sm:$0xff]
    %v1464 = vld [vmem:[%s3 + $0xe8] sm:$0xff]
    %v1465 = vld [vmem:[%s3 + $0xf0] sm:$0xff]
    %v1466 = vld [vmem:[%s3 + $0xf8] sm:$0xff]
    %v1467 = vld [vmem:[%s3 + $0x100] sm:$0xff]
    %v1468 = vld [vmem:[%s3 + $0x108] sm:$0xff]
    %v1469 = vld [vmem:[%s3 + $0x110] sm:$0xff]
    %v1470 = vld [vmem:[%s3 + $0x118] sm:$0xff]
    %v1471 = vld [vmem:[%s3 + $0x120] sm:$0xff]
    %v1472 = vld [vmem:[%s3 + $0x128] sm:$0xff]
    %v1473 = vld [vmem:[%s3 + $0x130] sm:$0xff]
    %v1474 = vld [vmem:[%s3 + $0x138] sm:$0xff]
    %v1475 = vld [vmem:[%s3 + $0x140] sm:$0xff]
    %v1476 = vld [vmem:[%s3 + $0x148] sm:$0xff]
    %v1477 = vld [vmem:[%s3 + $0x150] sm:$0xff]
    %v1478 = vld [vmem:[%s3 + $0x158] sm:$0xff]
    %v1479 = vld [vmem:[%s3 + $0x160] sm:$0xff]
    %v1480 = vld [vmem:[%s3 + $0x168] sm:$0xff]
    %v1481 = vld [vmem:[%s3 + $0x170] sm:$0xff]
    %v1482 = vld [vmem:[%s3 + $0x178] sm:$0xff]
    %v1483 = vld [vmem:[%s3 + $0x180] sm:$0xff]
    %v1484 = vld [vmem:[%s3 + $0x188] sm:$0xff]
    %v1485 = vld [vmem:[%s3 + $0x190] sm:$0xff]
    %v1486 = vld [vmem:[%s3 + $0x198] sm:$0xff]
    %v1487 = vld [vmem:[%s3 + $0x1a0] sm:$0xff]
    %v1488 = vld [vmem:[%s3 + $0x1a8] sm:$0xff]
    %v1489 = vld [vmem:[%s3 + $0x1b0] sm:$0xff]
    %v1490 = vld [vmem:[%s3 + $0x1b8] sm:$0xff]
    %v1491 = vld [vmem:[%s3 + $0x1c0] sm:$0xff]
    %v1492 = vld [vmem:[%s3 + $0x1c8] sm:$0xff]
    %v1493 = vld [vmem:[%s3 + $0x1d0] sm:$0xff]
    %v1494 = vld [vmem:[%s3 + $0x1d8] sm:$0xff]
    %v1495 = vld [vmem:[%s3 + $0x1e0] sm:$0xff]
    %v1496 = vld [vmem:[%s3 + $0x1e8] sm:$0xff]
    %v1497 = vld [vmem:[%s3 + $0x1f0] sm:$0xff]
    %v1498 = vld [vmem:[%s3 + $0x1f8] sm:$0xff]
    %v1563 = vunpack.c.l.b16 %v1435
    %v1564 = vunpack.c.h.b16 %v1435
    %v1565 = vunpack.c.l.b16 %v1436
    %v1566 = vunpack.c.h.b16 %v1436
    %v1567 = vunpack.c.l.b16 %v1437
    %v1568 = vunpack.c.h.b16 %v1437
    %v1569 = vunpack.c.l.b16 %v1438
    %v1570 = vunpack.c.h.b16 %v1438
    %v1571 = vunpack.c.l.b16 %v1439
    %v1572 = vunpack.c.h.b16 %v1439
    %v1573 = vunpack.c.l.b16 %v1440
    %v1574 = vunpack.c.h.b16 %v1440
    %v1575 = vunpack.c.l.b16 %v1441
    %v1576 = vunpack.c.h.b16 %v1441
    %v1577 = vunpack.c.l.b16 %v1442
    %v1578 = vunpack.c.h.b16 %v1442
    %v1579 = vunpack.c.l.b16 %v1443
    %v1580 = vunpack.c.h.b16 %v1443
    %v1581 = vunpack.c.l.b16 %v1444
    %v1582 = vunpack.c.h.b16 %v1444
    %v1583 = vunpack.c.l.b16 %v1445
    %v1584 = vunpack.c.h.b16 %v1445
    %v1585 = vunpack.c.l.b16 %v1446
    %v1586 = vunpack.c.h.b16 %v1446
    %v1587 = vunpack.c.l.b16 %v1447
    %v1588 = vunpack.c.h.b16 %v1447
    %v1589 = vunpack.c.l.b16 %v1448
    %v1590 = vunpack.c.h.b16 %v1448
    %v1591 = vunpack.c.l.b16 %v1449
    %v1592 = vunpack.c.h.b16 %v1449
    %v1593 = vunpack.c.l.b16 %v1450
    %v1594 = vunpack.c.h.b16 %v1450
    %v1595 = vunpack.c.l.b16 %v1451
    %v1596 = vunpack.c.h.b16 %v1451
    %v1597 = vunpack.c.l.b16 %v1452
    %v1598 = vunpack.c.h.b16 %v1452
    %v1599 = vunpack.c.l.b16 %v1453
    %v1600 = vunpack.c.h.b16 %v1453
    %v1601 = vunpack.c.l.b16 %v1454
    %v1602 = vunpack.c.h.b16 %v1454
    %v1603 = vunpack.c.l.b16 %v1455
    %v1604 = vunpack.c.h.b16 %v1455
    %v1605 = vunpack.c.l.b16 %v1456
    %v1606 = vunpack.c.h.b16 %v1456
    %v1607 = vunpack.c.l.b16 %v1457
    %v1608 = vunpack.c.h.b16 %v1457
    %v1609 = vunpack.c.l.b16 %v1458
    %v1610 = vunpack.c.h.b16 %v1458
    %v1611 = vunpack.c.l.b16 %v1459
    %v1612 = vunpack.c.h.b16 %v1459
    %v1613 = vunpack.c.l.b16 %v1460
    %v1614 = vunpack.c.h.b16 %v1460
    %v1615 = vunpack.c.l.b16 %v1461
    %v1616 = vunpack.c.h.b16 %v1461
    %v1617 = vunpack.c.l.b16 %v1462
    %v1618 = vunpack.c.h.b16 %v1462
    %v1619 = vunpack.c.l.b16 %v1463
    %v1620 = vunpack.c.h.b16 %v1463
    %v1621 = vunpack.c.l.b16 %v1464
    %v1622 = vunpack.c.h.b16 %v1464
    %v1623 = vunpack.c.l.b16 %v1465
    %v1624 = vunpack.c.h.b16 %v1465
    %v1625 = vunpack.c.l.b16 %v1466
    %v1626 = vunpack.c.h.b16 %v1466
    %v1627 = vunpack.c.l.b16 %v1467
    %v1628 = vunpack.c.h.b16 %v1467
    %v1629 = vunpack.c.l.b16 %v1468
    %v1630 = vunpack.c.h.b16 %v1468
    %v1631 = vunpack.c.l.b16 %v1469
    %v1632 = vunpack.c.h.b16 %v1469
    %v1633 = vunpack.c.l.b16 %v1470
    %v1634 = vunpack.c.h.b16 %v1470
    %v1635 = vunpack.c.l.b16 %v1471
    %v1636 = vunpack.c.h.b16 %v1471
    %v1637 = vunpack.c.l.b16 %v1472
    %v1638 = vunpack.c.h.b16 %v1472
    %v1639 = vunpack.c.l.b16 %v1473
    %v1640 = vunpack.c.h.b16 %v1473
    %v1641 = vunpack.c.l.b16 %v1474
    %v1642 = vunpack.c.h.b16 %v1474
    %v1643 = vunpack.c.l.b16 %v1475
    %v1644 = vunpack.c.h.b16 %v1475
    %v1645 = vunpack.c.l.b16 %v1476
    %v1646 = vunpack.c.h.b16 %v1476
    %v1647 = vunpack.c.l.b16 %v1477
    %v1648 = vunpack.c.h.b16 %v1477
    %v1649 = vunpack.c.l.b16 %v1478
    %v1650 = vunpack.c.h.b16 %v1478
    %v1651 = vunpack.c.l.b16 %v1479
    %v1652 = vunpack.c.h.b16 %v1479
    %v1653 = vunpack.c.l.b16 %v1480
    %v1654 = vunpack.c.h.b16 %v1480
    %v1655 = vunpack.c.l.b16 %v1481
    %v1656 = vunpack.c.h.b16 %v1481
    %v1657 = vunpack.c.l.b16 %v1482
    %v1658 = vunpack.c.h.b16 %v1482
    %v1659 = vunpack.c.l.b16 %v1483
    %v1660 = vunpack.c.h.b16 %v1483
    %v1661 = vunpack.c.l.b16 %v1484
    %v1662 = vunpack.c.h.b16 %v1484
    %v1663 = vunpack.c.l.b16 %v1485
    %v1664 = vunpack.c.h.b16 %v1485
    %v1665 = vunpack.c.l.b16 %v1486
    %v1666 = vunpack.c.h.b16 %v1486
    %v1667 = vunpack.c.l.b16 %v1487
    %v1668 = vunpack.c.h.b16 %v1487
    %v1669 = vunpack.c.l.b16 %v1488
    %v1670 = vunpack.c.h.b16 %v1488
    %v1671 = vunpack.c.l.b16 %v1489
    %v1672 = vunpack.c.h.b16 %v1489
    %v1673 = vunpack.c.l.b16 %v1490
    %v1674 = vunpack.c.h.b16 %v1490
    %v1675 = vunpack.c.l.b16 %v1491
    %v1676 = vunpack.c.h.b16 %v1491
    %v1677 = vunpack.c.l.b16 %v1492
    %v1678 = vunpack.c.h.b16 %v1492
    %v1679 = vunpack.c.l.b16 %v1493
    %v1680 = vunpack.c.h.b16 %v1493
    %v1681 = vunpack.c.l.b16 %v1494
    %v1682 = vunpack.c.h.b16 %v1494
    %v1683 = vunpack.c.l.b16 %v1495
    %v1684 = vunpack.c.h.b16 %v1495
    %v1685 = vunpack.c.l.b16 %v1496
    %v1686 = vunpack.c.h.b16 %v1496
    %v1687 = vunpack.c.l.b16 %v1497
    %v1688 = vunpack.c.h.b16 %v1497
    %v1689 = vunpack.c.l.b16 %v1498
    %v1690 = vunpack.c.h.b16 %v1498
    %v1691 = vpack.c.b16 %v1567, %v1563
    %v1692 = vpack.c.b16 %v1568, %v1564
    %v1693 = vpack.c.b16 %v1569, %v1565
    %v1694 = vpack.c.b16 %v1570, %v1566
    %v1695 = vpack.c.b16 %v1575, %v1571
    %v1696 = vpack.c.b16 %v1576, %v1572
    %v1697 = vpack.c.b16 %v1577, %v1573
    %v1698 = vpack.c.b16 %v1578, %v1574
    %v1699 = vpack.c.b16 %v1583, %v1579
    %v1700 = vpack.c.b16 %v1584, %v1580
    %v1701 = vpack.c.b16 %v1585, %v1581
    %v1702 = vpack.c.b16 %v1586, %v1582
    %v1703 = vpack.c.b16 %v1591, %v1587
    %v1704 = vpack.c.b16 %v1592, %v1588
    %v1705 = vpack.c.b16 %v1593, %v1589
    %v1706 = vpack.c.b16 %v1594, %v1590
    %v1707 = vpack.c.b16 %v1599, %v1595
    %v1708 = vpack.c.b16 %v1600, %v1596
    %v1709 = vpack.c.b16 %v1601, %v1597
    %v1710 = vpack.c.b16 %v1602, %v1598
    %v1711 = vpack.c.b16 %v1607, %v1603
    %v1712 = vpack.c.b16 %v1608, %v1604
    %v1713 = vpack.c.b16 %v1609, %v1605
    %v1714 = vpack.c.b16 %v1610, %v1606
    %v1715 = vpack.c.b16 %v1615, %v1611
    %v1716 = vpack.c.b16 %v1616, %v1612
    %v1717 = vpack.c.b16 %v1617, %v1613
    %v1718 = vpack.c.b16 %v1618, %v1614
    %v1719 = vpack.c.b16 %v1623, %v1619
    %v1720 = vpack.c.b16 %v1624, %v1620
    %v1721 = vpack.c.b16 %v1625, %v1621
    %v1722 = vpack.c.b16 %v1626, %v1622
    %v1723 = vpack.c.b16 %v1631, %v1627
    %v1724 = vpack.c.b16 %v1632, %v1628
    %v1725 = vpack.c.b16 %v1633, %v1629
    %v1726 = vpack.c.b16 %v1634, %v1630
    %v1727 = vpack.c.b16 %v1639, %v1635
    %v1728 = vpack.c.b16 %v1640, %v1636
    %v1729 = vpack.c.b16 %v1641, %v1637
    %v1730 = vpack.c.b16 %v1642, %v1638
    %v1731 = vpack.c.b16 %v1647, %v1643
    %v1732 = vpack.c.b16 %v1648, %v1644
    %v1733 = vpack.c.b16 %v1649, %v1645
    %v1734 = vpack.c.b16 %v1650, %v1646
    %v1735 = vpack.c.b16 %v1655, %v1651
    %v1736 = vpack.c.b16 %v1656, %v1652
    %v1737 = vpack.c.b16 %v1657, %v1653
    %v1738 = vpack.c.b16 %v1658, %v1654
    %v1739 = vpack.c.b16 %v1663, %v1659
    %v1740 = vpack.c.b16 %v1664, %v1660
    %v1741 = vpack.c.b16 %v1665, %v1661
    %v1742 = vpack.c.b16 %v1666, %v1662
    %v1743 = vpack.c.b16 %v1671, %v1667
    %v1744 = vpack.c.b16 %v1672, %v1668
    %v1745 = vpack.c.b16 %v1673, %v1669
    %v1746 = vpack.c.b16 %v1674, %v1670
    %v1747 = vpack.c.b16 %v1679, %v1675
    %v1748 = vpack.c.b16 %v1680, %v1676
    %v1749 = vpack.c.b16 %v1681, %v1677
    %v1750 = vpack.c.b16 %v1682, %v1678
    %v1751 = vpack.c.b16 %v1687, %v1683
    %v1752 = vpack.c.b16 %v1688, %v1684
    %v1753 = vpack.c.b16 %v1689, %v1685
    %v1754 = vpack.c.b16 %v1690, %v1686
    %1819 = vmatprep.subr.bf16.mxu0 %v1720
    %1820 = vmatpush1.bf16.msra.mxu0 %v1719
    %1821 = vmatprep.subr.bf16.mxu0 %v1716
    %1822 = vmatpush1.bf16.msra.mxu0 %v1715
    %1823 = vmatprep.subr.bf16.mxu0 %v1712
    %1824 = vmatpush1.bf16.msra.mxu0 %v1711
    %1825 = vmatprep.subr.bf16.mxu0 %v1708
    %1826 = vmatpush1.bf16.msra.mxu0 %v1707
    %1827 = vmatprep.subr.bf16.mxu0 %v1704
    %1828 = vmatpush1.bf16.msra.mxu0 %v1703
    %1829 = vmatprep.subr.bf16.mxu0 %v1700
    %1830 = vmatpush1.bf16.msra.mxu0 %v1699
    %1831 = vmatprep.subr.bf16.mxu0 %v1696
    %1832 = vmatpush1.bf16.msra.mxu0 %v1695
    %1833 = vmatprep.subr.bf16.mxu0 %v1692
    %1834 = vmatpush1.bf16.msra.mxu0 %v1691
    %1835 = vmatprep.subr.bf16.mxu0 %v1752
    %1836 = vmatpush2.bf16.msra.mxu0 %v1751
    %1837 = vmatprep.subr.bf16.mxu0 %v1748
    %1838 = vmatpush2.bf16.msra.mxu0 %v1747
    %1839 = vmatprep.subr.bf16.mxu0 %v1744
    %1840 = vmatpush2.bf16.msra.mxu0 %v1743
    %1841 = vmatprep.subr.bf16.mxu0 %v1740
    %1842 = vmatpush2.bf16.msra.mxu0 %v1739
    %1843 = vmatprep.subr.bf16.mxu0 %v1736
    %1844 = vmatpush2.bf16.msra.mxu0 %v1735
    %1845 = vmatprep.subr.bf16.mxu0 %v1732
    %1846 = vmatpush2.bf16.msra.mxu0 %v1731
    %1847 = vmatprep.subr.bf16.mxu0 %v1728
    %1848 = vmatpush2.bf16.msra.mxu0 %v1727
    %1849 = vmatprep.subr.bf16.mxu0 %v1724
    %1850 = vmatpush2.bf16.msra.mxu0 %v1723
    %1851 = vmatprep.mubr.bf16.mxu0 %v1404
    %1852 = vmatmul.mubr.bf16.gmra.mxu0 %v1403
    %v1853 = vpop.f32.mrf.mxu0
    %v1854 = vadd.f32 0.0, %v1853
    %v1855 = vpop.f32.mrf.mxu0
    %v1856 = vadd.f32 0.0, %v1855
    %v1857 = vpop.f32.mrf.mxu0
    %v1858 = vadd.f32 0.0, %v1857
    %v1859 = vpop.f32.mrf.mxu0
    %v1860 = vadd.f32 0.0, %v1859
    %1861 = vmatprep.mubr.bf16.mxu0 %v1406
    %1862 = vmatmul.mubr.bf16.gmra.mxu0 %v1405
    %v1863 = vpop.f32.mrf.mxu0
    %v1864 = vadd.f32 0.0, %v1863
    %v1865 = vpop.f32.mrf.mxu0
    %v1866 = vadd.f32 0.0, %v1865
    %v1867 = vpop.f32.mrf.mxu0
    %v1868 = vadd.f32 0.0, %v1867
    %v1869 = vpop.f32.mrf.mxu0
    %v1870 = vadd.f32 0.0, %v1869
    %1871 = vmatprep.mubr.bf16.mxu0 %v1408
    %1872 = vmatmul.mubr.bf16.gmra.mxu0 %v1407
    %v1873 = vpop.f32.mrf.mxu0
    %v1874 = vadd.f32 0.0, %v1873
    %v1875 = vpop.f32.mrf.mxu0
    %v1876 = vadd.f32 0.0, %v1875
    %v1877 = vpop.f32.mrf.mxu0
    %v1878 = vadd.f32 0.0, %v1877
    %v1879 = vpop.f32.mrf.mxu0
    %v1880 = vadd.f32 0.0, %v1879
    %1881 = vmatprep.mubr.bf16.mxu0 %v1410
    %1882 = vmatmul.mubr.bf16.gmra.mxu0 %v1409
    %v1883 = vpop.f32.mrf.mxu0
    %v1884 = vadd.f32 0.0, %v1883
    %v1885 = vpop.f32.mrf.mxu0
    %v1886 = vadd.f32 0.0, %v1885
    %v1887 = vpop.f32.mrf.mxu0
    %v1888 = vadd.f32 0.0, %v1887
    %v1889 = vpop.f32.mrf.mxu0
    %v1890 = vadd.f32 0.0, %v1889
    %1891 = vmatprep.mubr.bf16.mxu0 %v1412
    %1892 = vmatmul.mubr.bf16.gmra.mxu0 %v1411
    %v1893 = vpop.f32.mrf.mxu0
    %v1894 = vadd.f32 0.0, %v1893
    %v1895 = vpop.f32.mrf.mxu0
    %v1896 = vadd.f32 0.0, %v1895
    %v1897 = vpop.f32.mrf.mxu0
    %v1898 = vadd.f32 0.0, %v1897
    %v1899 = vpop.f32.mrf.mxu0
    %v1900 = vadd.f32 0.0, %v1899
    %1901 = vmatprep.mubr.bf16.mxu0 %v1414
    %1902 = vmatmul.mubr.bf16.gmra.mxu0 %v1413
    %v1903 = vpop.f32.mrf.mxu0
    %v1904 = vadd.f32 0.0, %v1903
    %v1905 = vpop.f32.mrf.mxu0
    %v1906 = vadd.f32 0.0, %v1905
    %v1907 = vpop.f32.mrf.mxu0
    %v1908 = vadd.f32 0.0, %v1907
    %v1909 = vpop.f32.mrf.mxu0
    %v1910 = vadd.f32 0.0, %v1909
    %1911 = vmatprep.mubr.bf16.mxu0 %v1416
    %1912 = vmatmul.mubr.bf16.gmra.mxu0 %v1415
    %v1913 = vpop.f32.mrf.mxu0
    %v1914 = vadd.f32 0.0, %v1913
    %v1915 = vpop.f32.mrf.mxu0
    %v1916 = vadd.f32 0.0, %v1915
    %v1917 = vpop.f32.mrf.mxu0
    %v1918 = vadd.f32 0.0, %v1917
    %v1919 = vpop.f32.mrf.mxu0
    %v1920 = vadd.f32 0.0, %v1919
    %1921 = vmatprep.mubr.bf16.mxu0 %v1418
    %1922 = vmatmul.mubr.bf16.gmra.mxu0 %v1417
    %v1923 = vpop.f32.mrf.mxu0
    %v1924 = vadd.f32 0.0, %v1923
    %v1925 = vpop.f32.mrf.mxu0
    %v1926 = vadd.f32 0.0, %v1925
    %v1927 = vpop.f32.mrf.mxu0
    %v1928 = vadd.f32 0.0, %v1927
    %v1929 = vpop.f32.mrf.mxu0
    %v1930 = vadd.f32 0.0, %v1929
    %1931 = vmatprep.mubr.bf16.mxu0 %v1420
    %1932 = vmatmul.mubr.bf16.gmra.mxu0 %v1419
    %v1933 = vpop.f32.mrf.mxu0
    %v1934 = vadd.f32 0.0, %v1933
    %v1935 = vpop.f32.mrf.mxu0
    %v1936 = vadd.f32 0.0, %v1935
    %v1937 = vpop.f32.mrf.mxu0
    %v1938 = vadd.f32 0.0, %v1937
    %v1939 = vpop.f32.mrf.mxu0
    %v1940 = vadd.f32 0.0, %v1939
    %1941 = vmatprep.mubr.bf16.mxu0 %v1422
    %1942 = vmatmul.mubr.bf16.gmra.mxu0 %v1421
    %v1943 = vpop.f32.mrf.mxu0
    %v1944 = vadd.f32 0.0, %v1943
    %v1945 = vpop.f32.mrf.mxu0
    %v1946 = vadd.f32 0.0, %v1945
    %v1947 = vpop.f32.mrf.mxu0
    %v1948 = vadd.f32 0.0, %v1947
    %v1949 = vpop.f32.mrf.mxu0
    %v1950 = vadd.f32 0.0, %v1949
    %1951 = vmatprep.mubr.bf16.mxu0 %v1424
    %1952 = vmatmul.mubr.bf16.gmra.mxu0 %v1423
    %v1953 = vpop.f32.mrf.mxu0
    %v1954 = vadd.f32 0.0, %v1953
    %v1955 = vpop.f32.mrf.mxu0
    %v1956 = vadd.f32 0.0, %v1955
    %v1957 = vpop.f32.mrf.mxu0
    %v1958 = vadd.f32 0.0, %v1957
    %v1959 = vpop.f32.mrf.mxu0
    %v1960 = vadd.f32 0.0, %v1959
    %1961 = vmatprep.mubr.bf16.mxu0 %v1426
    %1962 = vmatmul.mubr.bf16.gmra.mxu0 %v1425
    %v1963 = vpop.f32.mrf.mxu0
    %v1964 = vadd.f32 0.0, %v1963
    %v1965 = vpop.f32.mrf.mxu0
    %v1966 = vadd.f32 0.0, %v1965
    %v1967 = vpop.f32.mrf.mxu0
    %v1968 = vadd.f32 0.0, %v1967
    %v1969 = vpop.f32.mrf.mxu0
    %v1970 = vadd.f32 0.0, %v1969
    %1971 = vmatprep.mubr.bf16.mxu0 %v1428
    %1972 = vmatmul.mubr.bf16.gmra.mxu0 %v1427
    %v1973 = vpop.f32.mrf.mxu0
    %v1974 = vadd.f32 0.0, %v1973
    %v1975 = vpop.f32.mrf.mxu0
    %v1976 = vadd.f32 0.0, %v1975
    %v1977 = vpop.f32.mrf.mxu0
    %v1978 = vadd.f32 0.0, %v1977
    %v1979 = vpop.f32.mrf.mxu0
    %v1980 = vadd.f32 0.0, %v1979
    %1981 = vmatprep.mubr.bf16.mxu0 %v1430
    %1982 = vmatmul.mubr.bf16.gmra.mxu0 %v1429
    %v1983 = vpop.f32.mrf.mxu0
    %v1984 = vadd.f32 0.0, %v1983
    %v1985 = vpop.f32.mrf.mxu0
    %v1986 = vadd.f32 0.0, %v1985
    %v1987 = vpop.f32.mrf.mxu0
    %v1988 = vadd.f32 0.0, %v1987
    %v1989 = vpop.f32.mrf.mxu0
    %v1990 = vadd.f32 0.0, %v1989
    %1991 = vmatprep.mubr.bf16.mxu0 %v1432
    %1992 = vmatmul.mubr.bf16.gmra.mxu0 %v1431
    %v1993 = vpop.f32.mrf.mxu0
    %v1994 = vadd.f32 0.0, %v1993
    %v1995 = vpop.f32.mrf.mxu0
    %v1996 = vadd.f32 0.0, %v1995
    %v1997 = vpop.f32.mrf.mxu0
    %v1998 = vadd.f32 0.0, %v1997
    %v1999 = vpop.f32.mrf.mxu0
    %v2000 = vadd.f32 0.0, %v1999
    %2001 = vmatprep.mubr.bf16.mxu0 %v1434
    %2002 = vmatmul.mubr.bf16.gmra.mxu0 %v1433
    %v2003 = vpop.f32.mrf.mxu0
    %v2004 = vadd.f32 0.0, %v2003
    %v2005 = vpop.f32.mrf.mxu0
    %v2006 = vadd.f32 0.0, %v2005
    %v2007 = vpop.f32.mrf.mxu0
    %v2008 = vadd.f32 0.0, %v2007
    %v2009 = vpop.f32.mrf.mxu0
    %v2010 = vadd.f32 0.0, %v2009
    %2011 = vdwg.mxu0
    %2012 = vmatprep.subr.bf16.mxu0 %v1722
    %2013 = vmatpush1.bf16.msra.mxu0 %v1721
    %2014 = vmatprep.subr.bf16.mxu0 %v1718
    %2015 = vmatpush1.bf16.msra.mxu0 %v1717
    %2016 = vmatprep.subr.bf16.mxu0 %v1714
    %2017 = vmatpush1.bf16.msra.mxu0 %v1713
    %2018 = vmatprep.subr.bf16.mxu0 %v1710
    %2019 = vmatpush1.bf16.msra.mxu0 %v1709
    %2020 = vmatprep.subr.bf16.mxu0 %v1706
    %2021 = vmatpush1.bf16.msra.mxu0 %v1705
    %2022 = vmatprep.subr.bf16.mxu0 %v1702
    %2023 = vmatpush1.bf16.msra.mxu0 %v1701
    %2024 = vmatprep.subr.bf16.mxu0 %v1698
    %2025 = vmatpush1.bf16.msra.mxu0 %v1697
    %2026 = vmatprep.subr.bf16.mxu0 %v1694
    %2027 = vmatpush1.bf16.msra.mxu0 %v1693
    %2028 = vmatprep.subr.bf16.mxu0 %v1754
    %2029 = vmatpush2.bf16.msra.mxu0 %v1753
    %2030 = vmatprep.subr.bf16.mxu0 %v1750
    %2031 = vmatpush2.bf16.msra.mxu0 %v1749
    %2032 = vmatprep.subr.bf16.mxu0 %v1746
    %2033 = vmatpush2.bf16.msra.mxu0 %v1745
    %2034 = vmatprep.subr.bf16.mxu0 %v1742
    %2035 = vmatpush2.bf16.msra.mxu0 %v1741
    %2036 = vmatprep.subr.bf16.mxu0 %v1738
    %2037 = vmatpush2.bf16.msra.mxu0 %v1737
    %2038 = vmatprep.subr.bf16.mxu0 %v1734
    %2039 = vmatpush2.bf16.msra.mxu0 %v1733
    %2040 = vmatprep.subr.bf16.mxu0 %v1730
    %2041 = vmatpush2.bf16.msra.mxu0 %v1729
    %2042 = vmatprep.subr.bf16.mxu0 %v1726
    %2043 = vmatpush2.bf16.msra.mxu0 %v1725
    %2044 = vmatprep.mubr.bf16.mxu0 %v1404
    %2045 = vmatmul.mubr.bf16.gmra.mxu0 %v1403
    %v2046 = vpop.f32.mrf.mxu0
    %v2047 = vadd.f32 0.0, %v2046
    %v2048 = vpop.f32.mrf.mxu0
    %v2049 = vadd.f32 0.0, %v2048
    %v2050 = vpop.f32.mrf.mxu0
    %v2051 = vadd.f32 0.0, %v2050
    %v2052 = vpop.f32.mrf.mxu0
    %v2053 = vadd.f32 0.0, %v2052
    %2054 = vmatprep.mubr.bf16.mxu0 %v1406
    %2055 = vmatmul.mubr.bf16.gmra.mxu0 %v1405
    %v2056 = vpop.f32.mrf.mxu0
    %v2057 = vadd.f32 0.0, %v2056
    %v2058 = vpop.f32.mrf.mxu0
    %v2059 = vadd.f32 0.0, %v2058
    %v2060 = vpop.f32.mrf.mxu0
    %v2061 = vadd.f32 0.0, %v2060
    %v2062 = vpop.f32.mrf.mxu0
    %v2063 = vadd.f32 0.0, %v2062
    %2064 = vmatprep.mubr.bf16.mxu0 %v1408
    %2065 = vmatmul.mubr.bf16.gmra.mxu0 %v1407
    %v2066 = vpop.f32.mrf.mxu0
    %v2067 = vadd.f32 0.0, %v2066
    %v2068 = vpop.f32.mrf.mxu0
    %v2069 = vadd.f32 0.0, %v2068
    %v2070 = vpop.f32.mrf.mxu0
    %v2071 = vadd.f32 0.0, %v2070
    %v2072 = vpop.f32.mrf.mxu0
    %v2073 = vadd.f32 0.0, %v2072
    %2074 = vmatprep.mubr.bf16.mxu0 %v1410
    %2075 = vmatmul.mubr.bf16.gmra.mxu0 %v1409
    %v2076 = vpop.f32.mrf.mxu0
    %v2077 = vadd.f32 0.0, %v2076
    %v2078 = vpop.f32.mrf.mxu0
    %v2079 = vadd.f32 0.0, %v2078
    %v2080 = vpop.f32.mrf.mxu0
    %v2081 = vadd.f32 0.0, %v2080
    %v2082 = vpop.f32.mrf.mxu0
    %v2083 = vadd.f32 0.0, %v2082
    %2084 = vmatprep.mubr.bf16.mxu0 %v1412
    %2085 = vmatmul.mubr.bf16.gmra.mxu0 %v1411
    %v2086 = vpop.f32.mrf.mxu0
    %v2087 = vadd.f32 0.0, %v2086
    %v2088 = vpop.f32.mrf.mxu0
    %v2089 = vadd.f32 0.0, %v2088
    %v2090 = vpop.f32.mrf.mxu0
    %v2091 = vadd.f32 0.0, %v2090
    %v2092 = vpop.f32.mrf.mxu0
    %v2093 = vadd.f32 0.0, %v2092
    %2094 = vmatprep.mubr.bf16.mxu0 %v1414
    %2095 = vmatmul.mubr.bf16.gmra.mxu0 %v1413
    %v2096 = vpop.f32.mrf.mxu0
    %v2097 = vadd.f32 0.0, %v2096
    %v2098 = vpop.f32.mrf.mxu0
    %v2099 = vadd.f32 0.0, %v2098
    %v2100 = vpop.f32.mrf.mxu0
    %v2101 = vadd.f32 0.0, %v2100
    %v2102 = vpop.f32.mrf.mxu0
    %v2103 = vadd.f32 0.0, %v2102
    %2104 = vmatprep.mubr.bf16.mxu0 %v1416
    %2105 = vmatmul.mubr.bf16.gmra.mxu0 %v1415
    %v2106 = vpop.f32.mrf.mxu0
    %v2107 = vadd.f32 0.0, %v2106
    %v2108 = vpop.f32.mrf.mxu0
    %v2109 = vadd.f32 0.0, %v2108
    %v2110 = vpop.f32.mrf.mxu0
    %v2111 = vadd.f32 0.0, %v2110
    %v2112 = vpop.f32.mrf.mxu0
    %v2113 = vadd.f32 0.0, %v2112
    %2114 = vmatprep.mubr.bf16.mxu0 %v1418
    %2115 = vmatmul.mubr.bf16.gmra.mxu0 %v1417
    %v2116 = vpop.f32.mrf.mxu0
    %v2117 = vadd.f32 0.0, %v2116
    %v2118 = vpop.f32.mrf.mxu0
    %v2119 = vadd.f32 0.0, %v2118
    %v2120 = vpop.f32.mrf.mxu0
    %v2121 = vadd.f32 0.0, %v2120
    %v2122 = vpop.f32.mrf.mxu0
    %v2123 = vadd.f32 0.0, %v2122
    %2124 = vmatprep.mubr.bf16.mxu0 %v1420
    %2125 = vmatmul.mubr.bf16.gmra.mxu0 %v1419
    %v2126 = vpop.f32.mrf.mxu0
    %v2127 = vadd.f32 0.0, %v2126
    %v2128 = vpop.f32.mrf.mxu0
    %v2129 = vadd.f32 0.0, %v2128
    %v2130 = vpop.f32.mrf.mxu0
    %v2131 = vadd.f32 0.0, %v2130
    %v2132 = vpop.f32.mrf.mxu0
    %v2133 = vadd.f32 0.0, %v2132
    %2134 = vmatprep.mubr.bf16.mxu0 %v1422
    %2135 = vmatmul.mubr.bf16.gmra.mxu0 %v1421
    %v2136 = vpop.f32.mrf.mxu0
    %v2137 = vadd.f32 0.0, %v2136
    %v2138 = vpop.f32.mrf.mxu0
    %v2139 = vadd.f32 0.0, %v2138
    %v2140 = vpop.f32.mrf.mxu0
    %v2141 = vadd.f32 0.0, %v2140
    %v2142 = vpop.f32.mrf.mxu0
    %v2143 = vadd.f32 0.0, %v2142
    %2144 = vmatprep.mubr.bf16.mxu0 %v1424
    %2145 = vmatmul.mubr.bf16.gmra.mxu0 %v1423
    %v2146 = vpop.f32.mrf.mxu0
    %v2147 = vadd.f32 0.0, %v2146
    %v2148 = vpop.f32.mrf.mxu0
    %v2149 = vadd.f32 0.0, %v2148
    %v2150 = vpop.f32.mrf.mxu0
    %v2151 = vadd.f32 0.0, %v2150
    %v2152 = vpop.f32.mrf.mxu0
    %v2153 = vadd.f32 0.0, %v2152
    %2154 = vmatprep.mubr.bf16.mxu0 %v1426
    %2155 = vmatmul.mubr.bf16.gmra.mxu0 %v1425
    %v2156 = vpop.f32.mrf.mxu0
    %v2157 = vadd.f32 0.0, %v2156
    %v2158 = vpop.f32.mrf.mxu0
    %v2159 = vadd.f32 0.0, %v2158
    %v2160 = vpop.f32.mrf.mxu0
    %v2161 = vadd.f32 0.0, %v2160
    %v2162 = vpop.f32.mrf.mxu0
    %v2163 = vadd.f32 0.0, %v2162
    %2164 = vmatprep.mubr.bf16.mxu0 %v1428
    %2165 = vmatmul.mubr.bf16.gmra.mxu0 %v1427
    %v2166 = vpop.f32.mrf.mxu0
    %v2167 = vadd.f32 0.0, %v2166
    %v2168 = vpop.f32.mrf.mxu0
    %v2169 = vadd.f32 0.0, %v2168
    %v2170 = vpop.f32.mrf.mxu0
    %v2171 = vadd.f32 0.0, %v2170
    %v2172 = vpop.f32.mrf.mxu0
    %v2173 = vadd.f32 0.0, %v2172
    %2174 = vmatprep.mubr.bf16.mxu0 %v1430
    %2175 = vmatmul.mubr.bf16.gmra.mxu0 %v1429
    %v2176 = vpop.f32.mrf.mxu0
    %v2177 = vadd.f32 0.0, %v2176
    %v2178 = vpop.f32.mrf.mxu0
    %v2179 = vadd.f32 0.0, %v2178
    %v2180 = vpop.f32.mrf.mxu0
    %v2181 = vadd.f32 0.0, %v2180
    %v2182 = vpop.f32.mrf.mxu0
    %v2183 = vadd.f32 0.0, %v2182
    %2184 = vmatprep.mubr.bf16.mxu0 %v1432
    %2185 = vmatmul.mubr.bf16.gmra.mxu0 %v1431
    %v2186 = vpop.f32.mrf.mxu0
    %v2187 = vadd.f32 0.0, %v2186
    %v2188 = vpop.f32.mrf.mxu0
    %v2189 = vadd.f32 0.0, %v2188
    %v2190 = vpop.f32.mrf.mxu0
    %v2191 = vadd.f32 0.0, %v2190
    %v2192 = vpop.f32.mrf.mxu0
    %v2193 = vadd.f32 0.0, %v2192
    %2194 = vmatprep.mubr.bf16.mxu0 %v1434
    %2195 = vmatmul.mubr.bf16.gmra.mxu0 %v1433
    %v2196 = vpop.f32.mrf.mxu0
    %v2197 = vadd.f32 0.0, %v2196
    %v2198 = vpop.f32.mrf.mxu0
    %v2199 = vadd.f32 0.0, %v2198
    %v2200 = vpop.f32.mrf.mxu0
    %v2201 = vadd.f32 0.0, %v2200
    %v2202 = vpop.f32.mrf.mxu0
    %v2203 = vadd.f32 0.0, %v2202
    %2204 = vdwg.mxu0
    %v2205 = vld [vmem:[%s6 + $0x4] sm:$0xf]
    %v2206 = vld [vmem:[%s6 + $0x8] sm:$0xf]
    %v2207 = vadd.f32 %v1854, %v1858
    %v2208 = vadd.f32 %v2207, %v1864
    %v2209 = vadd.f32 %v2208, %v1868
    %v2210 = vadd.f32 %v2209, %v1874
    %v2211 = vadd.f32 %v2210, %v1878
    %v2212 = vadd.f32 %v2211, %v1884
    %v2213 = vadd.f32 %v2212, %v1888
    %v2214 = vadd.f32 %v2213, %v1894
    %v2215 = vadd.f32 %v2214, %v1898
    %v2216 = vadd.f32 %v2215, %v1904
    %v2217 = vadd.f32 %v2216, %v1908
    %v2218 = vadd.f32 %v2217, %v1914
    %v2219 = vadd.f32 %v2218, %v1918
    %v2220 = vadd.f32 %v2219, %v1924
    %v2221 = vadd.f32 %v2220, %v1928
    %v2222 = vadd.f32 %v2221, %v1934
    %v2223 = vadd.f32 %v2222, %v1938
    %v2224 = vadd.f32 %v2223, %v1944
    %v2225 = vadd.f32 %v2224, %v1948
    %v2226 = vadd.f32 %v2225, %v1954
    %v2227 = vadd.f32 %v2226, %v1958
    %v2228 = vadd.f32 %v2227, %v1964
    %v2229 = vadd.f32 %v2228, %v1968
    %v2230 = vadd.f32 %v2229, %v1974
    %v2231 = vadd.f32 %v2230, %v1978
    %v2232 = vadd.f32 %v2231, %v1984
    %v2233 = vadd.f32 %v2232, %v1988
    %v2234 = vadd.f32 %v2233, %v1994
    %v2235 = vadd.f32 %v2234, %v1998
    %v2236 = vadd.f32 %v2235, %v2004
    %v2237 = vadd.f32 %v2236, %v2008
    %v2238 = vrot.slane %v2237, 4
    %v2239 = vadd.f32 %v2237, %v2238
    %v2240 = vrot.slane %v2239, 2
    %v2241 = vadd.f32 %v2239, %v2240
    %v2242 = vrot.slane %v2241, 1
    %v2243 = vadd.f32 %v2241, %v2242
    %v2244 = vadd.f32 %v1856, %v1860
    %v2245 = vadd.f32 %v2244, %v1866
    %v2246 = vadd.f32 %v2245, %v1870
    %v2247 = vadd.f32 %v2246, %v1876
    %v2248 = vadd.f32 %v2247, %v1880
    %v2249 = vadd.f32 %v2248, %v1886
    %v2250 = vadd.f32 %v2249, %v1890
    %v2251 = vadd.f32 %v2250, %v1896
    %v2252 = vadd.f32 %v2251, %v1900
    %v2253 = vadd.f32 %v2252, %v1906
    %v2254 = vadd.f32 %v2253, %v1910
    %v2255 = vadd.f32 %v2254, %v1916
    %v2256 = vadd.f32 %v2255, %v1920
    %v2257 = vadd.f32 %v2256, %v1926
    %v2258 = vadd.f32 %v2257, %v1930
    %v2259 = vadd.f32 %v2258, %v1936
    %v2260 = vadd.f32 %v2259, %v1940
    %v2261 = vadd.f32 %v2260, %v1946
    %v2262 = vadd.f32 %v2261, %v1950
    %v2263 = vadd.f32 %v2262, %v1956
    %v2264 = vadd.f32 %v2263, %v1960
    %v2265 = vadd.f32 %v2264, %v1966
    %v2266 = vadd.f32 %v2265, %v1970
    %v2267 = vadd.f32 %v2266, %v1976
    %v2268 = vadd.f32 %v2267, %v1980
    %v2269 = vadd.f32 %v2268, %v1986
    %v2270 = vadd.f32 %v2269, %v1990
    %v2271 = vadd.f32 %v2270, %v1996
    %v2272 = vadd.f32 %v2271, %v2000
    %v2273 = vadd.f32 %v2272, %v2006
    %v2274 = vadd.f32 %v2273, %v2010
    %v2275 = vrot.slane %v2274, 4
    %v2276 = vadd.f32 %v2274, %v2275
    %v2277 = vrot.slane %v2276, 2
    %v2278 = vadd.f32 %v2276, %v2277
    %v2279 = vrot.slane %v2278, 1
    %v2280 = vadd.f32 %v2278, %v2279
    %v2281 = vadd.f32 %v2047, %v2051
    %v2282 = vadd.f32 %v2281, %v2057
    %v2283 = vadd.f32 %v2282, %v2061
    %v2284 = vadd.f32 %v2283, %v2067
    %v2285 = vadd.f32 %v2284, %v2071
    %v2286 = vadd.f32 %v2285, %v2077
    %v2287 = vadd.f32 %v2286, %v2081
    %v2288 = vadd.f32 %v2287, %v2087
    %v2289 = vadd.f32 %v2288, %v2091
    %v2290 = vadd.f32 %v2289, %v2097
    %v2291 = vadd.f32 %v2290, %v2101
    %v2292 = vadd.f32 %v2291, %v2107
    %v2293 = vadd.f32 %v2292, %v2111
    %v2294 = vadd.f32 %v2293, %v2117
    %v2295 = vadd.f32 %v2294, %v2121
    %v2296 = vadd.f32 %v2295, %v2127
    %v2297 = vadd.f32 %v2296, %v2131
    %v2298 = vadd.f32 %v2297, %v2137
    %v2299 = vadd.f32 %v2298, %v2141
    %v2300 = vadd.f32 %v2299, %v2147
    %v2301 = vadd.f32 %v2300, %v2151
    %v2302 = vadd.f32 %v2301, %v2157
    %v2303 = vadd.f32 %v2302, %v2161
    %v2304 = vadd.f32 %v2303, %v2167
    %v2305 = vadd.f32 %v2304, %v2171
    %v2306 = vadd.f32 %v2305, %v2177
    %v2307 = vadd.f32 %v2306, %v2181
    %v2308 = vadd.f32 %v2307, %v2187
    %v2309 = vadd.f32 %v2308, %v2191
    %v2310 = vadd.f32 %v2309, %v2197
    %v2311 = vadd.f32 %v2310, %v2201
    %v2312 = vrot.slane %v2311, 4
    %v2313 = vadd.f32 %v2311, %v2312
    %v2314 = vrot.slane %v2313, 2
    %v2315 = vadd.f32 %v2313, %v2314
    %v2316 = vrot.slane %v2315, 1
    %v2317 = vadd.f32 %v2315, %v2316
    %v2318 = vadd.f32 %v2049, %v2053
    %v2319 = vadd.f32 %v2318, %v2059
    %v2320 = vadd.f32 %v2319, %v2063
    %v2321 = vadd.f32 %v2320, %v2069
    %v2322 = vadd.f32 %v2321, %v2073
    %v2323 = vadd.f32 %v2322, %v2079
    %v2324 = vadd.f32 %v2323, %v2083
    %v2325 = vadd.f32 %v2324, %v2089
    %v2326 = vadd.f32 %v2325, %v2093
    %v2327 = vadd.f32 %v2326, %v2099
    %v2328 = vadd.f32 %v2327, %v2103
    %v2329 = vadd.f32 %v2328, %v2109
    %v2330 = vadd.f32 %v2329, %v2113
    %v2331 = vadd.f32 %v2330, %v2119
    %v2332 = vadd.f32 %v2331, %v2123
    %v2333 = vadd.f32 %v2332, %v2129
    %v2334 = vadd.f32 %v2333, %v2133
    %v2335 = vadd.f32 %v2334, %v2139
    %v2336 = vadd.f32 %v2335, %v2143
    %v2337 = vadd.f32 %v2336, %v2149
    %v2338 = vadd.f32 %v2337, %v2153
    %v2339 = vadd.f32 %v2338, %v2159
    %v2340 = vadd.f32 %v2339, %v2163
    %v2341 = vadd.f32 %v2340, %v2169
    %v2342 = vadd.f32 %v2341, %v2173
    %v2343 = vadd.f32 %v2342, %v2179
    %v2344 = vadd.f32 %v2343, %v2183
    %v2345 = vadd.f32 %v2344, %v2189
    %v2346 = vadd.f32 %v2345, %v2193
    %v2347 = vadd.f32 %v2346, %v2199
    %v2348 = vadd.f32 %v2347, %v2203
    %v2349 = vrot.slane %v2348, 4
    %v2350 = vadd.f32 %v2348, %v2349
    %v2351 = vrot.slane %v2350, 2
    %v2352 = vadd.f32 %v2350, %v2351
    %v2353 = vrot.slane %v2352, 1
    %v2354 = vadd.f32 %v2352, %v2353
    %v2355 = vmul.f32 %v1854, %v1854
    %v2356 = vmul.f32 %v1856, %v1856
    %v2357 = vmul.f32 %v2047, %v2047
    %v2358 = vmul.f32 %v2049, %v2049
    %v2359 = vmul.f32 %v1858, %v1858
    %v2360 = vmul.f32 %v1860, %v1860
    %v2361 = vmul.f32 %v2051, %v2051
    %v2362 = vmul.f32 %v2053, %v2053
    %v2363 = vmul.f32 %v1864, %v1864
    %v2364 = vmul.f32 %v1866, %v1866
    %v2365 = vmul.f32 %v2057, %v2057
    %v2366 = vmul.f32 %v2059, %v2059
    %v2367 = vmul.f32 %v1868, %v1868
    %v2368 = vmul.f32 %v1870, %v1870
    %v2369 = vmul.f32 %v2061, %v2061
    %v2370 = vmul.f32 %v2063, %v2063
    %v2371 = vmul.f32 %v1874, %v1874
    %v2372 = vmul.f32 %v1876, %v1876
    %v2373 = vmul.f32 %v2067, %v2067
    %v2374 = vmul.f32 %v2069, %v2069
    %v2375 = vmul.f32 %v1878, %v1878
    %v2376 = vmul.f32 %v1880, %v1880
    %v2377 = vmul.f32 %v2071, %v2071
    %v2378 = vmul.f32 %v2073, %v2073
    %v2379 = vmul.f32 %v1884, %v1884
    %v2380 = vmul.f32 %v1886, %v1886
    %v2381 = vmul.f32 %v2077, %v2077
    %v2382 = vmul.f32 %v2079, %v2079
    %v2383 = vmul.f32 %v1888, %v1888
    %v2384 = vmul.f32 %v1890, %v1890
    %v2385 = vmul.f32 %v2081, %v2081
    %v2386 = vmul.f32 %v2083, %v2083
    %v2387 = vmul.f32 %v1894, %v1894
    %v2388 = vmul.f32 %v1896, %v1896
    %v2389 = vmul.f32 %v2087, %v2087
    %v2390 = vmul.f32 %v2089, %v2089
    %v2391 = vmul.f32 %v1898, %v1898
    %v2392 = vmul.f32 %v1900, %v1900
    %v2393 = vmul.f32 %v2091, %v2091
    %v2394 = vmul.f32 %v2093, %v2093
    %v2395 = vmul.f32 %v1904, %v1904
    %v2396 = vmul.f32 %v1906, %v1906
    %v2397 = vmul.f32 %v2097, %v2097
    %v2398 = vmul.f32 %v2099, %v2099
    %v2399 = vmul.f32 %v1908, %v1908
    %v2400 = vmul.f32 %v1910, %v1910
    %v2401 = vmul.f32 %v2101, %v2101
    %v2402 = vmul.f32 %v2103, %v2103
    %v2403 = vmul.f32 %v1914, %v1914
    %v2404 = vmul.f32 %v1916, %v1916
    %v2405 = vmul.f32 %v2107, %v2107
    %v2406 = vmul.f32 %v2109, %v2109
    %v2407 = vmul.f32 %v1918, %v1918
    %v2408 = vmul.f32 %v1920, %v1920
    %v2409 = vmul.f32 %v2111, %v2111
    %v2410 = vmul.f32 %v2113, %v2113
    %v2411 = vmul.f32 %v1924, %v1924
    %v2412 = vmul.f32 %v1926, %v1926
    %v2413 = vmul.f32 %v2117, %v2117
    %v2414 = vmul.f32 %v2119, %v2119
    %v2415 = vmul.f32 %v1928, %v1928
    %v2416 = vmul.f32 %v1930, %v1930
    %v2417 = vmul.f32 %v2121, %v2121
    %v2418 = vmul.f32 %v2123, %v2123
    %v2419 = vmul.f32 %v1934, %v1934
    %v2420 = vmul.f32 %v1936, %v1936
    %v2421 = vmul.f32 %v2127, %v2127
    %v2422 = vmul.f32 %v2129, %v2129
    %v2423 = vmul.f32 %v1938, %v1938
    %v2424 = vmul.f32 %v1940, %v1940
    %v2425 = vmul.f32 %v2131, %v2131
    %v2426 = vmul.f32 %v2133, %v2133
    %v2427 = vmul.f32 %v1944, %v1944
    %v2428 = vmul.f32 %v1946, %v1946
    %v2429 = vmul.f32 %v2137, %v2137
    %v2430 = vmul.f32 %v2139, %v2139
    %v2431 = vmul.f32 %v1948, %v1948
    %v2432 = vmul.f32 %v1950, %v1950
    %v2433 = vmul.f32 %v2141, %v2141
    %v2434 = vmul.f32 %v2143, %v2143
    %v2435 = vmul.f32 %v1954, %v1954
    %v2436 = vmul.f32 %v1956, %v1956
    %v2437 = vmul.f32 %v2147, %v2147
    %v2438 = vmul.f32 %v2149, %v2149
    %v2439 = vmul.f32 %v1958, %v1958
    %v2440 = vmul.f32 %v1960, %v1960
    %v2441 = vmul.f32 %v2151, %v2151
    %v2442 = vmul.f32 %v2153, %v2153
    %v2443 = vmul.f32 %v1964, %v1964
    %v2444 = vmul.f32 %v1966, %v1966
    %v2445 = vmul.f32 %v2157, %v2157
    %v2446 = vmul.f32 %v2159, %v2159
    %v2447 = vmul.f32 %v1968, %v1968
    %v2448 = vmul.f32 %v1970, %v1970
    %v2449 = vmul.f32 %v2161, %v2161
    %v2450 = vmul.f32 %v2163, %v2163
    %v2451 = vmul.f32 %v1974, %v1974
    %v2452 = vmul.f32 %v1976, %v1976
    %v2453 = vmul.f32 %v2167, %v2167
    %v2454 = vmul.f32 %v2169, %v2169
    %v2455 = vmul.f32 %v1978, %v1978
    %v2456 = vmul.f32 %v1980, %v1980
    %v2457 = vmul.f32 %v2171, %v2171
    %v2458 = vmul.f32 %v2173, %v2173
    %v2459 = vmul.f32 %v1984, %v1984
    %v2460 = vmul.f32 %v1986, %v1986
    %v2461 = vmul.f32 %v2177, %v2177
    %v2462 = vmul.f32 %v2179, %v2179
    %v2463 = vmul.f32 %v1988, %v1988
    %v2464 = vmul.f32 %v1990, %v1990
    %v2465 = vmul.f32 %v2181, %v2181
    %v2466 = vmul.f32 %v2183, %v2183
    %v2467 = vmul.f32 %v1994, %v1994
    %v2468 = vmul.f32 %v1996, %v1996
    %v2469 = vmul.f32 %v2187, %v2187
    %v2470 = vmul.f32 %v2189, %v2189
    %v2471 = vmul.f32 %v1998, %v1998
    %v2472 = vmul.f32 %v2000, %v2000
    %v2473 = vmul.f32 %v2191, %v2191
    %v2474 = vmul.f32 %v2193, %v2193
    %v2475 = vmul.f32 %v2004, %v2004
    %v2476 = vmul.f32 %v2006, %v2006
    %v2477 = vmul.f32 %v2197, %v2197
    %v2478 = vmul.f32 %v2199, %v2199
    %v2479 = vmul.f32 %v2008, %v2008
    %v2480 = vmul.f32 %v2010, %v2010
    %v2481 = vmul.f32 %v2201, %v2201
    %v2482 = vmul.f32 %v2203, %v2203
    %v2483 = vadd.f32 %v2355, %v2359
    %v2484 = vadd.f32 %v2483, %v2363
    %v2485 = vadd.f32 %v2484, %v2367
    %v2486 = vadd.f32 %v2485, %v2371
    %v2487 = vadd.f32 %v2486, %v2375
    %v2488 = vadd.f32 %v2487, %v2379
    %v2489 = vadd.f32 %v2488, %v2383
    %v2490 = vadd.f32 %v2489, %v2387
    %v2491 = vadd.f32 %v2490, %v2391
    %v2492 = vadd.f32 %v2491, %v2395
    %v2493 = vadd.f32 %v2492, %v2399
    %v2494 = vadd.f32 %v2493, %v2403
    %v2495 = vadd.f32 %v2494, %v2407
    %v2496 = vadd.f32 %v2495, %v2411
    %v2497 = vadd.f32 %v2496, %v2415
    %v2498 = vadd.f32 %v2497, %v2419
    %v2499 = vadd.f32 %v2498, %v2423
    %v2500 = vadd.f32 %v2499, %v2427
    %v2501 = vadd.f32 %v2500, %v2431
    %v2502 = vadd.f32 %v2501, %v2435
    %v2503 = vadd.f32 %v2502, %v2439
    %v2504 = vadd.f32 %v2503, %v2443
    %v2505 = vadd.f32 %v2504, %v2447
    %v2506 = vadd.f32 %v2505, %v2451
    %v2507 = vadd.f32 %v2506, %v2455
    %v2508 = vadd.f32 %v2507, %v2459
    %v2509 = vadd.f32 %v2508, %v2463
    %v2510 = vadd.f32 %v2509, %v2467
    %v2511 = vadd.f32 %v2510, %v2471
    %v2512 = vadd.f32 %v2511, %v2475
    %v2513 = vadd.f32 %v2512, %v2479
    %v2514 = vrot.slane %v2513, 4
    %v2515 = vadd.f32 %v2513, %v2514
    %v2516 = vrot.slane %v2515, 2
    %v2517 = vadd.f32 %v2515, %v2516
    %v2518 = vrot.slane %v2517, 1
    %v2519 = vadd.f32 %v2517, %v2518
    %v2520 = vadd.f32 %v2356, %v2360
    %v2521 = vadd.f32 %v2520, %v2364
    %v2522 = vadd.f32 %v2521, %v2368
    %v2523 = vadd.f32 %v2522, %v2372
    %v2524 = vadd.f32 %v2523, %v2376
    %v2525 = vadd.f32 %v2524, %v2380
    %v2526 = vadd.f32 %v2525, %v2384
    %v2527 = vadd.f32 %v2526, %v2388
    %v2528 = vadd.f32 %v2527, %v2392
    %v2529 = vadd.f32 %v2528, %v2396
    %v2530 = vadd.f32 %v2529, %v2400
    %v2531 = vadd.f32 %v2530, %v2404
    %v2532 = vadd.f32 %v2531, %v2408
    %v2533 = vadd.f32 %v2532, %v2412
    %v2534 = vadd.f32 %v2533, %v2416
    %v2535 = vadd.f32 %v2534, %v2420
    %v2536 = vadd.f32 %v2535, %v2424
    %v2537 = vadd.f32 %v2536, %v2428
    %v2538 = vadd.f32 %v2537, %v2432
    %v2539 = vadd.f32 %v2538, %v2436
    %v2540 = vadd.f32 %v2539, %v2440
    %v2541 = vadd.f32 %v2540, %v2444
    %v2542 = vadd.f32 %v2541, %v2448
    %v2543 = vadd.f32 %v2542, %v2452
    %v2544 = vadd.f32 %v2543, %v2456
    %v2545 = vadd.f32 %v2544, %v2460
    %v2546 = vadd.f32 %v2545, %v2464
    %v2547 = vadd.f32 %v2546, %v2468
    %v2548 = vadd.f32 %v2547, %v2472
    %v2549 = vadd.f32 %v2548, %v2476
    %v2550 = vadd.f32 %v2549, %v2480
    %v2551 = vrot.slane %v2550, 4
    %v2552 = vadd.f32 %v2550, %v2551
    %v2553 = vrot.slane %v2552, 2
    %v2554 = vadd.f32 %v2552, %v2553
    %v2555 = vrot.slane %v2554, 1
    %v2556 = vadd.f32 %v2554, %v2555
    %v2557 = vadd.f32 %v2357, %v2361
    %v2558 = vadd.f32 %v2557, %v2365
    %v2559 = vadd.f32 %v2558, %v2369
    %v2560 = vadd.f32 %v2559, %v2373
    %v2561 = vadd.f32 %v2560, %v2377
    %v2562 = vadd.f32 %v2561, %v2381
    %v2563 = vadd.f32 %v2562, %v2385
    %v2564 = vadd.f32 %v2563, %v2389
    %v2565 = vadd.f32 %v2564, %v2393
    %v2566 = vadd.f32 %v2565, %v2397
    %v2567 = vadd.f32 %v2566, %v2401
    %v2568 = vadd.f32 %v2567, %v2405
    %v2569 = vadd.f32 %v2568, %v2409
    %v2570 = vadd.f32 %v2569, %v2413
    %v2571 = vadd.f32 %v2570, %v2417
    %v2572 = vadd.f32 %v2571, %v2421
    %v2573 = vadd.f32 %v2572, %v2425
    %v2574 = vadd.f32 %v2573, %v2429
    %v2575 = vadd.f32 %v2574, %v2433
    %v2576 = vadd.f32 %v2575, %v2437
    %v2577 = vadd.f32 %v2576, %v2441
    %v2578 = vadd.f32 %v2577, %v2445
    %v2579 = vadd.f32 %v2578, %v2449
    %v2580 = vadd.f32 %v2579, %v2453
    %v2581 = vadd.f32 %v2580, %v2457
    %v2582 = vadd.f32 %v2581, %v2461
    %v2583 = vadd.f32 %v2582, %v2465
    %v2584 = vadd.f32 %v2583, %v2469
    %v2585 = vadd.f32 %v2584, %v2473
    %v2586 = vadd.f32 %v2585, %v2477
    %v2587 = vadd.f32 %v2586, %v2481
    %v2588 = vrot.slane %v2587, 4
    %v2589 = vadd.f32 %v2587, %v2588
    %v2590 = vrot.slane %v2589, 2
    %v2591 = vadd.f32 %v2589, %v2590
    %v2592 = vrot.slane %v2591, 1
    %v2593 = vadd.f32 %v2591, %v2592
    %v2594 = vadd.f32 %v2358, %v2362
    %v2595 = vadd.f32 %v2594, %v2366
    %v2596 = vadd.f32 %v2595, %v2370
    %v2597 = vadd.f32 %v2596, %v2374
    %v2598 = vadd.f32 %v2597, %v2378
    %v2599 = vadd.f32 %v2598, %v2382
    %v2600 = vadd.f32 %v2599, %v2386
    %v2601 = vadd.f32 %v2600, %v2390
    %v2602 = vadd.f32 %v2601, %v2394
    %v2603 = vadd.f32 %v2602, %v2398
    %v2604 = vadd.f32 %v2603, %v2402
    %v2605 = vadd.f32 %v2604, %v2406
    %v2606 = vadd.f32 %v2605, %v2410
    %v2607 = vadd.f32 %v2606, %v2414
    %v2608 = vadd.f32 %v2607, %v2418
    %v2609 = vadd.f32 %v2608, %v2422
    %v2610 = vadd.f32 %v2609, %v2426
    %v2611 = vadd.f32 %v2610, %v2430
    %v2612 = vadd.f32 %v2611, %v2434
    %v2613 = vadd.f32 %v2612, %v2438
    %v2614 = vadd.f32 %v2613, %v2442
    %v2615 = vadd.f32 %v2614, %v2446
    %v2616 = vadd.f32 %v2615, %v2450
    %v2617 = vadd.f32 %v2616, %v2454
    %v2618 = vadd.f32 %v2617, %v2458
    %v2619 = vadd.f32 %v2618, %v2462
    %v2620 = vadd.f32 %v2619, %v2466
    %v2621 = vadd.f32 %v2620, %v2470
    %v2622 = vadd.f32 %v2621, %v2474
    %v2623 = vadd.f32 %v2622, %v2478
    %v2624 = vadd.f32 %v2623, %v2482
    %v2625 = vrot.slane %v2624, 4
    %v2626 = vadd.f32 %v2624, %v2625
    %v2627 = vrot.slane %v2626, 2
    %v2628 = vadd.f32 %v2626, %v2627
    %v2629 = vrot.slane %v2628, 1
    %v2630 = vadd.f32 %v2628, %v2629
    %v2631 = vmul.f32 %v2243, 0.00390625
    %v2632 = vmul.f32 %v2280, 0.00390625
    %v2633 = vmul.f32 %v2317, 0.00390625
    %v2634 = vmul.f32 %v2354, 0.00390625
    %v2635 = vmul.f32 %v2519, 0.00390625
    %v2636 = vmul.f32 %v2556, 0.00390625
    %v2637 = vmul.f32 %v2593, 0.00390625
    %v2638 = vmul.f32 %v2630, 0.00390625
    %v2639 = vmul.f32 %v2631, %v2631
    %v2640 = vmul.f32 %v2632, %v2632
    %v2641 = vmul.f32 %v2633, %v2633
    %v2642 = vmul.f32 %v2634, %v2634
    %v2643 = vsub.f32 %v2635, %v2639
    %v2644 = vsub.f32 %v2636, %v2640
    %v2645 = vsub.f32 %v2637, %v2641
    %v2646 = vsub.f32 %v2638, %v2642
    %v2647 = vadd.f32 %v2643, 0.8
    %v2648 = vadd.f32 %v2644, 0.8
    %v2649 = vadd.f32 %v2645, 0.8
    %v2650 = vadd.f32 %v2646, 0.8
    %v2651 = vrsqrt.pop %v2647
    %v2652 = vrsqrt.pop %v2648
    %v2653 = vrsqrt.pop %v2649
    %v2654 = vrsqrt.pop %v2650
    %v2659 = vcombine.low %v2651, %v2652
    %v2660 = vcombine.low %v2653, %v2654
    %v2662 = vunpack.c.l.s4 1966171168
    %v2663 = vunpack.c.0.s8 %v2662
    %v2664 = vlaneseq
    %v2665 = vshrl.u32 %v2664, 7
    %v2666 = vsub.s32 %v2663, %v2665
    %v2667 = vrot.slane %v2659, %v2666
    %v2669 = vunpack.c.l.s4 1966171168
    %v2670 = vunpack.c.0.s8 %v2669
    %v2671 = vlaneseq
    %v2672 = vshrl.u32 %v2671, 7
    %v2673 = vsub.s32 %v2670, %v2672
    %v2674 = vrot.slane %v2660, %v2673
    %v2675 = vcombine.low %v2667, %v2674
    %v2677 = vunpack.c.l.s4 1966171168
    %v2678 = vunpack.c.0.s8 %v2677
    %v2679 = vlaneseq
    %v2680 = vshrl.u32 %v2679, 7
    %v2681 = vsub.s32 %v2678, %v2680
    %v2682 = vrot.slane %v2675, %v2681
    %v2684 = vmul.f32 %v2205, %v2682
    %v2686 = vlaneseq
    %v2687 = vshrl.u32 %v2686, 7
    %v2688 = vsub.s32 0, %v2687
    %v2689 = vrot.slane %v2684, %v2688
    %v2690 = vlaneseq
    %v2691 = vshrl.u32 %v2690, 7
    %v2692 = vsub.s32 1, %v2691
    %v2693 = vrot.slane %v2684, %v2692
    %v2694 = vlaneseq
    %v2695 = vshrl.u32 %v2694, 7
    %v2696 = vsub.s32 2, %v2695
    %v2697 = vrot.slane %v2684, %v2696
    %v2698 = vlaneseq
    %v2699 = vshrl.u32 %v2698, 7
    %v2700 = vsub.s32 3, %v2699
    %v2701 = vrot.slane %v2684, %v2700
    %v2706 = vmul.f32 %v2631, %v2689
    %v2707 = vmul.f32 %v2632, %v2693
    %v2708 = vmul.f32 %v2633, %v2697
    %v2709 = vmul.f32 %v2634, %v2701
    %v2714 = vcombine.low %v2706, %v2707
    %v2715 = vcombine.low %v2708, %v2709
    %v2717 = vunpack.c.l.s4 1966171168
    %v2718 = vunpack.c.0.s8 %v2717
    %v2719 = vlaneseq
    %v2720 = vshrl.u32 %v2719, 7
    %v2721 = vsub.s32 %v2718, %v2720
    %v2722 = vrot.slane %v2714, %v2721
    %v2724 = vunpack.c.l.s4 1966171168
    %v2725 = vunpack.c.0.s8 %v2724
    %v2726 = vlaneseq
    %v2727 = vshrl.u32 %v2726, 7
    %v2728 = vsub.s32 %v2725, %v2727
    %v2729 = vrot.slane %v2715, %v2728
    %v2730 = vcombine.low %v2722, %v2729
    %v2732 = vunpack.c.l.s4 1966171168
    %v2733 = vunpack.c.0.s8 %v2732
    %v2734 = vlaneseq
    %v2735 = vshrl.u32 %v2734, 7
    %v2736 = vsub.s32 %v2733, %v2735
    %v2737 = vrot.slane %v2730, %v2736
    %v2739 = vsub.f32 %v2206, %v2737
    %v2740 = vmul.f32 %v1854, %v2689
    %v2741 = vmul.f32 %v1856, %v2693
    %v2742 = vmul.f32 %v2047, %v2697
    %v2743 = vmul.f32 %v2049, %v2701
    %v2744 = vmul.f32 %v1858, %v2689
    %v2745 = vmul.f32 %v1860, %v2693
    %v2746 = vmul.f32 %v2051, %v2697
    %v2747 = vmul.f32 %v2053, %v2701
    %v2748 = vmul.f32 %v1864, %v2689
    %v2749 = vmul.f32 %v1866, %v2693
    %v2750 = vmul.f32 %v2057, %v2697
    %v2751 = vmul.f32 %v2059, %v2701
    %v2752 = vmul.f32 %v1868, %v2689
    %v2753 = vmul.f32 %v1870, %v2693
    %v2754 = vmul.f32 %v2061, %v2697
    %v2755 = vmul.f32 %v2063, %v2701
    %v2756 = vmul.f32 %v1874, %v2689
    %v2757 = vmul.f32 %v1876, %v2693
    %v2758 = vmul.f32 %v2067, %v2697
    %v2759 = vmul.f32 %v2069, %v2701
    %v2760 = vmul.f32 %v1878, %v2689
    %v2761 = vmul.f32 %v1880, %v2693
    %v2762 = vmul.f32 %v2071, %v2697
    %v2763 = vmul.f32 %v2073, %v2701
    %v2764 = vmul.f32 %v1884, %v2689
    %v2765 = vmul.f32 %v1886, %v2693
    %v2766 = vmul.f32 %v2077, %v2697
    %v2767 = vmul.f32 %v2079, %v2701
    %v2768 = vmul.f32 %v1888, %v2689
    %v2769 = vmul.f32 %v1890, %v2693
    %v2770 = vmul.f32 %v2081, %v2697
    %v2771 = vmul.f32 %v2083, %v2701
    %v2772 = vmul.f32 %v1894, %v2689
    %v2773 = vmul.f32 %v1896, %v2693
    %v2774 = vmul.f32 %v2087, %v2697
    %v2775 = vmul.f32 %v2089, %v2701
    %v2776 = vmul.f32 %v1898, %v2689
    %v2777 = vmul.f32 %v1900, %v2693
    %v2778 = vmul.f32 %v2091, %v2697
    %v2779 = vmul.f32 %v2093, %v2701
    %v2780 = vmul.f32 %v1904, %v2689
    %v2781 = vmul.f32 %v1906, %v2693
    %v2782 = vmul.f32 %v2097, %v2697
    %v2783 = vmul.f32 %v2099, %v2701
    %v2784 = vmul.f32 %v1908, %v2689
    %v2785 = vmul.f32 %v1910, %v2693
    %v2786 = vmul.f32 %v2101, %v2697
    %v2787 = vmul.f32 %v2103, %v2701
    %v2788 = vmul.f32 %v1914, %v2689
    %v2789 = vmul.f32 %v1916, %v2693
    %v2790 = vmul.f32 %v2107, %v2697
    %v2791 = vmul.f32 %v2109, %v2701
    %v2792 = vmul.f32 %v1918, %v2689
    %v2793 = vmul.f32 %v1920, %v2693
    %v2794 = vmul.f32 %v2111, %v2697
    %v2795 = vmul.f32 %v2113, %v2701
    %v2796 = vmul.f32 %v1924, %v2689
    %v2797 = vmul.f32 %v1926, %v2693
    %v2798 = vmul.f32 %v2117, %v2697
    %v2799 = vmul.f32 %v2119, %v2701
    %v2800 = vmul.f32 %v1928, %v2689
    %v2801 = vmul.f32 %v1930, %v2693
    %v2802 = vmul.f32 %v2121, %v2697
    %v2803 = vmul.f32 %v2123, %v2701
    %v2804 = vmul.f32 %v1934, %v2689
    %v2805 = vmul.f32 %v1936, %v2693
    %v2806 = vmul.f32 %v2127, %v2697
    %v2807 = vmul.f32 %v2129, %v2701
    %v2808 = vmul.f32 %v1938, %v2689
    %v2809 = vmul.f32 %v1940, %v2693
    %v2810 = vmul.f32 %v2131, %v2697
    %v2811 = vmul.f32 %v2133, %v2701
    %v2812 = vmul.f32 %v1944, %v2689
    %v2813 = vmul.f32 %v1946, %v2693
    %v2814 = vmul.f32 %v2137, %v2697
    %v2815 = vmul.f32 %v2139, %v2701
    %v2816 = vmul.f32 %v1948, %v2689
    %v2817 = vmul.f32 %v1950, %v2693
    %v2818 = vmul.f32 %v2141, %v2697
    %v2819 = vmul.f32 %v2143, %v2701
    %v2820 = vmul.f32 %v1954, %v2689
    %v2821 = vmul.f32 %v1956, %v2693
    %v2822 = vmul.f32 %v2147, %v2697
    %v2823 = vmul.f32 %v2149, %v2701
    %v2824 = vmul.f32 %v1958, %v2689
    %v2825 = vmul.f32 %v1960, %v2693
    %v2826 = vmul.f32 %v2151, %v2697
    %v2827 = vmul.f32 %v2153, %v2701
    %v2828 = vmul.f32 %v1964, %v2689
    %v2829 = vmul.f32 %v1966, %v2693
    %v2830 = vmul.f32 %v2157, %v2697
    %v2831 = vmul.f32 %v2159, %v2701
    %v2832 = vmul.f32 %v1968, %v2689
    %v2833 = vmul.f32 %v1970, %v2693
    %v2834 = vmul.f32 %v2161, %v2697
    %v2835 = vmul.f32 %v2163, %v2701
    %v2836 = vmul.f32 %v1974, %v2689
    %v2837 = vmul.f32 %v1976, %v2693
    %v2838 = vmul.f32 %v2167, %v2697
    %v2839 = vmul.f32 %v2169, %v2701
    %v2840 = vmul.f32 %v1978, %v2689
    %v2841 = vmul.f32 %v1980, %v2693
    %v2842 = vmul.f32 %v2171, %v2697
    %v2843 = vmul.f32 %v2173, %v2701
    %v2844 = vmul.f32 %v1984, %v2689
    %v2845 = vmul.f32 %v1986, %v2693
    %v2846 = vmul.f32 %v2177, %v2697
    %v2847 = vmul.f32 %v2179, %v2701
    %v2848 = vmul.f32 %v1988, %v2689
    %v2849 = vmul.f32 %v1990, %v2693
    %v2850 = vmul.f32 %v2181, %v2697
    %v2851 = vmul.f32 %v2183, %v2701
    %v2852 = vmul.f32 %v1994, %v2689
    %v2853 = vmul.f32 %v1996, %v2693
    %v2854 = vmul.f32 %v2187, %v2697
    %v2855 = vmul.f32 %v2189, %v2701
    %v2856 = vmul.f32 %v1998, %v2689
    %v2857 = vmul.f32 %v2000, %v2693
    %v2858 = vmul.f32 %v2191, %v2697
    %v2859 = vmul.f32 %v2193, %v2701
    %v2860 = vmul.f32 %v2004, %v2689
    %v2861 = vmul.f32 %v2006, %v2693
    %v2862 = vmul.f32 %v2197, %v2697
    %v2863 = vmul.f32 %v2199, %v2701
    %v2864 = vmul.f32 %v2008, %v2689
    %v2865 = vmul.f32 %v2010, %v2693
    %v2866 = vmul.f32 %v2201, %v2697
    %v2867 = vmul.f32 %v2203, %v2701
    %v2869 = vlaneseq
    %v2870 = vshrl.u32 %v2869, 7
    %v2871 = vsub.s32 0, %v2870
    %v2872 = vrot.slane %v2739, %v2871
    %v2873 = vlaneseq
    %v2874 = vshrl.u32 %v2873, 7
    %v2875 = vsub.s32 1, %v2874
    %v2876 = vrot.slane %v2739, %v2875
    %v2877 = vlaneseq
    %v2878 = vshrl.u32 %v2877, 7
    %v2879 = vsub.s32 2, %v2878
    %v2880 = vrot.slane %v2739, %v2879
    %v2881 = vlaneseq
    %v2882 = vshrl.u32 %v2881, 7
    %v2883 = vsub.s32 3, %v2882
    %v2884 = vrot.slane %v2739, %v2883
    %v2889 = vadd.f32 %v2740, %v2872
    %v2890 = vadd.f32 %v2741, %v2876
    %v2891 = vadd.f32 %v2742, %v2880
    %v2892 = vadd.f32 %v2743, %v2884
    %v2893 = vadd.f32 %v2744, %v2872
    %v2894 = vadd.f32 %v2745, %v2876
    %v2895 = vadd.f32 %v2746, %v2880
    %v2896 = vadd.f32 %v2747, %v2884
    %v2897 = vadd.f32 %v2748, %v2872
    %v2898 = vadd.f32 %v2749, %v2876
    %v2899 = vadd.f32 %v2750, %v2880
    %v2900 = vadd.f32 %v2751, %v2884
    %v2901 = vadd.f32 %v2752, %v2872
    %v2902 = vadd.f32 %v2753, %v2876
    %v2903 = vadd.f32 %v2754, %v2880
    %v2904 = vadd.f32 %v2755, %v2884
    %v2905 = vadd.f32 %v2756, %v2872
    %v2906 = vadd.f32 %v2757, %v2876
    %v2907 = vadd.f32 %v2758, %v2880
    %v2908 = vadd.f32 %v2759, %v2884
    %v2909 = vadd.f32 %v2760, %v2872
    %v2910 = vadd.f32 %v2761, %v2876
    %v2911 = vadd.f32 %v2762, %v2880
    %v2912 = vadd.f32 %v2763, %v2884
    %v2913 = vadd.f32 %v2764, %v2872
    %v2914 = vadd.f32 %v2765, %v2876
    %v2915 = vadd.f32 %v2766, %v2880
    %v2916 = vadd.f32 %v2767, %v2884
    %v2917 = vadd.f32 %v2768, %v2872
    %v2918 = vadd.f32 %v2769, %v2876
    %v2919 = vadd.f32 %v2770, %v2880
    %v2920 = vadd.f32 %v2771, %v2884
    %v2921 = vadd.f32 %v2772, %v2872
    %v2922 = vadd.f32 %v2773, %v2876
    %v2923 = vadd.f32 %v2774, %v2880
    %v2924 = vadd.f32 %v2775, %v2884
    %v2925 = vadd.f32 %v2776, %v2872
    %v2926 = vadd.f32 %v2777, %v2876
    %v2927 = vadd.f32 %v2778, %v2880
    %v2928 = vadd.f32 %v2779, %v2884
    %v2929 = vadd.f32 %v2780, %v2872
    %v2930 = vadd.f32 %v2781, %v2876
    %v2931 = vadd.f32 %v2782, %v2880
    %v2932 = vadd.f32 %v2783, %v2884
    %v2933 = vadd.f32 %v2784, %v2872
    %v2934 = vadd.f32 %v2785, %v2876
    %v2935 = vadd.f32 %v2786, %v2880
    %v2936 = vadd.f32 %v2787, %v2884
    %v2937 = vadd.f32 %v2788, %v2872
    %v2938 = vadd.f32 %v2789, %v2876
    %v2939 = vadd.f32 %v2790, %v2880
    %v2940 = vadd.f32 %v2791, %v2884
    %v2941 = vadd.f32 %v2792, %v2872
    %v2942 = vadd.f32 %v2793, %v2876
    %v2943 = vadd.f32 %v2794, %v2880
    %v2944 = vadd.f32 %v2795, %v2884
    %v2945 = vadd.f32 %v2796, %v2872
    %v2946 = vadd.f32 %v2797, %v2876
    %v2947 = vadd.f32 %v2798, %v2880
    %v2948 = vadd.f32 %v2799, %v2884
    %v2949 = vadd.f32 %v2800, %v2872
    %v2950 = vadd.f32 %v2801, %v2876
    %v2951 = vadd.f32 %v2802, %v2880
    %v2952 = vadd.f32 %v2803, %v2884
    %v2953 = vadd.f32 %v2804, %v2872
    %v2954 = vadd.f32 %v2805, %v2876
    %v2955 = vadd.f32 %v2806, %v2880
    %v2956 = vadd.f32 %v2807, %v2884
    %v2957 = vadd.f32 %v2808, %v2872
    %v2958 = vadd.f32 %v2809, %v2876
    %v2959 = vadd.f32 %v2810, %v2880
    %v2960 = vadd.f32 %v2811, %v2884
    %v2961 = vadd.f32 %v2812, %v2872
    %v2962 = vadd.f32 %v2813, %v2876
    %v2963 = vadd.f32 %v2814, %v2880
    %v2964 = vadd.f32 %v2815, %v2884
    %v2965 = vadd.f32 %v2816, %v2872
    %v2966 = vadd.f32 %v2817, %v2876
    %v2967 = vadd.f32 %v2818, %v2880
    %v2968 = vadd.f32 %v2819, %v2884
    %v2969 = vadd.f32 %v2820, %v2872
    %v2970 = vadd.f32 %v2821, %v2876
    %v2971 = vadd.f32 %v2822, %v2880
    %v2972 = vadd.f32 %v2823, %v2884
    %v2973 = vadd.f32 %v2824, %v2872
    %v2974 = vadd.f32 %v2825, %v2876
    %v2975 = vadd.f32 %v2826, %v2880
    %v2976 = vadd.f32 %v2827, %v2884
    %v2977 = vadd.f32 %v2828, %v2872
    %v2978 = vadd.f32 %v2829, %v2876
    %v2979 = vadd.f32 %v2830, %v2880
    %v2980 = vadd.f32 %v2831, %v2884
    %v2981 = vadd.f32 %v2832, %v2872
    %v2982 = vadd.f32 %v2833, %v2876
    %v2983 = vadd.f32 %v2834, %v2880
    %v2984 = vadd.f32 %v2835, %v2884
    %v2985 = vadd.f32 %v2836, %v2872
    %v2986 = vadd.f32 %v2837, %v2876
    %v2987 = vadd.f32 %v2838, %v2880
    %v2988 = vadd.f32 %v2839, %v2884
    %v2989 = vadd.f32 %v2840, %v2872
    %v2990 = vadd.f32 %v2841, %v2876
    %v2991 = vadd.f32 %v2842, %v2880
    %v2992 = vadd.f32 %v2843, %v2884
    %v2993 = vadd.f32 %v2844, %v2872
    %v2994 = vadd.f32 %v2845, %v2876
    %v2995 = vadd.f32 %v2846, %v2880
    %v2996 = vadd.f32 %v2847, %v2884
    %v2997 = vadd.f32 %v2848, %v2872
    %v2998 = vadd.f32 %v2849, %v2876
    %v2999 = vadd.f32 %v2850, %v2880
    %v3000 = vadd.f32 %v2851, %v2884
    %v3001 = vadd.f32 %v2852, %v2872
    %v3002 = vadd.f32 %v2853, %v2876
    %v3003 = vadd.f32 %v2854, %v2880
    %v3004 = vadd.f32 %v2855, %v2884
    %v3005 = vadd.f32 %v2856, %v2872
    %v3006 = vadd.f32 %v2857, %v2876
    %v3007 = vadd.f32 %v2858, %v2880
    %v3008 = vadd.f32 %v2859, %v2884
    %v3009 = vadd.f32 %v2860, %v2872
    %v3010 = vadd.f32 %v2861, %v2876
    %v3011 = vadd.f32 %v2862, %v2880
    %v3012 = vadd.f32 %v2863, %v2884
    %v3013 = vadd.f32 %v2864, %v2872
    %v3014 = vadd.f32 %v2865, %v2876
    %v3015 = vadd.f32 %v2866, %v2880
    %v3016 = vadd.f32 %v2867, %v2884
    %vm3017 = vcmp.gt.f32.partialorder %v2889, 0.0
    %vm3018 = vcmp.gt.f32.partialorder %v2890, 0.0
    %vm3019 = vcmp.gt.f32.partialorder %v2891, 0.0
    %vm3020 = vcmp.gt.f32.partialorder %v2892, 0.0
    %vm3021 = vcmp.gt.f32.partialorder %v2893, 0.0
    %vm3022 = vcmp.gt.f32.partialorder %v2894, 0.0
    %vm3023 = vcmp.gt.f32.partialorder %v2895, 0.0
    %vm3024 = vcmp.gt.f32.partialorder %v2896, 0.0
    %vm3025 = vcmp.gt.f32.partialorder %v2897, 0.0
    %vm3026 = vcmp.gt.f32.partialorder %v2898, 0.0
    %vm3027 = vcmp.gt.f32.partialorder %v2899, 0.0
    %vm3028 = vcmp.gt.f32.partialorder %v2900, 0.0
    %vm3029 = vcmp.gt.f32.partialorder %v2901, 0.0
    %vm3030 = vcmp.gt.f32.partialorder %v2902, 0.0
    %vm3031 = vcmp.gt.f32.partialorder %v2903, 0.0
    %vm3032 = vcmp.gt.f32.partialorder %v2904, 0.0
    %vm3033 = vcmp.gt.f32.partialorder %v2905, 0.0
    %vm3034 = vcmp.gt.f32.partialorder %v2906, 0.0
    %vm3035 = vcmp.gt.f32.partialorder %v2907, 0.0
    %vm3036 = vcmp.gt.f32.partialorder %v2908, 0.0
    %vm3037 = vcmp.gt.f32.partialorder %v2909, 0.0
    %vm3038 = vcmp.gt.f32.partialorder %v2910, 0.0
    %vm3039 = vcmp.gt.f32.partialorder %v2911, 0.0
    %vm3040 = vcmp.gt.f32.partialorder %v2912, 0.0
    %vm3041 = vcmp.gt.f32.partialorder %v2913, 0.0
    %vm3042 = vcmp.gt.f32.partialorder %v2914, 0.0
    %vm3043 = vcmp.gt.f32.partialorder %v2915, 0.0
    %vm3044 = vcmp.gt.f32.partialorder %v2916, 0.0
    %vm3045 = vcmp.gt.f32.partialorder %v2917, 0.0
    %vm3046 = vcmp.gt.f32.partialorder %v2918, 0.0
    %vm3047 = vcmp.gt.f32.partialorder %v2919, 0.0
    %vm3048 = vcmp.gt.f32.partialorder %v2920, 0.0
    %vm3049 = vcmp.gt.f32.partialorder %v2921, 0.0
    %vm3050 = vcmp.gt.f32.partialorder %v2922, 0.0
    %vm3051 = vcmp.gt.f32.partialorder %v2923, 0.0
    %vm3052 = vcmp.gt.f32.partialorder %v2924, 0.0
    %vm3053 = vcmp.gt.f32.partialorder %v2925, 0.0
    %vm3054 = vcmp.gt.f32.partialorder %v2926, 0.0
    %vm3055 = vcmp.gt.f32.partialorder %v2927, 0.0
    %vm3056 = vcmp.gt.f32.partialorder %v2928, 0.0
    %vm3057 = vcmp.gt.f32.partialorder %v2929, 0.0
    %vm3058 = vcmp.gt.f32.partialorder %v2930, 0.0
    %vm3059 = vcmp.gt.f32.partialorder %v2931, 0.0
    %vm3060 = vcmp.gt.f32.partialorder %v2932, 0.0
    %vm3061 = vcmp.gt.f32.partialorder %v2933, 0.0
    %vm3062 = vcmp.gt.f32.partialorder %v2934, 0.0
    %vm3063 = vcmp.gt.f32.partialorder %v2935, 0.0
    %vm3064 = vcmp.gt.f32.partialorder %v2936, 0.0
    %vm3065 = vcmp.gt.f32.partialorder %v2937, 0.0
    %vm3066 = vcmp.gt.f32.partialorder %v2938, 0.0
    %vm3067 = vcmp.gt.f32.partialorder %v2939, 0.0
    %vm3068 = vcmp.gt.f32.partialorder %v2940, 0.0
    %vm3069 = vcmp.gt.f32.partialorder %v2941, 0.0
    %vm3070 = vcmp.gt.f32.partialorder %v2942, 0.0
    %vm3071 = vcmp.gt.f32.partialorder %v2943, 0.0
    %vm3072 = vcmp.gt.f32.partialorder %v2944, 0.0
    %vm3073 = vcmp.gt.f32.partialorder %v2945, 0.0
    %vm3074 = vcmp.gt.f32.partialorder %v2946, 0.0
    %vm3075 = vcmp.gt.f32.partialorder %v2947, 0.0
    %vm3076 = vcmp.gt.f32.partialorder %v2948, 0.0
    %vm3077 = vcmp.gt.f32.partialorder %v2949, 0.0
    %vm3078 = vcmp.gt.f32.partialorder %v2950, 0.0
    %vm3079 = vcmp.gt.f32.partialorder %v2951, 0.0
    %vm3080 = vcmp.gt.f32.partialorder %v2952, 0.0
    %vm3081 = vcmp.gt.f32.partialorder %v2953, 0.0
    %vm3082 = vcmp.gt.f32.partialorder %v2954, 0.0
    %vm3083 = vcmp.gt.f32.partialorder %v2955, 0.0
    %vm3084 = vcmp.gt.f32.partialorder %v2956, 0.0
    %vm3085 = vcmp.gt.f32.partialorder %v2957, 0.0
    %vm3086 = vcmp.gt.f32.partialorder %v2958, 0.0
    %vm3087 = vcmp.gt.f32.partialorder %v2959, 0.0
    %vm3088 = vcmp.gt.f32.partialorder %v2960, 0.0
    %vm3089 = vcmp.gt.f32.partialorder %v2961, 0.0
    %vm3090 = vcmp.gt.f32.partialorder %v2962, 0.0
    %vm3091 = vcmp.gt.f32.partialorder %v2963, 0.0
    %vm3092 = vcmp.gt.f32.partialorder %v2964, 0.0
    %vm3093 = vcmp.gt.f32.partialorder %v2965, 0.0
    %vm3094 = vcmp.gt.f32.partialorder %v2966, 0.0
    %vm3095 = vcmp.gt.f32.partialorder %v2967, 0.0
    %vm3096 = vcmp.gt.f32.partialorder %v2968, 0.0
    %vm3097 = vcmp.gt.f32.partialorder %v2969, 0.0
    %vm3098 = vcmp.gt.f32.partialorder %v2970, 0.0
    %vm3099 = vcmp.gt.f32.partialorder %v2971, 0.0
    %vm3100 = vcmp.gt.f32.partialorder %v2972, 0.0
    %vm3101 = vcmp.gt.f32.partialorder %v2973, 0.0
    %vm3102 = vcmp.gt.f32.partialorder %v2974, 0.0
    %vm3103 = vcmp.gt.f32.partialorder %v2975, 0.0
    %vm3104 = vcmp.gt.f32.partialorder %v2976, 0.0
    %vm3105 = vcmp.gt.f32.partialorder %v2977, 0.0
    %vm3106 = vcmp.gt.f32.partialorder %v2978, 0.0
    %vm3107 = vcmp.gt.f32.partialorder %v2979, 0.0
    %vm3108 = vcmp.gt.f32.partialorder %v2980, 0.0
    %vm3109 = vcmp.gt.f32.partialorder %v2981, 0.0
    %vm3110 = vcmp.gt.f32.partialorder %v2982, 0.0
    %vm3111 = vcmp.gt.f32.partialorder %v2983, 0.0
    %vm3112 = vcmp.gt.f32.partialorder %v2984, 0.0
    %vm3113 = vcmp.gt.f32.partialorder %v2985, 0.0
    %vm3114 = vcmp.gt.f32.partialorder %v2986, 0.0
    %vm3115 = vcmp.gt.f32.partialorder %v2987, 0.0
    %vm3116 = vcmp.gt.f32.partialorder %v2988, 0.0
    %vm3117 = vcmp.gt.f32.partialorder %v2989, 0.0
    %vm3118 = vcmp.gt.f32.partialorder %v2990, 0.0
    %vm3119 = vcmp.gt.f32.partialorder %v2991, 0.0
    %vm3120 = vcmp.gt.f32.partialorder %v2992, 0.0
    %vm3121 = vcmp.gt.f32.partialorder %v2993, 0.0
    %vm3122 = vcmp.gt.f32.partialorder %v2994, 0.0
    %vm3123 = vcmp.gt.f32.partialorder %v2995, 0.0
    %vm3124 = vcmp.gt.f32.partialorder %v2996, 0.0
    %vm3125 = vcmp.gt.f32.partialorder %v2997, 0.0
    %vm3126 = vcmp.gt.f32.partialorder %v2998, 0.0
    %vm3127 = vcmp.gt.f32.partialorder %v2999, 0.0
    %vm3128 = vcmp.gt.f32.partialorder %v3000, 0.0
    %vm3129 = vcmp.gt.f32.partialorder %v3001, 0.0
    %vm3130 = vcmp.gt.f32.partialorder %v3002, 0.0
    %vm3131 = vcmp.gt.f32.partialorder %v3003, 0.0
    %vm3132 = vcmp.gt.f32.partialorder %v3004, 0.0
    %vm3133 = vcmp.gt.f32.partialorder %v3005, 0.0
    %vm3134 = vcmp.gt.f32.partialorder %v3006, 0.0
    %vm3135 = vcmp.gt.f32.partialorder %v3007, 0.0
    %vm3136 = vcmp.gt.f32.partialorder %v3008, 0.0
    %vm3137 = vcmp.gt.f32.partialorder %v3009, 0.0
    %vm3138 = vcmp.gt.f32.partialorder %v3010, 0.0
    %vm3139 = vcmp.gt.f32.partialorder %v3011, 0.0
    %vm3140 = vcmp.gt.f32.partialorder %v3012, 0.0
    %vm3141 = vcmp.gt.f32.partialorder %v3013, 0.0
    %vm3142 = vcmp.gt.f32.partialorder %v3014, 0.0
    %vm3143 = vcmp.gt.f32.partialorder %v3015, 0.0
    %vm3144 = vcmp.gt.f32.partialorder %v3016, 0.0
    %v3145 = vmul.f32 %v2889, 0.2
    %v3146 = vmul.f32 %v2890, 0.2
    %v3147 = vmul.f32 %v2891, 0.2
    %v3148 = vmul.f32 %v2892, 0.2
    %v3149 = vmul.f32 %v2893, 0.2
    %v3150 = vmul.f32 %v2894, 0.2
    %v3151 = vmul.f32 %v2895, 0.2
    %v3152 = vmul.f32 %v2896, 0.2
    %v3153 = vmul.f32 %v2897, 0.2
    %v3154 = vmul.f32 %v2898, 0.2
    %v3155 = vmul.f32 %v2899, 0.2
    %v3156 = vmul.f32 %v2900, 0.2
    %v3157 = vmul.f32 %v2901, 0.2
    %v3158 = vmul.f32 %v2902, 0.2
    %v3159 = vmul.f32 %v2903, 0.2
    %v3160 = vmul.f32 %v2904, 0.2
    %v3161 = vmul.f32 %v2905, 0.2
    %v3162 = vmul.f32 %v2906, 0.2
    %v3163 = vmul.f32 %v2907, 0.2
    %v3164 = vmul.f32 %v2908, 0.2
    %v3165 = vmul.f32 %v2909, 0.2
    %v3166 = vmul.f32 %v2910, 0.2
    %v3167 = vmul.f32 %v2911, 0.2
    %v3168 = vmul.f32 %v2912, 0.2
    %v3169 = vmul.f32 %v2913, 0.2
    %v3170 = vmul.f32 %v2914, 0.2
    %v3171 = vmul.f32 %v2915, 0.2
    %v3172 = vmul.f32 %v2916, 0.2
    %v3173 = vmul.f32 %v2917, 0.2
    %v3174 = vmul.f32 %v2918, 0.2
    %v3175 = vmul.f32 %v2919, 0.2
    %v3176 = vmul.f32 %v2920, 0.2
    %v3177 = vmul.f32 %v2921, 0.2
    %v3178 = vmul.f32 %v2922, 0.2
    %v3179 = vmul.f32 %v2923, 0.2
    %v3180 = vmul.f32 %v2924, 0.2
    %v3181 = vmul.f32 %v2925, 0.2
    %v3182 = vmul.f32 %v2926, 0.2
    %v3183 = vmul.f32 %v2927, 0.2
    %v3184 = vmul.f32 %v2928, 0.2
    %v3185 = vmul.f32 %v2929, 0.2
    %v3186 = vmul.f32 %v2930, 0.2
    %v3187 = vmul.f32 %v2931, 0.2
    %v3188 = vmul.f32 %v2932, 0.2
    %v3189 = vmul.f32 %v2933, 0.2
    %v3190 = vmul.f32 %v2934, 0.2
    %v3191 = vmul.f32 %v2935, 0.2
    %v3192 = vmul.f32 %v2936, 0.2
    %v3193 = vmul.f32 %v2937, 0.2
    %v3194 = vmul.f32 %v2938, 0.2
    %v3195 = vmul.f32 %v2939, 0.2
    %v3196 = vmul.f32 %v2940, 0.2
    %v3197 = vmul.f32 %v2941, 0.2
    %v3198 = vmul.f32 %v2942, 0.2
    %v3199 = vmul.f32 %v2943, 0.2
    %v3200 = vmul.f32 %v2944, 0.2
    %v3201 = vmul.f32 %v2945, 0.2
    %v3202 = vmul.f32 %v2946, 0.2
    %v3203 = vmul.f32 %v2947, 0.2
    %v3204 = vmul.f32 %v2948, 0.2
    %v3205 = vmul.f32 %v2949, 0.2
    %v3206 = vmul.f32 %v2950, 0.2
    %v3207 = vmul.f32 %v2951, 0.2
    %v3208 = vmul.f32 %v2952, 0.2
    %v3209 = vmul.f32 %v2953, 0.2
    %v3210 = vmul.f32 %v2954, 0.2
    %v3211 = vmul.f32 %v2955, 0.2
    %v3212 = vmul.f32 %v2956, 0.2
    %v3213 = vmul.f32 %v2957, 0.2
    %v3214 = vmul.f32 %v2958, 0.2
    %v3215 = vmul.f32 %v2959, 0.2
    %v3216 = vmul.f32 %v2960, 0.2
    %v3217 = vmul.f32 %v2961, 0.2
    %v3218 = vmul.f32 %v2962, 0.2
    %v3219 = vmul.f32 %v2963, 0.2
    %v3220 = vmul.f32 %v2964, 0.2
    %v3221 = vmul.f32 %v2965, 0.2
    %v3222 = vmul.f32 %v2966, 0.2
    %v3223 = vmul.f32 %v2967, 0.2
    %v3224 = vmul.f32 %v2968, 0.2
    %v3225 = vmul.f32 %v2969, 0.2
    %v3226 = vmul.f32 %v2970, 0.2
    %v3227 = vmul.f32 %v2971, 0.2
    %v3228 = vmul.f32 %v2972, 0.2
    %v3229 = vmul.f32 %v2973, 0.2
    %v3230 = vmul.f32 %v2974, 0.2
    %v3231 = vmul.f32 %v2975, 0.2
    %v3232 = vmul.f32 %v2976, 0.2
    %v3233 = vmul.f32 %v2977, 0.2
    %v3234 = vmul.f32 %v2978, 0.2
    %v3235 = vmul.f32 %v2979, 0.2
    %v3236 = vmul.f32 %v2980, 0.2
    %v3237 = vmul.f32 %v2981, 0.2
    %v3238 = vmul.f32 %v2982, 0.2
    %v3239 = vmul.f32 %v2983, 0.2
    %v3240 = vmul.f32 %v2984, 0.2
    %v3241 = vmul.f32 %v2985, 0.2
    %v3242 = vmul.f32 %v2986, 0.2
    %v3243 = vmul.f32 %v2987, 0.2
    %v3244 = vmul.f32 %v2988, 0.2
    %v3245 = vmul.f32 %v2989, 0.2
    %v3246 = vmul.f32 %v2990, 0.2
    %v3247 = vmul.f32 %v2991, 0.2
    %v3248 = vmul.f32 %v2992, 0.2
    %v3249 = vmul.f32 %v2993, 0.2
    %v3250 = vmul.f32 %v2994, 0.2
    %v3251 = vmul.f32 %v2995, 0.2
    %v3252 = vmul.f32 %v2996, 0.2
    %v3253 = vmul.f32 %v2997, 0.2
    %v3254 = vmul.f32 %v2998, 0.2
    %v3255 = vmul.f32 %v2999, 0.2
    %v3256 = vmul.f32 %v3000, 0.2
    %v3257 = vmul.f32 %v3001, 0.2
    %v3258 = vmul.f32 %v3002, 0.2
    %v3259 = vmul.f32 %v3003, 0.2
    %v3260 = vmul.f32 %v3004, 0.2
    %v3261 = vmul.f32 %v3005, 0.2
    %v3262 = vmul.f32 %v3006, 0.2
    %v3263 = vmul.f32 %v3007, 0.2
    %v3264 = vmul.f32 %v3008, 0.2
    %v3265 = vmul.f32 %v3009, 0.2
    %v3266 = vmul.f32 %v3010, 0.2
    %v3267 = vmul.f32 %v3011, 0.2
    %v3268 = vmul.f32 %v3012, 0.2
    %v3269 = vmul.f32 %v3013, 0.2
    %v3270 = vmul.f32 %v3014, 0.2
    %v3271 = vmul.f32 %v3015, 0.2
    %v3272 = vmul.f32 %v3016, 0.2
    %v3273 = vsel %vm3017, %v2889, %v3145
    %v3274 = vsel %vm3018, %v2890, %v3146
    %v3275 = vsel %vm3019, %v2891, %v3147
    %v3276 = vsel %vm3020, %v2892, %v3148
    %v3277 = vsel %vm3021, %v2893, %v3149
    %v3278 = vsel %vm3022, %v2894, %v3150
    %v3279 = vsel %vm3023, %v2895, %v3151
    %v3280 = vsel %vm3024, %v2896, %v3152
    %v3281 = vsel %vm3025, %v2897, %v3153
    %v3282 = vsel %vm3026, %v2898, %v3154
    %v3283 = vsel %vm3027, %v2899, %v3155
    %v3284 = vsel %vm3028, %v2900, %v3156
    %v3285 = vsel %vm3029, %v2901, %v3157
    %v3286 = vsel %vm3030, %v2902, %v3158
    %v3287 = vsel %vm3031, %v2903, %v3159
    %v3288 = vsel %vm3032, %v2904, %v3160
    %v3289 = vsel %vm3033, %v2905, %v3161
    %v3290 = vsel %vm3034, %v2906, %v3162
    %v3291 = vsel %vm3035, %v2907, %v3163
    %v3292 = vsel %vm3036, %v2908, %v3164
    %v3293 = vsel %vm3037, %v2909, %v3165
    %v3294 = vsel %vm3038, %v2910, %v3166
    %v3295 = vsel %vm3039, %v2911, %v3167
    %v3296 = vsel %vm3040, %v2912, %v3168
    %v3297 = vsel %vm3041, %v2913, %v3169
    %v3298 = vsel %vm3042, %v2914, %v3170
    %v3299 = vsel %vm3043, %v2915, %v3171
    %v3300 = vsel %vm3044, %v2916, %v3172
    %v3301 = vsel %vm3045, %v2917, %v3173
    %v3302 = vsel %vm3046, %v2918, %v3174
    %v3303 = vsel %vm3047, %v2919, %v3175
    %v3304 = vsel %vm3048, %v2920, %v3176
    %v3305 = vsel %vm3049, %v2921, %v3177
    %v3306 = vsel %vm3050, %v2922, %v3178
    %v3307 = vsel %vm3051, %v2923, %v3179
    %v3308 = vsel %vm3052, %v2924, %v3180
    %v3309 = vsel %vm3053, %v2925, %v3181
    %v3310 = vsel %vm3054, %v2926, %v3182
    %v3311 = vsel %vm3055, %v2927, %v3183
    %v3312 = vsel %vm3056, %v2928, %v3184
    %v3313 = vsel %vm3057, %v2929, %v3185
    %v3314 = vsel %vm3058, %v2930, %v3186
    %v3315 = vsel %vm3059, %v2931, %v3187
    %v3316 = vsel %vm3060, %v2932, %v3188
    %v3317 = vsel %vm3061, %v2933, %v3189
    %v3318 = vsel %vm3062, %v2934, %v3190
    %v3319 = vsel %vm3063, %v2935, %v3191
    %v3320 = vsel %vm3064, %v2936, %v3192
    %v3321 = vsel %vm3065, %v2937, %v3193
    %v3322 = vsel %vm3066, %v2938, %v3194
    %v3323 = vsel %vm3067, %v2939, %v3195
    %v3324 = vsel %vm3068, %v2940, %v3196
    %v3325 = vsel %vm3069, %v2941, %v3197
    %v3326 = vsel %vm3070, %v2942, %v3198
    %v3327 = vsel %vm3071, %v2943, %v3199
    %v3328 = vsel %vm3072, %v2944, %v3200
    %v3329 = vsel %vm3073, %v2945, %v3201
    %v3330 = vsel %vm3074, %v2946, %v3202
    %v3331 = vsel %vm3075, %v2947, %v3203
    %v3332 = vsel %vm3076, %v2948, %v3204
    %v3333 = vsel %vm3077, %v2949, %v3205
    %v3334 = vsel %vm3078, %v2950, %v3206
    %v3335 = vsel %vm3079, %v2951, %v3207
    %v3336 = vsel %vm3080, %v2952, %v3208
    %v3337 = vsel %vm3081, %v2953, %v3209
    %v3338 = vsel %vm3082, %v2954, %v3210
    %v3339 = vsel %vm3083, %v2955, %v3211
    %v3340 = vsel %vm3084, %v2956, %v3212
    %v3341 = vsel %vm3085, %v2957, %v3213
    %v3342 = vsel %vm3086, %v2958, %v3214
    %v3343 = vsel %vm3087, %v2959, %v3215
    %v3344 = vsel %vm3088, %v2960, %v3216
    %v3345 = vsel %vm3089, %v2961, %v3217
    %v3346 = vsel %vm3090, %v2962, %v3218
    %v3347 = vsel %vm3091, %v2963, %v3219
    %v3348 = vsel %vm3092, %v2964, %v3220
    %v3349 = vsel %vm3093, %v2965, %v3221
    %v3350 = vsel %vm3094, %v2966, %v3222
    %v3351 = vsel %vm3095, %v2967, %v3223
    %v3352 = vsel %vm3096, %v2968, %v3224
    %v3353 = vsel %vm3097, %v2969, %v3225
    %v3354 = vsel %vm3098, %v2970, %v3226
    %v3355 = vsel %vm3099, %v2971, %v3227
    %v3356 = vsel %vm3100, %v2972, %v3228
    %v3357 = vsel %vm3101, %v2973, %v3229
    %v3358 = vsel %vm3102, %v2974, %v3230
    %v3359 = vsel %vm3103, %v2975, %v3231
    %v3360 = vsel %vm3104, %v2976, %v3232
    %v3361 = vsel %vm3105, %v2977, %v3233
    %v3362 = vsel %vm3106, %v2978, %v3234
    %v3363 = vsel %vm3107, %v2979, %v3235
    %v3364 = vsel %vm3108, %v2980, %v3236
    %v3365 = vsel %vm3109, %v2981, %v3237
    %v3366 = vsel %vm3110, %v2982, %v3238
    %v3367 = vsel %vm3111, %v2983, %v3239
    %v3368 = vsel %vm3112, %v2984, %v3240
    %v3369 = vsel %vm3113, %v2985, %v3241
    %v3370 = vsel %vm3114, %v2986, %v3242
    %v3371 = vsel %vm3115, %v2987, %v3243
    %v3372 = vsel %vm3116, %v2988, %v3244
    %v3373 = vsel %vm3117, %v2989, %v3245
    %v3374 = vsel %vm3118, %v2990, %v3246
    %v3375 = vsel %vm3119, %v2991, %v3247
    %v3376 = vsel %vm3120, %v2992, %v3248
    %v3377 = vsel %vm3121, %v2993, %v3249
    %v3378 = vsel %vm3122, %v2994, %v3250
    %v3379 = vsel %vm3123, %v2995, %v3251
    %v3380 = vsel %vm3124, %v2996, %v3252
    %v3381 = vsel %vm3125, %v2997, %v3253
    %v3382 = vsel %vm3126, %v2998, %v3254
    %v3383 = vsel %vm3127, %v2999, %v3255
    %v3384 = vsel %vm3128, %v3000, %v3256
    %v3385 = vsel %vm3129, %v3001, %v3257
    %v3386 = vsel %vm3130, %v3002, %v3258
    %v3387 = vsel %vm3131, %v3003, %v3259
    %v3388 = vsel %vm3132, %v3004, %v3260
    %v3389 = vsel %vm3133, %v3005, %v3261
    %v3390 = vsel %vm3134, %v3006, %v3262
    %v3391 = vsel %vm3135, %v3007, %v3263
    %v3392 = vsel %vm3136, %v3008, %v3264
    %v3393 = vsel %vm3137, %v3009, %v3265
    %v3394 = vsel %vm3138, %v3010, %v3266
    %v3395 = vsel %vm3139, %v3011, %v3267
    %v3396 = vsel %vm3140, %v3012, %v3268
    %v3397 = vsel %vm3141, %v3013, %v3269
    %v3398 = vsel %vm3142, %v3014, %v3270
    %v3399 = vsel %vm3143, %v3015, %v3271
    %v3400 = vsel %vm3144, %v3016, %v3272
    %v3401 = vpack.c.bf16 %v3277, %v3273
    %v3402 = vpack.c.bf16 %v3278, %v3274
    %v3403 = vpack.c.bf16 %v3279, %v3275
    %v3404 = vpack.c.bf16 %v3280, %v3276
    %v3405 = vpack.c.bf16 %v3285, %v3281
    %v3406 = vpack.c.bf16 %v3286, %v3282
    %v3407 = vpack.c.bf16 %v3287, %v3283
    %v3408 = vpack.c.bf16 %v3288, %v3284
    %v3409 = vpack.c.bf16 %v3293, %v3289
    %v3410 = vpack.c.bf16 %v3294, %v3290
    %v3411 = vpack.c.bf16 %v3295, %v3291
    %v3412 = vpack.c.bf16 %v3296, %v3292
    %v3413 = vpack.c.bf16 %v3301, %v3297
    %v3414 = vpack.c.bf16 %v3302, %v3298
    %v3415 = vpack.c.bf16 %v3303, %v3299
    %v3416 = vpack.c.bf16 %v3304, %v3300
    %v3417 = vpack.c.bf16 %v3309, %v3305
    %v3418 = vpack.c.bf16 %v3310, %v3306
    %v3419 = vpack.c.bf16 %v3311, %v3307
    %v3420 = vpack.c.bf16 %v3312, %v3308
    %v3421 = vpack.c.bf16 %v3317, %v3313
    %v3422 = vpack.c.bf16 %v3318, %v3314
    %v3423 = vpack.c.bf16 %v3319, %v3315
    %v3424 = vpack.c.bf16 %v3320, %v3316
    %v3425 = vpack.c.bf16 %v3325, %v3321
    %v3426 = vpack.c.bf16 %v3326, %v3322
    %v3427 = vpack.c.bf16 %v3327, %v3323
    %v3428 = vpack.c.bf16 %v3328, %v3324
    %v3429 = vpack.c.bf16 %v3333, %v3329
    %v3430 = vpack.c.bf16 %v3334, %v3330
    %v3431 = vpack.c.bf16 %v3335, %v3331
    %v3432 = vpack.c.bf16 %v3336, %v3332
    %v3433 = vpack.c.bf16 %v3341, %v3337
    %v3434 = vpack.c.bf16 %v3342, %v3338
    %v3435 = vpack.c.bf16 %v3343, %v3339
    %v3436 = vpack.c.bf16 %v3344, %v3340
    %v3437 = vpack.c.bf16 %v3349, %v3345
    %v3438 = vpack.c.bf16 %v3350, %v3346
    %v3439 = vpack.c.bf16 %v3351, %v3347
    %v3440 = vpack.c.bf16 %v3352, %v3348
    %v3441 = vpack.c.bf16 %v3357, %v3353
    %v3442 = vpack.c.bf16 %v3358, %v3354
    %v3443 = vpack.c.bf16 %v3359, %v3355
    %v3444 = vpack.c.bf16 %v3360, %v3356
    %v3445 = vpack.c.bf16 %v3365, %v3361
    %v3446 = vpack.c.bf16 %v3366, %v3362
    %v3447 = vpack.c.bf16 %v3367, %v3363
    %v3448 = vpack.c.bf16 %v3368, %v3364
    %v3449 = vpack.c.bf16 %v3373, %v3369
    %v3450 = vpack.c.bf16 %v3374, %v3370
    %v3451 = vpack.c.bf16 %v3375, %v3371
    %v3452 = vpack.c.bf16 %v3376, %v3372
    %v3453 = vpack.c.bf16 %v3381, %v3377
    %v3454 = vpack.c.bf16 %v3382, %v3378
    %v3455 = vpack.c.bf16 %v3383, %v3379
    %v3456 = vpack.c.bf16 %v3384, %v3380
    %v3457 = vpack.c.bf16 %v3389, %v3385
    %v3458 = vpack.c.bf16 %v3390, %v3386
    %v3459 = vpack.c.bf16 %v3391, %v3387
    %v3460 = vpack.c.bf16 %v3392, %v3388
    %v3461 = vpack.c.bf16 %v3397, %v3393
    %v3462 = vpack.c.bf16 %v3398, %v3394
    %v3463 = vpack.c.bf16 %v3399, %v3395
    %v3464 = vpack.c.bf16 %v3400, %v3396
    %v3465 = vld [vmem:[%s4] sm:$0xff]
    %v3466 = vld [vmem:[%s4 + $0x8] sm:$0xff]
    %v3467 = vld [vmem:[%s4 + $0x10] sm:$0xff]
    %v3468 = vld [vmem:[%s4 + $0x18] sm:$0xff]
    %v3469 = vld [vmem:[%s4 + $0x20] sm:$0xff]
    %v3470 = vld [vmem:[%s4 + $0x28] sm:$0xff]
    %v3471 = vld [vmem:[%s4 + $0x30] sm:$0xff]
    %v3472 = vld [vmem:[%s4 + $0x38] sm:$0xff]
    %v3473 = vld [vmem:[%s4 + $0x40] sm:$0xff]
    %v3474 = vld [vmem:[%s4 + $0x48] sm:$0xff]
    %v3475 = vld [vmem:[%s4 + $0x50] sm:$0xff]
    %v3476 = vld [vmem:[%s4 + $0x58] sm:$0xff]
    %v3477 = vld [vmem:[%s4 + $0x60] sm:$0xff]
    %v3478 = vld [vmem:[%s4 + $0x68] sm:$0xff]
    %v3479 = vld [vmem:[%s4 + $0x70] sm:$0xff]
    %v3480 = vld [vmem:[%s4 + $0x78] sm:$0xff]
    %v3481 = vld [vmem:[%s4 + $0x80] sm:$0xff]
    %v3482 = vld [vmem:[%s4 + $0x88] sm:$0xff]
    %v3483 = vld [vmem:[%s4 + $0x90] sm:$0xff]
    %v3484 = vld [vmem:[%s4 + $0x98] sm:$0xff]
    %v3485 = vld [vmem:[%s4 + $0xa0] sm:$0xff]
    %v3486 = vld [vmem:[%s4 + $0xa8] sm:$0xff]
    %v3487 = vld [vmem:[%s4 + $0xb0] sm:$0xff]
    %v3488 = vld [vmem:[%s4 + $0xb8] sm:$0xff]
    %v3489 = vld [vmem:[%s4 + $0xc0] sm:$0xff]
    %v3490 = vld [vmem:[%s4 + $0xc8] sm:$0xff]
    %v3491 = vld [vmem:[%s4 + $0xd0] sm:$0xff]
    %v3492 = vld [vmem:[%s4 + $0xd8] sm:$0xff]
    %v3493 = vld [vmem:[%s4 + $0xe0] sm:$0xff]
    %v3494 = vld [vmem:[%s4 + $0xe8] sm:$0xff]
    %v3495 = vld [vmem:[%s4 + $0xf0] sm:$0xff]
    %v3496 = vld [vmem:[%s4 + $0xf8] sm:$0xff]
    %v3497 = vld [vmem:[%s4 + $0x100] sm:$0xff]
    %v3498 = vld [vmem:[%s4 + $0x108] sm:$0xff]
    %v3499 = vld [vmem:[%s4 + $0x110] sm:$0xff]
    %v3500 = vld [vmem:[%s4 + $0x118] sm:$0xff]
    %v3501 = vld [vmem:[%s4 + $0x120] sm:$0xff]
    %v3502 = vld [vmem:[%s4 + $0x128] sm:$0xff]
    %v3503 = vld [vmem:[%s4 + $0x130] sm:$0xff]
    %v3504 = vld [vmem:[%s4 + $0x138] sm:$0xff]
    %v3505 = vld [vmem:[%s4 + $0x140] sm:$0xff]
    %v3506 = vld [vmem:[%s4 + $0x148] sm:$0xff]
    %v3507 = vld [vmem:[%s4 + $0x150] sm:$0xff]
    %v3508 = vld [vmem:[%s4 + $0x158] sm:$0xff]
    %v3509 = vld [vmem:[%s4 + $0x160] sm:$0xff]
    %v3510 = vld [vmem:[%s4 + $0x168] sm:$0xff]
    %v3511 = vld [vmem:[%s4 + $0x170] sm:$0xff]
    %v3512 = vld [vmem:[%s4 + $0x178] sm:$0xff]
    %v3513 = vld [vmem:[%s4 + $0x180] sm:$0xff]
    %v3514 = vld [vmem:[%s4 + $0x188] sm:$0xff]
    %v3515 = vld [vmem:[%s4 + $0x190] sm:$0xff]
    %v3516 = vld [vmem:[%s4 + $0x198] sm:$0xff]
    %v3517 = vld [vmem:[%s4 + $0x1a0] sm:$0xff]
    %v3518 = vld [vmem:[%s4 + $0x1a8] sm:$0xff]
    %v3519 = vld [vmem:[%s4 + $0x1b0] sm:$0xff]
    %v3520 = vld [vmem:[%s4 + $0x1b8] sm:$0xff]
    %v3521 = vld [vmem:[%s4 + $0x1c0] sm:$0xff]
    %v3522 = vld [vmem:[%s4 + $0x1c8] sm:$0xff]
    %v3523 = vld [vmem:[%s4 + $0x1d0] sm:$0xff]
    %v3524 = vld [vmem:[%s4 + $0x1d8] sm:$0xff]
    %v3525 = vld [vmem:[%s4 + $0x1e0] sm:$0xff]
    %v3526 = vld [vmem:[%s4 + $0x1e8] sm:$0xff]
    %v3527 = vld [vmem:[%s4 + $0x1f0] sm:$0xff]
    %v3528 = vld [vmem:[%s4 + $0x1f8] sm:$0xff]
    %v3529 = vld [vmem:[%s4 + $0x200] sm:$0xff]
    %v3530 = vld [vmem:[%s4 + $0x208] sm:$0xff]
    %v3531 = vld [vmem:[%s4 + $0x210] sm:$0xff]
    %v3532 = vld [vmem:[%s4 + $0x218] sm:$0xff]
    %v3533 = vld [vmem:[%s4 + $0x220] sm:$0xff]
    %v3534 = vld [vmem:[%s4 + $0x228] sm:$0xff]
    %v3535 = vld [vmem:[%s4 + $0x230] sm:$0xff]
    %v3536 = vld [vmem:[%s4 + $0x238] sm:$0xff]
    %v3537 = vld [vmem:[%s4 + $0x240] sm:$0xff]
    %v3538 = vld [vmem:[%s4 + $0x248] sm:$0xff]
    %v3539 = vld [vmem:[%s4 + $0x250] sm:$0xff]
    %v3540 = vld [vmem:[%s4 + $0x258] sm:$0xff]
    %v3541 = vld [vmem:[%s4 + $0x260] sm:$0xff]
    %v3542 = vld [vmem:[%s4 + $0x268] sm:$0xff]
    %v3543 = vld [vmem:[%s4 + $0x270] sm:$0xff]
    %v3544 = vld [vmem:[%s4 + $0x278] sm:$0xff]
    %v3545 = vld [vmem:[%s4 + $0x280] sm:$0xff]
    %v3546 = vld [vmem:[%s4 + $0x288] sm:$0xff]
    %v3547 = vld [vmem:[%s4 + $0x290] sm:$0xff]
    %v3548 = vld [vmem:[%s4 + $0x298] sm:$0xff]
    %v3549 = vld [vmem:[%s4 + $0x2a0] sm:$0xff]
    %v3550 = vld [vmem:[%s4 + $0x2a8] sm:$0xff]
    %v3551 = vld [vmem:[%s4 + $0x2b0] sm:$0xff]
    %v3552 = vld [vmem:[%s4 + $0x2b8] sm:$0xff]
    %v3553 = vld [vmem:[%s4 + $0x2c0] sm:$0xff]
    %v3554 = vld [vmem:[%s4 + $0x2c8] sm:$0xff]
    %v3555 = vld [vmem:[%s4 + $0x2d0] sm:$0xff]
    %v3556 = vld [vmem:[%s4 + $0x2d8] sm:$0xff]
    %v3557 = vld [vmem:[%s4 + $0x2e0] sm:$0xff]
    %v3558 = vld [vmem:[%s4 + $0x2e8] sm:$0xff]
    %v3559 = vld [vmem:[%s4 + $0x2f0] sm:$0xff]
    %v3560 = vld [vmem:[%s4 + $0x2f8] sm:$0xff]
    %v3561 = vld [vmem:[%s4 + $0x300] sm:$0xff]
    %v3562 = vld [vmem:[%s4 + $0x308] sm:$0xff]
    %v3563 = vld [vmem:[%s4 + $0x310] sm:$0xff]
    %v3564 = vld [vmem:[%s4 + $0x318] sm:$0xff]
    %v3565 = vld [vmem:[%s4 + $0x320] sm:$0xff]
    %v3566 = vld [vmem:[%s4 + $0x328] sm:$0xff]
    %v3567 = vld [vmem:[%s4 + $0x330] sm:$0xff]
    %v3568 = vld [vmem:[%s4 + $0x338] sm:$0xff]
    %v3569 = vld [vmem:[%s4 + $0x340] sm:$0xff]
    %v3570 = vld [vmem:[%s4 + $0x348] sm:$0xff]
    %v3571 = vld [vmem:[%s4 + $0x350] sm:$0xff]
    %v3572 = vld [vmem:[%s4 + $0x358] sm:$0xff]
    %v3573 = vld [vmem:[%s4 + $0x360] sm:$0xff]
    %v3574 = vld [vmem:[%s4 + $0x368] sm:$0xff]
    %v3575 = vld [vmem:[%s4 + $0x370] sm:$0xff]
    %v3576 = vld [vmem:[%s4 + $0x378] sm:$0xff]
    %v3577 = vld [vmem:[%s4 + $0x380] sm:$0xff]
    %v3578 = vld [vmem:[%s4 + $0x388] sm:$0xff]
    %v3579 = vld [vmem:[%s4 + $0x390] sm:$0xff]
    %v3580 = vld [vmem:[%s4 + $0x398] sm:$0xff]
    %v3581 = vld [vmem:[%s4 + $0x3a0] sm:$0xff]
    %v3582 = vld [vmem:[%s4 + $0x3a8] sm:$0xff]
    %v3583 = vld [vmem:[%s4 + $0x3b0] sm:$0xff]
    %v3584 = vld [vmem:[%s4 + $0x3b8] sm:$0xff]
    %v3585 = vld [vmem:[%s4 + $0x3c0] sm:$0xff]
    %v3586 = vld [vmem:[%s4 + $0x3c8] sm:$0xff]
    %v3587 = vld [vmem:[%s4 + $0x3d0] sm:$0xff]
    %v3588 = vld [vmem:[%s4 + $0x3d8] sm:$0xff]
    %v3589 = vld [vmem:[%s4 + $0x3e0] sm:$0xff]
    %v3590 = vld [vmem:[%s4 + $0x3e8] sm:$0xff]
    %v3591 = vld [vmem:[%s4 + $0x3f0] sm:$0xff]
    %v3592 = vld [vmem:[%s4 + $0x3f8] sm:$0xff]
    %v3593 = vld [vmem:[%s4 + $0x400] sm:$0xff]
    %v3594 = vld [vmem:[%s4 + $0x408] sm:$0xff]
    %v3595 = vld [vmem:[%s4 + $0x410] sm:$0xff]
    %v3596 = vld [vmem:[%s4 + $0x418] sm:$0xff]
    %v3597 = vld [vmem:[%s4 + $0x420] sm:$0xff]
    %v3598 = vld [vmem:[%s4 + $0x428] sm:$0xff]
    %v3599 = vld [vmem:[%s4 + $0x430] sm:$0xff]
    %v3600 = vld [vmem:[%s4 + $0x438] sm:$0xff]
    %v3601 = vld [vmem:[%s4 + $0x440] sm:$0xff]
    %v3602 = vld [vmem:[%s4 + $0x448] sm:$0xff]
    %v3603 = vld [vmem:[%s4 + $0x450] sm:$0xff]
    %v3604 = vld [vmem:[%s4 + $0x458] sm:$0xff]
    %v3605 = vld [vmem:[%s4 + $0x460] sm:$0xff]
    %v3606 = vld [vmem:[%s4 + $0x468] sm:$0xff]
    %v3607 = vld [vmem:[%s4 + $0x470] sm:$0xff]
    %v3608 = vld [vmem:[%s4 + $0x478] sm:$0xff]
    %v3609 = vld [vmem:[%s4 + $0x480] sm:$0xff]
    %v3610 = vld [vmem:[%s4 + $0x488] sm:$0xff]
    %v3611 = vld [vmem:[%s4 + $0x490] sm:$0xff]
    %v3612 = vld [vmem:[%s4 + $0x498] sm:$0xff]
    %v3613 = vld [vmem:[%s4 + $0x4a0] sm:$0xff]
    %v3614 = vld [vmem:[%s4 + $0x4a8] sm:$0xff]
    %v3615 = vld [vmem:[%s4 + $0x4b0] sm:$0xff]
    %v3616 = vld [vmem:[%s4 + $0x4b8] sm:$0xff]
    %v3617 = vld [vmem:[%s4 + $0x4c0] sm:$0xff]
    %v3618 = vld [vmem:[%s4 + $0x4c8] sm:$0xff]
    %v3619 = vld [vmem:[%s4 + $0x4d0] sm:$0xff]
    %v3620 = vld [vmem:[%s4 + $0x4d8] sm:$0xff]
    %v3621 = vld [vmem:[%s4 + $0x4e0] sm:$0xff]
    %v3622 = vld [vmem:[%s4 + $0x4e8] sm:$0xff]
    %v3623 = vld [vmem:[%s4 + $0x4f0] sm:$0xff]
    %v3624 = vld [vmem:[%s4 + $0x4f8] sm:$0xff]
    %v3625 = vld [vmem:[%s4 + $0x500] sm:$0xff]
    %v3626 = vld [vmem:[%s4 + $0x508] sm:$0xff]
    %v3627 = vld [vmem:[%s4 + $0x510] sm:$0xff]
    %v3628 = vld [vmem:[%s4 + $0x518] sm:$0xff]
    %v3629 = vld [vmem:[%s4 + $0x520] sm:$0xff]
    %v3630 = vld [vmem:[%s4 + $0x528] sm:$0xff]
    %v3631 = vld [vmem:[%s4 + $0x530] sm:$0xff]
    %v3632 = vld [vmem:[%s4 + $0x538] sm:$0xff]
    %v3633 = vld [vmem:[%s4 + $0x540] sm:$0xff]
    %v3634 = vld [vmem:[%s4 + $0x548] sm:$0xff]
    %v3635 = vld [vmem:[%s4 + $0x550] sm:$0xff]
    %v3636 = vld [vmem:[%s4 + $0x558] sm:$0xff]
    %v3637 = vld [vmem:[%s4 + $0x560] sm:$0xff]
    %v3638 = vld [vmem:[%s4 + $0x568] sm:$0xff]
    %v3639 = vld [vmem:[%s4 + $0x570] sm:$0xff]
    %v3640 = vld [vmem:[%s4 + $0x578] sm:$0xff]
    %v3641 = vld [vmem:[%s4 + $0x580] sm:$0xff]
    %v3642 = vld [vmem:[%s4 + $0x588] sm:$0xff]
    %v3643 = vld [vmem:[%s4 + $0x590] sm:$0xff]
    %v3644 = vld [vmem:[%s4 + $0x598] sm:$0xff]
    %v3645 = vld [vmem:[%s4 + $0x5a0] sm:$0xff]
    %v3646 = vld [vmem:[%s4 + $0x5a8] sm:$0xff]
    %v3647 = vld [vmem:[%s4 + $0x5b0] sm:$0xff]
    %v3648 = vld [vmem:[%s4 + $0x5b8] sm:$0xff]
    %v3649 = vld [vmem:[%s4 + $0x5c0] sm:$0xff]
    %v3650 = vld [vmem:[%s4 + $0x5c8] sm:$0xff]
    %v3651 = vld [vmem:[%s4 + $0x5d0] sm:$0xff]
    %v3652 = vld [vmem:[%s4 + $0x5d8] sm:$0xff]
    %v3653 = vld [vmem:[%s4 + $0x5e0] sm:$0xff]
    %v3654 = vld [vmem:[%s4 + $0x5e8] sm:$0xff]
    %v3655 = vld [vmem:[%s4 + $0x5f0] sm:$0xff]
    %v3656 = vld [vmem:[%s4 + $0x5f8] sm:$0xff]
    %v3657 = vld [vmem:[%s4 + $0x600] sm:$0xff]
    %v3658 = vld [vmem:[%s4 + $0x608] sm:$0xff]
    %v3659 = vld [vmem:[%s4 + $0x610] sm:$0xff]
    %v3660 = vld [vmem:[%s4 + $0x618] sm:$0xff]
    %v3661 = vld [vmem:[%s4 + $0x620] sm:$0xff]
    %v3662 = vld [vmem:[%s4 + $0x628] sm:$0xff]
    %v3663 = vld [vmem:[%s4 + $0x630] sm:$0xff]
    %v3664 = vld [vmem:[%s4 + $0x638] sm:$0xff]
    %v3665 = vld [vmem:[%s4 + $0x640] sm:$0xff]
    %v3666 = vld [vmem:[%s4 + $0x648] sm:$0xff]
    %v3667 = vld [vmem:[%s4 + $0x650] sm:$0xff]
    %v3668 = vld [vmem:[%s4 + $0x658] sm:$0xff]
    %v3669 = vld [vmem:[%s4 + $0x660] sm:$0xff]
    %v3670 = vld [vmem:[%s4 + $0x668] sm:$0xff]
    %v3671 = vld [vmem:[%s4 + $0x670] sm:$0xff]
    %v3672 = vld [vmem:[%s4 + $0x678] sm:$0xff]
    %v3673 = vld [vmem:[%s4 + $0x680] sm:$0xff]
    %v3674 = vld [vmem:[%s4 + $0x688] sm:$0xff]
    %v3675 = vld [vmem:[%s4 + $0x690] sm:$0xff]
    %v3676 = vld [vmem:[%s4 + $0x698] sm:$0xff]
    %v3677 = vld [vmem:[%s4 + $0x6a0] sm:$0xff]
    %v3678 = vld [vmem:[%s4 + $0x6a8] sm:$0xff]
    %v3679 = vld [vmem:[%s4 + $0x6b0] sm:$0xff]
    %v3680 = vld [vmem:[%s4 + $0x6b8] sm:$0xff]
    %v3681 = vld [vmem:[%s4 + $0x6c0] sm:$0xff]
    %v3682 = vld [vmem:[%s4 + $0x6c8] sm:$0xff]
    %v3683 = vld [vmem:[%s4 + $0x6d0] sm:$0xff]
    %v3684 = vld [vmem:[%s4 + $0x6d8] sm:$0xff]
    %v3685 = vld [vmem:[%s4 + $0x6e0] sm:$0xff]
    %v3686 = vld [vmem:[%s4 + $0x6e8] sm:$0xff]
    %v3687 = vld [vmem:[%s4 + $0x6f0] sm:$0xff]
    %v3688 = vld [vmem:[%s4 + $0x6f8] sm:$0xff]
    %v3689 = vld [vmem:[%s4 + $0x700] sm:$0xff]
    %v3690 = vld [vmem:[%s4 + $0x708] sm:$0xff]
    %v3691 = vld [vmem:[%s4 + $0x710] sm:$0xff]
    %v3692 = vld [vmem:[%s4 + $0x718] sm:$0xff]
    %v3693 = vld [vmem:[%s4 + $0x720] sm:$0xff]
    %v3694 = vld [vmem:[%s4 + $0x728] sm:$0xff]
    %v3695 = vld [vmem:[%s4 + $0x730] sm:$0xff]
    %v3696 = vld [vmem:[%s4 + $0x738] sm:$0xff]
    %v3697 = vld [vmem:[%s4 + $0x740] sm:$0xff]
    %v3698 = vld [vmem:[%s4 + $0x748] sm:$0xff]
    %v3699 = vld [vmem:[%s4 + $0x750] sm:$0xff]
    %v3700 = vld [vmem:[%s4 + $0x758] sm:$0xff]
    %v3701 = vld [vmem:[%s4 + $0x760] sm:$0xff]
    %v3702 = vld [vmem:[%s4 + $0x768] sm:$0xff]
    %v3703 = vld [vmem:[%s4 + $0x770] sm:$0xff]
    %v3704 = vld [vmem:[%s4 + $0x778] sm:$0xff]
    %v3705 = vld [vmem:[%s4 + $0x780] sm:$0xff]
    %v3706 = vld [vmem:[%s4 + $0x788] sm:$0xff]
    %v3707 = vld [vmem:[%s4 + $0x790] sm:$0xff]
    %v3708 = vld [vmem:[%s4 + $0x798] sm:$0xff]
    %v3709 = vld [vmem:[%s4 + $0x7a0] sm:$0xff]
    %v3710 = vld [vmem:[%s4 + $0x7a8] sm:$0xff]
    %v3711 = vld [vmem:[%s4 + $0x7b0] sm:$0xff]
    %v3712 = vld [vmem:[%s4 + $0x7b8] sm:$0xff]
    %v3713 = vld [vmem:[%s4 + $0x7c0] sm:$0xff]
    %v3714 = vld [vmem:[%s4 + $0x7c8] sm:$0xff]
    %v3715 = vld [vmem:[%s4 + $0x7d0] sm:$0xff]
    %v3716 = vld [vmem:[%s4 + $0x7d8] sm:$0xff]
    %v3717 = vld [vmem:[%s4 + $0x7e0] sm:$0xff]
    %v3718 = vld [vmem:[%s4 + $0x7e8] sm:$0xff]
    %v3719 = vld [vmem:[%s4 + $0x7f0] sm:$0xff]
    %v3720 = vld [vmem:[%s4 + $0x7f8] sm:$0xff]
    %v3977 = vunpack.c.l.b16 %v3465
    %v3978 = vunpack.c.h.b16 %v3465
    %v3979 = vunpack.c.l.b16 %v3466
    %v3980 = vunpack.c.h.b16 %v3466
    %v3981 = vunpack.c.l.b16 %v3467
    %v3982 = vunpack.c.h.b16 %v3467
    %v3983 = vunpack.c.l.b16 %v3468
    %v3984 = vunpack.c.h.b16 %v3468
    %v3985 = vunpack.c.l.b16 %v3469
    %v3986 = vunpack.c.h.b16 %v3469
    %v3987 = vunpack.c.l.b16 %v3470
    %v3988 = vunpack.c.h.b16 %v3470
    %v3989 = vunpack.c.l.b16 %v3471
    %v3990 = vunpack.c.h.b16 %v3471
    %v3991 = vunpack.c.l.b16 %v3472
    %v3992 = vunpack.c.h.b16 %v3472
    %v3993 = vunpack.c.l.b16 %v3473
    %v3994 = vunpack.c.h.b16 %v3473
    %v3995 = vunpack.c.l.b16 %v3474
    %v3996 = vunpack.c.h.b16 %v3474
    %v3997 = vunpack.c.l.b16 %v3475
    %v3998 = vunpack.c.h.b16 %v3475
    %v3999 = vunpack.c.l.b16 %v3476
    %v4000 = vunpack.c.h.b16 %v3476
    %v4001 = vunpack.c.l.b16 %v3477
    %v4002 = vunpack.c.h.b16 %v3477
    %v4003 = vunpack.c.l.b16 %v3478
    %v4004 = vunpack.c.h.b16 %v3478
    %v4005 = vunpack.c.l.b16 %v3479
    %v4006 = vunpack.c.h.b16 %v3479
    %v4007 = vunpack.c.l.b16 %v3480
    %v4008 = vunpack.c.h.b16 %v3480
    %v4009 = vunpack.c.l.b16 %v3481
    %v4010 = vunpack.c.h.b16 %v3481
    %v4011 = vunpack.c.l.b16 %v3482
    %v4012 = vunpack.c.h.b16 %v3482
    %v4013 = vunpack.c.l.b16 %v3483
    %v4014 = vunpack.c.h.b16 %v3483
    %v4015 = vunpack.c.l.b16 %v3484
    %v4016 = vunpack.c.h.b16 %v3484
    %v4017 = vunpack.c.l.b16 %v3485
    %v4018 = vunpack.c.h.b16 %v3485
    %v4019 = vunpack.c.l.b16 %v3486
    %v4020 = vunpack.c.h.b16 %v3486
    %v4021 = vunpack.c.l.b16 %v3487
    %v4022 = vunpack.c.h.b16 %v3487
    %v4023 = vunpack.c.l.b16 %v3488
    %v4024 = vunpack.c.h.b16 %v3488
    %v4025 = vunpack.c.l.b16 %v3489
    %v4026 = vunpack.c.h.b16 %v3489
    %v4027 = vunpack.c.l.b16 %v3490
    %v4028 = vunpack.c.h.b16 %v3490
    %v4029 = vunpack.c.l.b16 %v3491
    %v4030 = vunpack.c.h.b16 %v3491
    %v4031 = vunpack.c.l.b16 %v3492
    %v4032 = vunpack.c.h.b16 %v3492
    %v4033 = vunpack.c.l.b16 %v3493
    %v4034 = vunpack.c.h.b16 %v3493
    %v4035 = vunpack.c.l.b16 %v3494
    %v4036 = vunpack.c.h.b16 %v3494
    %v4037 = vunpack.c.l.b16 %v3495
    %v4038 = vunpack.c.h.b16 %v3495
    %v4039 = vunpack.c.l.b16 %v3496
    %v4040 = vunpack.c.h.b16 %v3496
    %v4041 = vunpack.c.l.b16 %v3497
    %v4042 = vunpack.c.h.b16 %v3497
    %v4043 = vunpack.c.l.b16 %v3498
    %v4044 = vunpack.c.h.b16 %v3498
    %v4045 = vunpack.c.l.b16 %v3499
    %v4046 = vunpack.c.h.b16 %v3499
    %v4047 = vunpack.c.l.b16 %v3500
    %v4048 = vunpack.c.h.b16 %v3500
    %v4049 = vunpack.c.l.b16 %v3501
    %v4050 = vunpack.c.h.b16 %v3501
    %v4051 = vunpack.c.l.b16 %v3502
    %v4052 = vunpack.c.h.b16 %v3502
    %v4053 = vunpack.c.l.b16 %v3503
    %v4054 = vunpack.c.h.b16 %v3503
    %v4055 = vunpack.c.l.b16 %v3504
    %v4056 = vunpack.c.h.b16 %v3504
    %v4057 = vunpack.c.l.b16 %v3505
    %v4058 = vunpack.c.h.b16 %v3505
    %v4059 = vunpack.c.l.b16 %v3506
    %v4060 = vunpack.c.h.b16 %v3506
    %v4061 = vunpack.c.l.b16 %v3507
    %v4062 = vunpack.c.h.b16 %v3507
    %v4063 = vunpack.c.l.b16 %v3508
    %v4064 = vunpack.c.h.b16 %v3508
    %v4065 = vunpack.c.l.b16 %v3509
    %v4066 = vunpack.c.h.b16 %v3509
    %v4067 = vunpack.c.l.b16 %v3510
    %v4068 = vunpack.c.h.b16 %v3510
    %v4069 = vunpack.c.l.b16 %v3511
    %v4070 = vunpack.c.h.b16 %v3511
    %v4071 = vunpack.c.l.b16 %v3512
    %v4072 = vunpack.c.h.b16 %v3512
    %v4073 = vunpack.c.l.b16 %v3513
    %v4074 = vunpack.c.h.b16 %v3513
    %v4075 = vunpack.c.l.b16 %v3514
    %v4076 = vunpack.c.h.b16 %v3514
    %v4077 = vunpack.c.l.b16 %v3515
    %v4078 = vunpack.c.h.b16 %v3515
    %v4079 = vunpack.c.l.b16 %v3516
    %v4080 = vunpack.c.h.b16 %v3516
    %v4081 = vunpack.c.l.b16 %v3517
    %v4082 = vunpack.c.h.b16 %v3517
    %v4083 = vunpack.c.l.b16 %v3518
    %v4084 = vunpack.c.h.b16 %v3518
    %v4085 = vunpack.c.l.b16 %v3519
    %v4086 = vunpack.c.h.b16 %v3519
    %v4087 = vunpack.c.l.b16 %v3520
    %v4088 = vunpack.c.h.b16 %v3520
    %v4089 = vunpack.c.l.b16 %v3521
    %v4090 = vunpack.c.h.b16 %v3521
    %v4091 = vunpack.c.l.b16 %v3522
    %v4092 = vunpack.c.h.b16 %v3522
    %v4093 = vunpack.c.l.b16 %v3523
    %v4094 = vunpack.c.h.b16 %v3523
    %v4095 = vunpack.c.l.b16 %v3524
    %v4096 = vunpack.c.h.b16 %v3524
    %v4097 = vunpack.c.l.b16 %v3525
    %v4098 = vunpack.c.h.b16 %v3525
    %v4099 = vunpack.c.l.b16 %v3526
    %v4100 = vunpack.c.h.b16 %v3526
    %v4101 = vunpack.c.l.b16 %v3527
    %v4102 = vunpack.c.h.b16 %v3527
    %v4103 = vunpack.c.l.b16 %v3528
    %v4104 = vunpack.c.h.b16 %v3528
    %v4105 = vunpack.c.l.b16 %v3529
    %v4106 = vunpack.c.h.b16 %v3529
    %v4107 = vunpack.c.l.b16 %v3530
    %v4108 = vunpack.c.h.b16 %v3530
    %v4109 = vunpack.c.l.b16 %v3531
    %v4110 = vunpack.c.h.b16 %v3531
    %v4111 = vunpack.c.l.b16 %v3532
    %v4112 = vunpack.c.h.b16 %v3532
    %v4113 = vunpack.c.l.b16 %v3533
    %v4114 = vunpack.c.h.b16 %v3533
    %v4115 = vunpack.c.l.b16 %v3534
    %v4116 = vunpack.c.h.b16 %v3534
    %v4117 = vunpack.c.l.b16 %v3535
    %v4118 = vunpack.c.h.b16 %v3535
    %v4119 = vunpack.c.l.b16 %v3536
    %v4120 = vunpack.c.h.b16 %v3536
    %v4121 = vunpack.c.l.b16 %v3537
    %v4122 = vunpack.c.h.b16 %v3537
    %v4123 = vunpack.c.l.b16 %v3538
    %v4124 = vunpack.c.h.b16 %v3538
    %v4125 = vunpack.c.l.b16 %v3539
    %v4126 = vunpack.c.h.b16 %v3539
    %v4127 = vunpack.c.l.b16 %v3540
    %v4128 = vunpack.c.h.b16 %v3540
    %v4129 = vunpack.c.l.b16 %v3541
    %v4130 = vunpack.c.h.b16 %v3541
    %v4131 = vunpack.c.l.b16 %v3542
    %v4132 = vunpack.c.h.b16 %v3542
    %v4133 = vunpack.c.l.b16 %v3543
    %v4134 = vunpack.c.h.b16 %v3543
    %v4135 = vunpack.c.l.b16 %v3544
    %v4136 = vunpack.c.h.b16 %v3544
    %v4137 = vunpack.c.l.b16 %v3545
    %v4138 = vunpack.c.h.b16 %v3545
    %v4139 = vunpack.c.l.b16 %v3546
    %v4140 = vunpack.c.h.b16 %v3546
    %v4141 = vunpack.c.l.b16 %v3547
    %v4142 = vunpack.c.h.b16 %v3547
    %v4143 = vunpack.c.l.b16 %v3548
    %v4144 = vunpack.c.h.b16 %v3548
    %v4145 = vunpack.c.l.b16 %v3549
    %v4146 = vunpack.c.h.b16 %v3549
    %v4147 = vunpack.c.l.b16 %v3550
    %v4148 = vunpack.c.h.b16 %v3550
    %v4149 = vunpack.c.l.b16 %v3551
    %v4150 = vunpack.c.h.b16 %v3551
    %v4151 = vunpack.c.l.b16 %v3552
    %v4152 = vunpack.c.h.b16 %v3552
    %v4153 = vunpack.c.l.b16 %v3553
    %v4154 = vunpack.c.h.b16 %v3553
    %v4155 = vunpack.c.l.b16 %v3554
    %v4156 = vunpack.c.h.b16 %v3554
    %v4157 = vunpack.c.l.b16 %v3555
    %v4158 = vunpack.c.h.b16 %v3555
    %v4159 = vunpack.c.l.b16 %v3556
    %v4160 = vunpack.c.h.b16 %v3556
    %v4161 = vunpack.c.l.b16 %v3557
    %v4162 = vunpack.c.h.b16 %v3557
    %v4163 = vunpack.c.l.b16 %v3558
    %v4164 = vunpack.c.h.b16 %v3558
    %v4165 = vunpack.c.l.b16 %v3559
    %v4166 = vunpack.c.h.b16 %v3559
    %v4167 = vunpack.c.l.b16 %v3560
    %v4168 = vunpack.c.h.b16 %v3560
    %v4169 = vunpack.c.l.b16 %v3561
    %v4170 = vunpack.c.h.b16 %v3561
    %v4171 = vunpack.c.l.b16 %v3562
    %v4172 = vunpack.c.h.b16 %v3562
    %v4173 = vunpack.c.l.b16 %v3563
    %v4174 = vunpack.c.h.b16 %v3563
    %v4175 = vunpack.c.l.b16 %v3564
    %v4176 = vunpack.c.h.b16 %v3564
    %v4177 = vunpack.c.l.b16 %v3565
    %v4178 = vunpack.c.h.b16 %v3565
    %v4179 = vunpack.c.l.b16 %v3566
    %v4180 = vunpack.c.h.b16 %v3566
    %v4181 = vunpack.c.l.b16 %v3567
    %v4182 = vunpack.c.h.b16 %v3567
    %v4183 = vunpack.c.l.b16 %v3568
    %v4184 = vunpack.c.h.b16 %v3568
    %v4185 = vunpack.c.l.b16 %v3569
    %v4186 = vunpack.c.h.b16 %v3569
    %v4187 = vunpack.c.l.b16 %v3570
    %v4188 = vunpack.c.h.b16 %v3570
    %v4189 = vunpack.c.l.b16 %v3571
    %v4190 = vunpack.c.h.b16 %v3571
    %v4191 = vunpack.c.l.b16 %v3572
    %v4192 = vunpack.c.h.b16 %v3572
    %v4193 = vunpack.c.l.b16 %v3573
    %v4194 = vunpack.c.h.b16 %v3573
    %v4195 = vunpack.c.l.b16 %v3574
    %v4196 = vunpack.c.h.b16 %v3574
    %v4197 = vunpack.c.l.b16 %v3575
    %v4198 = vunpack.c.h.b16 %v3575
    %v4199 = vunpack.c.l.b16 %v3576
    %v4200 = vunpack.c.h.b16 %v3576
    %v4201 = vunpack.c.l.b16 %v3577
    %v4202 = vunpack.c.h.b16 %v3577
    %v4203 = vunpack.c.l.b16 %v3578
    %v4204 = vunpack.c.h.b16 %v3578
    %v4205 = vunpack.c.l.b16 %v3579
    %v4206 = vunpack.c.h.b16 %v3579
    %v4207 = vunpack.c.l.b16 %v3580
    %v4208 = vunpack.c.h.b16 %v3580
    %v4209 = vunpack.c.l.b16 %v3581
    %v4210 = vunpack.c.h.b16 %v3581
    %v4211 = vunpack.c.l.b16 %v3582
    %v4212 = vunpack.c.h.b16 %v3582
    %v4213 = vunpack.c.l.b16 %v3583
    %v4214 = vunpack.c.h.b16 %v3583
    %v4215 = vunpack.c.l.b16 %v3584
    %v4216 = vunpack.c.h.b16 %v3584
    %v4217 = vunpack.c.l.b16 %v3585
    %v4218 = vunpack.c.h.b16 %v3585
    %v4219 = vunpack.c.l.b16 %v3586
    %v4220 = vunpack.c.h.b16 %v3586
    %v4221 = vunpack.c.l.b16 %v3587
    %v4222 = vunpack.c.h.b16 %v3587
    %v4223 = vunpack.c.l.b16 %v3588
    %v4224 = vunpack.c.h.b16 %v3588
    %v4225 = vunpack.c.l.b16 %v3589
    %v4226 = vunpack.c.h.b16 %v3589
    %v4227 = vunpack.c.l.b16 %v3590
    %v4228 = vunpack.c.h.b16 %v3590
    %v4229 = vunpack.c.l.b16 %v3591
    %v4230 = vunpack.c.h.b16 %v3591
    %v4231 = vunpack.c.l.b16 %v3592
    %v4232 = vunpack.c.h.b16 %v3592
    %v4233 = vunpack.c.l.b16 %v3593
    %v4234 = vunpack.c.h.b16 %v3593
    %v4235 = vunpack.c.l.b16 %v3594
    %v4236 = vunpack.c.h.b16 %v3594
    %v4237 = vunpack.c.l.b16 %v3595
    %v4238 = vunpack.c.h.b16 %v3595
    %v4239 = vunpack.c.l.b16 %v3596
    %v4240 = vunpack.c.h.b16 %v3596
    %v4241 = vunpack.c.l.b16 %v3597
    %v4242 = vunpack.c.h.b16 %v3597
    %v4243 = vunpack.c.l.b16 %v3598
    %v4244 = vunpack.c.h.b16 %v3598
    %v4245 = vunpack.c.l.b16 %v3599
    %v4246 = vunpack.c.h.b16 %v3599
    %v4247 = vunpack.c.l.b16 %v3600
    %v4248 = vunpack.c.h.b16 %v3600
    %v4249 = vunpack.c.l.b16 %v3601
    %v4250 = vunpack.c.h.b16 %v3601
    %v4251 = vunpack.c.l.b16 %v3602
    %v4252 = vunpack.c.h.b16 %v3602
    %v4253 = vunpack.c.l.b16 %v3603
    %v4254 = vunpack.c.h.b16 %v3603
    %v4255 = vunpack.c.l.b16 %v3604
    %v4256 = vunpack.c.h.b16 %v3604
    %v4257 = vunpack.c.l.b16 %v3605
    %v4258 = vunpack.c.h.b16 %v3605
    %v4259 = vunpack.c.l.b16 %v3606
    %v4260 = vunpack.c.h.b16 %v3606
    %v4261 = vunpack.c.l.b16 %v3607
    %v4262 = vunpack.c.h.b16 %v3607
    %v4263 = vunpack.c.l.b16 %v3608
    %v4264 = vunpack.c.h.b16 %v3608
    %v4265 = vunpack.c.l.b16 %v3609
    %v4266 = vunpack.c.h.b16 %v3609
    %v4267 = vunpack.c.l.b16 %v3610
    %v4268 = vunpack.c.h.b16 %v3610
    %v4269 = vunpack.c.l.b16 %v3611
    %v4270 = vunpack.c.h.b16 %v3611
    %v4271 = vunpack.c.l.b16 %v3612
    %v4272 = vunpack.c.h.b16 %v3612
    %v4273 = vunpack.c.l.b16 %v3613
    %v4274 = vunpack.c.h.b16 %v3613
    %v4275 = vunpack.c.l.b16 %v3614
    %v4276 = vunpack.c.h.b16 %v3614
    %v4277 = vunpack.c.l.b16 %v3615
    %v4278 = vunpack.c.h.b16 %v3615
    %v4279 = vunpack.c.l.b16 %v3616
    %v4280 = vunpack.c.h.b16 %v3616
    %v4281 = vunpack.c.l.b16 %v3617
    %v4282 = vunpack.c.h.b16 %v3617
    %v4283 = vunpack.c.l.b16 %v3618
    %v4284 = vunpack.c.h.b16 %v3618
    %v4285 = vunpack.c.l.b16 %v3619
    %v4286 = vunpack.c.h.b16 %v3619
    %v4287 = vunpack.c.l.b16 %v3620
    %v4288 = vunpack.c.h.b16 %v3620
    %v4289 = vunpack.c.l.b16 %v3621
    %v4290 = vunpack.c.h.b16 %v3621
    %v4291 = vunpack.c.l.b16 %v3622
    %v4292 = vunpack.c.h.b16 %v3622
    %v4293 = vunpack.c.l.b16 %v3623
    %v4294 = vunpack.c.h.b16 %v3623
    %v4295 = vunpack.c.l.b16 %v3624
    %v4296 = vunpack.c.h.b16 %v3624
    %v4297 = vunpack.c.l.b16 %v3625
    %v4298 = vunpack.c.h.b16 %v3625
    %v4299 = vunpack.c.l.b16 %v3626
    %v4300 = vunpack.c.h.b16 %v3626
    %v4301 = vunpack.c.l.b16 %v3627
    %v4302 = vunpack.c.h.b16 %v3627
    %v4303 = vunpack.c.l.b16 %v3628
    %v4304 = vunpack.c.h.b16 %v3628
    %v4305 = vunpack.c.l.b16 %v3629
    %v4306 = vunpack.c.h.b16 %v3629
    %v4307 = vunpack.c.l.b16 %v3630
    %v4308 = vunpack.c.h.b16 %v3630
    %v4309 = vunpack.c.l.b16 %v3631
    %v4310 = vunpack.c.h.b16 %v3631
    %v4311 = vunpack.c.l.b16 %v3632
    %v4312 = vunpack.c.h.b16 %v3632
    %v4313 = vunpack.c.l.b16 %v3633
    %v4314 = vunpack.c.h.b16 %v3633
    %v4315 = vunpack.c.l.b16 %v3634
    %v4316 = vunpack.c.h.b16 %v3634
    %v4317 = vunpack.c.l.b16 %v3635
    %v4318 = vunpack.c.h.b16 %v3635
    %v4319 = vunpack.c.l.b16 %v3636
    %v4320 = vunpack.c.h.b16 %v3636
    %v4321 = vunpack.c.l.b16 %v3637
    %v4322 = vunpack.c.h.b16 %v3637
    %v4323 = vunpack.c.l.b16 %v3638
    %v4324 = vunpack.c.h.b16 %v3638
    %v4325 = vunpack.c.l.b16 %v3639
    %v4326 = vunpack.c.h.b16 %v3639
    %v4327 = vunpack.c.l.b16 %v3640
    %v4328 = vunpack.c.h.b16 %v3640
    %v4329 = vunpack.c.l.b16 %v3641
    %v4330 = vunpack.c.h.b16 %v3641
    %v4331 = vunpack.c.l.b16 %v3642
    %v4332 = vunpack.c.h.b16 %v3642
    %v4333 = vunpack.c.l.b16 %v3643
    %v4334 = vunpack.c.h.b16 %v3643
    %v4335 = vunpack.c.l.b16 %v3644
    %v4336 = vunpack.c.h.b16 %v3644
    %v4337 = vunpack.c.l.b16 %v3645
    %v4338 = vunpack.c.h.b16 %v3645
    %v4339 = vunpack.c.l.b16 %v3646
    %v4340 = vunpack.c.h.b16 %v3646
    %v4341 = vunpack.c.l.b16 %v3647
    %v4342 = vunpack.c.h.b16 %v3647
    %v4343 = vunpack.c.l.b16 %v3648
    %v4344 = vunpack.c.h.b16 %v3648
    %v4345 = vunpack.c.l.b16 %v3649
    %v4346 = vunpack.c.h.b16 %v3649
    %v4347 = vunpack.c.l.b16 %v3650
    %v4348 = vunpack.c.h.b16 %v3650
    %v4349 = vunpack.c.l.b16 %v3651
    %v4350 = vunpack.c.h.b16 %v3651
    %v4351 = vunpack.c.l.b16 %v3652
    %v4352 = vunpack.c.h.b16 %v3652
    %v4353 = vunpack.c.l.b16 %v3653
    %v4354 = vunpack.c.h.b16 %v3653
    %v4355 = vunpack.c.l.b16 %v3654
    %v4356 = vunpack.c.h.b16 %v3654
    %v4357 = vunpack.c.l.b16 %v3655
    %v4358 = vunpack.c.h.b16 %v3655
    %v4359 = vunpack.c.l.b16 %v3656
    %v4360 = vunpack.c.h.b16 %v3656
    %v4361 = vunpack.c.l.b16 %v3657
    %v4362 = vunpack.c.h.b16 %v3657
    %v4363 = vunpack.c.l.b16 %v3658
    %v4364 = vunpack.c.h.b16 %v3658
    %v4365 = vunpack.c.l.b16 %v3659
    %v4366 = vunpack.c.h.b16 %v3659
    %v4367 = vunpack.c.l.b16 %v3660
    %v4368 = vunpack.c.h.b16 %v3660
    %v4369 = vunpack.c.l.b16 %v3661
    %v4370 = vunpack.c.h.b16 %v3661
    %v4371 = vunpack.c.l.b16 %v3662
    %v4372 = vunpack.c.h.b16 %v3662
    %v4373 = vunpack.c.l.b16 %v3663
    %v4374 = vunpack.c.h.b16 %v3663
    %v4375 = vunpack.c.l.b16 %v3664
    %v4376 = vunpack.c.h.b16 %v3664
    %v4377 = vunpack.c.l.b16 %v3665
    %v4378 = vunpack.c.h.b16 %v3665
    %v4379 = vunpack.c.l.b16 %v3666
    %v4380 = vunpack.c.h.b16 %v3666
    %v4381 = vunpack.c.l.b16 %v3667
    %v4382 = vunpack.c.h.b16 %v3667
    %v4383 = vunpack.c.l.b16 %v3668
    %v4384 = vunpack.c.h.b16 %v3668
    %v4385 = vunpack.c.l.b16 %v3669
    %v4386 = vunpack.c.h.b16 %v3669
    %v4387 = vunpack.c.l.b16 %v3670
    %v4388 = vunpack.c.h.b16 %v3670
    %v4389 = vunpack.c.l.b16 %v3671
    %v4390 = vunpack.c.h.b16 %v3671
    %v4391 = vunpack.c.l.b16 %v3672
    %v4392 = vunpack.c.h.b16 %v3672
    %v4393 = vunpack.c.l.b16 %v3673
    %v4394 = vunpack.c.h.b16 %v3673
    %v4395 = vunpack.c.l.b16 %v3674
    %v4396 = vunpack.c.h.b16 %v3674
    %v4397 = vunpack.c.l.b16 %v3675
    %v4398 = vunpack.c.h.b16 %v3675
    %v4399 = vunpack.c.l.b16 %v3676
    %v4400 = vunpack.c.h.b16 %v3676
    %v4401 = vunpack.c.l.b16 %v3677
    %v4402 = vunpack.c.h.b16 %v3677
    %v4403 = vunpack.c.l.b16 %v3678
    %v4404 = vunpack.c.h.b16 %v3678
    %v4405 = vunpack.c.l.b16 %v3679
    %v4406 = vunpack.c.h.b16 %v3679
    %v4407 = vunpack.c.l.b16 %v3680
    %v4408 = vunpack.c.h.b16 %v3680
    %v4409 = vunpack.c.l.b16 %v3681
    %v4410 = vunpack.c.h.b16 %v3681
    %v4411 = vunpack.c.l.b16 %v3682
    %v4412 = vunpack.c.h.b16 %v3682
    %v4413 = vunpack.c.l.b16 %v3683
    %v4414 = vunpack.c.h.b16 %v3683
    %v4415 = vunpack.c.l.b16 %v3684
    %v4416 = vunpack.c.h.b16 %v3684
    %v4417 = vunpack.c.l.b16 %v3685
    %v4418 = vunpack.c.h.b16 %v3685
    %v4419 = vunpack.c.l.b16 %v3686
    %v4420 = vunpack.c.h.b16 %v3686
    %v4421 = vunpack.c.l.b16 %v3687
    %v4422 = vunpack.c.h.b16 %v3687
    %v4423 = vunpack.c.l.b16 %v3688
    %v4424 = vunpack.c.h.b16 %v3688
    %v4425 = vunpack.c.l.b16 %v3689
    %v4426 = vunpack.c.h.b16 %v3689
    %v4427 = vunpack.c.l.b16 %v3690
    %v4428 = vunpack.c.h.b16 %v3690
    %v4429 = vunpack.c.l.b16 %v3691
    %v4430 = vunpack.c.h.b16 %v3691
    %v4431 = vunpack.c.l.b16 %v3692
    %v4432 = vunpack.c.h.b16 %v3692
    %v4433 = vunpack.c.l.b16 %v3693
    %v4434 = vunpack.c.h.b16 %v3693
    %v4435 = vunpack.c.l.b16 %v3694
    %v4436 = vunpack.c.h.b16 %v3694
    %v4437 = vunpack.c.l.b16 %v3695
    %v4438 = vunpack.c.h.b16 %v3695
    %v4439 = vunpack.c.l.b16 %v3696
    %v4440 = vunpack.c.h.b16 %v3696
    %v4441 = vunpack.c.l.b16 %v3697
    %v4442 = vunpack.c.h.b16 %v3697
    %v4443 = vunpack.c.l.b16 %v3698
    %v4444 = vunpack.c.h.b16 %v3698
    %v4445 = vunpack.c.l.b16 %v3699
    %v4446 = vunpack.c.h.b16 %v3699
    %v4447 = vunpack.c.l.b16 %v3700
    %v4448 = vunpack.c.h.b16 %v3700
    %v4449 = vunpack.c.l.b16 %v3701
    %v4450 = vunpack.c.h.b16 %v3701
    %v4451 = vunpack.c.l.b16 %v3702
    %v4452 = vunpack.c.h.b16 %v3702
    %v4453 = vunpack.c.l.b16 %v3703
    %v4454 = vunpack.c.h.b16 %v3703
    %v4455 = vunpack.c.l.b16 %v3704
    %v4456 = vunpack.c.h.b16 %v3704
    %v4457 = vunpack.c.l.b16 %v3705
    %v4458 = vunpack.c.h.b16 %v3705
    %v4459 = vunpack.c.l.b16 %v3706
    %v4460 = vunpack.c.h.b16 %v3706
    %v4461 = vunpack.c.l.b16 %v3707
    %v4462 = vunpack.c.h.b16 %v3707
    %v4463 = vunpack.c.l.b16 %v3708
    %v4464 = vunpack.c.h.b16 %v3708
    %v4465 = vunpack.c.l.b16 %v3709
    %v4466 = vunpack.c.h.b16 %v3709
    %v4467 = vunpack.c.l.b16 %v3710
    %v4468 = vunpack.c.h.b16 %v3710
    %v4469 = vunpack.c.l.b16 %v3711
    %v4470 = vunpack.c.h.b16 %v3711
    %v4471 = vunpack.c.l.b16 %v3712
    %v4472 = vunpack.c.h.b16 %v3712
    %v4473 = vunpack.c.l.b16 %v3713
    %v4474 = vunpack.c.h.b16 %v3713
    %v4475 = vunpack.c.l.b16 %v3714
    %v4476 = vunpack.c.h.b16 %v3714
    %v4477 = vunpack.c.l.b16 %v3715
    %v4478 = vunpack.c.h.b16 %v3715
    %v4479 = vunpack.c.l.b16 %v3716
    %v4480 = vunpack.c.h.b16 %v3716
    %v4481 = vunpack.c.l.b16 %v3717
    %v4482 = vunpack.c.h.b16 %v3717
    %v4483 = vunpack.c.l.b16 %v3718
    %v4484 = vunpack.c.h.b16 %v3718
    %v4485 = vunpack.c.l.b16 %v3719
    %v4486 = vunpack.c.h.b16 %v3719
    %v4487 = vunpack.c.l.b16 %v3720
    %v4488 = vunpack.c.h.b16 %v3720
    %v4489 = vpack.c.b16 %v3985, %v3977
    %v4490 = vpack.c.b16 %v3986, %v3978
    %v4491 = vpack.c.b16 %v3987, %v3979
    %v4492 = vpack.c.b16 %v3988, %v3980
    %v4493 = vpack.c.b16 %v3989, %v3981
    %v4494 = vpack.c.b16 %v3990, %v3982
    %v4495 = vpack.c.b16 %v3991, %v3983
    %v4496 = vpack.c.b16 %v3992, %v3984
    %v4497 = vpack.c.b16 %v4001, %v3993
    %v4498 = vpack.c.b16 %v4002, %v3994
    %v4499 = vpack.c.b16 %v4003, %v3995
    %v4500 = vpack.c.b16 %v4004, %v3996
    %v4501 = vpack.c.b16 %v4005, %v3997
    %v4502 = vpack.c.b16 %v4006, %v3998
    %v4503 = vpack.c.b16 %v4007, %v3999
    %v4504 = vpack.c.b16 %v4008, %v4000
    %v4505 = vpack.c.b16 %v4017, %v4009
    %v4506 = vpack.c.b16 %v4018, %v4010
    %v4507 = vpack.c.b16 %v4019, %v4011
    %v4508 = vpack.c.b16 %v4020, %v4012
    %v4509 = vpack.c.b16 %v4021, %v4013
    %v4510 = vpack.c.b16 %v4022, %v4014
    %v4511 = vpack.c.b16 %v4023, %v4015
    %v4512 = vpack.c.b16 %v4024, %v4016
    %v4513 = vpack.c.b16 %v4033, %v4025
    %v4514 = vpack.c.b16 %v4034, %v4026
    %v4515 = vpack.c.b16 %v4035, %v4027
    %v4516 = vpack.c.b16 %v4036, %v4028
    %v4517 = vpack.c.b16 %v4037, %v4029
    %v4518 = vpack.c.b16 %v4038, %v4030
    %v4519 = vpack.c.b16 %v4039, %v4031
    %v4520 = vpack.c.b16 %v4040, %v4032
    %v4521 = vpack.c.b16 %v4049, %v4041
    %v4522 = vpack.c.b16 %v4050, %v4042
    %v4523 = vpack.c.b16 %v4051, %v4043
    %v4524 = vpack.c.b16 %v4052, %v4044
    %v4525 = vpack.c.b16 %v4053, %v4045
    %v4526 = vpack.c.b16 %v4054, %v4046
    %v4527 = vpack.c.b16 %v4055, %v4047
    %v4528 = vpack.c.b16 %v4056, %v4048
    %v4529 = vpack.c.b16 %v4065, %v4057
    %v4530 = vpack.c.b16 %v4066, %v4058
    %v4531 = vpack.c.b16 %v4067, %v4059
    %v4532 = vpack.c.b16 %v4068, %v4060
    %v4533 = vpack.c.b16 %v4069, %v4061
    %v4534 = vpack.c.b16 %v4070, %v4062
    %v4535 = vpack.c.b16 %v4071, %v4063
    %v4536 = vpack.c.b16 %v4072, %v4064
    %v4537 = vpack.c.b16 %v4081, %v4073
    %v4538 = vpack.c.b16 %v4082, %v4074
    %v4539 = vpack.c.b16 %v4083, %v4075
    %v4540 = vpack.c.b16 %v4084, %v4076
    %v4541 = vpack.c.b16 %v4085, %v4077
    %v4542 = vpack.c.b16 %v4086, %v4078
    %v4543 = vpack.c.b16 %v4087, %v4079
    %v4544 = vpack.c.b16 %v4088, %v4080
    %v4545 = vpack.c.b16 %v4097, %v4089
    %v4546 = vpack.c.b16 %v4098, %v4090
    %v4547 = vpack.c.b16 %v4099, %v4091
    %v4548 = vpack.c.b16 %v4100, %v4092
    %v4549 = vpack.c.b16 %v4101, %v4093
    %v4550 = vpack.c.b16 %v4102, %v4094
    %v4551 = vpack.c.b16 %v4103, %v4095
    %v4552 = vpack.c.b16 %v4104, %v4096
    %v4553 = vpack.c.b16 %v4113, %v4105
    %v4554 = vpack.c.b16 %v4114, %v4106
    %v4555 = vpack.c.b16 %v4115, %v4107
    %v4556 = vpack.c.b16 %v4116, %v4108
    %v4557 = vpack.c.b16 %v4117, %v4109
    %v4558 = vpack.c.b16 %v4118, %v4110
    %v4559 = vpack.c.b16 %v4119, %v4111
    %v4560 = vpack.c.b16 %v4120, %v4112
    %v4561 = vpack.c.b16 %v4129, %v4121
    %v4562 = vpack.c.b16 %v4130, %v4122
    %v4563 = vpack.c.b16 %v4131, %v4123
    %v4564 = vpack.c.b16 %v4132, %v4124
    %v4565 = vpack.c.b16 %v4133, %v4125
    %v4566 = vpack.c.b16 %v4134, %v4126
    %v4567 = vpack.c.b16 %v4135, %v4127
    %v4568 = vpack.c.b16 %v4136, %v4128
    %v4569 = vpack.c.b16 %v4145, %v4137
    %v4570 = vpack.c.b16 %v4146, %v4138
    %v4571 = vpack.c.b16 %v4147, %v4139
    %v4572 = vpack.c.b16 %v4148, %v4140
    %v4573 = vpack.c.b16 %v4149, %v4141
    %v4574 = vpack.c.b16 %v4150, %v4142
    %v4575 = vpack.c.b16 %v4151, %v4143
    %v4576 = vpack.c.b16 %v4152, %v4144
    %v4577 = vpack.c.b16 %v4161, %v4153
    %v4578 = vpack.c.b16 %v4162, %v4154
    %v4579 = vpack.c.b16 %v4163, %v4155
    %v4580 = vpack.c.b16 %v4164, %v4156
    %v4581 = vpack.c.b16 %v4165, %v4157
    %v4582 = vpack.c.b16 %v4166, %v4158
    %v4583 = vpack.c.b16 %v4167, %v4159
    %v4584 = vpack.c.b16 %v4168, %v4160
    %v4585 = vpack.c.b16 %v4177, %v4169
    %v4586 = vpack.c.b16 %v4178, %v4170
    %v4587 = vpack.c.b16 %v4179, %v4171
    %v4588 = vpack.c.b16 %v4180, %v4172
    %v4589 = vpack.c.b16 %v4181, %v4173
    %v4590 = vpack.c.b16 %v4182, %v4174
    %v4591 = vpack.c.b16 %v4183, %v4175
    %v4592 = vpack.c.b16 %v4184, %v4176
    %v4593 = vpack.c.b16 %v4193, %v4185
    %v4594 = vpack.c.b16 %v4194, %v4186
    %v4595 = vpack.c.b16 %v4195, %v4187
    %v4596 = vpack.c.b16 %v4196, %v4188
    %v4597 = vpack.c.b16 %v4197, %v4189
    %v4598 = vpack.c.b16 %v4198, %v4190
    %v4599 = vpack.c.b16 %v4199, %v4191
    %v4600 = vpack.c.b16 %v4200, %v4192
    %v4601 = vpack.c.b16 %v4209, %v4201
    %v4602 = vpack.c.b16 %v4210, %v4202
    %v4603 = vpack.c.b16 %v4211, %v4203
    %v4604 = vpack.c.b16 %v4212, %v4204
    %v4605 = vpack.c.b16 %v4213, %v4205
    %v4606 = vpack.c.b16 %v4214, %v4206
    %v4607 = vpack.c.b16 %v4215, %v4207
    %v4608 = vpack.c.b16 %v4216, %v4208
    %v4609 = vpack.c.b16 %v4225, %v4217
    %v4610 = vpack.c.b16 %v4226, %v4218
    %v4611 = vpack.c.b16 %v4227, %v4219
    %v4612 = vpack.c.b16 %v4228, %v4220
    %v4613 = vpack.c.b16 %v4229, %v4221
    %v4614 = vpack.c.b16 %v4230, %v4222
    %v4615 = vpack.c.b16 %v4231, %v4223
    %v4616 = vpack.c.b16 %v4232, %v4224
    %v4617 = vpack.c.b16 %v4241, %v4233
    %v4618 = vpack.c.b16 %v4242, %v4234
    %v4619 = vpack.c.b16 %v4243, %v4235
    %v4620 = vpack.c.b16 %v4244, %v4236
    %v4621 = vpack.c.b16 %v4245, %v4237
    %v4622 = vpack.c.b16 %v4246, %v4238
    %v4623 = vpack.c.b16 %v4247, %v4239
    %v4624 = vpack.c.b16 %v4248, %v4240
    %v4625 = vpack.c.b16 %v4257, %v4249
    %v4626 = vpack.c.b16 %v4258, %v4250
    %v4627 = vpack.c.b16 %v4259, %v4251
    %v4628 = vpack.c.b16 %v4260, %v4252
    %v4629 = vpack.c.b16 %v4261, %v4253
    %v4630 = vpack.c.b16 %v4262, %v4254
    %v4631 = vpack.c.b16 %v4263, %v4255
    %v4632 = vpack.c.b16 %v4264, %v4256
    %v4633 = vpack.c.b16 %v4273, %v4265
    %v4634 = vpack.c.b16 %v4274, %v4266
    %v4635 = vpack.c.b16 %v4275, %v4267
    %v4636 = vpack.c.b16 %v4276, %v4268
    %v4637 = vpack.c.b16 %v4277, %v4269
    %v4638 = vpack.c.b16 %v4278, %v4270
    %v4639 = vpack.c.b16 %v4279, %v4271
    %v4640 = vpack.c.b16 %v4280, %v4272
    %v4641 = vpack.c.b16 %v4289, %v4281
    %v4642 = vpack.c.b16 %v4290, %v4282
    %v4643 = vpack.c.b16 %v4291, %v4283
    %v4644 = vpack.c.b16 %v4292, %v4284
    %v4645 = vpack.c.b16 %v4293, %v4285
    %v4646 = vpack.c.b16 %v4294, %v4286
    %v4647 = vpack.c.b16 %v4295, %v4287
    %v4648 = vpack.c.b16 %v4296, %v4288
    %v4649 = vpack.c.b16 %v4305, %v4297
    %v4650 = vpack.c.b16 %v4306, %v4298
    %v4651 = vpack.c.b16 %v4307, %v4299
    %v4652 = vpack.c.b16 %v4308, %v4300
    %v4653 = vpack.c.b16 %v4309, %v4301
    %v4654 = vpack.c.b16 %v4310, %v4302
    %v4655 = vpack.c.b16 %v4311, %v4303
    %v4656 = vpack.c.b16 %v4312, %v4304
    %v4657 = vpack.c.b16 %v4321, %v4313
    %v4658 = vpack.c.b16 %v4322, %v4314
    %v4659 = vpack.c.b16 %v4323, %v4315
    %v4660 = vpack.c.b16 %v4324, %v4316
    %v4661 = vpack.c.b16 %v4325, %v4317
    %v4662 = vpack.c.b16 %v4326, %v4318
    %v4663 = vpack.c.b16 %v4327, %v4319
    %v4664 = vpack.c.b16 %v4328, %v4320
    %v4665 = vpack.c.b16 %v4337, %v4329
    %v4666 = vpack.c.b16 %v4338, %v4330
    %v4667 = vpack.c.b16 %v4339, %v4331
    %v4668 = vpack.c.b16 %v4340, %v4332
    %v4669 = vpack.c.b16 %v4341, %v4333
    %v4670 = vpack.c.b16 %v4342, %v4334
    %v4671 = vpack.c.b16 %v4343, %v4335
    %v4672 = vpack.c.b16 %v4344, %v4336
    %v4673 = vpack.c.b16 %v4353, %v4345
    %v4674 = vpack.c.b16 %v4354, %v4346
    %v4675 = vpack.c.b16 %v4355, %v4347
    %v4676 = vpack.c.b16 %v4356, %v4348
    %v4677 = vpack.c.b16 %v4357, %v4349
    %v4678 = vpack.c.b16 %v4358, %v4350
    %v4679 = vpack.c.b16 %v4359, %v4351
    %v4680 = vpack.c.b16 %v4360, %v4352
    %v4681 = vpack.c.b16 %v4369, %v4361
    %v4682 = vpack.c.b16 %v4370, %v4362
    %v4683 = vpack.c.b16 %v4371, %v4363
    %v4684 = vpack.c.b16 %v4372, %v4364
    %v4685 = vpack.c.b16 %v4373, %v4365
    %v4686 = vpack.c.b16 %v4374, %v4366
    %v4687 = vpack.c.b16 %v4375, %v4367
    %v4688 = vpack.c.b16 %v4376, %v4368
    %v4689 = vpack.c.b16 %v4385, %v4377
    %v4690 = vpack.c.b16 %v4386, %v4378
    %v4691 = vpack.c.b16 %v4387, %v4379
    %v4692 = vpack.c.b16 %v4388, %v4380
    %v4693 = vpack.c.b16 %v4389, %v4381
    %v4694 = vpack.c.b16 %v4390, %v4382
    %v4695 = vpack.c.b16 %v4391, %v4383
    %v4696 = vpack.c.b16 %v4392, %v4384
    %v4697 = vpack.c.b16 %v4401, %v4393
    %v4698 = vpack.c.b16 %v4402, %v4394
    %v4699 = vpack.c.b16 %v4403, %v4395
    %v4700 = vpack.c.b16 %v4404, %v4396
    %v4701 = vpack.c.b16 %v4405, %v4397
    %v4702 = vpack.c.b16 %v4406, %v4398
    %v4703 = vpack.c.b16 %v4407, %v4399
    %v4704 = vpack.c.b16 %v4408, %v4400
    %v4705 = vpack.c.b16 %v4417, %v4409
    %v4706 = vpack.c.b16 %v4418, %v4410
    %v4707 = vpack.c.b16 %v4419, %v4411
    %v4708 = vpack.c.b16 %v4420, %v4412
    %v4709 = vpack.c.b16 %v4421, %v4413
    %v4710 = vpack.c.b16 %v4422, %v4414
    %v4711 = vpack.c.b16 %v4423, %v4415
    %v4712 = vpack.c.b16 %v4424, %v4416
    %v4713 = vpack.c.b16 %v4433, %v4425
    %v4714 = vpack.c.b16 %v4434, %v4426
    %v4715 = vpack.c.b16 %v4435, %v4427
    %v4716 = vpack.c.b16 %v4436, %v4428
    %v4717 = vpack.c.b16 %v4437, %v4429
    %v4718 = vpack.c.b16 %v4438, %v4430
    %v4719 = vpack.c.b16 %v4439, %v4431
    %v4720 = vpack.c.b16 %v4440, %v4432
    %v4721 = vpack.c.b16 %v4449, %v4441
    %v4722 = vpack.c.b16 %v4450, %v4442
    %v4723 = vpack.c.b16 %v4451, %v4443
    %v4724 = vpack.c.b16 %v4452, %v4444
    %v4725 = vpack.c.b16 %v4453, %v4445
    %v4726 = vpack.c.b16 %v4454, %v4446
    %v4727 = vpack.c.b16 %v4455, %v4447
    %v4728 = vpack.c.b16 %v4456, %v4448
    %v4729 = vpack.c.b16 %v4465, %v4457
    %v4730 = vpack.c.b16 %v4466, %v4458
    %v4731 = vpack.c.b16 %v4467, %v4459
    %v4732 = vpack.c.b16 %v4468, %v4460
    %v4733 = vpack.c.b16 %v4469, %v4461
    %v4734 = vpack.c.b16 %v4470, %v4462
    %v4735 = vpack.c.b16 %v4471, %v4463
    %v4736 = vpack.c.b16 %v4472, %v4464
    %v4737 = vpack.c.b16 %v4481, %v4473
    %v4738 = vpack.c.b16 %v4482, %v4474
    %v4739 = vpack.c.b16 %v4483, %v4475
    %v4740 = vpack.c.b16 %v4484, %v4476
    %v4741 = vpack.c.b16 %v4485, %v4477
    %v4742 = vpack.c.b16 %v4486, %v4478
    %v4743 = vpack.c.b16 %v4487, %v4479
    %v4744 = vpack.c.b16 %v4488, %v4480
    %5001 = vmatprep.subr.bf16.mxu0 %v4546
    %5002 = vmatpush1.bf16.msra.mxu0 %v4545
    %5003 = vmatprep.subr.bf16.mxu0 %v4538
    %5004 = vmatpush1.bf16.msra.mxu0 %v4537
    %5005 = vmatprep.subr.bf16.mxu0 %v4530
    %5006 = vmatpush1.bf16.msra.mxu0 %v4529
    %5007 = vmatprep.subr.bf16.mxu0 %v4522
    %5008 = vmatpush1.bf16.msra.mxu0 %v4521
    %5009 = vmatprep.subr.bf16.mxu0 %v4514
    %5010 = vmatpush1.bf16.msra.mxu0 %v4513
    %5011 = vmatprep.subr.bf16.mxu0 %v4506
    %5012 = vmatpush1.bf16.msra.mxu0 %v4505
    %5013 = vmatprep.subr.bf16.mxu0 %v4498
    %5014 = vmatpush1.bf16.msra.mxu0 %v4497
    %5015 = vmatprep.subr.bf16.mxu0 %v4490
    %5016 = vmatpush1.bf16.msra.mxu0 %v4489
    %5017 = vmatprep.subr.bf16.mxu0 %v4610
    %5018 = vmatpush2.bf16.msra.mxu0 %v4609
    %5019 = vmatprep.subr.bf16.mxu0 %v4602
    %5020 = vmatpush2.bf16.msra.mxu0 %v4601
    %5021 = vmatprep.subr.bf16.mxu0 %v4594
    %5022 = vmatpush2.bf16.msra.mxu0 %v4593
    %5023 = vmatprep.subr.bf16.mxu0 %v4586
    %5024 = vmatpush2.bf16.msra.mxu0 %v4585
    %5025 = vmatprep.subr.bf16.mxu0 %v4578
    %5026 = vmatpush2.bf16.msra.mxu0 %v4577
    %5027 = vmatprep.subr.bf16.mxu0 %v4570
    %5028 = vmatpush2.bf16.msra.mxu0 %v4569
    %5029 = vmatprep.subr.bf16.mxu0 %v4562
    %5030 = vmatpush2.bf16.msra.mxu0 %v4561
    %5031 = vmatprep.subr.bf16.mxu0 %v4554
    %5032 = vmatpush2.bf16.msra.mxu0 %v4553
    %5033 = vmatprep.mubr.bf16.mxu0 %v3402
    %5034 = vmatmul.mubr.bf16.gmra.mxu0 %v3401
    %v5035 = vpop.f32.mrf.mxu0
    %v5036 = vadd.f32 0.0, %v5035
    %v5037 = vpop.f32.mrf.mxu0
    %v5038 = vadd.f32 0.0, %v5037
    %v5039 = vpop.f32.mrf.mxu0
    %v5040 = vadd.f32 0.0, %v5039
    %v5041 = vpop.f32.mrf.mxu0
    %v5042 = vadd.f32 0.0, %v5041
    %5043 = vmatprep.mubr.bf16.mxu0 %v3406
    %5044 = vmatmul.mubr.bf16.gmra.mxu0 %v3405
    %v5045 = vpop.f32.mrf.mxu0
    %v5046 = vadd.f32 0.0, %v5045
    %v5047 = vpop.f32.mrf.mxu0
    %v5048 = vadd.f32 0.0, %v5047
    %v5049 = vpop.f32.mrf.mxu0
    %v5050 = vadd.f32 0.0, %v5049
    %v5051 = vpop.f32.mrf.mxu0
    %v5052 = vadd.f32 0.0, %v5051
    %5053 = vmatprep.mubr.bf16.mxu0 %v3410
    %5054 = vmatmul.mubr.bf16.gmra.mxu0 %v3409
    %v5055 = vpop.f32.mrf.mxu0
    %v5056 = vadd.f32 0.0, %v5055
    %v5057 = vpop.f32.mrf.mxu0
    %v5058 = vadd.f32 0.0, %v5057
    %v5059 = vpop.f32.mrf.mxu0
    %v5060 = vadd.f32 0.0, %v5059
    %v5061 = vpop.f32.mrf.mxu0
    %v5062 = vadd.f32 0.0, %v5061
    %5063 = vmatprep.mubr.bf16.mxu0 %v3414
    %5064 = vmatmul.mubr.bf16.gmra.mxu0 %v3413
    %v5065 = vpop.f32.mrf.mxu0
    %v5066 = vadd.f32 0.0, %v5065
    %v5067 = vpop.f32.mrf.mxu0
    %v5068 = vadd.f32 0.0, %v5067
    %v5069 = vpop.f32.mrf.mxu0
    %v5070 = vadd.f32 0.0, %v5069
    %v5071 = vpop.f32.mrf.mxu0
    %v5072 = vadd.f32 0.0, %v5071
    %5073 = vmatprep.mubr.bf16.mxu0 %v3418
    %5074 = vmatmul.mubr.bf16.gmra.mxu0 %v3417
    %v5075 = vpop.f32.mrf.mxu0
    %v5076 = vadd.f32 0.0, %v5075
    %v5077 = vpop.f32.mrf.mxu0
    %v5078 = vadd.f32 0.0, %v5077
    %v5079 = vpop.f32.mrf.mxu0
    %v5080 = vadd.f32 0.0, %v5079
    %v5081 = vpop.f32.mrf.mxu0
    %v5082 = vadd.f32 0.0, %v5081
    %5083 = vmatprep.mubr.bf16.mxu0 %v3422
    %5084 = vmatmul.mubr.bf16.gmra.mxu0 %v3421
    %v5085 = vpop.f32.mrf.mxu0
    %v5086 = vadd.f32 0.0, %v5085
    %v5087 = vpop.f32.mrf.mxu0
    %v5088 = vadd.f32 0.0, %v5087
    %v5089 = vpop.f32.mrf.mxu0
    %v5090 = vadd.f32 0.0, %v5089
    %v5091 = vpop.f32.mrf.mxu0
    %v5092 = vadd.f32 0.0, %v5091
    %5093 = vmatprep.mubr.bf16.mxu0 %v3426
    %5094 = vmatmul.mubr.bf16.gmra.mxu0 %v3425
    %v5095 = vpop.f32.mrf.mxu0
    %v5096 = vadd.f32 0.0, %v5095
    %v5097 = vpop.f32.mrf.mxu0
    %v5098 = vadd.f32 0.0, %v5097
    %v5099 = vpop.f32.mrf.mxu0
    %v5100 = vadd.f32 0.0, %v5099
    %v5101 = vpop.f32.mrf.mxu0
    %v5102 = vadd.f32 0.0, %v5101
    %5103 = vmatprep.mubr.bf16.mxu0 %v3430
    %5104 = vmatmul.mubr.bf16.gmra.mxu0 %v3429
    %v5105 = vpop.f32.mrf.mxu0
    %v5106 = vadd.f32 0.0, %v5105
    %v5107 = vpop.f32.mrf.mxu0
    %v5108 = vadd.f32 0.0, %v5107
    %v5109 = vpop.f32.mrf.mxu0
    %v5110 = vadd.f32 0.0, %v5109
    %v5111 = vpop.f32.mrf.mxu0
    %v5112 = vadd.f32 0.0, %v5111
    %5113 = vmatprep.mubr.bf16.mxu0 %v3434
    %5114 = vmatmul.mubr.bf16.gmra.mxu0 %v3433
    %v5115 = vpop.f32.mrf.mxu0
    %v5116 = vadd.f32 0.0, %v5115
    %v5117 = vpop.f32.mrf.mxu0
    %v5118 = vadd.f32 0.0, %v5117
    %v5119 = vpop.f32.mrf.mxu0
    %v5120 = vadd.f32 0.0, %v5119
    %v5121 = vpop.f32.mrf.mxu0
    %v5122 = vadd.f32 0.0, %v5121
    %5123 = vmatprep.mubr.bf16.mxu0 %v3438
    %5124 = vmatmul.mubr.bf16.gmra.mxu0 %v3437
    %v5125 = vpop.f32.mrf.mxu0
    %v5126 = vadd.f32 0.0, %v5125
    %v5127 = vpop.f32.mrf.mxu0
    %v5128 = vadd.f32 0.0, %v5127
    %v5129 = vpop.f32.mrf.mxu0
    %v5130 = vadd.f32 0.0, %v5129
    %v5131 = vpop.f32.mrf.mxu0
    %v5132 = vadd.f32 0.0, %v5131
    %5133 = vmatprep.mubr.bf16.mxu0 %v3442
    %5134 = vmatmul.mubr.bf16.gmra.mxu0 %v3441
    %v5135 = vpop.f32.mrf.mxu0
    %v5136 = vadd.f32 0.0, %v5135
    %v5137 = vpop.f32.mrf.mxu0
    %v5138 = vadd.f32 0.0, %v5137
    %v5139 = vpop.f32.mrf.mxu0
    %v5140 = vadd.f32 0.0, %v5139
    %v5141 = vpop.f32.mrf.mxu0
    %v5142 = vadd.f32 0.0, %v5141
    %5143 = vmatprep.mubr.bf16.mxu0 %v3446
    %5144 = vmatmul.mubr.bf16.gmra.mxu0 %v3445
    %v5145 = vpop.f32.mrf.mxu0
    %v5146 = vadd.f32 0.0, %v5145
    %v5147 = vpop.f32.mrf.mxu0
    %v5148 = vadd.f32 0.0, %v5147
    %v5149 = vpop.f32.mrf.mxu0
    %v5150 = vadd.f32 0.0, %v5149
    %v5151 = vpop.f32.mrf.mxu0
    %v5152 = vadd.f32 0.0, %v5151
    %5153 = vmatprep.mubr.bf16.mxu0 %v3450
    %5154 = vmatmul.mubr.bf16.gmra.mxu0 %v3449
    %v5155 = vpop.f32.mrf.mxu0
    %v5156 = vadd.f32 0.0, %v5155
    %v5157 = vpop.f32.mrf.mxu0
    %v5158 = vadd.f32 0.0, %v5157
    %v5159 = vpop.f32.mrf.mxu0
    %v5160 = vadd.f32 0.0, %v5159
    %v5161 = vpop.f32.mrf.mxu0
    %v5162 = vadd.f32 0.0, %v5161
    %5163 = vmatprep.mubr.bf16.mxu0 %v3454
    %5164 = vmatmul.mubr.bf16.gmra.mxu0 %v3453
    %v5165 = vpop.f32.mrf.mxu0
    %v5166 = vadd.f32 0.0, %v5165
    %v5167 = vpop.f32.mrf.mxu0
    %v5168 = vadd.f32 0.0, %v5167
    %v5169 = vpop.f32.mrf.mxu0
    %v5170 = vadd.f32 0.0, %v5169
    %v5171 = vpop.f32.mrf.mxu0
    %v5172 = vadd.f32 0.0, %v5171
    %5173 = vmatprep.mubr.bf16.mxu0 %v3458
    %5174 = vmatmul.mubr.bf16.gmra.mxu0 %v3457
    %v5175 = vpop.f32.mrf.mxu0
    %v5176 = vadd.f32 0.0, %v5175
    %v5177 = vpop.f32.mrf.mxu0
    %v5178 = vadd.f32 0.0, %v5177
    %v5179 = vpop.f32.mrf.mxu0
    %v5180 = vadd.f32 0.0, %v5179
    %v5181 = vpop.f32.mrf.mxu0
    %v5182 = vadd.f32 0.0, %v5181
    %5183 = vmatprep.mubr.bf16.mxu0 %v3462
    %5184 = vmatmul.mubr.bf16.gmra.mxu0 %v3461
    %v5185 = vpop.f32.mrf.mxu0
    %v5186 = vadd.f32 0.0, %v5185
    %v5187 = vpop.f32.mrf.mxu0
    %v5188 = vadd.f32 0.0, %v5187
    %v5189 = vpop.f32.mrf.mxu0
    %v5190 = vadd.f32 0.0, %v5189
    %v5191 = vpop.f32.mrf.mxu0
    %v5192 = vadd.f32 0.0, %v5191
    %5193 = vdwg.mxu0
    %5194 = vmatprep.subr.bf16.mxu0 %v4674
    %5195 = vmatpush1.bf16.msra.mxu0 %v4673
    %5196 = vmatprep.subr.bf16.mxu0 %v4666
    %5197 = vmatpush1.bf16.msra.mxu0 %v4665
    %5198 = vmatprep.subr.bf16.mxu0 %v4658
    %5199 = vmatpush1.bf16.msra.mxu0 %v4657
    %5200 = vmatprep.subr.bf16.mxu0 %v4650
    %5201 = vmatpush1.bf16.msra.mxu0 %v4649
    %5202 = vmatprep.subr.bf16.mxu0 %v4642
    %5203 = vmatpush1.bf16.msra.mxu0 %v4641
    %5204 = vmatprep.subr.bf16.mxu0 %v4634
    %5205 = vmatpush1.bf16.msra.mxu0 %v4633
    %5206 = vmatprep.subr.bf16.mxu0 %v4626
    %5207 = vmatpush1.bf16.msra.mxu0 %v4625
    %5208 = vmatprep.subr.bf16.mxu0 %v4618
    %5209 = vmatpush1.bf16.msra.mxu0 %v4617
    %5210 = vmatprep.subr.bf16.mxu0 %v4738
    %5211 = vmatpush2.bf16.msra.mxu0 %v4737
    %5212 = vmatprep.subr.bf16.mxu0 %v4730
    %5213 = vmatpush2.bf16.msra.mxu0 %v4729
    %5214 = vmatprep.subr.bf16.mxu0 %v4722
    %5215 = vmatpush2.bf16.msra.mxu0 %v4721
    %5216 = vmatprep.subr.bf16.mxu0 %v4714
    %5217 = vmatpush2.bf16.msra.mxu0 %v4713
    %5218 = vmatprep.subr.bf16.mxu0 %v4706
    %5219 = vmatpush2.bf16.msra.mxu0 %v4705
    %5220 = vmatprep.subr.bf16.mxu0 %v4698
    %5221 = vmatpush2.bf16.msra.mxu0 %v4697
    %5222 = vmatprep.subr.bf16.mxu0 %v4690
    %5223 = vmatpush2.bf16.msra.mxu0 %v4689
    %5224 = vmatprep.subr.bf16.mxu0 %v4682
    %5225 = vmatpush2.bf16.msra.mxu0 %v4681
    %5226 = vmatprep.mubr.bf16.mxu0 %v3404
    %5227 = vmatmul.mubr.bf16.gmra.mxu0 %v3403
    %v5228 = vpop.f32.mrf.mxu0
    %v5229 = vadd.f32 %v5036, %v5228
    %v5230 = vpop.f32.mrf.mxu0
    %v5231 = vadd.f32 %v5038, %v5230
    %v5232 = vpop.f32.mrf.mxu0
    %v5233 = vadd.f32 %v5040, %v5232
    %v5234 = vpop.f32.mrf.mxu0
    %v5235 = vadd.f32 %v5042, %v5234
    %5236 = vmatprep.mubr.bf16.mxu0 %v3408
    %5237 = vmatmul.mubr.bf16.gmra.mxu0 %v3407
    %v5238 = vpop.f32.mrf.mxu0
    %v5239 = vadd.f32 %v5046, %v5238
    %v5240 = vpop.f32.mrf.mxu0
    %v5241 = vadd.f32 %v5048, %v5240
    %v5242 = vpop.f32.mrf.mxu0
    %v5243 = vadd.f32 %v5050, %v5242
    %v5244 = vpop.f32.mrf.mxu0
    %v5245 = vadd.f32 %v5052, %v5244
    %5246 = vmatprep.mubr.bf16.mxu0 %v3412
    %5247 = vmatmul.mubr.bf16.gmra.mxu0 %v3411
    %v5248 = vpop.f32.mrf.mxu0
    %v5249 = vadd.f32 %v5056, %v5248
    %v5250 = vpop.f32.mrf.mxu0
    %v5251 = vadd.f32 %v5058, %v5250
    %v5252 = vpop.f32.mrf.mxu0
    %v5253 = vadd.f32 %v5060, %v5252
    %v5254 = vpop.f32.mrf.mxu0
    %v5255 = vadd.f32 %v5062, %v5254
    %5256 = vmatprep.mubr.bf16.mxu0 %v3416
    %5257 = vmatmul.mubr.bf16.gmra.mxu0 %v3415
    %v5258 = vpop.f32.mrf.mxu0
    %v5259 = vadd.f32 %v5066, %v5258
    %v5260 = vpop.f32.mrf.mxu0
    %v5261 = vadd.f32 %v5068, %v5260
    %v5262 = vpop.f32.mrf.mxu0
    %v5263 = vadd.f32 %v5070, %v5262
    %v5264 = vpop.f32.mrf.mxu0
    %v5265 = vadd.f32 %v5072, %v5264
    %5266 = vmatprep.mubr.bf16.mxu0 %v3420
    %5267 = vmatmul.mubr.bf16.gmra.mxu0 %v3419
    %v5268 = vpop.f32.mrf.mxu0
    %v5269 = vadd.f32 %v5076, %v5268
    %v5270 = vpop.f32.mrf.mxu0
    %v5271 = vadd.f32 %v5078, %v5270
    %v5272 = vpop.f32.mrf.mxu0
    %v5273 = vadd.f32 %v5080, %v5272
    %v5274 = vpop.f32.mrf.mxu0
    %v5275 = vadd.f32 %v5082, %v5274
    %5276 = vmatprep.mubr.bf16.mxu0 %v3424
    %5277 = vmatmul.mubr.bf16.gmra.mxu0 %v3423
    %v5278 = vpop.f32.mrf.mxu0
    %v5279 = vadd.f32 %v5086, %v5278
    %v5280 = vpop.f32.mrf.mxu0
    %v5281 = vadd.f32 %v5088, %v5280
    %v5282 = vpop.f32.mrf.mxu0
    %v5283 = vadd.f32 %v5090, %v5282
    %v5284 = vpop.f32.mrf.mxu0
    %v5285 = vadd.f32 %v5092, %v5284
    %5286 = vmatprep.mubr.bf16.mxu0 %v3428
    %5287 = vmatmul.mubr.bf16.gmra.mxu0 %v3427
    %v5288 = vpop.f32.mrf.mxu0
    %v5289 = vadd.f32 %v5096, %v5288
    %v5290 = vpop.f32.mrf.mxu0
    %v5291 = vadd.f32 %v5098, %v5290
    %v5292 = vpop.f32.mrf.mxu0
    %v5293 = vadd.f32 %v5100, %v5292
    %v5294 = vpop.f32.mrf.mxu0
    %v5295 = vadd.f32 %v5102, %v5294
    %5296 = vmatprep.mubr.bf16.mxu0 %v3432
    %5297 = vmatmul.mubr.bf16.gmra.mxu0 %v3431
    %v5298 = vpop.f32.mrf.mxu0
    %v5299 = vadd.f32 %v5106, %v5298
    %v5300 = vpop.f32.mrf.mxu0
    %v5301 = vadd.f32 %v5108, %v5300
    %v5302 = vpop.f32.mrf.mxu0
    %v5303 = vadd.f32 %v5110, %v5302
    %v5304 = vpop.f32.mrf.mxu0
    %v5305 = vadd.f32 %v5112, %v5304
    %5306 = vmatprep.mubr.bf16.mxu0 %v3436
    %5307 = vmatmul.mubr.bf16.gmra.mxu0 %v3435
    %v5308 = vpop.f32.mrf.mxu0
    %v5309 = vadd.f32 %v5116, %v5308
    %v5310 = vpop.f32.mrf.mxu0
    %v5311 = vadd.f32 %v5118, %v5310
    %v5312 = vpop.f32.mrf.mxu0
    %v5313 = vadd.f32 %v5120, %v5312
    %v5314 = vpop.f32.mrf.mxu0
    %v5315 = vadd.f32 %v5122, %v5314
    %5316 = vmatprep.mubr.bf16.mxu0 %v3440
    %5317 = vmatmul.mubr.bf16.gmra.mxu0 %v3439
    %v5318 = vpop.f32.mrf.mxu0
    %v5319 = vadd.f32 %v5126, %v5318
    %v5320 = vpop.f32.mrf.mxu0
    %v5321 = vadd.f32 %v5128, %v5320
    %v5322 = vpop.f32.mrf.mxu0
    %v5323 = vadd.f32 %v5130, %v5322
    %v5324 = vpop.f32.mrf.mxu0
    %v5325 = vadd.f32 %v5132, %v5324
    %5326 = vmatprep.mubr.bf16.mxu0 %v3444
    %5327 = vmatmul.mubr.bf16.gmra.mxu0 %v3443
    %v5328 = vpop.f32.mrf.mxu0
    %v5329 = vadd.f32 %v5136, %v5328
    %v5330 = vpop.f32.mrf.mxu0
    %v5331 = vadd.f32 %v5138, %v5330
    %v5332 = vpop.f32.mrf.mxu0
    %v5333 = vadd.f32 %v5140, %v5332
    %v5334 = vpop.f32.mrf.mxu0
    %v5335 = vadd.f32 %v5142, %v5334
    %5336 = vmatprep.mubr.bf16.mxu0 %v3448
    %5337 = vmatmul.mubr.bf16.gmra.mxu0 %v3447
    %v5338 = vpop.f32.mrf.mxu0
    %v5339 = vadd.f32 %v5146, %v5338
    %v5340 = vpop.f32.mrf.mxu0
    %v5341 = vadd.f32 %v5148, %v5340
    %v5342 = vpop.f32.mrf.mxu0
    %v5343 = vadd.f32 %v5150, %v5342
    %v5344 = vpop.f32.mrf.mxu0
    %v5345 = vadd.f32 %v5152, %v5344
    %5346 = vmatprep.mubr.bf16.mxu0 %v3452
    %5347 = vmatmul.mubr.bf16.gmra.mxu0 %v3451
    %v5348 = vpop.f32.mrf.mxu0
    %v5349 = vadd.f32 %v5156, %v5348
    %v5350 = vpop.f32.mrf.mxu0
    %v5351 = vadd.f32 %v5158, %v5350
    %v5352 = vpop.f32.mrf.mxu0
    %v5353 = vadd.f32 %v5160, %v5352
    %v5354 = vpop.f32.mrf.mxu0
    %v5355 = vadd.f32 %v5162, %v5354
    %5356 = vmatprep.mubr.bf16.mxu0 %v3456
    %5357 = vmatmul.mubr.bf16.gmra.mxu0 %v3455
    %v5358 = vpop.f32.mrf.mxu0
    %v5359 = vadd.f32 %v5166, %v5358
    %v5360 = vpop.f32.mrf.mxu0
    %v5361 = vadd.f32 %v5168, %v5360
    %v5362 = vpop.f32.mrf.mxu0
    %v5363 = vadd.f32 %v5170, %v5362
    %v5364 = vpop.f32.mrf.mxu0
    %v5365 = vadd.f32 %v5172, %v5364
    %5366 = vmatprep.mubr.bf16.mxu0 %v3460
    %5367 = vmatmul.mubr.bf16.gmra.mxu0 %v3459
    %v5368 = vpop.f32.mrf.mxu0
    %v5369 = vadd.f32 %v5176, %v5368
    %v5370 = vpop.f32.mrf.mxu0
    %v5371 = vadd.f32 %v5178, %v5370
    %v5372 = vpop.f32.mrf.mxu0
    %v5373 = vadd.f32 %v5180, %v5372
    %v5374 = vpop.f32.mrf.mxu0
    %v5375 = vadd.f32 %v5182, %v5374
    %5376 = vmatprep.mubr.bf16.mxu0 %v3464
    %5377 = vmatmul.mubr.bf16.gmra.mxu0 %v3463
    %v5378 = vpop.f32.mrf.mxu0
    %v5379 = vadd.f32 %v5186, %v5378
    %v5380 = vpop.f32.mrf.mxu0
    %v5381 = vadd.f32 %v5188, %v5380
    %v5382 = vpop.f32.mrf.mxu0
    %v5383 = vadd.f32 %v5190, %v5382
    %v5384 = vpop.f32.mrf.mxu0
    %v5385 = vadd.f32 %v5192, %v5384
    %5386 = vdwg.mxu0
    %5387 = vmatprep.subr.bf16.mxu0 %v4548
    %5388 = vmatpush1.bf16.msra.mxu0 %v4547
    %5389 = vmatprep.subr.bf16.mxu0 %v4540
    %5390 = vmatpush1.bf16.msra.mxu0 %v4539
    %5391 = vmatprep.subr.bf16.mxu0 %v4532
    %5392 = vmatpush1.bf16.msra.mxu0 %v4531
    %5393 = vmatprep.subr.bf16.mxu0 %v4524
    %5394 = vmatpush1.bf16.msra.mxu0 %v4523
    %5395 = vmatprep.subr.bf16.mxu0 %v4516
    %5396 = vmatpush1.bf16.msra.mxu0 %v4515
    %5397 = vmatprep.subr.bf16.mxu0 %v4508
    %5398 = vmatpush1.bf16.msra.mxu0 %v4507
    %5399 = vmatprep.subr.bf16.mxu0 %v4500
    %5400 = vmatpush1.bf16.msra.mxu0 %v4499
    %5401 = vmatprep.subr.bf16.mxu0 %v4492
    %5402 = vmatpush1.bf16.msra.mxu0 %v4491
    %5403 = vmatprep.subr.bf16.mxu0 %v4612
    %5404 = vmatpush2.bf16.msra.mxu0 %v4611
    %5405 = vmatprep.subr.bf16.mxu0 %v4604
    %5406 = vmatpush2.bf16.msra.mxu0 %v4603
    %5407 = vmatprep.subr.bf16.mxu0 %v4596
    %5408 = vmatpush2.bf16.msra.mxu0 %v4595
    %5409 = vmatprep.subr.bf16.mxu0 %v4588
    %5410 = vmatpush2.bf16.msra.mxu0 %v4587
    %5411 = vmatprep.subr.bf16.mxu0 %v4580
    %5412 = vmatpush2.bf16.msra.mxu0 %v4579
    %5413 = vmatprep.subr.bf16.mxu0 %v4572
    %5414 = vmatpush2.bf16.msra.mxu0 %v4571
    %5415 = vmatprep.subr.bf16.mxu0 %v4564
    %5416 = vmatpush2.bf16.msra.mxu0 %v4563
    %5417 = vmatprep.subr.bf16.mxu0 %v4556
    %5418 = vmatpush2.bf16.msra.mxu0 %v4555
    %5419 = vmatprep.mubr.bf16.mxu0 %v3402
    %5420 = vmatmul.mubr.bf16.gmra.mxu0 %v3401
    %v5421 = vpop.f32.mrf.mxu0
    %v5422 = vadd.f32 0.0, %v5421
    %v5423 = vpop.f32.mrf.mxu0
    %v5424 = vadd.f32 0.0, %v5423
    %v5425 = vpop.f32.mrf.mxu0
    %v5426 = vadd.f32 0.0, %v5425
    %v5427 = vpop.f32.mrf.mxu0
    %v5428 = vadd.f32 0.0, %v5427
    %5429 = vmatprep.mubr.bf16.mxu0 %v3406
    %5430 = vmatmul.mubr.bf16.gmra.mxu0 %v3405
    %v5431 = vpop.f32.mrf.mxu0
    %v5432 = vadd.f32 0.0, %v5431
    %v5433 = vpop.f32.mrf.mxu0
    %v5434 = vadd.f32 0.0, %v5433
    %v5435 = vpop.f32.mrf.mxu0
    %v5436 = vadd.f32 0.0, %v5435
    %v5437 = vpop.f32.mrf.mxu0
    %v5438 = vadd.f32 0.0, %v5437
    %5439 = vmatprep.mubr.bf16.mxu0 %v3410
    %5440 = vmatmul.mubr.bf16.gmra.mxu0 %v3409
    %v5441 = vpop.f32.mrf.mxu0
    %v5442 = vadd.f32 0.0, %v5441
    %v5443 = vpop.f32.mrf.mxu0
    %v5444 = vadd.f32 0.0, %v5443
    %v5445 = vpop.f32.mrf.mxu0
    %v5446 = vadd.f32 0.0, %v5445
    %v5447 = vpop.f32.mrf.mxu0
    %v5448 = vadd.f32 0.0, %v5447
    %5449 = vmatprep.mubr.bf16.mxu0 %v3414
    %5450 = vmatmul.mubr.bf16.gmra.mxu0 %v3413
    %v5451 = vpop.f32.mrf.mxu0
    %v5452 = vadd.f32 0.0, %v5451
    %v5453 = vpop.f32.mrf.mxu0
    %v5454 = vadd.f32 0.0, %v5453
    %v5455 = vpop.f32.mrf.mxu0
    %v5456 = vadd.f32 0.0, %v5455
    %v5457 = vpop.f32.mrf.mxu0
    %v5458 = vadd.f32 0.0, %v5457
    %5459 = vmatprep.mubr.bf16.mxu0 %v3418
    %5460 = vmatmul.mubr.bf16.gmra.mxu0 %v3417
    %v5461 = vpop.f32.mrf.mxu0
    %v5462 = vadd.f32 0.0, %v5461
    %v5463 = vpop.f32.mrf.mxu0
    %v5464 = vadd.f32 0.0, %v5463
    %v5465 = vpop.f32.mrf.mxu0
    %v5466 = vadd.f32 0.0, %v5465
    %v5467 = vpop.f32.mrf.mxu0
    %v5468 = vadd.f32 0.0, %v5467
    %5469 = vmatprep.mubr.bf16.mxu0 %v3422
    %5470 = vmatmul.mubr.bf16.gmra.mxu0 %v3421
    %v5471 = vpop.f32.mrf.mxu0
    %v5472 = vadd.f32 0.0, %v5471
    %v5473 = vpop.f32.mrf.mxu0
    %v5474 = vadd.f32 0.0, %v5473
    %v5475 = vpop.f32.mrf.mxu0
    %v5476 = vadd.f32 0.0, %v5475
    %v5477 = vpop.f32.mrf.mxu0
    %v5478 = vadd.f32 0.0, %v5477
    %5479 = vmatprep.mubr.bf16.mxu0 %v3426
    %5480 = vmatmul.mubr.bf16.gmra.mxu0 %v3425
    %v5481 = vpop.f32.mrf.mxu0
    %v5482 = vadd.f32 0.0, %v5481
    %v5483 = vpop.f32.mrf.mxu0
    %v5484 = vadd.f32 0.0, %v5483
    %v5485 = vpop.f32.mrf.mxu0
    %v5486 = vadd.f32 0.0, %v5485
    %v5487 = vpop.f32.mrf.mxu0
    %v5488 = vadd.f32 0.0, %v5487
    %5489 = vmatprep.mubr.bf16.mxu0 %v3430
    %5490 = vmatmul.mubr.bf16.gmra.mxu0 %v3429
    %v5491 = vpop.f32.mrf.mxu0
    %v5492 = vadd.f32 0.0, %v5491
    %v5493 = vpop.f32.mrf.mxu0
    %v5494 = vadd.f32 0.0, %v5493
    %v5495 = vpop.f32.mrf.mxu0
    %v5496 = vadd.f32 0.0, %v5495
    %v5497 = vpop.f32.mrf.mxu0
    %v5498 = vadd.f32 0.0, %v5497
    %5499 = vmatprep.mubr.bf16.mxu0 %v3434
    %5500 = vmatmul.mubr.bf16.gmra.mxu0 %v3433
    %v5501 = vpop.f32.mrf.mxu0
    %v5502 = vadd.f32 0.0, %v5501
    %v5503 = vpop.f32.mrf.mxu0
    %v5504 = vadd.f32 0.0, %v5503
    %v5505 = vpop.f32.mrf.mxu0
    %v5506 = vadd.f32 0.0, %v5505
    %v5507 = vpop.f32.mrf.mxu0
    %v5508 = vadd.f32 0.0, %v5507
    %5509 = vmatprep.mubr.bf16.mxu0 %v3438
    %5510 = vmatmul.mubr.bf16.gmra.mxu0 %v3437
    %v5511 = vpop.f32.mrf.mxu0
    %v5512 = vadd.f32 0.0, %v5511
    %v5513 = vpop.f32.mrf.mxu0
    %v5514 = vadd.f32 0.0, %v5513
    %v5515 = vpop.f32.mrf.mxu0
    %v5516 = vadd.f32 0.0, %v5515
    %v5517 = vpop.f32.mrf.mxu0
    %v5518 = vadd.f32 0.0, %v5517
    %5519 = vmatprep.mubr.bf16.mxu0 %v3442
    %5520 = vmatmul.mubr.bf16.gmra.mxu0 %v3441
    %v5521 = vpop.f32.mrf.mxu0
    %v5522 = vadd.f32 0.0, %v5521
    %v5523 = vpop.f32.mrf.mxu0
    %v5524 = vadd.f32 0.0, %v5523
    %v5525 = vpop.f32.mrf.mxu0
    %v5526 = vadd.f32 0.0, %v5525
    %v5527 = vpop.f32.mrf.mxu0
    %v5528 = vadd.f32 0.0, %v5527
    %5529 = vmatprep.mubr.bf16.mxu0 %v3446
    %5530 = vmatmul.mubr.bf16.gmra.mxu0 %v3445
    %v5531 = vpop.f32.mrf.mxu0
    %v5532 = vadd.f32 0.0, %v5531
    %v5533 = vpop.f32.mrf.mxu0
    %v5534 = vadd.f32 0.0, %v5533
    %v5535 = vpop.f32.mrf.mxu0
    %v5536 = vadd.f32 0.0, %v5535
    %v5537 = vpop.f32.mrf.mxu0
    %v5538 = vadd.f32 0.0, %v5537
    %5539 = vmatprep.mubr.bf16.mxu0 %v3450
    %5540 = vmatmul.mubr.bf16.gmra.mxu0 %v3449
    %v5541 = vpop.f32.mrf.mxu0
    %v5542 = vadd.f32 0.0, %v5541
    %v5543 = vpop.f32.mrf.mxu0
    %v5544 = vadd.f32 0.0, %v5543
    %v5545 = vpop.f32.mrf.mxu0
    %v5546 = vadd.f32 0.0, %v5545
    %v5547 = vpop.f32.mrf.mxu0
    %v5548 = vadd.f32 0.0, %v5547
    %5549 = vmatprep.mubr.bf16.mxu0 %v3454
    %5550 = vmatmul.mubr.bf16.gmra.mxu0 %v3453
    %v5551 = vpop.f32.mrf.mxu0
    %v5552 = vadd.f32 0.0, %v5551
    %v5553 = vpop.f32.mrf.mxu0
    %v5554 = vadd.f32 0.0, %v5553
    %v5555 = vpop.f32.mrf.mxu0
    %v5556 = vadd.f32 0.0, %v5555
    %v5557 = vpop.f32.mrf.mxu0
    %v5558 = vadd.f32 0.0, %v5557
    %5559 = vmatprep.mubr.bf16.mxu0 %v3458
    %5560 = vmatmul.mubr.bf16.gmra.mxu0 %v3457
    %v5561 = vpop.f32.mrf.mxu0
    %v5562 = vadd.f32 0.0, %v5561
    %v5563 = vpop.f32.mrf.mxu0
    %v5564 = vadd.f32 0.0, %v5563
    %v5565 = vpop.f32.mrf.mxu0
    %v5566 = vadd.f32 0.0, %v5565
    %v5567 = vpop.f32.mrf.mxu0
    %v5568 = vadd.f32 0.0, %v5567
    %5569 = vmatprep.mubr.bf16.mxu0 %v3462
    %5570 = vmatmul.mubr.bf16.gmra.mxu0 %v3461
    %v5571 = vpop.f32.mrf.mxu0
    %v5572 = vadd.f32 0.0, %v5571
    %v5573 = vpop.f32.mrf.mxu0
    %v5574 = vadd.f32 0.0, %v5573
    %v5575 = vpop.f32.mrf.mxu0
    %v5576 = vadd.f32 0.0, %v5575
    %v5577 = vpop.f32.mrf.mxu0
    %v5578 = vadd.f32 0.0, %v5577
    %5579 = vdwg.mxu0
    %5580 = vmatprep.subr.bf16.mxu0 %v4676
    %5581 = vmatpush1.bf16.msra.mxu0 %v4675
    %5582 = vmatprep.subr.bf16.mxu0 %v4668
    %5583 = vmatpush1.bf16.msra.mxu0 %v4667
    %5584 = vmatprep.subr.bf16.mxu0 %v4660
    %5585 = vmatpush1.bf16.msra.mxu0 %v4659
    %5586 = vmatprep.subr.bf16.mxu0 %v4652
    %5587 = vmatpush1.bf16.msra.mxu0 %v4651
    %5588 = vmatprep.subr.bf16.mxu0 %v4644
    %5589 = vmatpush1.bf16.msra.mxu0 %v4643
    %5590 = vmatprep.subr.bf16.mxu0 %v4636
    %5591 = vmatpush1.bf16.msra.mxu0 %v4635
    %5592 = vmatprep.subr.bf16.mxu0 %v4628
    %5593 = vmatpush1.bf16.msra.mxu0 %v4627
    %5594 = vmatprep.subr.bf16.mxu0 %v4620
    %5595 = vmatpush1.bf16.msra.mxu0 %v4619
    %5596 = vmatprep.subr.bf16.mxu0 %v4740
    %5597 = vmatpush2.bf16.msra.mxu0 %v4739
    %5598 = vmatprep.subr.bf16.mxu0 %v4732
    %5599 = vmatpush2.bf16.msra.mxu0 %v4731
    %5600 = vmatprep.subr.bf16.mxu0 %v4724
    %5601 = vmatpush2.bf16.msra.mxu0 %v4723
    %5602 = vmatprep.subr.bf16.mxu0 %v4716
    %5603 = vmatpush2.bf16.msra.mxu0 %v4715
    %5604 = vmatprep.subr.bf16.mxu0 %v4708
    %5605 = vmatpush2.bf16.msra.mxu0 %v4707
    %5606 = vmatprep.subr.bf16.mxu0 %v4700
    %5607 = vmatpush2.bf16.msra.mxu0 %v4699
    %5608 = vmatprep.subr.bf16.mxu0 %v4692
    %5609 = vmatpush2.bf16.msra.mxu0 %v4691
    %5610 = vmatprep.subr.bf16.mxu0 %v4684
    %5611 = vmatpush2.bf16.msra.mxu0 %v4683
    %5612 = vmatprep.mubr.bf16.mxu0 %v3404
    %5613 = vmatmul.mubr.bf16.gmra.mxu0 %v3403
    %v5614 = vpop.f32.mrf.mxu0
    %v5615 = vadd.f32 %v5422, %v5614
    %v5616 = vpop.f32.mrf.mxu0
    %v5617 = vadd.f32 %v5424, %v5616
    %v5618 = vpop.f32.mrf.mxu0
    %v5619 = vadd.f32 %v5426, %v5618
    %v5620 = vpop.f32.mrf.mxu0
    %v5621 = vadd.f32 %v5428, %v5620
    %5622 = vmatprep.mubr.bf16.mxu0 %v3408
    %5623 = vmatmul.mubr.bf16.gmra.mxu0 %v3407
    %v5624 = vpop.f32.mrf.mxu0
    %v5625 = vadd.f32 %v5432, %v5624
    %v5626 = vpop.f32.mrf.mxu0
    %v5627 = vadd.f32 %v5434, %v5626
    %v5628 = vpop.f32.mrf.mxu0
    %v5629 = vadd.f32 %v5436, %v5628
    %v5630 = vpop.f32.mrf.mxu0
    %v5631 = vadd.f32 %v5438, %v5630
    %5632 = vmatprep.mubr.bf16.mxu0 %v3412
    %5633 = vmatmul.mubr.bf16.gmra.mxu0 %v3411
    %v5634 = vpop.f32.mrf.mxu0
    %v5635 = vadd.f32 %v5442, %v5634
    %v5636 = vpop.f32.mrf.mxu0
    %v5637 = vadd.f32 %v5444, %v5636
    %v5638 = vpop.f32.mrf.mxu0
    %v5639 = vadd.f32 %v5446, %v5638
    %v5640 = vpop.f32.mrf.mxu0
    %v5641 = vadd.f32 %v5448, %v5640
    %5642 = vmatprep.mubr.bf16.mxu0 %v3416
    %5643 = vmatmul.mubr.bf16.gmra.mxu0 %v3415
    %v5644 = vpop.f32.mrf.mxu0
    %v5645 = vadd.f32 %v5452, %v5644
    %v5646 = vpop.f32.mrf.mxu0
    %v5647 = vadd.f32 %v5454, %v5646
    %v5648 = vpop.f32.mrf.mxu0
    %v5649 = vadd.f32 %v5456, %v5648
    %v5650 = vpop.f32.mrf.mxu0
    %v5651 = vadd.f32 %v5458, %v5650
    %5652 = vmatprep.mubr.bf16.mxu0 %v3420
    %5653 = vmatmul.mubr.bf16.gmra.mxu0 %v3419
    %v5654 = vpop.f32.mrf.mxu0
    %v5655 = vadd.f32 %v5462, %v5654
    %v5656 = vpop.f32.mrf.mxu0
    %v5657 = vadd.f32 %v5464, %v5656
    %v5658 = vpop.f32.mrf.mxu0
    %v5659 = vadd.f32 %v5466, %v5658
    %v5660 = vpop.f32.mrf.mxu0
    %v5661 = vadd.f32 %v5468, %v5660
    %5662 = vmatprep.mubr.bf16.mxu0 %v3424
    %5663 = vmatmul.mubr.bf16.gmra.mxu0 %v3423
    %v5664 = vpop.f32.mrf.mxu0
    %v5665 = vadd.f32 %v5472, %v5664
    %v5666 = vpop.f32.mrf.mxu0
    %v5667 = vadd.f32 %v5474, %v5666
    %v5668 = vpop.f32.mrf.mxu0
    %v5669 = vadd.f32 %v5476, %v5668
    %v5670 = vpop.f32.mrf.mxu0
    %v5671 = vadd.f32 %v5478, %v5670
    %5672 = vmatprep.mubr.bf16.mxu0 %v3428
    %5673 = vmatmul.mubr.bf16.gmra.mxu0 %v3427
    %v5674 = vpop.f32.mrf.mxu0
    %v5675 = vadd.f32 %v5482, %v5674
    %v5676 = vpop.f32.mrf.mxu0
    %v5677 = vadd.f32 %v5484, %v5676
    %v5678 = vpop.f32.mrf.mxu0
    %v5679 = vadd.f32 %v5486, %v5678
    %v5680 = vpop.f32.mrf.mxu0
    %v5681 = vadd.f32 %v5488, %v5680
    %5682 = vmatprep.mubr.bf16.mxu0 %v3432
    %5683 = vmatmul.mubr.bf16.gmra.mxu0 %v3431
    %v5684 = vpop.f32.mrf.mxu0
    %v5685 = vadd.f32 %v5492, %v5684
    %v5686 = vpop.f32.mrf.mxu0
    %v5687 = vadd.f32 %v5494, %v5686
    %v5688 = vpop.f32.mrf.mxu0
    %v5689 = vadd.f32 %v5496, %v5688
    %v5690 = vpop.f32.mrf.mxu0
    %v5691 = vadd.f32 %v5498, %v5690
    %5692 = vmatprep.mubr.bf16.mxu0 %v3436
    %5693 = vmatmul.mubr.bf16.gmra.mxu0 %v3435
    %v5694 = vpop.f32.mrf.mxu0
    %v5695 = vadd.f32 %v5502, %v5694
    %v5696 = vpop.f32.mrf.mxu0
    %v5697 = vadd.f32 %v5504, %v5696
    %v5698 = vpop.f32.mrf.mxu0
    %v5699 = vadd.f32 %v5506, %v5698
    %v5700 = vpop.f32.mrf.mxu0
    %v5701 = vadd.f32 %v5508, %v5700
    %5702 = vmatprep.mubr.bf16.mxu0 %v3440
    %5703 = vmatmul.mubr.bf16.gmra.mxu0 %v3439
    %v5704 = vpop.f32.mrf.mxu0
    %v5705 = vadd.f32 %v5512, %v5704
    %v5706 = vpop.f32.mrf.mxu0
    %v5707 = vadd.f32 %v5514, %v5706
    %v5708 = vpop.f32.mrf.mxu0
    %v5709 = vadd.f32 %v5516, %v5708
    %v5710 = vpop.f32.mrf.mxu0
    %v5711 = vadd.f32 %v5518, %v5710
    %5712 = vmatprep.mubr.bf16.mxu0 %v3444
    %5713 = vmatmul.mubr.bf16.gmra.mxu0 %v3443
    %v5714 = vpop.f32.mrf.mxu0
    %v5715 = vadd.f32 %v5522, %v5714
    %v5716 = vpop.f32.mrf.mxu0
    %v5717 = vadd.f32 %v5524, %v5716
    %v5718 = vpop.f32.mrf.mxu0
    %v5719 = vadd.f32 %v5526, %v5718
    %v5720 = vpop.f32.mrf.mxu0
    %v5721 = vadd.f32 %v5528, %v5720
    %5722 = vmatprep.mubr.bf16.mxu0 %v3448
    %5723 = vmatmul.mubr.bf16.gmra.mxu0 %v3447
    %v5724 = vpop.f32.mrf.mxu0
    %v5725 = vadd.f32 %v5532, %v5724
    %v5726 = vpop.f32.mrf.mxu0
    %v5727 = vadd.f32 %v5534, %v5726
    %v5728 = vpop.f32.mrf.mxu0
    %v5729 = vadd.f32 %v5536, %v5728
    %v5730 = vpop.f32.mrf.mxu0
    %v5731 = vadd.f32 %v5538, %v5730
    %5732 = vmatprep.mubr.bf16.mxu0 %v3452
    %5733 = vmatmul.mubr.bf16.gmra.mxu0 %v3451
    %v5734 = vpop.f32.mrf.mxu0
    %v5735 = vadd.f32 %v5542, %v5734
    %v5736 = vpop.f32.mrf.mxu0
    %v5737 = vadd.f32 %v5544, %v5736
    %v5738 = vpop.f32.mrf.mxu0
    %v5739 = vadd.f32 %v5546, %v5738
    %v5740 = vpop.f32.mrf.mxu0
    %v5741 = vadd.f32 %v5548, %v5740
    %5742 = vmatprep.mubr.bf16.mxu0 %v3456
    %5743 = vmatmul.mubr.bf16.gmra.mxu0 %v3455
    %v5744 = vpop.f32.mrf.mxu0
    %v5745 = vadd.f32 %v5552, %v5744
    %v5746 = vpop.f32.mrf.mxu0
    %v5747 = vadd.f32 %v5554, %v5746
    %v5748 = vpop.f32.mrf.mxu0
    %v5749 = vadd.f32 %v5556, %v5748
    %v5750 = vpop.f32.mrf.mxu0
    %v5751 = vadd.f32 %v5558, %v5750
    %5752 = vmatprep.mubr.bf16.mxu0 %v3460
    %5753 = vmatmul.mubr.bf16.gmra.mxu0 %v3459
    %v5754 = vpop.f32.mrf.mxu0
    %v5755 = vadd.f32 %v5562, %v5754
    %v5756 = vpop.f32.mrf.mxu0
    %v5757 = vadd.f32 %v5564, %v5756
    %v5758 = vpop.f32.mrf.mxu0
    %v5759 = vadd.f32 %v5566, %v5758
    %v5760 = vpop.f32.mrf.mxu0
    %v5761 = vadd.f32 %v5568, %v5760
    %5762 = vmatprep.mubr.bf16.mxu0 %v3464
    %5763 = vmatmul.mubr.bf16.gmra.mxu0 %v3463
    %v5764 = vpop.f32.mrf.mxu0
    %v5765 = vadd.f32 %v5572, %v5764
    %v5766 = vpop.f32.mrf.mxu0
    %v5767 = vadd.f32 %v5574, %v5766
    %v5768 = vpop.f32.mrf.mxu0
    %v5769 = vadd.f32 %v5576, %v5768
    %v5770 = vpop.f32.mrf.mxu0
    %v5771 = vadd.f32 %v5578, %v5770
    %5772 = vdwg.mxu0
    %5773 = vmatprep.subr.bf16.mxu0 %v4550
    %5774 = vmatpush1.bf16.msra.mxu0 %v4549
    %5775 = vmatprep.subr.bf16.mxu0 %v4542
    %5776 = vmatpush1.bf16.msra.mxu0 %v4541
    %5777 = vmatprep.subr.bf16.mxu0 %v4534
    %5778 = vmatpush1.bf16.msra.mxu0 %v4533
    %5779 = vmatprep.subr.bf16.mxu0 %v4526
    %5780 = vmatpush1.bf16.msra.mxu0 %v4525
    %5781 = vmatprep.subr.bf16.mxu0 %v4518
    %5782 = vmatpush1.bf16.msra.mxu0 %v4517
    %5783 = vmatprep.subr.bf16.mxu0 %v4510
    %5784 = vmatpush1.bf16.msra.mxu0 %v4509
    %5785 = vmatprep.subr.bf16.mxu0 %v4502
    %5786 = vmatpush1.bf16.msra.mxu0 %v4501
    %5787 = vmatprep.subr.bf16.mxu0 %v4494
    %5788 = vmatpush1.bf16.msra.mxu0 %v4493
    %5789 = vmatprep.subr.bf16.mxu0 %v4614
    %5790 = vmatpush2.bf16.msra.mxu0 %v4613
    %5791 = vmatprep.subr.bf16.mxu0 %v4606
    %5792 = vmatpush2.bf16.msra.mxu0 %v4605
    %5793 = vmatprep.subr.bf16.mxu0 %v4598
    %5794 = vmatpush2.bf16.msra.mxu0 %v4597
    %5795 = vmatprep.subr.bf16.mxu0 %v4590
    %5796 = vmatpush2.bf16.msra.mxu0 %v4589
    %5797 = vmatprep.subr.bf16.mxu0 %v4582
    %5798 = vmatpush2.bf16.msra.mxu0 %v4581
    %5799 = vmatprep.subr.bf16.mxu0 %v4574
    %5800 = vmatpush2.bf16.msra.mxu0 %v4573
    %5801 = vmatprep.subr.bf16.mxu0 %v4566
    %5802 = vmatpush2.bf16.msra.mxu0 %v4565
    %5803 = vmatprep.subr.bf16.mxu0 %v4558
    %5804 = vmatpush2.bf16.msra.mxu0 %v4557
    %5805 = vmatprep.mubr.bf16.mxu0 %v3402
    %5806 = vmatmul.mubr.bf16.gmra.mxu0 %v3401
    %v5807 = vpop.f32.mrf.mxu0
    %v5808 = vadd.f32 0.0, %v5807
    %v5809 = vpop.f32.mrf.mxu0
    %v5810 = vadd.f32 0.0, %v5809
    %v5811 = vpop.f32.mrf.mxu0
    %v5812 = vadd.f32 0.0, %v5811
    %v5813 = vpop.f32.mrf.mxu0
    %v5814 = vadd.f32 0.0, %v5813
    %5815 = vmatprep.mubr.bf16.mxu0 %v3406
    %5816 = vmatmul.mubr.bf16.gmra.mxu0 %v3405
    %v5817 = vpop.f32.mrf.mxu0
    %v5818 = vadd.f32 0.0, %v5817
    %v5819 = vpop.f32.mrf.mxu0
    %v5820 = vadd.f32 0.0, %v5819
    %v5821 = vpop.f32.mrf.mxu0
    %v5822 = vadd.f32 0.0, %v5821
    %v5823 = vpop.f32.mrf.mxu0
    %v5824 = vadd.f32 0.0, %v5823
    %5825 = vmatprep.mubr.bf16.mxu0 %v3410
    %5826 = vmatmul.mubr.bf16.gmra.mxu0 %v3409
    %v5827 = vpop.f32.mrf.mxu0
    %v5828 = vadd.f32 0.0, %v5827
    %v5829 = vpop.f32.mrf.mxu0
    %v5830 = vadd.f32 0.0, %v5829
    %v5831 = vpop.f32.mrf.mxu0
    %v5832 = vadd.f32 0.0, %v5831
    %v5833 = vpop.f32.mrf.mxu0
    %v5834 = vadd.f32 0.0, %v5833
    %5835 = vmatprep.mubr.bf16.mxu0 %v3414
    %5836 = vmatmul.mubr.bf16.gmra.mxu0 %v3413
    %v5837 = vpop.f32.mrf.mxu0
    %v5838 = vadd.f32 0.0, %v5837
    %v5839 = vpop.f32.mrf.mxu0
    %v5840 = vadd.f32 0.0, %v5839
    %v5841 = vpop.f32.mrf.mxu0
    %v5842 = vadd.f32 0.0, %v5841
    %v5843 = vpop.f32.mrf.mxu0
    %v5844 = vadd.f32 0.0, %v5843
    %5845 = vmatprep.mubr.bf16.mxu0 %v3418
    %5846 = vmatmul.mubr.bf16.gmra.mxu0 %v3417
    %v5847 = vpop.f32.mrf.mxu0
    %v5848 = vadd.f32 0.0, %v5847
    %v5849 = vpop.f32.mrf.mxu0
    %v5850 = vadd.f32 0.0, %v5849
    %v5851 = vpop.f32.mrf.mxu0
    %v5852 = vadd.f32 0.0, %v5851
    %v5853 = vpop.f32.mrf.mxu0
    %v5854 = vadd.f32 0.0, %v5853
    %5855 = vmatprep.mubr.bf16.mxu0 %v3422
    %5856 = vmatmul.mubr.bf16.gmra.mxu0 %v3421
    %v5857 = vpop.f32.mrf.mxu0
    %v5858 = vadd.f32 0.0, %v5857
    %v5859 = vpop.f32.mrf.mxu0
    %v5860 = vadd.f32 0.0, %v5859
    %v5861 = vpop.f32.mrf.mxu0
    %v5862 = vadd.f32 0.0, %v5861
    %v5863 = vpop.f32.mrf.mxu0
    %v5864 = vadd.f32 0.0, %v5863
    %5865 = vmatprep.mubr.bf16.mxu0 %v3426
    %5866 = vmatmul.mubr.bf16.gmra.mxu0 %v3425
    %v5867 = vpop.f32.mrf.mxu0
    %v5868 = vadd.f32 0.0, %v5867
    %v5869 = vpop.f32.mrf.mxu0
    %v5870 = vadd.f32 0.0, %v5869
    %v5871 = vpop.f32.mrf.mxu0
    %v5872 = vadd.f32 0.0, %v5871
    %v5873 = vpop.f32.mrf.mxu0
    %v5874 = vadd.f32 0.0, %v5873
    %5875 = vmatprep.mubr.bf16.mxu0 %v3430
    %5876 = vmatmul.mubr.bf16.gmra.mxu0 %v3429
    %v5877 = vpop.f32.mrf.mxu0
    %v5878 = vadd.f32 0.0, %v5877
    %v5879 = vpop.f32.mrf.mxu0
    %v5880 = vadd.f32 0.0, %v5879
    %v5881 = vpop.f32.mrf.mxu0
    %v5882 = vadd.f32 0.0, %v5881
    %v5883 = vpop.f32.mrf.mxu0
    %v5884 = vadd.f32 0.0, %v5883
    %5885 = vmatprep.mubr.bf16.mxu0 %v3434
    %5886 = vmatmul.mubr.bf16.gmra.mxu0 %v3433
    %v5887 = vpop.f32.mrf.mxu0
    %v5888 = vadd.f32 0.0, %v5887
    %v5889 = vpop.f32.mrf.mxu0
    %v5890 = vadd.f32 0.0, %v5889
    %v5891 = vpop.f32.mrf.mxu0
    %v5892 = vadd.f32 0.0, %v5891
    %v5893 = vpop.f32.mrf.mxu0
    %v5894 = vadd.f32 0.0, %v5893
    %5895 = vmatprep.mubr.bf16.mxu0 %v3438
    %5896 = vmatmul.mubr.bf16.gmra.mxu0 %v3437
    %v5897 = vpop.f32.mrf.mxu0
    %v5898 = vadd.f32 0.0, %v5897
    %v5899 = vpop.f32.mrf.mxu0
    %v5900 = vadd.f32 0.0, %v5899
    %v5901 = vpop.f32.mrf.mxu0
    %v5902 = vadd.f32 0.0, %v5901
    %v5903 = vpop.f32.mrf.mxu0
    %v5904 = vadd.f32 0.0, %v5903
    %5905 = vmatprep.mubr.bf16.mxu0 %v3442
    %5906 = vmatmul.mubr.bf16.gmra.mxu0 %v3441
    %v5907 = vpop.f32.mrf.mxu0
    %v5908 = vadd.f32 0.0, %v5907
    %v5909 = vpop.f32.mrf.mxu0
    %v5910 = vadd.f32 0.0, %v5909
    %v5911 = vpop.f32.mrf.mxu0
    %v5912 = vadd.f32 0.0, %v5911
    %v5913 = vpop.f32.mrf.mxu0
    %v5914 = vadd.f32 0.0, %v5913
    %5915 = vmatprep.mubr.bf16.mxu0 %v3446
    %5916 = vmatmul.mubr.bf16.gmra.mxu0 %v3445
    %v5917 = vpop.f32.mrf.mxu0
    %v5918 = vadd.f32 0.0, %v5917
    %v5919 = vpop.f32.mrf.mxu0
    %v5920 = vadd.f32 0.0, %v5919
    %v5921 = vpop.f32.mrf.mxu0
    %v5922 = vadd.f32 0.0, %v5921
    %v5923 = vpop.f32.mrf.mxu0
    %v5924 = vadd.f32 0.0, %v5923
    %5925 = vmatprep.mubr.bf16.mxu0 %v3450
    %5926 = vmatmul.mubr.bf16.gmra.mxu0 %v3449
    %v5927 = vpop.f32.mrf.mxu0
    %v5928 = vadd.f32 0.0, %v5927
    %v5929 = vpop.f32.mrf.mxu0
    %v5930 = vadd.f32 0.0, %v5929
    %v5931 = vpop.f32.mrf.mxu0
    %v5932 = vadd.f32 0.0, %v5931
    %v5933 = vpop.f32.mrf.mxu0
    %v5934 = vadd.f32 0.0, %v5933
    %5935 = vmatprep.mubr.bf16.mxu0 %v3454
    %5936 = vmatmul.mubr.bf16.gmra.mxu0 %v3453
    %v5937 = vpop.f32.mrf.mxu0
    %v5938 = vadd.f32 0.0, %v5937
    %v5939 = vpop.f32.mrf.mxu0
    %v5940 = vadd.f32 0.0, %v5939
    %v5941 = vpop.f32.mrf.mxu0
    %v5942 = vadd.f32 0.0, %v5941
    %v5943 = vpop.f32.mrf.mxu0
    %v5944 = vadd.f32 0.0, %v5943
    %5945 = vmatprep.mubr.bf16.mxu0 %v3458
    %5946 = vmatmul.mubr.bf16.gmra.mxu0 %v3457
    %v5947 = vpop.f32.mrf.mxu0
    %v5948 = vadd.f32 0.0, %v5947
    %v5949 = vpop.f32.mrf.mxu0
    %v5950 = vadd.f32 0.0, %v5949
    %v5951 = vpop.f32.mrf.mxu0
    %v5952 = vadd.f32 0.0, %v5951
    %v5953 = vpop.f32.mrf.mxu0
    %v5954 = vadd.f32 0.0, %v5953
    %5955 = vmatprep.mubr.bf16.mxu0 %v3462
    %5956 = vmatmul.mubr.bf16.gmra.mxu0 %v3461
    %v5957 = vpop.f32.mrf.mxu0
    %v5958 = vadd.f32 0.0, %v5957
    %v5959 = vpop.f32.mrf.mxu0
    %v5960 = vadd.f32 0.0, %v5959
    %v5961 = vpop.f32.mrf.mxu0
    %v5962 = vadd.f32 0.0, %v5961
    %v5963 = vpop.f32.mrf.mxu0
    %v5964 = vadd.f32 0.0, %v5963
    %5965 = vdwg.mxu0
    %5966 = vmatprep.subr.bf16.mxu0 %v4678
    %5967 = vmatpush1.bf16.msra.mxu0 %v4677
    %5968 = vmatprep.subr.bf16.mxu0 %v4670
    %5969 = vmatpush1.bf16.msra.mxu0 %v4669
    %5970 = vmatprep.subr.bf16.mxu0 %v4662
    %5971 = vmatpush1.bf16.msra.mxu0 %v4661
    %5972 = vmatprep.subr.bf16.mxu0 %v4654
    %5973 = vmatpush1.bf16.msra.mxu0 %v4653
    %5974 = vmatprep.subr.bf16.mxu0 %v4646
    %5975 = vmatpush1.bf16.msra.mxu0 %v4645
    %5976 = vmatprep.subr.bf16.mxu0 %v4638
    %5977 = vmatpush1.bf16.msra.mxu0 %v4637
    %5978 = vmatprep.subr.bf16.mxu0 %v4630
    %5979 = vmatpush1.bf16.msra.mxu0 %v4629
    %5980 = vmatprep.subr.bf16.mxu0 %v4622
    %5981 = vmatpush1.bf16.msra.mxu0 %v4621
    %5982 = vmatprep.subr.bf16.mxu0 %v4742
    %5983 = vmatpush2.bf16.msra.mxu0 %v4741
    %5984 = vmatprep.subr.bf16.mxu0 %v4734
    %5985 = vmatpush2.bf16.msra.mxu0 %v4733
    %5986 = vmatprep.subr.bf16.mxu0 %v4726
    %5987 = vmatpush2.bf16.msra.mxu0 %v4725
    %5988 = vmatprep.subr.bf16.mxu0 %v4718
    %5989 = vmatpush2.bf16.msra.mxu0 %v4717
    %5990 = vmatprep.subr.bf16.mxu0 %v4710
    %5991 = vmatpush2.bf16.msra.mxu0 %v4709
    %5992 = vmatprep.subr.bf16.mxu0 %v4702
    %5993 = vmatpush2.bf16.msra.mxu0 %v4701
    %5994 = vmatprep.subr.bf16.mxu0 %v4694
    %5995 = vmatpush2.bf16.msra.mxu0 %v4693
    %5996 = vmatprep.subr.bf16.mxu0 %v4686
    %5997 = vmatpush2.bf16.msra.mxu0 %v4685
    %5998 = vmatprep.mubr.bf16.mxu0 %v3404
    %5999 = vmatmul.mubr.bf16.gmra.mxu0 %v3403
    %v6000 = vpop.f32.mrf.mxu0
    %v6001 = vadd.f32 %v5808, %v6000
    %v6002 = vpop.f32.mrf.mxu0
    %v6003 = vadd.f32 %v5810, %v6002
    %v6004 = vpop.f32.mrf.mxu0
    %v6005 = vadd.f32 %v5812, %v6004
    %v6006 = vpop.f32.mrf.mxu0
    %v6007 = vadd.f32 %v5814, %v6006
    %6008 = vmatprep.mubr.bf16.mxu0 %v3408
    %6009 = vmatmul.mubr.bf16.gmra.mxu0 %v3407
    %v6010 = vpop.f32.mrf.mxu0
    %v6011 = vadd.f32 %v5818, %v6010
    %v6012 = vpop.f32.mrf.mxu0
    %v6013 = vadd.f32 %v5820, %v6012
    %v6014 = vpop.f32.mrf.mxu0
    %v6015 = vadd.f32 %v5822, %v6014
    %v6016 = vpop.f32.mrf.mxu0
    %v6017 = vadd.f32 %v5824, %v6016
    %6018 = vmatprep.mubr.bf16.mxu0 %v3412
    %6019 = vmatmul.mubr.bf16.gmra.mxu0 %v3411
    %v6020 = vpop.f32.mrf.mxu0
    %v6021 = vadd.f32 %v5828, %v6020
    %v6022 = vpop.f32.mrf.mxu0
    %v6023 = vadd.f32 %v5830, %v6022
    %v6024 = vpop.f32.mrf.mxu0
    %v6025 = vadd.f32 %v5832, %v6024
    %v6026 = vpop.f32.mrf.mxu0
    %v6027 = vadd.f32 %v5834, %v6026
    %6028 = vmatprep.mubr.bf16.mxu0 %v3416
    %6029 = vmatmul.mubr.bf16.gmra.mxu0 %v3415
    %v6030 = vpop.f32.mrf.mxu0
    %v6031 = vadd.f32 %v5838, %v6030
    %v6032 = vpop.f32.mrf.mxu0
    %v6033 = vadd.f32 %v5840, %v6032
    %v6034 = vpop.f32.mrf.mxu0
    %v6035 = vadd.f32 %v5842, %v6034
    %v6036 = vpop.f32.mrf.mxu0
    %v6037 = vadd.f32 %v5844, %v6036
    %6038 = vmatprep.mubr.bf16.mxu0 %v3420
    %6039 = vmatmul.mubr.bf16.gmra.mxu0 %v3419
    %v6040 = vpop.f32.mrf.mxu0
    %v6041 = vadd.f32 %v5848, %v6040
    %v6042 = vpop.f32.mrf.mxu0
    %v6043 = vadd.f32 %v5850, %v6042
    %v6044 = vpop.f32.mrf.mxu0
    %v6045 = vadd.f32 %v5852, %v6044
    %v6046 = vpop.f32.mrf.mxu0
    %v6047 = vadd.f32 %v5854, %v6046
    %6048 = vmatprep.mubr.bf16.mxu0 %v3424
    %6049 = vmatmul.mubr.bf16.gmra.mxu0 %v3423
    %v6050 = vpop.f32.mrf.mxu0
    %v6051 = vadd.f32 %v5858, %v6050
    %v6052 = vpop.f32.mrf.mxu0
    %v6053 = vadd.f32 %v5860, %v6052
    %v6054 = vpop.f32.mrf.mxu0
    %v6055 = vadd.f32 %v5862, %v6054
    %v6056 = vpop.f32.mrf.mxu0
    %v6057 = vadd.f32 %v5864, %v6056
    %6058 = vmatprep.mubr.bf16.mxu0 %v3428
    %6059 = vmatmul.mubr.bf16.gmra.mxu0 %v3427
    %v6060 = vpop.f32.mrf.mxu0
    %v6061 = vadd.f32 %v5868, %v6060
    %v6062 = vpop.f32.mrf.mxu0
    %v6063 = vadd.f32 %v5870, %v6062
    %v6064 = vpop.f32.mrf.mxu0
    %v6065 = vadd.f32 %v5872, %v6064
    %v6066 = vpop.f32.mrf.mxu0
    %v6067 = vadd.f32 %v5874, %v6066
    %6068 = vmatprep.mubr.bf16.mxu0 %v3432
    %6069 = vmatmul.mubr.bf16.gmra.mxu0 %v3431
    %v6070 = vpop.f32.mrf.mxu0
    %v6071 = vadd.f32 %v5878, %v6070
    %v6072 = vpop.f32.mrf.mxu0
    %v6073 = vadd.f32 %v5880, %v6072
    %v6074 = vpop.f32.mrf.mxu0
    %v6075 = vadd.f32 %v5882, %v6074
    %v6076 = vpop.f32.mrf.mxu0
    %v6077 = vadd.f32 %v5884, %v6076
    %6078 = vmatprep.mubr.bf16.mxu0 %v3436
    %6079 = vmatmul.mubr.bf16.gmra.mxu0 %v3435
    %v6080 = vpop.f32.mrf.mxu0
    %v6081 = vadd.f32 %v5888, %v6080
    %v6082 = vpop.f32.mrf.mxu0
    %v6083 = vadd.f32 %v5890, %v6082
    %v6084 = vpop.f32.mrf.mxu0
    %v6085 = vadd.f32 %v5892, %v6084
    %v6086 = vpop.f32.mrf.mxu0
    %v6087 = vadd.f32 %v5894, %v6086
    %6088 = vmatprep.mubr.bf16.mxu0 %v3440
    %6089 = vmatmul.mubr.bf16.gmra.mxu0 %v3439
    %v6090 = vpop.f32.mrf.mxu0
    %v6091 = vadd.f32 %v5898, %v6090
    %v6092 = vpop.f32.mrf.mxu0
    %v6093 = vadd.f32 %v5900, %v6092
    %v6094 = vpop.f32.mrf.mxu0
    %v6095 = vadd.f32 %v5902, %v6094
    %v6096 = vpop.f32.mrf.mxu0
    %v6097 = vadd.f32 %v5904, %v6096
    %6098 = vmatprep.mubr.bf16.mxu0 %v3444
    %6099 = vmatmul.mubr.bf16.gmra.mxu0 %v3443
    %v6100 = vpop.f32.mrf.mxu0
    %v6101 = vadd.f32 %v5908, %v6100
    %v6102 = vpop.f32.mrf.mxu0
    %v6103 = vadd.f32 %v5910, %v6102
    %v6104 = vpop.f32.mrf.mxu0
    %v6105 = vadd.f32 %v5912, %v6104
    %v6106 = vpop.f32.mrf.mxu0
    %v6107 = vadd.f32 %v5914, %v6106
    %6108 = vmatprep.mubr.bf16.mxu0 %v3448
    %6109 = vmatmul.mubr.bf16.gmra.mxu0 %v3447
    %v6110 = vpop.f32.mrf.mxu0
    %v6111 = vadd.f32 %v5918, %v6110
    %v6112 = vpop.f32.mrf.mxu0
    %v6113 = vadd.f32 %v5920, %v6112
    %v6114 = vpop.f32.mrf.mxu0
    %v6115 = vadd.f32 %v5922, %v6114
    %v6116 = vpop.f32.mrf.mxu0
    %v6117 = vadd.f32 %v5924, %v6116
    %6118 = vmatprep.mubr.bf16.mxu0 %v3452
    %6119 = vmatmul.mubr.bf16.gmra.mxu0 %v3451
    %v6120 = vpop.f32.mrf.mxu0
    %v6121 = vadd.f32 %v5928, %v6120
    %v6122 = vpop.f32.mrf.mxu0
    %v6123 = vadd.f32 %v5930, %v6122
    %v6124 = vpop.f32.mrf.mxu0
    %v6125 = vadd.f32 %v5932, %v6124
    %v6126 = vpop.f32.mrf.mxu0
    %v6127 = vadd.f32 %v5934, %v6126
    %6128 = vmatprep.mubr.bf16.mxu0 %v3456
    %6129 = vmatmul.mubr.bf16.gmra.mxu0 %v3455
    %v6130 = vpop.f32.mrf.mxu0
    %v6131 = vadd.f32 %v5938, %v6130
    %v6132 = vpop.f32.mrf.mxu0
    %v6133 = vadd.f32 %v5940, %v6132
    %v6134 = vpop.f32.mrf.mxu0
    %v6135 = vadd.f32 %v5942, %v6134
    %v6136 = vpop.f32.mrf.mxu0
    %v6137 = vadd.f32 %v5944, %v6136
    %6138 = vmatprep.mubr.bf16.mxu0 %v3460
    %6139 = vmatmul.mubr.bf16.gmra.mxu0 %v3459
    %v6140 = vpop.f32.mrf.mxu0
    %v6141 = vadd.f32 %v5948, %v6140
    %v6142 = vpop.f32.mrf.mxu0
    %v6143 = vadd.f32 %v5950, %v6142
    %v6144 = vpop.f32.mrf.mxu0
    %v6145 = vadd.f32 %v5952, %v6144
    %v6146 = vpop.f32.mrf.mxu0
    %v6147 = vadd.f32 %v5954, %v6146
    %6148 = vmatprep.mubr.bf16.mxu0 %v3464
    %6149 = vmatmul.mubr.bf16.gmra.mxu0 %v3463
    %v6150 = vpop.f32.mrf.mxu0
    %v6151 = vadd.f32 %v5958, %v6150
    %v6152 = vpop.f32.mrf.mxu0
    %v6153 = vadd.f32 %v5960, %v6152
    %v6154 = vpop.f32.mrf.mxu0
    %v6155 = vadd.f32 %v5962, %v6154
    %v6156 = vpop.f32.mrf.mxu0
    %v6157 = vadd.f32 %v5964, %v6156
    %6158 = vdwg.mxu0
    %6159 = vmatprep.subr.bf16.mxu0 %v4552
    %6160 = vmatpush1.bf16.msra.mxu0 %v4551
    %6161 = vmatprep.subr.bf16.mxu0 %v4544
    %6162 = vmatpush1.bf16.msra.mxu0 %v4543
    %6163 = vmatprep.subr.bf16.mxu0 %v4536
    %6164 = vmatpush1.bf16.msra.mxu0 %v4535
    %6165 = vmatprep.subr.bf16.mxu0 %v4528
    %6166 = vmatpush1.bf16.msra.mxu0 %v4527
    %6167 = vmatprep.subr.bf16.mxu0 %v4520
    %6168 = vmatpush1.bf16.msra.mxu0 %v4519
    %6169 = vmatprep.subr.bf16.mxu0 %v4512
    %6170 = vmatpush1.bf16.msra.mxu0 %v4511
    %6171 = vmatprep.subr.bf16.mxu0 %v4504
    %6172 = vmatpush1.bf16.msra.mxu0 %v4503
    %6173 = vmatprep.subr.bf16.mxu0 %v4496
    %6174 = vmatpush1.bf16.msra.mxu0 %v4495
    %6175 = vmatprep.subr.bf16.mxu0 %v4616
    %6176 = vmatpush2.bf16.msra.mxu0 %v4615
    %6177 = vmatprep.subr.bf16.mxu0 %v4608
    %6178 = vmatpush2.bf16.msra.mxu0 %v4607
    %6179 = vmatprep.subr.bf16.mxu0 %v4600
    %6180 = vmatpush2.bf16.msra.mxu0 %v4599
    %6181 = vmatprep.subr.bf16.mxu0 %v4592
    %6182 = vmatpush2.bf16.msra.mxu0 %v4591
    %6183 = vmatprep.subr.bf16.mxu0 %v4584
    %6184 = vmatpush2.bf16.msra.mxu0 %v4583
    %6185 = vmatprep.subr.bf16.mxu0 %v4576
    %6186 = vmatpush2.bf16.msra.mxu0 %v4575
    %6187 = vmatprep.subr.bf16.mxu0 %v4568
    %6188 = vmatpush2.bf16.msra.mxu0 %v4567
    %6189 = vmatprep.subr.bf16.mxu0 %v4560
    %6190 = vmatpush2.bf16.msra.mxu0 %v4559
    %6191 = vmatprep.mubr.bf16.mxu0 %v3402
    %6192 = vmatmul.mubr.bf16.gmra.mxu0 %v3401
    %v6193 = vpop.f32.mrf.mxu0
    %v6194 = vadd.f32 0.0, %v6193
    %v6195 = vpop.f32.mrf.mxu0
    %v6196 = vadd.f32 0.0, %v6195
    %v6197 = vpop.f32.mrf.mxu0
    %v6198 = vadd.f32 0.0, %v6197
    %v6199 = vpop.f32.mrf.mxu0
    %v6200 = vadd.f32 0.0, %v6199
    %6201 = vmatprep.mubr.bf16.mxu0 %v3406
    %6202 = vmatmul.mubr.bf16.gmra.mxu0 %v3405
    %v6203 = vpop.f32.mrf.mxu0
    %v6204 = vadd.f32 0.0, %v6203
    %v6205 = vpop.f32.mrf.mxu0
    %v6206 = vadd.f32 0.0, %v6205
    %v6207 = vpop.f32.mrf.mxu0
    %v6208 = vadd.f32 0.0, %v6207
    %v6209 = vpop.f32.mrf.mxu0
    %v6210 = vadd.f32 0.0, %v6209
    %6211 = vmatprep.mubr.bf16.mxu0 %v3410
    %6212 = vmatmul.mubr.bf16.gmra.mxu0 %v3409
    %v6213 = vpop.f32.mrf.mxu0
    %v6214 = vadd.f32 0.0, %v6213
    %v6215 = vpop.f32.mrf.mxu0
    %v6216 = vadd.f32 0.0, %v6215
    %v6217 = vpop.f32.mrf.mxu0
    %v6218 = vadd.f32 0.0, %v6217
    %v6219 = vpop.f32.mrf.mxu0
    %v6220 = vadd.f32 0.0, %v6219
    %6221 = vmatprep.mubr.bf16.mxu0 %v3414
    %6222 = vmatmul.mubr.bf16.gmra.mxu0 %v3413
    %v6223 = vpop.f32.mrf.mxu0
    %v6224 = vadd.f32 0.0, %v6223
    %v6225 = vpop.f32.mrf.mxu0
    %v6226 = vadd.f32 0.0, %v6225
    %v6227 = vpop.f32.mrf.mxu0
    %v6228 = vadd.f32 0.0, %v6227
    %v6229 = vpop.f32.mrf.mxu0
    %v6230 = vadd.f32 0.0, %v6229
    %6231 = vmatprep.mubr.bf16.mxu0 %v3418
    %6232 = vmatmul.mubr.bf16.gmra.mxu0 %v3417
    %v6233 = vpop.f32.mrf.mxu0
    %v6234 = vadd.f32 0.0, %v6233
    %v6235 = vpop.f32.mrf.mxu0
    %v6236 = vadd.f32 0.0, %v6235
    %v6237 = vpop.f32.mrf.mxu0
    %v6238 = vadd.f32 0.0, %v6237
    %v6239 = vpop.f32.mrf.mxu0
    %v6240 = vadd.f32 0.0, %v6239
    %6241 = vmatprep.mubr.bf16.mxu0 %v3422
    %6242 = vmatmul.mubr.bf16.gmra.mxu0 %v3421
    %v6243 = vpop.f32.mrf.mxu0
    %v6244 = vadd.f32 0.0, %v6243
    %v6245 = vpop.f32.mrf.mxu0
    %v6246 = vadd.f32 0.0, %v6245
    %v6247 = vpop.f32.mrf.mxu0
    %v6248 = vadd.f32 0.0, %v6247
    %v6249 = vpop.f32.mrf.mxu0
    %v6250 = vadd.f32 0.0, %v6249
    %6251 = vmatprep.mubr.bf16.mxu0 %v3426
    %6252 = vmatmul.mubr.bf16.gmra.mxu0 %v3425
    %v6253 = vpop.f32.mrf.mxu0
    %v6254 = vadd.f32 0.0, %v6253
    %v6255 = vpop.f32.mrf.mxu0
    %v6256 = vadd.f32 0.0, %v6255
    %v6257 = vpop.f32.mrf.mxu0
    %v6258 = vadd.f32 0.0, %v6257
    %v6259 = vpop.f32.mrf.mxu0
    %v6260 = vadd.f32 0.0, %v6259
    %6261 = vmatprep.mubr.bf16.mxu0 %v3430
    %6262 = vmatmul.mubr.bf16.gmra.mxu0 %v3429
    %v6263 = vpop.f32.mrf.mxu0
    %v6264 = vadd.f32 0.0, %v6263
    %v6265 = vpop.f32.mrf.mxu0
    %v6266 = vadd.f32 0.0, %v6265
    %v6267 = vpop.f32.mrf.mxu0
    %v6268 = vadd.f32 0.0, %v6267
    %v6269 = vpop.f32.mrf.mxu0
    %v6270 = vadd.f32 0.0, %v6269
    %6271 = vmatprep.mubr.bf16.mxu0 %v3434
    %6272 = vmatmul.mubr.bf16.gmra.mxu0 %v3433
    %v6273 = vpop.f32.mrf.mxu0
    %v6274 = vadd.f32 0.0, %v6273
    %v6275 = vpop.f32.mrf.mxu0
    %v6276 = vadd.f32 0.0, %v6275
    %v6277 = vpop.f32.mrf.mxu0
    %v6278 = vadd.f32 0.0, %v6277
    %v6279 = vpop.f32.mrf.mxu0
    %v6280 = vadd.f32 0.0, %v6279
    %6281 = vmatprep.mubr.bf16.mxu0 %v3438
    %6282 = vmatmul.mubr.bf16.gmra.mxu0 %v3437
    %v6283 = vpop.f32.mrf.mxu0
    %v6284 = vadd.f32 0.0, %v6283
    %v6285 = vpop.f32.mrf.mxu0
    %v6286 = vadd.f32 0.0, %v6285
    %v6287 = vpop.f32.mrf.mxu0
    %v6288 = vadd.f32 0.0, %v6287
    %v6289 = vpop.f32.mrf.mxu0
    %v6290 = vadd.f32 0.0, %v6289
    %6291 = vmatprep.mubr.bf16.mxu0 %v3442
    %6292 = vmatmul.mubr.bf16.gmra.mxu0 %v3441
    %v6293 = vpop.f32.mrf.mxu0
    %v6294 = vadd.f32 0.0, %v6293
    %v6295 = vpop.f32.mrf.mxu0
    %v6296 = vadd.f32 0.0, %v6295
    %v6297 = vpop.f32.mrf.mxu0
    %v6298 = vadd.f32 0.0, %v6297
    %v6299 = vpop.f32.mrf.mxu0
    %v6300 = vadd.f32 0.0, %v6299
    %6301 = vmatprep.mubr.bf16.mxu0 %v3446
    %6302 = vmatmul.mubr.bf16.gmra.mxu0 %v3445
    %v6303 = vpop.f32.mrf.mxu0
    %v6304 = vadd.f32 0.0, %v6303
    %v6305 = vpop.f32.mrf.mxu0
    %v6306 = vadd.f32 0.0, %v6305
    %v6307 = vpop.f32.mrf.mxu0
    %v6308 = vadd.f32 0.0, %v6307
    %v6309 = vpop.f32.mrf.mxu0
    %v6310 = vadd.f32 0.0, %v6309
    %6311 = vmatprep.mubr.bf16.mxu0 %v3450
    %6312 = vmatmul.mubr.bf16.gmra.mxu0 %v3449
    %v6313 = vpop.f32.mrf.mxu0
    %v6314 = vadd.f32 0.0, %v6313
    %v6315 = vpop.f32.mrf.mxu0
    %v6316 = vadd.f32 0.0, %v6315
    %v6317 = vpop.f32.mrf.mxu0
    %v6318 = vadd.f32 0.0, %v6317
    %v6319 = vpop.f32.mrf.mxu0
    %v6320 = vadd.f32 0.0, %v6319
    %6321 = vmatprep.mubr.bf16.mxu0 %v3454
    %6322 = vmatmul.mubr.bf16.gmra.mxu0 %v3453
    %v6323 = vpop.f32.mrf.mxu0
    %v6324 = vadd.f32 0.0, %v6323
    %v6325 = vpop.f32.mrf.mxu0
    %v6326 = vadd.f32 0.0, %v6325
    %v6327 = vpop.f32.mrf.mxu0
    %v6328 = vadd.f32 0.0, %v6327
    %v6329 = vpop.f32.mrf.mxu0
    %v6330 = vadd.f32 0.0, %v6329
    %6331 = vmatprep.mubr.bf16.mxu0 %v3458
    %6332 = vmatmul.mubr.bf16.gmra.mxu0 %v3457
    %v6333 = vpop.f32.mrf.mxu0
    %v6334 = vadd.f32 0.0, %v6333
    %v6335 = vpop.f32.mrf.mxu0
    %v6336 = vadd.f32 0.0, %v6335
    %v6337 = vpop.f32.mrf.mxu0
    %v6338 = vadd.f32 0.0, %v6337
    %v6339 = vpop.f32.mrf.mxu0
    %v6340 = vadd.f32 0.0, %v6339
    %6341 = vmatprep.mubr.bf16.mxu0 %v3462
    %6342 = vmatmul.mubr.bf16.gmra.mxu0 %v3461
    %v6343 = vpop.f32.mrf.mxu0
    %v6344 = vadd.f32 0.0, %v6343
    %v6345 = vpop.f32.mrf.mxu0
    %v6346 = vadd.f32 0.0, %v6345
    %v6347 = vpop.f32.mrf.mxu0
    %v6348 = vadd.f32 0.0, %v6347
    %v6349 = vpop.f32.mrf.mxu0
    %v6350 = vadd.f32 0.0, %v6349
    %6351 = vdwg.mxu0
    %6352 = vmatprep.subr.bf16.mxu0 %v4680
    %6353 = vmatpush1.bf16.msra.mxu0 %v4679
    %6354 = vmatprep.subr.bf16.mxu0 %v4672
    %6355 = vmatpush1.bf16.msra.mxu0 %v4671
    %6356 = vmatprep.subr.bf16.mxu0 %v4664
    %6357 = vmatpush1.bf16.msra.mxu0 %v4663
    %6358 = vmatprep.subr.bf16.mxu0 %v4656
    %6359 = vmatpush1.bf16.msra.mxu0 %v4655
    %6360 = vmatprep.subr.bf16.mxu0 %v4648
    %6361 = vmatpush1.bf16.msra.mxu0 %v4647
    %6362 = vmatprep.subr.bf16.mxu0 %v4640
    %6363 = vmatpush1.bf16.msra.mxu0 %v4639
    %6364 = vmatprep.subr.bf16.mxu0 %v4632
    %6365 = vmatpush1.bf16.msra.mxu0 %v4631
    %6366 = vmatprep.subr.bf16.mxu0 %v4624
    %6367 = vmatpush1.bf16.msra.mxu0 %v4623
    %6368 = vmatprep.subr.bf16.mxu0 %v4744
    %6369 = vmatpush2.bf16.msra.mxu0 %v4743
    %6370 = vmatprep.subr.bf16.mxu0 %v4736
    %6371 = vmatpush2.bf16.msra.mxu0 %v4735
    %6372 = vmatprep.subr.bf16.mxu0 %v4728
    %6373 = vmatpush2.bf16.msra.mxu0 %v4727
    %6374 = vmatprep.subr.bf16.mxu0 %v4720
    %6375 = vmatpush2.bf16.msra.mxu0 %v4719
    %6376 = vmatprep.subr.bf16.mxu0 %v4712
    %6377 = vmatpush2.bf16.msra.mxu0 %v4711
    %6378 = vmatprep.subr.bf16.mxu0 %v4704
    %6379 = vmatpush2.bf16.msra.mxu0 %v4703
    %6380 = vmatprep.subr.bf16.mxu0 %v4696
    %6381 = vmatpush2.bf16.msra.mxu0 %v4695
    %6382 = vmatprep.subr.bf16.mxu0 %v4688
    %6383 = vmatpush2.bf16.msra.mxu0 %v4687
    %6384 = vmatprep.mubr.bf16.mxu0 %v3404
    %6385 = vmatmul.mubr.bf16.gmra.mxu0 %v3403
    %v6386 = vpop.f32.mrf.mxu0
    %v6387 = vadd.f32 %v6194, %v6386
    %v6388 = vpop.f32.mrf.mxu0
    %v6389 = vadd.f32 %v6196, %v6388
    %v6390 = vpop.f32.mrf.mxu0
    %v6391 = vadd.f32 %v6198, %v6390
    %v6392 = vpop.f32.mrf.mxu0
    %v6393 = vadd.f32 %v6200, %v6392
    %6394 = vmatprep.mubr.bf16.mxu0 %v3408
    %6395 = vmatmul.mubr.bf16.gmra.mxu0 %v3407
    %v6396 = vpop.f32.mrf.mxu0
    %v6397 = vadd.f32 %v6204, %v6396
    %v6398 = vpop.f32.mrf.mxu0
    %v6399 = vadd.f32 %v6206, %v6398
    %v6400 = vpop.f32.mrf.mxu0
    %v6401 = vadd.f32 %v6208, %v6400
    %v6402 = vpop.f32.mrf.mxu0
    %v6403 = vadd.f32 %v6210, %v6402
    %6404 = vmatprep.mubr.bf16.mxu0 %v3412
    %6405 = vmatmul.mubr.bf16.gmra.mxu0 %v3411
    %v6406 = vpop.f32.mrf.mxu0
    %v6407 = vadd.f32 %v6214, %v6406
    %v6408 = vpop.f32.mrf.mxu0
    %v6409 = vadd.f32 %v6216, %v6408
    %v6410 = vpop.f32.mrf.mxu0
    %v6411 = vadd.f32 %v6218, %v6410
    %v6412 = vpop.f32.mrf.mxu0
    %v6413 = vadd.f32 %v6220, %v6412
    %6414 = vmatprep.mubr.bf16.mxu0 %v3416
    %6415 = vmatmul.mubr.bf16.gmra.mxu0 %v3415
    %v6416 = vpop.f32.mrf.mxu0
    %v6417 = vadd.f32 %v6224, %v6416
    %v6418 = vpop.f32.mrf.mxu0
    %v6419 = vadd.f32 %v6226, %v6418
    %v6420 = vpop.f32.mrf.mxu0
    %v6421 = vadd.f32 %v6228, %v6420
    %v6422 = vpop.f32.mrf.mxu0
    %v6423 = vadd.f32 %v6230, %v6422
    %6424 = vmatprep.mubr.bf16.mxu0 %v3420
    %6425 = vmatmul.mubr.bf16.gmra.mxu0 %v3419
    %v6426 = vpop.f32.mrf.mxu0
    %v6427 = vadd.f32 %v6234, %v6426
    %v6428 = vpop.f32.mrf.mxu0
    %v6429 = vadd.f32 %v6236, %v6428
    %v6430 = vpop.f32.mrf.mxu0
    %v6431 = vadd.f32 %v6238, %v6430
    %v6432 = vpop.f32.mrf.mxu0
    %v6433 = vadd.f32 %v6240, %v6432
    %6434 = vmatprep.mubr.bf16.mxu0 %v3424
    %6435 = vmatmul.mubr.bf16.gmra.mxu0 %v3423
    %v6436 = vpop.f32.mrf.mxu0
    %v6437 = vadd.f32 %v6244, %v6436
    %v6438 = vpop.f32.mrf.mxu0
    %v6439 = vadd.f32 %v6246, %v6438
    %v6440 = vpop.f32.mrf.mxu0
    %v6441 = vadd.f32 %v6248, %v6440
    %v6442 = vpop.f32.mrf.mxu0
    %v6443 = vadd.f32 %v6250, %v6442
    %6444 = vmatprep.mubr.bf16.mxu0 %v3428
    %6445 = vmatmul.mubr.bf16.gmra.mxu0 %v3427
    %v6446 = vpop.f32.mrf.mxu0
    %v6447 = vadd.f32 %v6254, %v6446
    %v6448 = vpop.f32.mrf.mxu0
    %v6449 = vadd.f32 %v6256, %v6448
    %v6450 = vpop.f32.mrf.mxu0
    %v6451 = vadd.f32 %v6258, %v6450
    %v6452 = vpop.f32.mrf.mxu0
    %v6453 = vadd.f32 %v6260, %v6452
    %6454 = vmatprep.mubr.bf16.mxu0 %v3432
    %6455 = vmatmul.mubr.bf16.gmra.mxu0 %v3431
    %v6456 = vpop.f32.mrf.mxu0
    %v6457 = vadd.f32 %v6264, %v6456
    %v6458 = vpop.f32.mrf.mxu0
    %v6459 = vadd.f32 %v6266, %v6458
    %v6460 = vpop.f32.mrf.mxu0
    %v6461 = vadd.f32 %v6268, %v6460
    %v6462 = vpop.f32.mrf.mxu0
    %v6463 = vadd.f32 %v6270, %v6462
    %6464 = vmatprep.mubr.bf16.mxu0 %v3436
    %6465 = vmatmul.mubr.bf16.gmra.mxu0 %v3435
    %v6466 = vpop.f32.mrf.mxu0
    %v6467 = vadd.f32 %v6274, %v6466
    %v6468 = vpop.f32.mrf.mxu0
    %v6469 = vadd.f32 %v6276, %v6468
    %v6470 = vpop.f32.mrf.mxu0
    %v6471 = vadd.f32 %v6278, %v6470
    %v6472 = vpop.f32.mrf.mxu0
    %v6473 = vadd.f32 %v6280, %v6472
    %6474 = vmatprep.mubr.bf16.mxu0 %v3440
    %6475 = vmatmul.mubr.bf16.gmra.mxu0 %v3439
    %v6476 = vpop.f32.mrf.mxu0
    %v6477 = vadd.f32 %v6284, %v6476
    %v6478 = vpop.f32.mrf.mxu0
    %v6479 = vadd.f32 %v6286, %v6478
    %v6480 = vpop.f32.mrf.mxu0
    %v6481 = vadd.f32 %v6288, %v6480
    %v6482 = vpop.f32.mrf.mxu0
    %v6483 = vadd.f32 %v6290, %v6482
    %6484 = vmatprep.mubr.bf16.mxu0 %v3444
    %6485 = vmatmul.mubr.bf16.gmra.mxu0 %v3443
    %v6486 = vpop.f32.mrf.mxu0
    %v6487 = vadd.f32 %v6294, %v6486
    %v6488 = vpop.f32.mrf.mxu0
    %v6489 = vadd.f32 %v6296, %v6488
    %v6490 = vpop.f32.mrf.mxu0
    %v6491 = vadd.f32 %v6298, %v6490
    %v6492 = vpop.f32.mrf.mxu0
    %v6493 = vadd.f32 %v6300, %v6492
    %6494 = vmatprep.mubr.bf16.mxu0 %v3448
    %6495 = vmatmul.mubr.bf16.gmra.mxu0 %v3447
    %v6496 = vpop.f32.mrf.mxu0
    %v6497 = vadd.f32 %v6304, %v6496
    %v6498 = vpop.f32.mrf.mxu0
    %v6499 = vadd.f32 %v6306, %v6498
    %v6500 = vpop.f32.mrf.mxu0
    %v6501 = vadd.f32 %v6308, %v6500
    %v6502 = vpop.f32.mrf.mxu0
    %v6503 = vadd.f32 %v6310, %v6502
    %6504 = vmatprep.mubr.bf16.mxu0 %v3452
    %6505 = vmatmul.mubr.bf16.gmra.mxu0 %v3451
    %v6506 = vpop.f32.mrf.mxu0
    %v6507 = vadd.f32 %v6314, %v6506
    %v6508 = vpop.f32.mrf.mxu0
    %v6509 = vadd.f32 %v6316, %v6508
    %v6510 = vpop.f32.mrf.mxu0
    %v6511 = vadd.f32 %v6318, %v6510
    %v6512 = vpop.f32.mrf.mxu0
    %v6513 = vadd.f32 %v6320, %v6512
    %6514 = vmatprep.mubr.bf16.mxu0 %v3456
    %6515 = vmatmul.mubr.bf16.gmra.mxu0 %v3455
    %v6516 = vpop.f32.mrf.mxu0
    %v6517 = vadd.f32 %v6324, %v6516
    %v6518 = vpop.f32.mrf.mxu0
    %v6519 = vadd.f32 %v6326, %v6518
    %v6520 = vpop.f32.mrf.mxu0
    %v6521 = vadd.f32 %v6328, %v6520
    %v6522 = vpop.f32.mrf.mxu0
    %v6523 = vadd.f32 %v6330, %v6522
    %6524 = vmatprep.mubr.bf16.mxu0 %v3460
    %6525 = vmatmul.mubr.bf16.gmra.mxu0 %v3459
    %v6526 = vpop.f32.mrf.mxu0
    %v6527 = vadd.f32 %v6334, %v6526
    %v6528 = vpop.f32.mrf.mxu0
    %v6529 = vadd.f32 %v6336, %v6528
    %v6530 = vpop.f32.mrf.mxu0
    %v6531 = vadd.f32 %v6338, %v6530
    %v6532 = vpop.f32.mrf.mxu0
    %v6533 = vadd.f32 %v6340, %v6532
    %6534 = vmatprep.mubr.bf16.mxu0 %v3464
    %6535 = vmatmul.mubr.bf16.gmra.mxu0 %v3463
    %v6536 = vpop.f32.mrf.mxu0
    %v6537 = vadd.f32 %v6344, %v6536
    %v6538 = vpop.f32.mrf.mxu0
    %v6539 = vadd.f32 %v6346, %v6538
    %v6540 = vpop.f32.mrf.mxu0
    %v6541 = vadd.f32 %v6348, %v6540
    %v6542 = vpop.f32.mrf.mxu0
    %v6543 = vadd.f32 %v6350, %v6542
    %6544 = vdwg.mxu0
    %v6545 = vld [vmem:[%s6 + $0xc] sm:$0xff]
    %v6546 = vld [vmem:[%s6 + $0x14] sm:$0xff]
    %v6547 = vadd.f32 %v5229, %v5233
    %v6548 = vadd.f32 %v6547, %v5239
    %v6549 = vadd.f32 %v6548, %v5243
    %v6550 = vadd.f32 %v6549, %v5249
    %v6551 = vadd.f32 %v6550, %v5253
    %v6552 = vadd.f32 %v6551, %v5259
    %v6553 = vadd.f32 %v6552, %v5263
    %v6554 = vadd.f32 %v6553, %v5269
    %v6555 = vadd.f32 %v6554, %v5273
    %v6556 = vadd.f32 %v6555, %v5279
    %v6557 = vadd.f32 %v6556, %v5283
    %v6558 = vadd.f32 %v6557, %v5289
    %v6559 = vadd.f32 %v6558, %v5293
    %v6560 = vadd.f32 %v6559, %v5299
    %v6561 = vadd.f32 %v6560, %v5303
    %v6562 = vadd.f32 %v6561, %v5309
    %v6563 = vadd.f32 %v6562, %v5313
    %v6564 = vadd.f32 %v6563, %v5319
    %v6565 = vadd.f32 %v6564, %v5323
    %v6566 = vadd.f32 %v6565, %v5329
    %v6567 = vadd.f32 %v6566, %v5333
    %v6568 = vadd.f32 %v6567, %v5339
    %v6569 = vadd.f32 %v6568, %v5343
    %v6570 = vadd.f32 %v6569, %v5349
    %v6571 = vadd.f32 %v6570, %v5353
    %v6572 = vadd.f32 %v6571, %v5359
    %v6573 = vadd.f32 %v6572, %v5363
    %v6574 = vadd.f32 %v6573, %v5369
    %v6575 = vadd.f32 %v6574, %v5373
    %v6576 = vadd.f32 %v6575, %v5379
    %v6577 = vadd.f32 %v6576, %v5383
    %v6578 = vrot.slane %v6577, 4
    %v6579 = vadd.f32 %v6577, %v6578
    %v6580 = vrot.slane %v6579, 2
    %v6581 = vadd.f32 %v6579, %v6580
    %v6582 = vrot.slane %v6581, 1
    %v6583 = vadd.f32 %v6581, %v6582
    %v6584 = vadd.f32 %v5231, %v5235
    %v6585 = vadd.f32 %v6584, %v5241
    %v6586 = vadd.f32 %v6585, %v5245
    %v6587 = vadd.f32 %v6586, %v5251
    %v6588 = vadd.f32 %v6587, %v5255
    %v6589 = vadd.f32 %v6588, %v5261
    %v6590 = vadd.f32 %v6589, %v5265
    %v6591 = vadd.f32 %v6590, %v5271
    %v6592 = vadd.f32 %v6591, %v5275
    %v6593 = vadd.f32 %v6592, %v5281
    %v6594 = vadd.f32 %v6593, %v5285
    %v6595 = vadd.f32 %v6594, %v5291
    %v6596 = vadd.f32 %v6595, %v5295
    %v6597 = vadd.f32 %v6596, %v5301
    %v6598 = vadd.f32 %v6597, %v5305
    %v6599 = vadd.f32 %v6598, %v5311
    %v6600 = vadd.f32 %v6599, %v5315
    %v6601 = vadd.f32 %v6600, %v5321
    %v6602 = vadd.f32 %v6601, %v5325
    %v6603 = vadd.f32 %v6602, %v5331
    %v6604 = vadd.f32 %v6603, %v5335
    %v6605 = vadd.f32 %v6604, %v5341
    %v6606 = vadd.f32 %v6605, %v5345
    %v6607 = vadd.f32 %v6606, %v5351
    %v6608 = vadd.f32 %v6607, %v5355
    %v6609 = vadd.f32 %v6608, %v5361
    %v6610 = vadd.f32 %v6609, %v5365
    %v6611 = vadd.f32 %v6610, %v5371
    %v6612 = vadd.f32 %v6611, %v5375
    %v6613 = vadd.f32 %v6612, %v5381
    %v6614 = vadd.f32 %v6613, %v5385
    %v6615 = vrot.slane %v6614, 4
    %v6616 = vadd.f32 %v6614, %v6615
    %v6617 = vrot.slane %v6616, 2
    %v6618 = vadd.f32 %v6616, %v6617
    %v6619 = vrot.slane %v6618, 1
    %v6620 = vadd.f32 %v6618, %v6619
    %v6621 = vadd.f32 %v5615, %v5619
    %v6622 = vadd.f32 %v6621, %v5625
    %v6623 = vadd.f32 %v6622, %v5629
    %v6624 = vadd.f32 %v6623, %v5635
    %v6625 = vadd.f32 %v6624, %v5639
    %v6626 = vadd.f32 %v6625, %v5645
    %v6627 = vadd.f32 %v6626, %v5649
    %v6628 = vadd.f32 %v6627, %v5655
    %v6629 = vadd.f32 %v6628, %v5659
    %v6630 = vadd.f32 %v6629, %v5665
    %v6631 = vadd.f32 %v6630, %v5669
    %v6632 = vadd.f32 %v6631, %v5675
    %v6633 = vadd.f32 %v6632, %v5679
    %v6634 = vadd.f32 %v6633, %v5685
    %v6635 = vadd.f32 %v6634, %v5689
    %v6636 = vadd.f32 %v6635, %v5695
    %v6637 = vadd.f32 %v6636, %v5699
    %v6638 = vadd.f32 %v6637, %v5705
    %v6639 = vadd.f32 %v6638, %v5709
    %v6640 = vadd.f32 %v6639, %v5715
    %v6641 = vadd.f32 %v6640, %v5719
    %v6642 = vadd.f32 %v6641, %v5725
    %v6643 = vadd.f32 %v6642, %v5729
    %v6644 = vadd.f32 %v6643, %v5735
    %v6645 = vadd.f32 %v6644, %v5739
    %v6646 = vadd.f32 %v6645, %v5745
    %v6647 = vadd.f32 %v6646, %v5749
    %v6648 = vadd.f32 %v6647, %v5755
    %v6649 = vadd.f32 %v6648, %v5759
    %v6650 = vadd.f32 %v6649, %v5765
    %v6651 = vadd.f32 %v6650, %v5769
    %v6652 = vrot.slane %v6651, 4
    %v6653 = vadd.f32 %v6651, %v6652
    %v6654 = vrot.slane %v6653, 2
    %v6655 = vadd.f32 %v6653, %v6654
    %v6656 = vrot.slane %v6655, 1
    %v6657 = vadd.f32 %v6655, %v6656
    %v6658 = vadd.f32 %v5617, %v5621
    %v6659 = vadd.f32 %v6658, %v5627
    %v6660 = vadd.f32 %v6659, %v5631
    %v6661 = vadd.f32 %v6660, %v5637
    %v6662 = vadd.f32 %v6661, %v5641
    %v6663 = vadd.f32 %v6662, %v5647
    %v6664 = vadd.f32 %v6663, %v5651
    %v6665 = vadd.f32 %v6664, %v5657
    %v6666 = vadd.f32 %v6665, %v5661
    %v6667 = vadd.f32 %v6666, %v5667
    %v6668 = vadd.f32 %v6667, %v5671
    %v6669 = vadd.f32 %v6668, %v5677
    %v6670 = vadd.f32 %v6669, %v5681
    %v6671 = vadd.f32 %v6670, %v5687
    %v6672 = vadd.f32 %v6671, %v5691
    %v6673 = vadd.f32 %v6672, %v5697
    %v6674 = vadd.f32 %v6673, %v5701
    %v6675 = vadd.f32 %v6674, %v5707
    %v6676 = vadd.f32 %v6675, %v5711
    %v6677 = vadd.f32 %v6676, %v5717
    %v6678 = vadd.f32 %v6677, %v5721
    %v6679 = vadd.f32 %v6678, %v5727
    %v6680 = vadd.f32 %v6679, %v5731
    %v6681 = vadd.f32 %v6680, %v5737
    %v6682 = vadd.f32 %v6681, %v5741
    %v6683 = vadd.f32 %v6682, %v5747
    %v6684 = vadd.f32 %v6683, %v5751
    %v6685 = vadd.f32 %v6684, %v5757
    %v6686 = vadd.f32 %v6685, %v5761
    %v6687 = vadd.f32 %v6686, %v5767
    %v6688 = vadd.f32 %v6687, %v5771
    %v6689 = vrot.slane %v6688, 4
    %v6690 = vadd.f32 %v6688, %v6689
    %v6691 = vrot.slane %v6690, 2
    %v6692 = vadd.f32 %v6690, %v6691
    %v6693 = vrot.slane %v6692, 1
    %v6694 = vadd.f32 %v6692, %v6693
    %v6695 = vadd.f32 %v6001, %v6005
    %v6696 = vadd.f32 %v6695, %v6011
    %v6697 = vadd.f32 %v6696, %v6015
    %v6698 = vadd.f32 %v6697, %v6021
    %v6699 = vadd.f32 %v6698, %v6025
    %v6700 = vadd.f32 %v6699, %v6031
    %v6701 = vadd.f32 %v6700, %v6035
    %v6702 = vadd.f32 %v6701, %v6041
    %v6703 = vadd.f32 %v6702, %v6045
    %v6704 = vadd.f32 %v6703, %v6051
    %v6705 = vadd.f32 %v6704, %v6055
    %v6706 = vadd.f32 %v6705, %v6061
    %v6707 = vadd.f32 %v6706, %v6065
    %v6708 = vadd.f32 %v6707, %v6071
    %v6709 = vadd.f32 %v6708, %v6075
    %v6710 = vadd.f32 %v6709, %v6081
    %v6711 = vadd.f32 %v6710, %v6085
    %v6712 = vadd.f32 %v6711, %v6091
    %v6713 = vadd.f32 %v6712, %v6095
    %v6714 = vadd.f32 %v6713, %v6101
    %v6715 = vadd.f32 %v6714, %v6105
    %v6716 = vadd.f32 %v6715, %v6111
    %v6717 = vadd.f32 %v6716, %v6115
    %v6718 = vadd.f32 %v6717, %v6121
    %v6719 = vadd.f32 %v6718, %v6125
    %v6720 = vadd.f32 %v6719, %v6131
    %v6721 = vadd.f32 %v6720, %v6135
    %v6722 = vadd.f32 %v6721, %v6141
    %v6723 = vadd.f32 %v6722, %v6145
    %v6724 = vadd.f32 %v6723, %v6151
    %v6725 = vadd.f32 %v6724, %v6155
    %v6726 = vrot.slane %v6725, 4
    %v6727 = vadd.f32 %v6725, %v6726
    %v6728 = vrot.slane %v6727, 2
    %v6729 = vadd.f32 %v6727, %v6728
    %v6730 = vrot.slane %v6729, 1
    %v6731 = vadd.f32 %v6729, %v6730
    %v6732 = vadd.f32 %v6003, %v6007
    %v6733 = vadd.f32 %v6732, %v6013
    %v6734 = vadd.f32 %v6733, %v6017
    %v6735 = vadd.f32 %v6734, %v6023
    %v6736 = vadd.f32 %v6735, %v6027
    %v6737 = vadd.f32 %v6736, %v6033
    %v6738 = vadd.f32 %v6737, %v6037
    %v6739 = vadd.f32 %v6738, %v6043
    %v6740 = vadd.f32 %v6739, %v6047
    %v6741 = vadd.f32 %v6740, %v6053
    %v6742 = vadd.f32 %v6741, %v6057
    %v6743 = vadd.f32 %v6742, %v6063
    %v6744 = vadd.f32 %v6743, %v6067
    %v6745 = vadd.f32 %v6744, %v6073
    %v6746 = vadd.f32 %v6745, %v6077
    %v6747 = vadd.f32 %v6746, %v6083
    %v6748 = vadd.f32 %v6747, %v6087
    %v6749 = vadd.f32 %v6748, %v6093
    %v6750 = vadd.f32 %v6749, %v6097
    %v6751 = vadd.f32 %v6750, %v6103
    %v6752 = vadd.f32 %v6751, %v6107
    %v6753 = vadd.f32 %v6752, %v6113
    %v6754 = vadd.f32 %v6753, %v6117
    %v6755 = vadd.f32 %v6754, %v6123
    %v6756 = vadd.f32 %v6755, %v6127
    %v6757 = vadd.f32 %v6756, %v6133
    %v6758 = vadd.f32 %v6757, %v6137
    %v6759 = vadd.f32 %v6758, %v6143
    %v6760 = vadd.f32 %v6759, %v6147
    %v6761 = vadd.f32 %v6760, %v6153
    %v6762 = vadd.f32 %v6761, %v6157
    %v6763 = vrot.slane %v6762, 4
    %v6764 = vadd.f32 %v6762, %v6763
    %v6765 = vrot.slane %v6764, 2
    %v6766 = vadd.f32 %v6764, %v6765
    %v6767 = vrot.slane %v6766, 1
    %v6768 = vadd.f32 %v6766, %v6767
    %v6769 = vadd.f32 %v6387, %v6391
    %v6770 = vadd.f32 %v6769, %v6397
    %v6771 = vadd.f32 %v6770, %v6401
    %v6772 = vadd.f32 %v6771, %v6407
    %v6773 = vadd.f32 %v6772, %v6411
    %v6774 = vadd.f32 %v6773, %v6417
    %v6775 = vadd.f32 %v6774, %v6421
    %v6776 = vadd.f32 %v6775, %v6427
    %v6777 = vadd.f32 %v6776, %v6431
    %v6778 = vadd.f32 %v6777, %v6437
    %v6779 = vadd.f32 %v6778, %v6441
    %v6780 = vadd.f32 %v6779, %v6447
    %v6781 = vadd.f32 %v6780, %v6451
    %v6782 = vadd.f32 %v6781, %v6457
    %v6783 = vadd.f32 %v6782, %v6461
    %v6784 = vadd.f32 %v6783, %v6467
    %v6785 = vadd.f32 %v6784, %v6471
    %v6786 = vadd.f32 %v6785, %v6477
    %v6787 = vadd.f32 %v6786, %v6481
    %v6788 = vadd.f32 %v6787, %v6487
    %v6789 = vadd.f32 %v6788, %v6491
    %v6790 = vadd.f32 %v6789, %v6497
    %v6791 = vadd.f32 %v6790, %v6501
    %v6792 = vadd.f32 %v6791, %v6507
    %v6793 = vadd.f32 %v6792, %v6511
    %v6794 = vadd.f32 %v6793, %v6517
    %v6795 = vadd.f32 %v6794, %v6521
    %v6796 = vadd.f32 %v6795, %v6527
    %v6797 = vadd.f32 %v6796, %v6531
    %v6798 = vadd.f32 %v6797, %v6537
    %v6799 = vadd.f32 %v6798, %v6541
    %v6800 = vrot.slane %v6799, 4
    %v6801 = vadd.f32 %v6799, %v6800
    %v6802 = vrot.slane %v6801, 2
    %v6803 = vadd.f32 %v6801, %v6802
    %v6804 = vrot.slane %v6803, 1
    %v6805 = vadd.f32 %v6803, %v6804
    %v6806 = vadd.f32 %v6389, %v6393
    %v6807 = vadd.f32 %v6806, %v6399
    %v6808 = vadd.f32 %v6807, %v6403
    %v6809 = vadd.f32 %v6808, %v6409
    %v6810 = vadd.f32 %v6809, %v6413
    %v6811 = vadd.f32 %v6810, %v6419
    %v6812 = vadd.f32 %v6811, %v6423
    %v6813 = vadd.f32 %v6812, %v6429
    %v6814 = vadd.f32 %v6813, %v6433
    %v6815 = vadd.f32 %v6814, %v6439
    %v6816 = vadd.f32 %v6815, %v6443
    %v6817 = vadd.f32 %v6816, %v6449
    %v6818 = vadd.f32 %v6817, %v6453
    %v6819 = vadd.f32 %v6818, %v6459
    %v6820 = vadd.f32 %v6819, %v6463
    %v6821 = vadd.f32 %v6820, %v6469
    %v6822 = vadd.f32 %v6821, %v6473
    %v6823 = vadd.f32 %v6822, %v6479
    %v6824 = vadd.f32 %v6823, %v6483
    %v6825 = vadd.f32 %v6824, %v6489
    %v6826 = vadd.f32 %v6825, %v6493
    %v6827 = vadd.f32 %v6826, %v6499
    %v6828 = vadd.f32 %v6827, %v6503
    %v6829 = vadd.f32 %v6828, %v6509
    %v6830 = vadd.f32 %v6829, %v6513
    %v6831 = vadd.f32 %v6830, %v6519
    %v6832 = vadd.f32 %v6831, %v6523
    %v6833 = vadd.f32 %v6832, %v6529
    %v6834 = vadd.f32 %v6833, %v6533
    %v6835 = vadd.f32 %v6834, %v6539
    %v6836 = vadd.f32 %v6835, %v6543
    %v6837 = vrot.slane %v6836, 4
    %v6838 = vadd.f32 %v6836, %v6837
    %v6839 = vrot.slane %v6838, 2
    %v6840 = vadd.f32 %v6838, %v6839
    %v6841 = vrot.slane %v6840, 1
    %v6842 = vadd.f32 %v6840, %v6841
    %v6843 = vmul.f32 %v5229, %v5229
    %v6844 = vmul.f32 %v5231, %v5231
    %v6845 = vmul.f32 %v5615, %v5615
    %v6846 = vmul.f32 %v5617, %v5617
    %v6847 = vmul.f32 %v6001, %v6001
    %v6848 = vmul.f32 %v6003, %v6003
    %v6849 = vmul.f32 %v6387, %v6387
    %v6850 = vmul.f32 %v6389, %v6389
    %v6851 = vmul.f32 %v5233, %v5233
    %v6852 = vmul.f32 %v5235, %v5235
    %v6853 = vmul.f32 %v5619, %v5619
    %v6854 = vmul.f32 %v5621, %v5621
    %v6855 = vmul.f32 %v6005, %v6005
    %v6856 = vmul.f32 %v6007, %v6007
    %v6857 = vmul.f32 %v6391, %v6391
    %v6858 = vmul.f32 %v6393, %v6393
    %v6859 = vmul.f32 %v5239, %v5239
    %v6860 = vmul.f32 %v5241, %v5241
    %v6861 = vmul.f32 %v5625, %v5625
    %v6862 = vmul.f32 %v5627, %v5627
    %v6863 = vmul.f32 %v6011, %v6011
    %v6864 = vmul.f32 %v6013, %v6013
    %v6865 = vmul.f32 %v6397, %v6397
    %v6866 = vmul.f32 %v6399, %v6399
    %v6867 = vmul.f32 %v5243, %v5243
    %v6868 = vmul.f32 %v5245, %v5245
    %v6869 = vmul.f32 %v5629, %v5629
    %v6870 = vmul.f32 %v5631, %v5631
    %v6871 = vmul.f32 %v6015, %v6015
    %v6872 = vmul.f32 %v6017, %v6017
    %v6873 = vmul.f32 %v6401, %v6401
    %v6874 = vmul.f32 %v6403, %v6403
    %v6875 = vmul.f32 %v5249, %v5249
    %v6876 = vmul.f32 %v5251, %v5251
    %v6877 = vmul.f32 %v5635, %v5635
    %v6878 = vmul.f32 %v5637, %v5637
    %v6879 = vmul.f32 %v6021, %v6021
    %v6880 = vmul.f32 %v6023, %v6023
    %v6881 = vmul.f32 %v6407, %v6407
    %v6882 = vmul.f32 %v6409, %v6409
    %v6883 = vmul.f32 %v5253, %v5253
    %v6884 = vmul.f32 %v5255, %v5255
    %v6885 = vmul.f32 %v5639, %v5639
    %v6886 = vmul.f32 %v5641, %v5641
    %v6887 = vmul.f32 %v6025, %v6025
    %v6888 = vmul.f32 %v6027, %v6027
    %v6889 = vmul.f32 %v6411, %v6411
    %v6890 = vmul.f32 %v6413, %v6413
    %v6891 = vmul.f32 %v5259, %v5259
    %v6892 = vmul.f32 %v5261, %v5261
    %v6893 = vmul.f32 %v5645, %v5645
    %v6894 = vmul.f32 %v5647, %v5647
    %v6895 = vmul.f32 %v6031, %v6031
    %v6896 = vmul.f32 %v6033, %v6033
    %v6897 = vmul.f32 %v6417, %v6417
    %v6898 = vmul.f32 %v6419, %v6419
    %v6899 = vmul.f32 %v5263, %v5263
    %v6900 = vmul.f32 %v5265, %v5265
    %v6901 = vmul.f32 %v5649, %v5649
    %v6902 = vmul.f32 %v5651, %v5651
    %v6903 = vmul.f32 %v6035, %v6035
    %v6904 = vmul.f32 %v6037, %v6037
    %v6905 = vmul.f32 %v6421, %v6421
    %v6906 = vmul.f32 %v6423, %v6423
    %v6907 = vmul.f32 %v5269, %v5269
    %v6908 = vmul.f32 %v5271, %v5271
    %v6909 = vmul.f32 %v5655, %v5655
    %v6910 = vmul.f32 %v5657, %v5657
    %v6911 = vmul.f32 %v6041, %v6041
    %v6912 = vmul.f32 %v6043, %v6043
    %v6913 = vmul.f32 %v6427, %v6427
    %v6914 = vmul.f32 %v6429, %v6429
    %v6915 = vmul.f32 %v5273, %v5273
    %v6916 = vmul.f32 %v5275, %v5275
    %v6917 = vmul.f32 %v5659, %v5659
    %v6918 = vmul.f32 %v5661, %v5661
    %v6919 = vmul.f32 %v6045, %v6045
    %v6920 = vmul.f32 %v6047, %v6047
    %v6921 = vmul.f32 %v6431, %v6431
    %v6922 = vmul.f32 %v6433, %v6433
    %v6923 = vmul.f32 %v5279, %v5279
    %v6924 = vmul.f32 %v5281, %v5281
    %v6925 = vmul.f32 %v5665, %v5665
    %v6926 = vmul.f32 %v5667, %v5667
    %v6927 = vmul.f32 %v6051, %v6051
    %v6928 = vmul.f32 %v6053, %v6053
    %v6929 = vmul.f32 %v6437, %v6437
    %v6930 = vmul.f32 %v6439, %v6439
    %v6931 = vmul.f32 %v5283, %v5283
    %v6932 = vmul.f32 %v5285, %v5285
    %v6933 = vmul.f32 %v5669, %v5669
    %v6934 = vmul.f32 %v5671, %v5671
    %v6935 = vmul.f32 %v6055, %v6055
    %v6936 = vmul.f32 %v6057, %v6057
    %v6937 = vmul.f32 %v6441, %v6441
    %v6938 = vmul.f32 %v6443, %v6443
    %v6939 = vmul.f32 %v5289, %v5289
    %v6940 = vmul.f32 %v5291, %v5291
    %v6941 = vmul.f32 %v5675, %v5675
    %v6942 = vmul.f32 %v5677, %v5677
    %v6943 = vmul.f32 %v6061, %v6061
    %v6944 = vmul.f32 %v6063, %v6063
    %v6945 = vmul.f32 %v6447, %v6447
    %v6946 = vmul.f32 %v6449, %v6449
    %v6947 = vmul.f32 %v5293, %v5293
    %v6948 = vmul.f32 %v5295, %v5295
    %v6949 = vmul.f32 %v5679, %v5679
    %v6950 = vmul.f32 %v5681, %v5681
    %v6951 = vmul.f32 %v6065, %v6065
    %v6952 = vmul.f32 %v6067, %v6067
    %v6953 = vmul.f32 %v6451, %v6451
    %v6954 = vmul.f32 %v6453, %v6453
    %v6955 = vmul.f32 %v5299, %v5299
    %v6956 = vmul.f32 %v5301, %v5301
    %v6957 = vmul.f32 %v5685, %v5685
    %v6958 = vmul.f32 %v5687, %v5687
    %v6959 = vmul.f32 %v6071, %v6071
    %v6960 = vmul.f32 %v6073, %v6073
    %v6961 = vmul.f32 %v6457, %v6457
    %v6962 = vmul.f32 %v6459, %v6459
    %v6963 = vmul.f32 %v5303, %v5303
    %v6964 = vmul.f32 %v5305, %v5305
    %v6965 = vmul.f32 %v5689, %v5689
    %v6966 = vmul.f32 %v5691, %v5691
    %v6967 = vmul.f32 %v6075, %v6075
    %v6968 = vmul.f32 %v6077, %v6077
    %v6969 = vmul.f32 %v6461, %v6461
    %v6970 = vmul.f32 %v6463, %v6463
    %v6971 = vmul.f32 %v5309, %v5309
    %v6972 = vmul.f32 %v5311, %v5311
    %v6973 = vmul.f32 %v5695, %v5695
    %v6974 = vmul.f32 %v5697, %v5697
    %v6975 = vmul.f32 %v6081, %v6081
    %v6976 = vmul.f32 %v6083, %v6083
    %v6977 = vmul.f32 %v6467, %v6467
    %v6978 = vmul.f32 %v6469, %v6469
    %v6979 = vmul.f32 %v5313, %v5313
    %v6980 = vmul.f32 %v5315, %v5315
    %v6981 = vmul.f32 %v5699, %v5699
    %v6982 = vmul.f32 %v5701, %v5701
    %v6983 = vmul.f32 %v6085, %v6085
    %v6984 = vmul.f32 %v6087, %v6087
    %v6985 = vmul.f32 %v6471, %v6471
    %v6986 = vmul.f32 %v6473, %v6473
    %v6987 = vmul.f32 %v5319, %v5319
    %v6988 = vmul.f32 %v5321, %v5321
    %v6989 = vmul.f32 %v5705, %v5705
    %v6990 = vmul.f32 %v5707, %v5707
    %v6991 = vmul.f32 %v6091, %v6091
    %v6992 = vmul.f32 %v6093, %v6093
    %v6993 = vmul.f32 %v6477, %v6477
    %v6994 = vmul.f32 %v6479, %v6479
    %v6995 = vmul.f32 %v5323, %v5323
    %v6996 = vmul.f32 %v5325, %v5325
    %v6997 = vmul.f32 %v5709, %v5709
    %v6998 = vmul.f32 %v5711, %v5711
    %v6999 = vmul.f32 %v6095, %v6095
    %v7000 = vmul.f32 %v6097, %v6097
    %v7001 = vmul.f32 %v6481, %v6481
    %v7002 = vmul.f32 %v6483, %v6483
    %v7003 = vmul.f32 %v5329, %v5329
    %v7004 = vmul.f32 %v5331, %v5331
    %v7005 = vmul.f32 %v5715, %v5715
    %v7006 = vmul.f32 %v5717, %v5717
    %v7007 = vmul.f32 %v6101, %v6101
    %v7008 = vmul.f32 %v6103, %v6103
    %v7009 = vmul.f32 %v6487, %v6487
    %v7010 = vmul.f32 %v6489, %v6489
    %v7011 = vmul.f32 %v5333, %v5333
    %v7012 = vmul.f32 %v5335, %v5335
    %v7013 = vmul.f32 %v5719, %v5719
    %v7014 = vmul.f32 %v5721, %v5721
    %v7015 = vmul.f32 %v6105, %v6105
    %v7016 = vmul.f32 %v6107, %v6107
    %v7017 = vmul.f32 %v6491, %v6491
    %v7018 = vmul.f32 %v6493, %v6493
    %v7019 = vmul.f32 %v5339, %v5339
    %v7020 = vmul.f32 %v5341, %v5341
    %v7021 = vmul.f32 %v5725, %v5725
    %v7022 = vmul.f32 %v5727, %v5727
    %v7023 = vmul.f32 %v6111, %v6111
    %v7024 = vmul.f32 %v6113, %v6113
    %v7025 = vmul.f32 %v6497, %v6497
    %v7026 = vmul.f32 %v6499, %v6499
    %v7027 = vmul.f32 %v5343, %v5343
    %v7028 = vmul.f32 %v5345, %v5345
    %v7029 = vmul.f32 %v5729, %v5729
    %v7030 = vmul.f32 %v5731, %v5731
    %v7031 = vmul.f32 %v6115, %v6115
    %v7032 = vmul.f32 %v6117, %v6117
    %v7033 = vmul.f32 %v6501, %v6501
    %v7034 = vmul.f32 %v6503, %v6503
    %v7035 = vmul.f32 %v5349, %v5349
    %v7036 = vmul.f32 %v5351, %v5351
    %v7037 = vmul.f32 %v5735, %v5735
    %v7038 = vmul.f32 %v5737, %v5737
    %v7039 = vmul.f32 %v6121, %v6121
    %v7040 = vmul.f32 %v6123, %v6123
    %v7041 = vmul.f32 %v6507, %v6507
    %v7042 = vmul.f32 %v6509, %v6509
    %v7043 = vmul.f32 %v5353, %v5353
    %v7044 = vmul.f32 %v5355, %v5355
    %v7045 = vmul.f32 %v5739, %v5739
    %v7046 = vmul.f32 %v5741, %v5741
    %v7047 = vmul.f32 %v6125, %v6125
    %v7048 = vmul.f32 %v6127, %v6127
    %v7049 = vmul.f32 %v6511, %v6511
    %v7050 = vmul.f32 %v6513, %v6513
    %v7051 = vmul.f32 %v5359, %v5359
    %v7052 = vmul.f32 %v5361, %v5361
    %v7053 = vmul.f32 %v5745, %v5745
    %v7054 = vmul.f32 %v5747, %v5747
    %v7055 = vmul.f32 %v6131, %v6131
    %v7056 = vmul.f32 %v6133, %v6133
    %v7057 = vmul.f32 %v6517, %v6517
    %v7058 = vmul.f32 %v6519, %v6519
    %v7059 = vmul.f32 %v5363, %v5363
    %v7060 = vmul.f32 %v5365, %v5365
    %v7061 = vmul.f32 %v5749, %v5749
    %v7062 = vmul.f32 %v5751, %v5751
    %v7063 = vmul.f32 %v6135, %v6135
    %v7064 = vmul.f32 %v6137, %v6137
    %v7065 = vmul.f32 %v6521, %v6521
    %v7066 = vmul.f32 %v6523, %v6523
    %v7067 = vmul.f32 %v5369, %v5369
    %v7068 = vmul.f32 %v5371, %v5371
    %v7069 = vmul.f32 %v5755, %v5755
    %v7070 = vmul.f32 %v5757, %v5757
    %v7071 = vmul.f32 %v6141, %v6141
    %v7072 = vmul.f32 %v6143, %v6143
    %v7073 = vmul.f32 %v6527, %v6527
    %v7074 = vmul.f32 %v6529, %v6529
    %v7075 = vmul.f32 %v5373, %v5373
    %v7076 = vmul.f32 %v5375, %v5375
    %v7077 = vmul.f32 %v5759, %v5759
    %v7078 = vmul.f32 %v5761, %v5761
    %v7079 = vmul.f32 %v6145, %v6145
    %v7080 = vmul.f32 %v6147, %v6147
    %v7081 = vmul.f32 %v6531, %v6531
    %v7082 = vmul.f32 %v6533, %v6533
    %v7083 = vmul.f32 %v5379, %v5379
    %v7084 = vmul.f32 %v5381, %v5381
    %v7085 = vmul.f32 %v5765, %v5765
    %v7086 = vmul.f32 %v5767, %v5767
    %v7087 = vmul.f32 %v6151, %v6151
    %v7088 = vmul.f32 %v6153, %v6153
    %v7089 = vmul.f32 %v6537, %v6537
    %v7090 = vmul.f32 %v6539, %v6539
    %v7091 = vmul.f32 %v5383, %v5383
    %v7092 = vmul.f32 %v5385, %v5385
    %v7093 = vmul.f32 %v5769, %v5769
    %v7094 = vmul.f32 %v5771, %v5771
    %v7095 = vmul.f32 %v6155, %v6155
    %v7096 = vmul.f32 %v6157, %v6157
    %v7097 = vmul.f32 %v6541, %v6541
    %v7098 = vmul.f32 %v6543, %v6543
    %v7099 = vadd.f32 %v6843, %v6851
    %v7100 = vadd.f32 %v7099, %v6859
    %v7101 = vadd.f32 %v7100, %v6867
    %v7102 = vadd.f32 %v7101, %v6875
    %v7103 = vadd.f32 %v7102, %v6883
    %v7104 = vadd.f32 %v7103, %v6891
    %v7105 = vadd.f32 %v7104, %v6899
    %v7106 = vadd.f32 %v7105, %v6907
    %v7107 = vadd.f32 %v7106, %v6915
    %v7108 = vadd.f32 %v7107, %v6923
    %v7109 = vadd.f32 %v7108, %v6931
    %v7110 = vadd.f32 %v7109, %v6939
    %v7111 = vadd.f32 %v7110, %v6947
    %v7112 = vadd.f32 %v7111, %v6955
    %v7113 = vadd.f32 %v7112, %v6963
    %v7114 = vadd.f32 %v7113, %v6971
    %v7115 = vadd.f32 %v7114, %v6979
    %v7116 = vadd.f32 %v7115, %v6987
    %v7117 = vadd.f32 %v7116, %v6995
    %v7118 = vadd.f32 %v7117, %v7003
    %v7119 = vadd.f32 %v7118, %v7011
    %v7120 = vadd.f32 %v7119, %v7019
    %v7121 = vadd.f32 %v7120, %v7027
    %v7122 = vadd.f32 %v7121, %v7035
    %v7123 = vadd.f32 %v7122, %v7043
    %v7124 = vadd.f32 %v7123, %v7051
    %v7125 = vadd.f32 %v7124, %v7059
    %v7126 = vadd.f32 %v7125, %v7067
    %v7127 = vadd.f32 %v7126, %v7075
    %v7128 = vadd.f32 %v7127, %v7083
    %v7129 = vadd.f32 %v7128, %v7091
    %v7130 = vrot.slane %v7129, 4
    %v7131 = vadd.f32 %v7129, %v7130
    %v7132 = vrot.slane %v7131, 2
    %v7133 = vadd.f32 %v7131, %v7132
    %v7134 = vrot.slane %v7133, 1
    %v7135 = vadd.f32 %v7133, %v7134
    %v7136 = vadd.f32 %v6844, %v6852
    %v7137 = vadd.f32 %v7136, %v6860
    %v7138 = vadd.f32 %v7137, %v6868
    %v7139 = vadd.f32 %v7138, %v6876
    %v7140 = vadd.f32 %v7139, %v6884
    %v7141 = vadd.f32 %v7140, %v6892
    %v7142 = vadd.f32 %v7141, %v6900
    %v7143 = vadd.f32 %v7142, %v6908
    %v7144 = vadd.f32 %v7143, %v6916
    %v7145 = vadd.f32 %v7144, %v6924
    %v7146 = vadd.f32 %v7145, %v6932
    %v7147 = vadd.f32 %v7146, %v6940
    %v7148 = vadd.f32 %v7147, %v6948
    %v7149 = vadd.f32 %v7148, %v6956
    %v7150 = vadd.f32 %v7149, %v6964
    %v7151 = vadd.f32 %v7150, %v6972
    %v7152 = vadd.f32 %v7151, %v6980
    %v7153 = vadd.f32 %v7152, %v6988
    %v7154 = vadd.f32 %v7153, %v6996
    %v7155 = vadd.f32 %v7154, %v7004
    %v7156 = vadd.f32 %v7155, %v7012
    %v7157 = vadd.f32 %v7156, %v7020
    %v7158 = vadd.f32 %v7157, %v7028
    %v7159 = vadd.f32 %v7158, %v7036
    %v7160 = vadd.f32 %v7159, %v7044
    %v7161 = vadd.f32 %v7160, %v7052
    %v7162 = vadd.f32 %v7161, %v7060
    %v7163 = vadd.f32 %v7162, %v7068
    %v7164 = vadd.f32 %v7163, %v7076
    %v7165 = vadd.f32 %v7164, %v7084
    %v7166 = vadd.f32 %v7165, %v7092
    %v7167 = vrot.slane %v7166, 4
    %v7168 = vadd.f32 %v7166, %v7167
    %v7169 = vrot.slane %v7168, 2
    %v7170 = vadd.f32 %v7168, %v7169
    %v7171 = vrot.slane %v7170, 1
    %v7172 = vadd.f32 %v7170, %v7171
    %v7173 = vadd.f32 %v6845, %v6853
    %v7174 = vadd.f32 %v7173, %v6861
    %v7175 = vadd.f32 %v7174, %v6869
    %v7176 = vadd.f32 %v7175, %v6877
    %v7177 = vadd.f32 %v7176, %v6885
    %v7178 = vadd.f32 %v7177, %v6893
    %v7179 = vadd.f32 %v7178, %v6901
    %v7180 = vadd.f32 %v7179, %v6909
    %v7181 = vadd.f32 %v7180, %v6917
    %v7182 = vadd.f32 %v7181, %v6925
    %v7183 = vadd.f32 %v7182, %v6933
    %v7184 = vadd.f32 %v7183, %v6941
    %v7185 = vadd.f32 %v7184, %v6949
    %v7186 = vadd.f32 %v7185, %v6957
    %v7187 = vadd.f32 %v7186, %v6965
    %v7188 = vadd.f32 %v7187, %v6973
    %v7189 = vadd.f32 %v7188, %v6981
    %v7190 = vadd.f32 %v7189, %v6989
    %v7191 = vadd.f32 %v7190, %v6997
    %v7192 = vadd.f32 %v7191, %v7005
    %v7193 = vadd.f32 %v7192, %v7013
    %v7194 = vadd.f32 %v7193, %v7021
    %v7195 = vadd.f32 %v7194, %v7029
    %v7196 = vadd.f32 %v7195, %v7037
    %v7197 = vadd.f32 %v7196, %v7045
    %v7198 = vadd.f32 %v7197, %v7053
    %v7199 = vadd.f32 %v7198, %v7061
    %v7200 = vadd.f32 %v7199, %v7069
    %v7201 = vadd.f32 %v7200, %v7077
    %v7202 = vadd.f32 %v7201, %v7085
    %v7203 = vadd.f32 %v7202, %v7093
    %v7204 = vrot.slane %v7203, 4
    %v7205 = vadd.f32 %v7203, %v7204
    %v7206 = vrot.slane %v7205, 2
    %v7207 = vadd.f32 %v7205, %v7206
    %v7208 = vrot.slane %v7207, 1
    %v7209 = vadd.f32 %v7207, %v7208
    %v7210 = vadd.f32 %v6846, %v6854
    %v7211 = vadd.f32 %v7210, %v6862
    %v7212 = vadd.f32 %v7211, %v6870
    %v7213 = vadd.f32 %v7212, %v6878
    %v7214 = vadd.f32 %v7213, %v6886
    %v7215 = vadd.f32 %v7214, %v6894
    %v7216 = vadd.f32 %v7215, %v6902
    %v7217 = vadd.f32 %v7216, %v6910
    %v7218 = vadd.f32 %v7217, %v6918
    %v7219 = vadd.f32 %v7218, %v6926
    %v7220 = vadd.f32 %v7219, %v6934
    %v7221 = vadd.f32 %v7220, %v6942
    %v7222 = vadd.f32 %v7221, %v6950
    %v7223 = vadd.f32 %v7222, %v6958
    %v7224 = vadd.f32 %v7223, %v6966
    %v7225 = vadd.f32 %v7224, %v6974
    %v7226 = vadd.f32 %v7225, %v6982
    %v7227 = vadd.f32 %v7226, %v6990
    %v7228 = vadd.f32 %v7227, %v6998
    %v7229 = vadd.f32 %v7228, %v7006
    %v7230 = vadd.f32 %v7229, %v7014
    %v7231 = vadd.f32 %v7230, %v7022
    %v7232 = vadd.f32 %v7231, %v7030
    %v7233 = vadd.f32 %v7232, %v7038
    %v7234 = vadd.f32 %v7233, %v7046
    %v7235 = vadd.f32 %v7234, %v7054
    %v7236 = vadd.f32 %v7235, %v7062
    %v7237 = vadd.f32 %v7236, %v7070
    %v7238 = vadd.f32 %v7237, %v7078
    %v7239 = vadd.f32 %v7238, %v7086
    %v7240 = vadd.f32 %v7239, %v7094
    %v7241 = vrot.slane %v7240, 4
    %v7242 = vadd.f32 %v7240, %v7241
    %v7243 = vrot.slane %v7242, 2
    %v7244 = vadd.f32 %v7242, %v7243
    %v7245 = vrot.slane %v7244, 1
    %v7246 = vadd.f32 %v7244, %v7245
    %v7247 = vadd.f32 %v6847, %v6855
    %v7248 = vadd.f32 %v7247, %v6863
    %v7249 = vadd.f32 %v7248, %v6871
    %v7250 = vadd.f32 %v7249, %v6879
    %v7251 = vadd.f32 %v7250, %v6887
    %v7252 = vadd.f32 %v7251, %v6895
    %v7253 = vadd.f32 %v7252, %v6903
    %v7254 = vadd.f32 %v7253, %v6911
    %v7255 = vadd.f32 %v7254, %v6919
    %v7256 = vadd.f32 %v7255, %v6927
    %v7257 = vadd.f32 %v7256, %v6935
    %v7258 = vadd.f32 %v7257, %v6943
    %v7259 = vadd.f32 %v7258, %v6951
    %v7260 = vadd.f32 %v7259, %v6959
    %v7261 = vadd.f32 %v7260, %v6967
    %v7262 = vadd.f32 %v7261, %v6975
    %v7263 = vadd.f32 %v7262, %v6983
    %v7264 = vadd.f32 %v7263, %v6991
    %v7265 = vadd.f32 %v7264, %v6999
    %v7266 = vadd.f32 %v7265, %v7007
    %v7267 = vadd.f32 %v7266, %v7015
    %v7268 = vadd.f32 %v7267, %v7023
    %v7269 = vadd.f32 %v7268, %v7031
    %v7270 = vadd.f32 %v7269, %v7039
    %v7271 = vadd.f32 %v7270, %v7047
    %v7272 = vadd.f32 %v7271, %v7055
    %v7273 = vadd.f32 %v7272, %v7063
    %v7274 = vadd.f32 %v7273, %v7071
    %v7275 = vadd.f32 %v7274, %v7079
    %v7276 = vadd.f32 %v7275, %v7087
    %v7277 = vadd.f32 %v7276, %v7095
    %v7278 = vrot.slane %v7277, 4
    %v7279 = vadd.f32 %v7277, %v7278
    %v7280 = vrot.slane %v7279, 2
    %v7281 = vadd.f32 %v7279, %v7280
    %v7282 = vrot.slane %v7281, 1
    %v7283 = vadd.f32 %v7281, %v7282
    %v7284 = vadd.f32 %v6848, %v6856
    %v7285 = vadd.f32 %v7284, %v6864
    %v7286 = vadd.f32 %v7285, %v6872
    %v7287 = vadd.f32 %v7286, %v6880
    %v7288 = vadd.f32 %v7287, %v6888
    %v7289 = vadd.f32 %v7288, %v6896
    %v7290 = vadd.f32 %v7289, %v6904
    %v7291 = vadd.f32 %v7290, %v6912
    %v7292 = vadd.f32 %v7291, %v6920
    %v7293 = vadd.f32 %v7292, %v6928
    %v7294 = vadd.f32 %v7293, %v6936
    %v7295 = vadd.f32 %v7294, %v6944
    %v7296 = vadd.f32 %v7295, %v6952
    %v7297 = vadd.f32 %v7296, %v6960
    %v7298 = vadd.f32 %v7297, %v6968
    %v7299 = vadd.f32 %v7298, %v6976
    %v7300 = vadd.f32 %v7299, %v6984
    %v7301 = vadd.f32 %v7300, %v6992
    %v7302 = vadd.f32 %v7301, %v7000
    %v7303 = vadd.f32 %v7302, %v7008
    %v7304 = vadd.f32 %v7303, %v7016
    %v7305 = vadd.f32 %v7304, %v7024
    %v7306 = vadd.f32 %v7305, %v7032
    %v7307 = vadd.f32 %v7306, %v7040
    %v7308 = vadd.f32 %v7307, %v7048
    %v7309 = vadd.f32 %v7308, %v7056
    %v7310 = vadd.f32 %v7309, %v7064
    %v7311 = vadd.f32 %v7310, %v7072
    %v7312 = vadd.f32 %v7311, %v7080
    %v7313 = vadd.f32 %v7312, %v7088
    %v7314 = vadd.f32 %v7313, %v7096
    %v7315 = vrot.slane %v7314, 4
    %v7316 = vadd.f32 %v7314, %v7315
    %v7317 = vrot.slane %v7316, 2
    %v7318 = vadd.f32 %v7316, %v7317
    %v7319 = vrot.slane %v7318, 1
    %v7320 = vadd.f32 %v7318, %v7319
    %v7321 = vadd.f32 %v6849, %v6857
    %v7322 = vadd.f32 %v7321, %v6865
    %v7323 = vadd.f32 %v7322, %v6873
    %v7324 = vadd.f32 %v7323, %v6881
    %v7325 = vadd.f32 %v7324, %v6889
    %v7326 = vadd.f32 %v7325, %v6897
    %v7327 = vadd.f32 %v7326, %v6905
    %v7328 = vadd.f32 %v7327, %v6913
    %v7329 = vadd.f32 %v7328, %v6921
    %v7330 = vadd.f32 %v7329, %v6929
    %v7331 = vadd.f32 %v7330, %v6937
    %v7332 = vadd.f32 %v7331, %v6945
    %v7333 = vadd.f32 %v7332, %v6953
    %v7334 = vadd.f32 %v7333, %v6961
    %v7335 = vadd.f32 %v7334, %v6969
    %v7336 = vadd.f32 %v7335, %v6977
    %v7337 = vadd.f32 %v7336, %v6985
    %v7338 = vadd.f32 %v7337, %v6993
    %v7339 = vadd.f32 %v7338, %v7001
    %v7340 = vadd.f32 %v7339, %v7009
    %v7341 = vadd.f32 %v7340, %v7017
    %v7342 = vadd.f32 %v7341, %v7025
    %v7343 = vadd.f32 %v7342, %v7033
    %v7344 = vadd.f32 %v7343, %v7041
    %v7345 = vadd.f32 %v7344, %v7049
    %v7346 = vadd.f32 %v7345, %v7057
    %v7347 = vadd.f32 %v7346, %v7065
    %v7348 = vadd.f32 %v7347, %v7073
    %v7349 = vadd.f32 %v7348, %v7081
    %v7350 = vadd.f32 %v7349, %v7089
    %v7351 = vadd.f32 %v7350, %v7097
    %v7352 = vrot.slane %v7351, 4
    %v7353 = vadd.f32 %v7351, %v7352
    %v7354 = vrot.slane %v7353, 2
    %v7355 = vadd.f32 %v7353, %v7354
    %v7356 = vrot.slane %v7355, 1
    %v7357 = vadd.f32 %v7355, %v7356
    %v7358 = vadd.f32 %v6850, %v6858
    %v7359 = vadd.f32 %v7358, %v6866
    %v7360 = vadd.f32 %v7359, %v6874
    %v7361 = vadd.f32 %v7360, %v6882
    %v7362 = vadd.f32 %v7361, %v6890
    %v7363 = vadd.f32 %v7362, %v6898
    %v7364 = vadd.f32 %v7363, %v6906
    %v7365 = vadd.f32 %v7364, %v6914
    %v7366 = vadd.f32 %v7365, %v6922
    %v7367 = vadd.f32 %v7366, %v6930
    %v7368 = vadd.f32 %v7367, %v6938
    %v7369 = vadd.f32 %v7368, %v6946
    %v7370 = vadd.f32 %v7369, %v6954
    %v7371 = vadd.f32 %v7370, %v6962
    %v7372 = vadd.f32 %v7371, %v6970
    %v7373 = vadd.f32 %v7372, %v6978
    %v7374 = vadd.f32 %v7373, %v6986
    %v7375 = vadd.f32 %v7374, %v6994
    %v7376 = vadd.f32 %v7375, %v7002
    %v7377 = vadd.f32 %v7376, %v7010
    %v7378 = vadd.f32 %v7377, %v7018
    %v7379 = vadd.f32 %v7378, %v7026
    %v7380 = vadd.f32 %v7379, %v7034
    %v7381 = vadd.f32 %v7380, %v7042
    %v7382 = vadd.f32 %v7381, %v7050
    %v7383 = vadd.f32 %v7382, %v7058
    %v7384 = vadd.f32 %v7383, %v7066
    %v7385 = vadd.f32 %v7384, %v7074
    %v7386 = vadd.f32 %v7385, %v7082
    %v7387 = vadd.f32 %v7386, %v7090
    %v7388 = vadd.f32 %v7387, %v7098
    %v7389 = vrot.slane %v7388, 4
    %v7390 = vadd.f32 %v7388, %v7389
    %v7391 = vrot.slane %v7390, 2
    %v7392 = vadd.f32 %v7390, %v7391
    %v7393 = vrot.slane %v7392, 1
    %v7394 = vadd.f32 %v7392, %v7393
    %v7395 = vmul.f32 %v6583, 0.00390625
    %v7396 = vmul.f32 %v6620, 0.00390625
    %v7397 = vmul.f32 %v6657, 0.00390625
    %v7398 = vmul.f32 %v6694, 0.00390625
    %v7399 = vmul.f32 %v6731, 0.00390625
    %v7400 = vmul.f32 %v6768, 0.00390625
    %v7401 = vmul.f32 %v6805, 0.00390625
    %v7402 = vmul.f32 %v6842, 0.00390625
    %v7403 = vmul.f32 %v7135, 0.00390625
    %v7404 = vmul.f32 %v7172, 0.00390625
    %v7405 = vmul.f32 %v7209, 0.00390625
    %v7406 = vmul.f32 %v7246, 0.00390625
    %v7407 = vmul.f32 %v7283, 0.00390625
    %v7408 = vmul.f32 %v7320, 0.00390625
    %v7409 = vmul.f32 %v7357, 0.00390625
    %v7410 = vmul.f32 %v7394, 0.00390625
    %v7411 = vmul.f32 %v7395, %v7395
    %v7412 = vmul.f32 %v7396, %v7396
    %v7413 = vmul.f32 %v7397, %v7397
    %v7414 = vmul.f32 %v7398, %v7398
    %v7415 = vmul.f32 %v7399, %v7399
    %v7416 = vmul.f32 %v7400, %v7400
    %v7417 = vmul.f32 %v7401, %v7401
    %v7418 = vmul.f32 %v7402, %v7402
    %v7419 = vsub.f32 %v7403, %v7411
    %v7420 = vsub.f32 %v7404, %v7412
    %v7421 = vsub.f32 %v7405, %v7413
    %v7422 = vsub.f32 %v7406, %v7414
    %v7423 = vsub.f32 %v7407, %v7415
    %v7424 = vsub.f32 %v7408, %v7416
    %v7425 = vsub.f32 %v7409, %v7417
    %v7426 = vsub.f32 %v7410, %v7418
    %v7427 = vadd.f32 %v7419, 0.8
    %v7428 = vadd.f32 %v7420, 0.8
    %v7429 = vadd.f32 %v7421, 0.8
    %v7430 = vadd.f32 %v7422, 0.8
    %v7431 = vadd.f32 %v7423, 0.8
    %v7432 = vadd.f32 %v7424, 0.8
    %v7433 = vadd.f32 %v7425, 0.8
    %v7434 = vadd.f32 %v7426, 0.8
    %v7435 = vrsqrt.pop %v7427
    %v7436 = vrsqrt.pop %v7428
    %v7437 = vrsqrt.pop %v7429
    %v7438 = vrsqrt.pop %v7430
    %v7439 = vrsqrt.pop %v7431
    %v7440 = vrsqrt.pop %v7432
    %v7441 = vrsqrt.pop %v7433
    %v7442 = vrsqrt.pop %v7434
    %v7451 = vcombine.low %v7435, %v7436
    %v7452 = vcombine.low %v7437, %v7438
    %v7453 = vcombine.low %v7439, %v7440
    %v7454 = vcombine.low %v7441, %v7442
    %v7456 = vunpack.c.l.s4 1966171168
    %v7457 = vunpack.c.0.s8 %v7456
    %v7458 = vlaneseq
    %v7459 = vshrl.u32 %v7458, 7
    %v7460 = vsub.s32 %v7457, %v7459
    %v7461 = vrot.slane %v7451, %v7460
    %v7463 = vunpack.c.l.s4 1966171168
    %v7464 = vunpack.c.0.s8 %v7463
    %v7465 = vlaneseq
    %v7466 = vshrl.u32 %v7465, 7
    %v7467 = vsub.s32 %v7464, %v7466
    %v7468 = vrot.slane %v7452, %v7467
    %v7470 = vunpack.c.l.s4 1966171168
    %v7471 = vunpack.c.0.s8 %v7470
    %v7472 = vlaneseq
    %v7473 = vshrl.u32 %v7472, 7
    %v7474 = vsub.s32 %v7471, %v7473
    %v7475 = vrot.slane %v7453, %v7474
    %v7477 = vunpack.c.l.s4 1966171168
    %v7478 = vunpack.c.0.s8 %v7477
    %v7479 = vlaneseq
    %v7480 = vshrl.u32 %v7479, 7
    %v7481 = vsub.s32 %v7478, %v7480
    %v7482 = vrot.slane %v7454, %v7481
    %v7483 = vcombine.low %v7461, %v7468
    %v7484 = vcombine.low %v7475, %v7482
    %v7486 = vunpack.c.l.s4 1966171168
    %v7487 = vunpack.c.0.s8 %v7486
    %v7488 = vlaneseq
    %v7489 = vshrl.u32 %v7488, 7
    %v7490 = vsub.s32 %v7487, %v7489
    %v7491 = vrot.slane %v7483, %v7490
    %v7493 = vunpack.c.l.s4 1966171168
    %v7494 = vunpack.c.0.s8 %v7493
    %v7495 = vlaneseq
    %v7496 = vshrl.u32 %v7495, 7
    %v7497 = vsub.s32 %v7494, %v7496
    %v7498 = vrot.slane %v7484, %v7497
    %v7499 = vcombine.low %v7491, %v7498
    %v7501 = vmul.f32 %v6545, %v7499
    %v7503 = vlaneseq
    %v7504 = vshrl.u32 %v7503, 7
    %v7505 = vsub.s32 0, %v7504
    %v7506 = vrot.slane %v7501, %v7505
    %v7507 = vlaneseq
    %v7508 = vshrl.u32 %v7507, 7
    %v7509 = vsub.s32 1, %v7508
    %v7510 = vrot.slane %v7501, %v7509
    %v7511 = vlaneseq
    %v7512 = vshrl.u32 %v7511, 7
    %v7513 = vsub.s32 2, %v7512
    %v7514 = vrot.slane %v7501, %v7513
    %v7515 = vlaneseq
    %v7516 = vshrl.u32 %v7515, 7
    %v7517 = vsub.s32 3, %v7516
    %v7518 = vrot.slane %v7501, %v7517
    %v7519 = vlaneseq
    %v7520 = vshrl.u32 %v7519, 7
    %v7521 = vsub.s32 4, %v7520
    %v7522 = vrot.slane %v7501, %v7521
    %v7523 = vlaneseq
    %v7524 = vshrl.u32 %v7523, 7
    %v7525 = vsub.s32 5, %v7524
    %v7526 = vrot.slane %v7501, %v7525
    %v7527 = vlaneseq
    %v7528 = vshrl.u32 %v7527, 7
    %v7529 = vsub.s32 6, %v7528
    %v7530 = vrot.slane %v7501, %v7529
    %v7531 = vlaneseq
    %v7532 = vshrl.u32 %v7531, 7
    %v7533 = vsub.s32 7, %v7532
    %v7534 = vrot.slane %v7501, %v7533
    %v7543 = vmul.f32 %v7395, %v7506
    %v7544 = vmul.f32 %v7396, %v7510
    %v7545 = vmul.f32 %v7397, %v7514
    %v7546 = vmul.f32 %v7398, %v7518
    %v7547 = vmul.f32 %v7399, %v7522
    %v7548 = vmul.f32 %v7400, %v7526
    %v7549 = vmul.f32 %v7401, %v7530
    %v7550 = vmul.f32 %v7402, %v7534
    %v7559 = vcombine.low %v7543, %v7544
    %v7560 = vcombine.low %v7545, %v7546
    %v7561 = vcombine.low %v7547, %v7548
    %v7562 = vcombine.low %v7549, %v7550
    %v7564 = vunpack.c.l.s4 1966171168
    %v7565 = vunpack.c.0.s8 %v7564
    %v7566 = vlaneseq
    %v7567 = vshrl.u32 %v7566, 7
    %v7568 = vsub.s32 %v7565, %v7567
    %v7569 = vrot.slane %v7559, %v7568
    %v7571 = vunpack.c.l.s4 1966171168
    %v7572 = vunpack.c.0.s8 %v7571
    %v7573 = vlaneseq
    %v7574 = vshrl.u32 %v7573, 7
    %v7575 = vsub.s32 %v7572, %v7574
    %v7576 = vrot.slane %v7560, %v7575
    %v7578 = vunpack.c.l.s4 1966171168
    %v7579 = vunpack.c.0.s8 %v7578
    %v7580 = vlaneseq
    %v7581 = vshrl.u32 %v7580, 7
    %v7582 = vsub.s32 %v7579, %v7581
    %v7583 = vrot.slane %v7561, %v7582
    %v7585 = vunpack.c.l.s4 1966171168
    %v7586 = vunpack.c.0.s8 %v7585
    %v7587 = vlaneseq
    %v7588 = vshrl.u32 %v7587, 7
    %v7589 = vsub.s32 %v7586, %v7588
    %v7590 = vrot.slane %v7562, %v7589
    %v7591 = vcombine.low %v7569, %v7576
    %v7592 = vcombine.low %v7583, %v7590
    %v7594 = vunpack.c.l.s4 1966171168
    %v7595 = vunpack.c.0.s8 %v7594
    %v7596 = vlaneseq
    %v7597 = vshrl.u32 %v7596, 7
    %v7598 = vsub.s32 %v7595, %v7597
    %v7599 = vrot.slane %v7591, %v7598
    %v7601 = vunpack.c.l.s4 1966171168
    %v7602 = vunpack.c.0.s8 %v7601
    %v7603 = vlaneseq
    %v7604 = vshrl.u32 %v7603, 7
    %v7605 = vsub.s32 %v7602, %v7604
    %v7606 = vrot.slane %v7592, %v7605
    %v7607 = vcombine.low %v7599, %v7606
    %v7609 = vsub.f32 %v6546, %v7607
    %v7610 = vmul.f32 %v5229, %v7506
    %v7611 = vmul.f32 %v5231, %v7510
    %v7612 = vmul.f32 %v5615, %v7514
    %v7613 = vmul.f32 %v5617, %v7518
    %v7614 = vmul.f32 %v6001, %v7522
    %v7615 = vmul.f32 %v6003, %v7526
    %v7616 = vmul.f32 %v6387, %v7530
    %v7617 = vmul.f32 %v6389, %v7534
    %v7618 = vmul.f32 %v5233, %v7506
    %v7619 = vmul.f32 %v5235, %v7510
    %v7620 = vmul.f32 %v5619, %v7514
    %v7621 = vmul.f32 %v5621, %v7518
    %v7622 = vmul.f32 %v6005, %v7522
    %v7623 = vmul.f32 %v6007, %v7526
    %v7624 = vmul.f32 %v6391, %v7530
    %v7625 = vmul.f32 %v6393, %v7534
    %v7626 = vmul.f32 %v5239, %v7506
    %v7627 = vmul.f32 %v5241, %v7510
    %v7628 = vmul.f32 %v5625, %v7514
    %v7629 = vmul.f32 %v5627, %v7518
    %v7630 = vmul.f32 %v6011, %v7522
    %v7631 = vmul.f32 %v6013, %v7526
    %v7632 = vmul.f32 %v6397, %v7530
    %v7633 = vmul.f32 %v6399, %v7534
    %v7634 = vmul.f32 %v5243, %v7506
    %v7635 = vmul.f32 %v5245, %v7510
    %v7636 = vmul.f32 %v5629, %v7514
    %v7637 = vmul.f32 %v5631, %v7518
    %v7638 = vmul.f32 %v6015, %v7522
    %v7639 = vmul.f32 %v6017, %v7526
    %v7640 = vmul.f32 %v6401, %v7530
    %v7641 = vmul.f32 %v6403, %v7534
    %v7642 = vmul.f32 %v5249, %v7506
    %v7643 = vmul.f32 %v5251, %v7510
    %v7644 = vmul.f32 %v5635, %v7514
    %v7645 = vmul.f32 %v5637, %v7518
    %v7646 = vmul.f32 %v6021, %v7522
    %v7647 = vmul.f32 %v6023, %v7526
    %v7648 = vmul.f32 %v6407, %v7530
    %v7649 = vmul.f32 %v6409, %v7534
    %v7650 = vmul.f32 %v5253, %v7506
    %v7651 = vmul.f32 %v5255, %v7510
    %v7652 = vmul.f32 %v5639, %v7514
    %v7653 = vmul.f32 %v5641, %v7518
    %v7654 = vmul.f32 %v6025, %v7522
    %v7655 = vmul.f32 %v6027, %v7526
    %v7656 = vmul.f32 %v6411, %v7530
    %v7657 = vmul.f32 %v6413, %v7534
    %v7658 = vmul.f32 %v5259, %v7506
    %v7659 = vmul.f32 %v5261, %v7510
    %v7660 = vmul.f32 %v5645, %v7514
    %v7661 = vmul.f32 %v5647, %v7518
    %v7662 = vmul.f32 %v6031, %v7522
    %v7663 = vmul.f32 %v6033, %v7526
    %v7664 = vmul.f32 %v6417, %v7530
    %v7665 = vmul.f32 %v6419, %v7534
    %v7666 = vmul.f32 %v5263, %v7506
    %v7667 = vmul.f32 %v5265, %v7510
    %v7668 = vmul.f32 %v5649, %v7514
    %v7669 = vmul.f32 %v5651, %v7518
    %v7670 = vmul.f32 %v6035, %v7522
    %v7671 = vmul.f32 %v6037, %v7526
    %v7672 = vmul.f32 %v6421, %v7530
    %v7673 = vmul.f32 %v6423, %v7534
    %v7674 = vmul.f32 %v5269, %v7506
    %v7675 = vmul.f32 %v5271, %v7510
    %v7676 = vmul.f32 %v5655, %v7514
    %v7677 = vmul.f32 %v5657, %v7518
    %v7678 = vmul.f32 %v6041, %v7522
    %v7679 = vmul.f32 %v6043, %v7526
    %v7680 = vmul.f32 %v6427, %v7530
    %v7681 = vmul.f32 %v6429, %v7534
    %v7682 = vmul.f32 %v5273, %v7506
    %v7683 = vmul.f32 %v5275, %v7510
    %v7684 = vmul.f32 %v5659, %v7514
    %v7685 = vmul.f32 %v5661, %v7518
    %v7686 = vmul.f32 %v6045, %v7522
    %v7687 = vmul.f32 %v6047, %v7526
    %v7688 = vmul.f32 %v6431, %v7530
    %v7689 = vmul.f32 %v6433, %v7534
    %v7690 = vmul.f32 %v5279, %v7506
    %v7691 = vmul.f32 %v5281, %v7510
    %v7692 = vmul.f32 %v5665, %v7514
    %v7693 = vmul.f32 %v5667, %v7518
    %v7694 = vmul.f32 %v6051, %v7522
    %v7695 = vmul.f32 %v6053, %v7526
    %v7696 = vmul.f32 %v6437, %v7530
    %v7697 = vmul.f32 %v6439, %v7534
    %v7698 = vmul.f32 %v5283, %v7506
    %v7699 = vmul.f32 %v5285, %v7510
    %v7700 = vmul.f32 %v5669, %v7514
    %v7701 = vmul.f32 %v5671, %v7518
    %v7702 = vmul.f32 %v6055, %v7522
    %v7703 = vmul.f32 %v6057, %v7526
    %v7704 = vmul.f32 %v6441, %v7530
    %v7705 = vmul.f32 %v6443, %v7534
    %v7706 = vmul.f32 %v5289, %v7506
    %v7707 = vmul.f32 %v5291, %v7510
    %v7708 = vmul.f32 %v5675, %v7514
    %v7709 = vmul.f32 %v5677, %v7518
    %v7710 = vmul.f32 %v6061, %v7522
    %v7711 = vmul.f32 %v6063, %v7526
    %v7712 = vmul.f32 %v6447, %v7530
    %v7713 = vmul.f32 %v6449, %v7534
    %v7714 = vmul.f32 %v5293, %v7506
    %v7715 = vmul.f32 %v5295, %v7510
    %v7716 = vmul.f32 %v5679, %v7514
    %v7717 = vmul.f32 %v5681, %v7518
    %v7718 = vmul.f32 %v6065, %v7522
    %v7719 = vmul.f32 %v6067, %v7526
    %v7720 = vmul.f32 %v6451, %v7530
    %v7721 = vmul.f32 %v6453, %v7534
    %v7722 = vmul.f32 %v5299, %v7506
    %v7723 = vmul.f32 %v5301, %v7510
    %v7724 = vmul.f32 %v5685, %v7514
    %v7725 = vmul.f32 %v5687, %v7518
    %v7726 = vmul.f32 %v6071, %v7522
    %v7727 = vmul.f32 %v6073, %v7526
    %v7728 = vmul.f32 %v6457, %v7530
    %v7729 = vmul.f32 %v6459, %v7534
    %v7730 = vmul.f32 %v5303, %v7506
    %v7731 = vmul.f32 %v5305, %v7510
    %v7732 = vmul.f32 %v5689, %v7514
    %v7733 = vmul.f32 %v5691, %v7518
    %v7734 = vmul.f32 %v6075, %v7522
    %v7735 = vmul.f32 %v6077, %v7526
    %v7736 = vmul.f32 %v6461, %v7530
    %v7737 = vmul.f32 %v6463, %v7534
    %v7738 = vmul.f32 %v5309, %v7506
    %v7739 = vmul.f32 %v5311, %v7510
    %v7740 = vmul.f32 %v5695, %v7514
    %v7741 = vmul.f32 %v5697, %v7518
    %v7742 = vmul.f32 %v6081, %v7522
    %v7743 = vmul.f32 %v6083, %v7526
    %v7744 = vmul.f32 %v6467, %v7530
    %v7745 = vmul.f32 %v6469, %v7534
    %v7746 = vmul.f32 %v5313, %v7506
    %v7747 = vmul.f32 %v5315, %v7510
    %v7748 = vmul.f32 %v5699, %v7514
    %v7749 = vmul.f32 %v5701, %v7518
    %v7750 = vmul.f32 %v6085, %v7522
    %v7751 = vmul.f32 %v6087, %v7526
    %v7752 = vmul.f32 %v6471, %v7530
    %v7753 = vmul.f32 %v6473, %v7534
    %v7754 = vmul.f32 %v5319, %v7506
    %v7755 = vmul.f32 %v5321, %v7510
    %v7756 = vmul.f32 %v5705, %v7514
    %v7757 = vmul.f32 %v5707, %v7518
    %v7758 = vmul.f32 %v6091, %v7522
    %v7759 = vmul.f32 %v6093, %v7526
    %v7760 = vmul.f32 %v6477, %v7530
    %v7761 = vmul.f32 %v6479, %v7534
    %v7762 = vmul.f32 %v5323, %v7506
    %v7763 = vmul.f32 %v5325, %v7510
    %v7764 = vmul.f32 %v5709, %v7514
    %v7765 = vmul.f32 %v5711, %v7518
    %v7766 = vmul.f32 %v6095, %v7522
    %v7767 = vmul.f32 %v6097, %v7526
    %v7768 = vmul.f32 %v6481, %v7530
    %v7769 = vmul.f32 %v6483, %v7534
    %v7770 = vmul.f32 %v5329, %v7506
    %v7771 = vmul.f32 %v5331, %v7510
    %v7772 = vmul.f32 %v5715, %v7514
    %v7773 = vmul.f32 %v5717, %v7518
    %v7774 = vmul.f32 %v6101, %v7522
    %v7775 = vmul.f32 %v6103, %v7526
    %v7776 = vmul.f32 %v6487, %v7530
    %v7777 = vmul.f32 %v6489, %v7534
    %v7778 = vmul.f32 %v5333, %v7506
    %v7779 = vmul.f32 %v5335, %v7510
    %v7780 = vmul.f32 %v5719, %v7514
    %v7781 = vmul.f32 %v5721, %v7518
    %v7782 = vmul.f32 %v6105, %v7522
    %v7783 = vmul.f32 %v6107, %v7526
    %v7784 = vmul.f32 %v6491, %v7530
    %v7785 = vmul.f32 %v6493, %v7534
    %v7786 = vmul.f32 %v5339, %v7506
    %v7787 = vmul.f32 %v5341, %v7510
    %v7788 = vmul.f32 %v5725, %v7514
    %v7789 = vmul.f32 %v5727, %v7518
    %v7790 = vmul.f32 %v6111, %v7522
    %v7791 = vmul.f32 %v6113, %v7526
    %v7792 = vmul.f32 %v6497, %v7530
    %v7793 = vmul.f32 %v6499, %v7534
    %v7794 = vmul.f32 %v5343, %v7506
    %v7795 = vmul.f32 %v5345, %v7510
    %v7796 = vmul.f32 %v5729, %v7514
    %v7797 = vmul.f32 %v5731, %v7518
    %v7798 = vmul.f32 %v6115, %v7522
    %v7799 = vmul.f32 %v6117, %v7526
    %v7800 = vmul.f32 %v6501, %v7530
    %v7801 = vmul.f32 %v6503, %v7534
    %v7802 = vmul.f32 %v5349, %v7506
    %v7803 = vmul.f32 %v5351, %v7510
    %v7804 = vmul.f32 %v5735, %v7514
    %v7805 = vmul.f32 %v5737, %v7518
    %v7806 = vmul.f32 %v6121, %v7522
    %v7807 = vmul.f32 %v6123, %v7526
    %v7808 = vmul.f32 %v6507, %v7530
    %v7809 = vmul.f32 %v6509, %v7534
    %v7810 = vmul.f32 %v5353, %v7506
    %v7811 = vmul.f32 %v5355, %v7510
    %v7812 = vmul.f32 %v5739, %v7514
    %v7813 = vmul.f32 %v5741, %v7518
    %v7814 = vmul.f32 %v6125, %v7522
    %v7815 = vmul.f32 %v6127, %v7526
    %v7816 = vmul.f32 %v6511, %v7530
    %v7817 = vmul.f32 %v6513, %v7534
    %v7818 = vmul.f32 %v5359, %v7506
    %v7819 = vmul.f32 %v5361, %v7510
    %v7820 = vmul.f32 %v5745, %v7514
    %v7821 = vmul.f32 %v5747, %v7518
    %v7822 = vmul.f32 %v6131, %v7522
    %v7823 = vmul.f32 %v6133, %v7526
    %v7824 = vmul.f32 %v6517, %v7530
    %v7825 = vmul.f32 %v6519, %v7534
    %v7826 = vmul.f32 %v5363, %v7506
    %v7827 = vmul.f32 %v5365, %v7510
    %v7828 = vmul.f32 %v5749, %v7514
    %v7829 = vmul.f32 %v5751, %v7518
    %v7830 = vmul.f32 %v6135, %v7522
    %v7831 = vmul.f32 %v6137, %v7526
    %v7832 = vmul.f32 %v6521, %v7530
    %v7833 = vmul.f32 %v6523, %v7534
    %v7834 = vmul.f32 %v5369, %v7506
    %v7835 = vmul.f32 %v5371, %v7510
    %v7836 = vmul.f32 %v5755, %v7514
    %v7837 = vmul.f32 %v5757, %v7518
    %v7838 = vmul.f32 %v6141, %v7522
    %v7839 = vmul.f32 %v6143, %v7526
    %v7840 = vmul.f32 %v6527, %v7530
    %v7841 = vmul.f32 %v6529, %v7534
    %v7842 = vmul.f32 %v5373, %v7506
    %v7843 = vmul.f32 %v5375, %v7510
    %v7844 = vmul.f32 %v5759, %v7514
    %v7845 = vmul.f32 %v5761, %v7518
    %v7846 = vmul.f32 %v6145, %v7522
    %v7847 = vmul.f32 %v6147, %v7526
    %v7848 = vmul.f32 %v6531, %v7530
    %v7849 = vmul.f32 %v6533, %v7534
    %v7850 = vmul.f32 %v5379, %v7506
    %v7851 = vmul.f32 %v5381, %v7510
    %v7852 = vmul.f32 %v5765, %v7514
    %v7853 = vmul.f32 %v5767, %v7518
    %v7854 = vmul.f32 %v6151, %v7522
    %v7855 = vmul.f32 %v6153, %v7526
    %v7856 = vmul.f32 %v6537, %v7530
    %v7857 = vmul.f32 %v6539, %v7534
    %v7858 = vmul.f32 %v5383, %v7506
    %v7859 = vmul.f32 %v5385, %v7510
    %v7860 = vmul.f32 %v5769, %v7514
    %v7861 = vmul.f32 %v5771, %v7518
    %v7862 = vmul.f32 %v6155, %v7522
    %v7863 = vmul.f32 %v6157, %v7526
    %v7864 = vmul.f32 %v6541, %v7530
    %v7865 = vmul.f32 %v6543, %v7534
    %v7867 = vlaneseq
    %v7868 = vshrl.u32 %v7867, 7
    %v7869 = vsub.s32 0, %v7868
    %v7870 = vrot.slane %v7609, %v7869
    %v7871 = vlaneseq
    %v7872 = vshrl.u32 %v7871, 7
    %v7873 = vsub.s32 1, %v7872
    %v7874 = vrot.slane %v7609, %v7873
    %v7875 = vlaneseq
    %v7876 = vshrl.u32 %v7875, 7
    %v7877 = vsub.s32 2, %v7876
    %v7878 = vrot.slane %v7609, %v7877
    %v7879 = vlaneseq
    %v7880 = vshrl.u32 %v7879, 7
    %v7881 = vsub.s32 3, %v7880
    %v7882 = vrot.slane %v7609, %v7881
    %v7883 = vlaneseq
    %v7884 = vshrl.u32 %v7883, 7
    %v7885 = vsub.s32 4, %v7884
    %v7886 = vrot.slane %v7609, %v7885
    %v7887 = vlaneseq
    %v7888 = vshrl.u32 %v7887, 7
    %v7889 = vsub.s32 5, %v7888
    %v7890 = vrot.slane %v7609, %v7889
    %v7891 = vlaneseq
    %v7892 = vshrl.u32 %v7891, 7
    %v7893 = vsub.s32 6, %v7892
    %v7894 = vrot.slane %v7609, %v7893
    %v7895 = vlaneseq
    %v7896 = vshrl.u32 %v7895, 7
    %v7897 = vsub.s32 7, %v7896
    %v7898 = vrot.slane %v7609, %v7897
    %v7907 = vadd.f32 %v7610, %v7870
    %v7908 = vadd.f32 %v7611, %v7874
    %v7909 = vadd.f32 %v7612, %v7878
    %v7910 = vadd.f32 %v7613, %v7882
    %v7911 = vadd.f32 %v7614, %v7886
    %v7912 = vadd.f32 %v7615, %v7890
    %v7913 = vadd.f32 %v7616, %v7894
    %v7914 = vadd.f32 %v7617, %v7898
    %v7915 = vadd.f32 %v7618, %v7870
    %v7916 = vadd.f32 %v7619, %v7874
    %v7917 = vadd.f32 %v7620, %v7878
    %v7918 = vadd.f32 %v7621, %v7882
    %v7919 = vadd.f32 %v7622, %v7886
    %v7920 = vadd.f32 %v7623, %v7890
    %v7921 = vadd.f32 %v7624, %v7894
    %v7922 = vadd.f32 %v7625, %v7898
    %v7923 = vadd.f32 %v7626, %v7870
    %v7924 = vadd.f32 %v7627, %v7874
    %v7925 = vadd.f32 %v7628, %v7878
    %v7926 = vadd.f32 %v7629, %v7882
    %v7927 = vadd.f32 %v7630, %v7886
    %v7928 = vadd.f32 %v7631, %v7890
    %v7929 = vadd.f32 %v7632, %v7894
    %v7930 = vadd.f32 %v7633, %v7898
    %v7931 = vadd.f32 %v7634, %v7870
    %v7932 = vadd.f32 %v7635, %v7874
    %v7933 = vadd.f32 %v7636, %v7878
    %v7934 = vadd.f32 %v7637, %v7882
    %v7935 = vadd.f32 %v7638, %v7886
    %v7936 = vadd.f32 %v7639, %v7890
    %v7937 = vadd.f32 %v7640, %v7894
    %v7938 = vadd.f32 %v7641, %v7898
    %v7939 = vadd.f32 %v7642, %v7870
    %v7940 = vadd.f32 %v7643, %v7874
    %v7941 = vadd.f32 %v7644, %v7878
    %v7942 = vadd.f32 %v7645, %v7882
    %v7943 = vadd.f32 %v7646, %v7886
    %v7944 = vadd.f32 %v7647, %v7890
    %v7945 = vadd.f32 %v7648, %v7894
    %v7946 = vadd.f32 %v7649, %v7898
    %v7947 = vadd.f32 %v7650, %v7870
    %v7948 = vadd.f32 %v7651, %v7874
    %v7949 = vadd.f32 %v7652, %v7878
    %v7950 = vadd.f32 %v7653, %v7882
    %v7951 = vadd.f32 %v7654, %v7886
    %v7952 = vadd.f32 %v7655, %v7890
    %v7953 = vadd.f32 %v7656, %v7894
    %v7954 = vadd.f32 %v7657, %v7898
    %v7955 = vadd.f32 %v7658, %v7870
    %v7956 = vadd.f32 %v7659, %v7874
    %v7957 = vadd.f32 %v7660, %v7878
    %v7958 = vadd.f32 %v7661, %v7882
    %v7959 = vadd.f32 %v7662, %v7886
    %v7960 = vadd.f32 %v7663, %v7890
    %v7961 = vadd.f32 %v7664, %v7894
    %v7962 = vadd.f32 %v7665, %v7898
    %v7963 = vadd.f32 %v7666, %v7870
    %v7964 = vadd.f32 %v7667, %v7874
    %v7965 = vadd.f32 %v7668, %v7878
    %v7966 = vadd.f32 %v7669, %v7882
    %v7967 = vadd.f32 %v7670, %v7886
    %v7968 = vadd.f32 %v7671, %v7890
    %v7969 = vadd.f32 %v7672, %v7894
    %v7970 = vadd.f32 %v7673, %v7898
    %v7971 = vadd.f32 %v7674, %v7870
    %v7972 = vadd.f32 %v7675, %v7874
    %v7973 = vadd.f32 %v7676, %v7878
    %v7974 = vadd.f32 %v7677, %v7882
    %v7975 = vadd.f32 %v7678, %v7886
    %v7976 = vadd.f32 %v7679, %v7890
    %v7977 = vadd.f32 %v7680, %v7894
    %v7978 = vadd.f32 %v7681, %v7898
    %v7979 = vadd.f32 %v7682, %v7870
    %v7980 = vadd.f32 %v7683, %v7874
    %v7981 = vadd.f32 %v7684, %v7878
    %v7982 = vadd.f32 %v7685, %v7882
    %v7983 = vadd.f32 %v7686, %v7886
    %v7984 = vadd.f32 %v7687, %v7890
    %v7985 = vadd.f32 %v7688, %v7894
    %v7986 = vadd.f32 %v7689, %v7898
    %v7987 = vadd.f32 %v7690, %v7870
    %v7988 = vadd.f32 %v7691, %v7874
    %v7989 = vadd.f32 %v7692, %v7878
    %v7990 = vadd.f32 %v7693, %v7882
    %v7991 = vadd.f32 %v7694, %v7886
    %v7992 = vadd.f32 %v7695, %v7890
    %v7993 = vadd.f32 %v7696, %v7894
    %v7994 = vadd.f32 %v7697, %v7898
    %v7995 = vadd.f32 %v7698, %v7870
    %v7996 = vadd.f32 %v7699, %v7874
    %v7997 = vadd.f32 %v7700, %v7878
    %v7998 = vadd.f32 %v7701, %v7882
    %v7999 = vadd.f32 %v7702, %v7886
    %v8000 = vadd.f32 %v7703, %v7890
    %v8001 = vadd.f32 %v7704, %v7894
    %v8002 = vadd.f32 %v7705, %v7898
    %v8003 = vadd.f32 %v7706, %v7870
    %v8004 = vadd.f32 %v7707, %v7874
    %v8005 = vadd.f32 %v7708, %v7878
    %v8006 = vadd.f32 %v7709, %v7882
    %v8007 = vadd.f32 %v7710, %v7886
    %v8008 = vadd.f32 %v7711, %v7890
    %v8009 = vadd.f32 %v7712, %v7894
    %v8010 = vadd.f32 %v7713, %v7898
    %v8011 = vadd.f32 %v7714, %v7870
    %v8012 = vadd.f32 %v7715, %v7874
    %v8013 = vadd.f32 %v7716, %v7878
    %v8014 = vadd.f32 %v7717, %v7882
    %v8015 = vadd.f32 %v7718, %v7886
    %v8016 = vadd.f32 %v7719, %v7890
    %v8017 = vadd.f32 %v7720, %v7894
    %v8018 = vadd.f32 %v7721, %v7898
    %v8019 = vadd.f32 %v7722, %v7870
    %v8020 = vadd.f32 %v7723, %v7874
    %v8021 = vadd.f32 %v7724, %v7878
    %v8022 = vadd.f32 %v7725, %v7882
    %v8023 = vadd.f32 %v7726, %v7886
    %v8024 = vadd.f32 %v7727, %v7890
    %v8025 = vadd.f32 %v7728, %v7894
    %v8026 = vadd.f32 %v7729, %v7898
    %v8027 = vadd.f32 %v7730, %v7870
    %v8028 = vadd.f32 %v7731, %v7874
    %v8029 = vadd.f32 %v7732, %v7878
    %v8030 = vadd.f32 %v7733, %v7882
    %v8031 = vadd.f32 %v7734, %v7886
    %v8032 = vadd.f32 %v7735, %v7890
    %v8033 = vadd.f32 %v7736, %v7894
    %v8034 = vadd.f32 %v7737, %v7898
    %v8035 = vadd.f32 %v7738, %v7870
    %v8036 = vadd.f32 %v7739, %v7874
    %v8037 = vadd.f32 %v7740, %v7878
    %v8038 = vadd.f32 %v7741, %v7882
    %v8039 = vadd.f32 %v7742, %v7886
    %v8040 = vadd.f32 %v7743, %v7890
    %v8041 = vadd.f32 %v7744, %v7894
    %v8042 = vadd.f32 %v7745, %v7898
    %v8043 = vadd.f32 %v7746, %v7870
    %v8044 = vadd.f32 %v7747, %v7874
    %v8045 = vadd.f32 %v7748, %v7878
    %v8046 = vadd.f32 %v7749, %v7882
    %v8047 = vadd.f32 %v7750, %v7886
    %v8048 = vadd.f32 %v7751, %v7890
    %v8049 = vadd.f32 %v7752, %v7894
    %v8050 = vadd.f32 %v7753, %v7898
    %v8051 = vadd.f32 %v7754, %v7870
    %v8052 = vadd.f32 %v7755, %v7874
    %v8053 = vadd.f32 %v7756, %v7878
    %v8054 = vadd.f32 %v7757, %v7882
    %v8055 = vadd.f32 %v7758, %v7886
    %v8056 = vadd.f32 %v7759, %v7890
    %v8057 = vadd.f32 %v7760, %v7894
    %v8058 = vadd.f32 %v7761, %v7898
    %v8059 = vadd.f32 %v7762, %v7870
    %v8060 = vadd.f32 %v7763, %v7874
    %v8061 = vadd.f32 %v7764, %v7878
    %v8062 = vadd.f32 %v7765, %v7882
    %v8063 = vadd.f32 %v7766, %v7886
    %v8064 = vadd.f32 %v7767, %v7890
    %v8065 = vadd.f32 %v7768, %v7894
    %v8066 = vadd.f32 %v7769, %v7898
    %v8067 = vadd.f32 %v7770, %v7870
    %v8068 = vadd.f32 %v7771, %v7874
    %v8069 = vadd.f32 %v7772, %v7878
    %v8070 = vadd.f32 %v7773, %v7882
    %v8071 = vadd.f32 %v7774, %v7886
    %v8072 = vadd.f32 %v7775, %v7890
    %v8073 = vadd.f32 %v7776, %v7894
    %v8074 = vadd.f32 %v7777, %v7898
    %v8075 = vadd.f32 %v7778, %v7870
    %v8076 = vadd.f32 %v7779, %v7874
    %v8077 = vadd.f32 %v7780, %v7878
    %v8078 = vadd.f32 %v7781, %v7882
    %v8079 = vadd.f32 %v7782, %v7886
    %v8080 = vadd.f32 %v7783, %v7890
    %v8081 = vadd.f32 %v7784, %v7894
    %v8082 = vadd.f32 %v7785, %v7898
    %v8083 = vadd.f32 %v7786, %v7870
    %v8084 = vadd.f32 %v7787, %v7874
    %v8085 = vadd.f32 %v7788, %v7878
    %v8086 = vadd.f32 %v7789, %v7882
    %v8087 = vadd.f32 %v7790, %v7886
    %v8088 = vadd.f32 %v7791, %v7890
    %v8089 = vadd.f32 %v7792, %v7894
    %v8090 = vadd.f32 %v7793, %v7898
    %v8091 = vadd.f32 %v7794, %v7870
    %v8092 = vadd.f32 %v7795, %v7874
    %v8093 = vadd.f32 %v7796, %v7878
    %v8094 = vadd.f32 %v7797, %v7882
    %v8095 = vadd.f32 %v7798, %v7886
    %v8096 = vadd.f32 %v7799, %v7890
    %v8097 = vadd.f32 %v7800, %v7894
    %v8098 = vadd.f32 %v7801, %v7898
    %v8099 = vadd.f32 %v7802, %v7870
    %v8100 = vadd.f32 %v7803, %v7874
    %v8101 = vadd.f32 %v7804, %v7878
    %v8102 = vadd.f32 %v7805, %v7882
    %v8103 = vadd.f32 %v7806, %v7886
    %v8104 = vadd.f32 %v7807, %v7890
    %v8105 = vadd.f32 %v7808, %v7894
    %v8106 = vadd.f32 %v7809, %v7898
    %v8107 = vadd.f32 %v7810, %v7870
    %v8108 = vadd.f32 %v7811, %v7874
    %v8109 = vadd.f32 %v7812, %v7878
    %v8110 = vadd.f32 %v7813, %v7882
    %v8111 = vadd.f32 %v7814, %v7886
    %v8112 = vadd.f32 %v7815, %v7890
    %v8113 = vadd.f32 %v7816, %v7894
    %v8114 = vadd.f32 %v7817, %v7898
    %v8115 = vadd.f32 %v7818, %v7870
    %v8116 = vadd.f32 %v7819, %v7874
    %v8117 = vadd.f32 %v7820, %v7878
    %v8118 = vadd.f32 %v7821, %v7882
    %v8119 = vadd.f32 %v7822, %v7886
    %v8120 = vadd.f32 %v7823, %v7890
    %v8121 = vadd.f32 %v7824, %v7894
    %v8122 = vadd.f32 %v7825, %v7898
    %v8123 = vadd.f32 %v7826, %v7870
    %v8124 = vadd.f32 %v7827, %v7874
    %v8125 = vadd.f32 %v7828, %v7878
    %v8126 = vadd.f32 %v7829, %v7882
    %v8127 = vadd.f32 %v7830, %v7886
    %v8128 = vadd.f32 %v7831, %v7890
    %v8129 = vadd.f32 %v7832, %v7894
    %v8130 = vadd.f32 %v7833, %v7898
    %v8131 = vadd.f32 %v7834, %v7870
    %v8132 = vadd.f32 %v7835, %v7874
    %v8133 = vadd.f32 %v7836, %v7878
    %v8134 = vadd.f32 %v7837, %v7882
    %v8135 = vadd.f32 %v7838, %v7886
    %v8136 = vadd.f32 %v7839, %v7890
    %v8137 = vadd.f32 %v7840, %v7894
    %v8138 = vadd.f32 %v7841, %v7898
    %v8139 = vadd.f32 %v7842, %v7870
    %v8140 = vadd.f32 %v7843, %v7874
    %v8141 = vadd.f32 %v7844, %v7878
    %v8142 = vadd.f32 %v7845, %v7882
    %v8143 = vadd.f32 %v7846, %v7886
    %v8144 = vadd.f32 %v7847, %v7890
    %v8145 = vadd.f32 %v7848, %v7894
    %v8146 = vadd.f32 %v7849, %v7898
    %v8147 = vadd.f32 %v7850, %v7870
    %v8148 = vadd.f32 %v7851, %v7874
    %v8149 = vadd.f32 %v7852, %v7878
    %v8150 = vadd.f32 %v7853, %v7882
    %v8151 = vadd.f32 %v7854, %v7886
    %v8152 = vadd.f32 %v7855, %v7890
    %v8153 = vadd.f32 %v7856, %v7894
    %v8154 = vadd.f32 %v7857, %v7898
    %v8155 = vadd.f32 %v7858, %v7870
    %v8156 = vadd.f32 %v7859, %v7874
    %v8157 = vadd.f32 %v7860, %v7878
    %v8158 = vadd.f32 %v7861, %v7882
    %v8159 = vadd.f32 %v7862, %v7886
    %v8160 = vadd.f32 %v7863, %v7890
    %v8161 = vadd.f32 %v7864, %v7894
    %v8162 = vadd.f32 %v7865, %v7898
    %vm8163 = vcmp.gt.f32.partialorder %v7907, 0.0
    %vm8164 = vcmp.gt.f32.partialorder %v7908, 0.0
    %vm8165 = vcmp.gt.f32.partialorder %v7909, 0.0
    %vm8166 = vcmp.gt.f32.partialorder %v7910, 0.0
    %vm8167 = vcmp.gt.f32.partialorder %v7911, 0.0
    %vm8168 = vcmp.gt.f32.partialorder %v7912, 0.0
    %vm8169 = vcmp.gt.f32.partialorder %v7913, 0.0
    %vm8170 = vcmp.gt.f32.partialorder %v7914, 0.0
    %vm8171 = vcmp.gt.f32.partialorder %v7915, 0.0
    %vm8172 = vcmp.gt.f32.partialorder %v7916, 0.0
    %vm8173 = vcmp.gt.f32.partialorder %v7917, 0.0
    %vm8174 = vcmp.gt.f32.partialorder %v7918, 0.0
    %vm8175 = vcmp.gt.f32.partialorder %v7919, 0.0
    %vm8176 = vcmp.gt.f32.partialorder %v7920, 0.0
    %vm8177 = vcmp.gt.f32.partialorder %v7921, 0.0
    %vm8178 = vcmp.gt.f32.partialorder %v7922, 0.0
    %vm8179 = vcmp.gt.f32.partialorder %v7923, 0.0
    %vm8180 = vcmp.gt.f32.partialorder %v7924, 0.0
    %vm8181 = vcmp.gt.f32.partialorder %v7925, 0.0
    %vm8182 = vcmp.gt.f32.partialorder %v7926, 0.0
    %vm8183 = vcmp.gt.f32.partialorder %v7927, 0.0
    %vm8184 = vcmp.gt.f32.partialorder %v7928, 0.0
    %vm8185 = vcmp.gt.f32.partialorder %v7929, 0.0
    %vm8186 = vcmp.gt.f32.partialorder %v7930, 0.0
    %vm8187 = vcmp.gt.f32.partialorder %v7931, 0.0
    %vm8188 = vcmp.gt.f32.partialorder %v7932, 0.0
    %vm8189 = vcmp.gt.f32.partialorder %v7933, 0.0
    %vm8190 = vcmp.gt.f32.partialorder %v7934, 0.0
    %vm8191 = vcmp.gt.f32.partialorder %v7935, 0.0
    %vm8192 = vcmp.gt.f32.partialorder %v7936, 0.0
    %vm8193 = vcmp.gt.f32.partialorder %v7937, 0.0
    %vm8194 = vcmp.gt.f32.partialorder %v7938, 0.0
    %vm8195 = vcmp.gt.f32.partialorder %v7939, 0.0
    %vm8196 = vcmp.gt.f32.partialorder %v7940, 0.0
    %vm8197 = vcmp.gt.f32.partialorder %v7941, 0.0
    %vm8198 = vcmp.gt.f32.partialorder %v7942, 0.0
    %vm8199 = vcmp.gt.f32.partialorder %v7943, 0.0
    %vm8200 = vcmp.gt.f32.partialorder %v7944, 0.0
    %vm8201 = vcmp.gt.f32.partialorder %v7945, 0.0
    %vm8202 = vcmp.gt.f32.partialorder %v7946, 0.0
    %vm8203 = vcmp.gt.f32.partialorder %v7947, 0.0
    %vm8204 = vcmp.gt.f32.partialorder %v7948, 0.0
    %vm8205 = vcmp.gt.f32.partialorder %v7949, 0.0
    %vm8206 = vcmp.gt.f32.partialorder %v7950, 0.0
    %vm8207 = vcmp.gt.f32.partialorder %v7951, 0.0
    %vm8208 = vcmp.gt.f32.partialorder %v7952, 0.0
    %vm8209 = vcmp.gt.f32.partialorder %v7953, 0.0
    %vm8210 = vcmp.gt.f32.partialorder %v7954, 0.0
    %vm8211 = vcmp.gt.f32.partialorder %v7955, 0.0
    %vm8212 = vcmp.gt.f32.partialorder %v7956, 0.0
    %vm8213 = vcmp.gt.f32.partialorder %v7957, 0.0
    %vm8214 = vcmp.gt.f32.partialorder %v7958, 0.0
    %vm8215 = vcmp.gt.f32.partialorder %v7959, 0.0
    %vm8216 = vcmp.gt.f32.partialorder %v7960, 0.0
    %vm8217 = vcmp.gt.f32.partialorder %v7961, 0.0
    %vm8218 = vcmp.gt.f32.partialorder %v7962, 0.0
    %vm8219 = vcmp.gt.f32.partialorder %v7963, 0.0
    %vm8220 = vcmp.gt.f32.partialorder %v7964, 0.0
    %vm8221 = vcmp.gt.f32.partialorder %v7965, 0.0
    %vm8222 = vcmp.gt.f32.partialorder %v7966, 0.0
    %vm8223 = vcmp.gt.f32.partialorder %v7967, 0.0
    %vm8224 = vcmp.gt.f32.partialorder %v7968, 0.0
    %vm8225 = vcmp.gt.f32.partialorder %v7969, 0.0
    %vm8226 = vcmp.gt.f32.partialorder %v7970, 0.0
    %vm8227 = vcmp.gt.f32.partialorder %v7971, 0.0
    %vm8228 = vcmp.gt.f32.partialorder %v7972, 0.0
    %vm8229 = vcmp.gt.f32.partialorder %v7973, 0.0
    %vm8230 = vcmp.gt.f32.partialorder %v7974, 0.0
    %vm8231 = vcmp.gt.f32.partialorder %v7975, 0.0
    %vm8232 = vcmp.gt.f32.partialorder %v7976, 0.0
    %vm8233 = vcmp.gt.f32.partialorder %v7977, 0.0
    %vm8234 = vcmp.gt.f32.partialorder %v7978, 0.0
    %vm8235 = vcmp.gt.f32.partialorder %v7979, 0.0
    %vm8236 = vcmp.gt.f32.partialorder %v7980, 0.0
    %vm8237 = vcmp.gt.f32.partialorder %v7981, 0.0
    %vm8238 = vcmp.gt.f32.partialorder %v7982, 0.0
    %vm8239 = vcmp.gt.f32.partialorder %v7983, 0.0
    %vm8240 = vcmp.gt.f32.partialorder %v7984, 0.0
    %vm8241 = vcmp.gt.f32.partialorder %v7985, 0.0
    %vm8242 = vcmp.gt.f32.partialorder %v7986, 0.0
    %vm8243 = vcmp.gt.f32.partialorder %v7987, 0.0
    %vm8244 = vcmp.gt.f32.partialorder %v7988, 0.0
    %vm8245 = vcmp.gt.f32.partialorder %v7989, 0.0
    %vm8246 = vcmp.gt.f32.partialorder %v7990, 0.0
    %vm8247 = vcmp.gt.f32.partialorder %v7991, 0.0
    %vm8248 = vcmp.gt.f32.partialorder %v7992, 0.0
    %vm8249 = vcmp.gt.f32.partialorder %v7993, 0.0
    %vm8250 = vcmp.gt.f32.partialorder %v7994, 0.0
    %vm8251 = vcmp.gt.f32.partialorder %v7995, 0.0
    %vm8252 = vcmp.gt.f32.partialorder %v7996, 0.0
    %vm8253 = vcmp.gt.f32.partialorder %v7997, 0.0
    %vm8254 = vcmp.gt.f32.partialorder %v7998, 0.0
    %vm8255 = vcmp.gt.f32.partialorder %v7999, 0.0
    %vm8256 = vcmp.gt.f32.partialorder %v8000, 0.0
    %vm8257 = vcmp.gt.f32.partialorder %v8001, 0.0
    %vm8258 = vcmp.gt.f32.partialorder %v8002, 0.0
    %vm8259 = vcmp.gt.f32.partialorder %v8003, 0.0
    %vm8260 = vcmp.gt.f32.partialorder %v8004, 0.0
    %vm8261 = vcmp.gt.f32.partialorder %v8005, 0.0
    %vm8262 = vcmp.gt.f32.partialorder %v8006, 0.0
    %vm8263 = vcmp.gt.f32.partialorder %v8007, 0.0
    %vm8264 = vcmp.gt.f32.partialorder %v8008, 0.0
    %vm8265 = vcmp.gt.f32.partialorder %v8009, 0.0
    %vm8266 = vcmp.gt.f32.partialorder %v8010, 0.0
    %vm8267 = vcmp.gt.f32.partialorder %v8011, 0.0
    %vm8268 = vcmp.gt.f32.partialorder %v8012, 0.0
    %vm8269 = vcmp.gt.f32.partialorder %v8013, 0.0
    %vm8270 = vcmp.gt.f32.partialorder %v8014, 0.0
    %vm8271 = vcmp.gt.f32.partialorder %v8015, 0.0
    %vm8272 = vcmp.gt.f32.partialorder %v8016, 0.0
    %vm8273 = vcmp.gt.f32.partialorder %v8017, 0.0
    %vm8274 = vcmp.gt.f32.partialorder %v8018, 0.0
    %vm8275 = vcmp.gt.f32.partialorder %v8019, 0.0
    %vm8276 = vcmp.gt.f32.partialorder %v8020, 0.0
    %vm8277 = vcmp.gt.f32.partialorder %v8021, 0.0
    %vm8278 = vcmp.gt.f32.partialorder %v8022, 0.0
    %vm8279 = vcmp.gt.f32.partialorder %v8023, 0.0
    %vm8280 = vcmp.gt.f32.partialorder %v8024, 0.0
    %vm8281 = vcmp.gt.f32.partialorder %v8025, 0.0
    %vm8282 = vcmp.gt.f32.partialorder %v8026, 0.0
    %vm8283 = vcmp.gt.f32.partialorder %v8027, 0.0
    %vm8284 = vcmp.gt.f32.partialorder %v8028, 0.0
    %vm8285 = vcmp.gt.f32.partialorder %v8029, 0.0
    %vm8286 = vcmp.gt.f32.partialorder %v8030, 0.0
    %vm8287 = vcmp.gt.f32.partialorder %v8031, 0.0
    %vm8288 = vcmp.gt.f32.partialorder %v8032, 0.0
    %vm8289 = vcmp.gt.f32.partialorder %v8033, 0.0
    %vm8290 = vcmp.gt.f32.partialorder %v8034, 0.0
    %vm8291 = vcmp.gt.f32.partialorder %v8035, 0.0
    %vm8292 = vcmp.gt.f32.partialorder %v8036, 0.0
    %vm8293 = vcmp.gt.f32.partialorder %v8037, 0.0
    %vm8294 = vcmp.gt.f32.partialorder %v8038, 0.0
    %vm8295 = vcmp.gt.f32.partialorder %v8039, 0.0
    %vm8296 = vcmp.gt.f32.partialorder %v8040, 0.0
    %vm8297 = vcmp.gt.f32.partialorder %v8041, 0.0
    %vm8298 = vcmp.gt.f32.partialorder %v8042, 0.0
    %vm8299 = vcmp.gt.f32.partialorder %v8043, 0.0
    %vm8300 = vcmp.gt.f32.partialorder %v8044, 0.0
    %vm8301 = vcmp.gt.f32.partialorder %v8045, 0.0
    %vm8302 = vcmp.gt.f32.partialorder %v8046, 0.0
    %vm8303 = vcmp.gt.f32.partialorder %v8047, 0.0
    %vm8304 = vcmp.gt.f32.partialorder %v8048, 0.0
    %vm8305 = vcmp.gt.f32.partialorder %v8049, 0.0
    %vm8306 = vcmp.gt.f32.partialorder %v8050, 0.0
    %vm8307 = vcmp.gt.f32.partialorder %v8051, 0.0
    %vm8308 = vcmp.gt.f32.partialorder %v8052, 0.0
    %vm8309 = vcmp.gt.f32.partialorder %v8053, 0.0
    %vm8310 = vcmp.gt.f32.partialorder %v8054, 0.0
    %vm8311 = vcmp.gt.f32.partialorder %v8055, 0.0
    %vm8312 = vcmp.gt.f32.partialorder %v8056, 0.0
    %vm8313 = vcmp.gt.f32.partialorder %v8057, 0.0
    %vm8314 = vcmp.gt.f32.partialorder %v8058, 0.0
    %vm8315 = vcmp.gt.f32.partialorder %v8059, 0.0
    %vm8316 = vcmp.gt.f32.partialorder %v8060, 0.0
    %vm8317 = vcmp.gt.f32.partialorder %v8061, 0.0
    %vm8318 = vcmp.gt.f32.partialorder %v8062, 0.0
    %vm8319 = vcmp.gt.f32.partialorder %v8063, 0.0
    %vm8320 = vcmp.gt.f32.partialorder %v8064, 0.0
    %vm8321 = vcmp.gt.f32.partialorder %v8065, 0.0
    %vm8322 = vcmp.gt.f32.partialorder %v8066, 0.0
    %vm8323 = vcmp.gt.f32.partialorder %v8067, 0.0
    %vm8324 = vcmp.gt.f32.partialorder %v8068, 0.0
    %vm8325 = vcmp.gt.f32.partialorder %v8069, 0.0
    %vm8326 = vcmp.gt.f32.partialorder %v8070, 0.0
    %vm8327 = vcmp.gt.f32.partialorder %v8071, 0.0
    %vm8328 = vcmp.gt.f32.partialorder %v8072, 0.0
    %vm8329 = vcmp.gt.f32.partialorder %v8073, 0.0
    %vm8330 = vcmp.gt.f32.partialorder %v8074, 0.0
    %vm8331 = vcmp.gt.f32.partialorder %v8075, 0.0
    %vm8332 = vcmp.gt.f32.partialorder %v8076, 0.0
    %vm8333 = vcmp.gt.f32.partialorder %v8077, 0.0
    %vm8334 = vcmp.gt.f32.partialorder %v8078, 0.0
    %vm8335 = vcmp.gt.f32.partialorder %v8079, 0.0
    %vm8336 = vcmp.gt.f32.partialorder %v8080, 0.0
    %vm8337 = vcmp.gt.f32.partialorder %v8081, 0.0
    %vm8338 = vcmp.gt.f32.partialorder %v8082, 0.0
    %vm8339 = vcmp.gt.f32.partialorder %v8083, 0.0
    %vm8340 = vcmp.gt.f32.partialorder %v8084, 0.0
    %vm8341 = vcmp.gt.f32.partialorder %v8085, 0.0
    %vm8342 = vcmp.gt.f32.partialorder %v8086, 0.0
    %vm8343 = vcmp.gt.f32.partialorder %v8087, 0.0
    %vm8344 = vcmp.gt.f32.partialorder %v8088, 0.0
    %vm8345 = vcmp.gt.f32.partialorder %v8089, 0.0
    %vm8346 = vcmp.gt.f32.partialorder %v8090, 0.0
    %vm8347 = vcmp.gt.f32.partialorder %v8091, 0.0
    %vm8348 = vcmp.gt.f32.partialorder %v8092, 0.0
    %vm8349 = vcmp.gt.f32.partialorder %v8093, 0.0
    %vm8350 = vcmp.gt.f32.partialorder %v8094, 0.0
    %vm8351 = vcmp.gt.f32.partialorder %v8095, 0.0
    %vm8352 = vcmp.gt.f32.partialorder %v8096, 0.0
    %vm8353 = vcmp.gt.f32.partialorder %v8097, 0.0
    %vm8354 = vcmp.gt.f32.partialorder %v8098, 0.0
    %vm8355 = vcmp.gt.f32.partialorder %v8099, 0.0
    %vm8356 = vcmp.gt.f32.partialorder %v8100, 0.0
    %vm8357 = vcmp.gt.f32.partialorder %v8101, 0.0
    %vm8358 = vcmp.gt.f32.partialorder %v8102, 0.0
    %vm8359 = vcmp.gt.f32.partialorder %v8103, 0.0
    %vm8360 = vcmp.gt.f32.partialorder %v8104, 0.0
    %vm8361 = vcmp.gt.f32.partialorder %v8105, 0.0
    %vm8362 = vcmp.gt.f32.partialorder %v8106, 0.0
    %vm8363 = vcmp.gt.f32.partialorder %v8107, 0.0
    %vm8364 = vcmp.gt.f32.partialorder %v8108, 0.0
    %vm8365 = vcmp.gt.f32.partialorder %v8109, 0.0
    %vm8366 = vcmp.gt.f32.partialorder %v8110, 0.0
    %vm8367 = vcmp.gt.f32.partialorder %v8111, 0.0
    %vm8368 = vcmp.gt.f32.partialorder %v8112, 0.0
    %vm8369 = vcmp.gt.f32.partialorder %v8113, 0.0
    %vm8370 = vcmp.gt.f32.partialorder %v8114, 0.0
    %vm8371 = vcmp.gt.f32.partialorder %v8115, 0.0
    %vm8372 = vcmp.gt.f32.partialorder %v8116, 0.0
    %vm8373 = vcmp.gt.f32.partialorder %v8117, 0.0
    %vm8374 = vcmp.gt.f32.partialorder %v8118, 0.0
    %vm8375 = vcmp.gt.f32.partialorder %v8119, 0.0
    %vm8376 = vcmp.gt.f32.partialorder %v8120, 0.0
    %vm8377 = vcmp.gt.f32.partialorder %v8121, 0.0
    %vm8378 = vcmp.gt.f32.partialorder %v8122, 0.0
    %vm8379 = vcmp.gt.f32.partialorder %v8123, 0.0
    %vm8380 = vcmp.gt.f32.partialorder %v8124, 0.0
    %vm8381 = vcmp.gt.f32.partialorder %v8125, 0.0
    %vm8382 = vcmp.gt.f32.partialorder %v8126, 0.0
    %vm8383 = vcmp.gt.f32.partialorder %v8127, 0.0
    %vm8384 = vcmp.gt.f32.partialorder %v8128, 0.0
    %vm8385 = vcmp.gt.f32.partialorder %v8129, 0.0
    %vm8386 = vcmp.gt.f32.partialorder %v8130, 0.0
    %vm8387 = vcmp.gt.f32.partialorder %v8131, 0.0
    %vm8388 = vcmp.gt.f32.partialorder %v8132, 0.0
    %vm8389 = vcmp.gt.f32.partialorder %v8133, 0.0
    %vm8390 = vcmp.gt.f32.partialorder %v8134, 0.0
    %vm8391 = vcmp.gt.f32.partialorder %v8135, 0.0
    %vm8392 = vcmp.gt.f32.partialorder %v8136, 0.0
    %vm8393 = vcmp.gt.f32.partialorder %v8137, 0.0
    %vm8394 = vcmp.gt.f32.partialorder %v8138, 0.0
    %vm8395 = vcmp.gt.f32.partialorder %v8139, 0.0
    %vm8396 = vcmp.gt.f32.partialorder %v8140, 0.0
    %vm8397 = vcmp.gt.f32.partialorder %v8141, 0.0
    %vm8398 = vcmp.gt.f32.partialorder %v8142, 0.0
    %vm8399 = vcmp.gt.f32.partialorder %v8143, 0.0
    %vm8400 = vcmp.gt.f32.partialorder %v8144, 0.0
    %vm8401 = vcmp.gt.f32.partialorder %v8145, 0.0
    %vm8402 = vcmp.gt.f32.partialorder %v8146, 0.0
    %vm8403 = vcmp.gt.f32.partialorder %v8147, 0.0
    %vm8404 = vcmp.gt.f32.partialorder %v8148, 0.0
    %vm8405 = vcmp.gt.f32.partialorder %v8149, 0.0
    %vm8406 = vcmp.gt.f32.partialorder %v8150, 0.0
    %vm8407 = vcmp.gt.f32.partialorder %v8151, 0.0
    %vm8408 = vcmp.gt.f32.partialorder %v8152, 0.0
    %vm8409 = vcmp.gt.f32.partialorder %v8153, 0.0
    %vm8410 = vcmp.gt.f32.partialorder %v8154, 0.0
    %vm8411 = vcmp.gt.f32.partialorder %v8155, 0.0
    %vm8412 = vcmp.gt.f32.partialorder %v8156, 0.0
    %vm8413 = vcmp.gt.f32.partialorder %v8157, 0.0
    %vm8414 = vcmp.gt.f32.partialorder %v8158, 0.0
    %vm8415 = vcmp.gt.f32.partialorder %v8159, 0.0
    %vm8416 = vcmp.gt.f32.partialorder %v8160, 0.0
    %vm8417 = vcmp.gt.f32.partialorder %v8161, 0.0
    %vm8418 = vcmp.gt.f32.partialorder %v8162, 0.0
    %v8419 = vmul.f32 %v7907, 0.2
    %v8420 = vmul.f32 %v7908, 0.2
    %v8421 = vmul.f32 %v7909, 0.2
    %v8422 = vmul.f32 %v7910, 0.2
    %v8423 = vmul.f32 %v7911, 0.2
    %v8424 = vmul.f32 %v7912, 0.2
    %v8425 = vmul.f32 %v7913, 0.2
    %v8426 = vmul.f32 %v7914, 0.2
    %v8427 = vmul.f32 %v7915, 0.2
    %v8428 = vmul.f32 %v7916, 0.2
    %v8429 = vmul.f32 %v7917, 0.2
    %v8430 = vmul.f32 %v7918, 0.2
    %v8431 = vmul.f32 %v7919, 0.2
    %v8432 = vmul.f32 %v7920, 0.2
    %v8433 = vmul.f32 %v7921, 0.2
    %v8434 = vmul.f32 %v7922, 0.2
    %v8435 = vmul.f32 %v7923, 0.2
    %v8436 = vmul.f32 %v7924, 0.2
    %v8437 = vmul.f32 %v7925, 0.2
    %v8438 = vmul.f32 %v7926, 0.2
    %v8439 = vmul.f32 %v7927, 0.2
    %v8440 = vmul.f32 %v7928, 0.2
    %v8441 = vmul.f32 %v7929, 0.2
    %v8442 = vmul.f32 %v7930, 0.2
    %v8443 = vmul.f32 %v7931, 0.2
    %v8444 = vmul.f32 %v7932, 0.2
    %v8445 = vmul.f32 %v7933, 0.2
    %v8446 = vmul.f32 %v7934, 0.2
    %v8447 = vmul.f32 %v7935, 0.2
    %v8448 = vmul.f32 %v7936, 0.2
    %v8449 = vmul.f32 %v7937, 0.2
    %v8450 = vmul.f32 %v7938, 0.2
    %v8451 = vmul.f32 %v7939, 0.2
    %v8452 = vmul.f32 %v7940, 0.2
    %v8453 = vmul.f32 %v7941, 0.2
    %v8454 = vmul.f32 %v7942, 0.2
    %v8455 = vmul.f32 %v7943, 0.2
    %v8456 = vmul.f32 %v7944, 0.2
    %v8457 = vmul.f32 %v7945, 0.2
    %v8458 = vmul.f32 %v7946, 0.2
    %v8459 = vmul.f32 %v7947, 0.2
    %v8460 = vmul.f32 %v7948, 0.2
    %v8461 = vmul.f32 %v7949, 0.2
    %v8462 = vmul.f32 %v7950, 0.2
    %v8463 = vmul.f32 %v7951, 0.2
    %v8464 = vmul.f32 %v7952, 0.2
    %v8465 = vmul.f32 %v7953, 0.2
    %v8466 = vmul.f32 %v7954, 0.2
    %v8467 = vmul.f32 %v7955, 0.2
    %v8468 = vmul.f32 %v7956, 0.2
    %v8469 = vmul.f32 %v7957, 0.2
    %v8470 = vmul.f32 %v7958, 0.2
    %v8471 = vmul.f32 %v7959, 0.2
    %v8472 = vmul.f32 %v7960, 0.2
    %v8473 = vmul.f32 %v7961, 0.2
    %v8474 = vmul.f32 %v7962, 0.2
    %v8475 = vmul.f32 %v7963, 0.2
    %v8476 = vmul.f32 %v7964, 0.2
    %v8477 = vmul.f32 %v7965, 0.2
    %v8478 = vmul.f32 %v7966, 0.2
    %v8479 = vmul.f32 %v7967, 0.2
    %v8480 = vmul.f32 %v7968, 0.2
    %v8481 = vmul.f32 %v7969, 0.2
    %v8482 = vmul.f32 %v7970, 0.2
    %v8483 = vmul.f32 %v7971, 0.2
    %v8484 = vmul.f32 %v7972, 0.2
    %v8485 = vmul.f32 %v7973, 0.2
    %v8486 = vmul.f32 %v7974, 0.2
    %v8487 = vmul.f32 %v7975, 0.2
    %v8488 = vmul.f32 %v7976, 0.2
    %v8489 = vmul.f32 %v7977, 0.2
    %v8490 = vmul.f32 %v7978, 0.2
    %v8491 = vmul.f32 %v7979, 0.2
    %v8492 = vmul.f32 %v7980, 0.2
    %v8493 = vmul.f32 %v7981, 0.2
    %v8494 = vmul.f32 %v7982, 0.2
    %v8495 = vmul.f32 %v7983, 0.2
    %v8496 = vmul.f32 %v7984, 0.2
    %v8497 = vmul.f32 %v7985, 0.2
    %v8498 = vmul.f32 %v7986, 0.2
    %v8499 = vmul.f32 %v7987, 0.2
    %v8500 = vmul.f32 %v7988, 0.2
    %v8501 = vmul.f32 %v7989, 0.2
    %v8502 = vmul.f32 %v7990, 0.2
    %v8503 = vmul.f32 %v7991, 0.2
    %v8504 = vmul.f32 %v7992, 0.2
    %v8505 = vmul.f32 %v7993, 0.2
    %v8506 = vmul.f32 %v7994, 0.2
    %v8507 = vmul.f32 %v7995, 0.2
    %v8508 = vmul.f32 %v7996, 0.2
    %v8509 = vmul.f32 %v7997, 0.2
    %v8510 = vmul.f32 %v7998, 0.2
    %v8511 = vmul.f32 %v7999, 0.2
    %v8512 = vmul.f32 %v8000, 0.2
    %v8513 = vmul.f32 %v8001, 0.2
    %v8514 = vmul.f32 %v8002, 0.2
    %v8515 = vmul.f32 %v8003, 0.2
    %v8516 = vmul.f32 %v8004, 0.2
    %v8517 = vmul.f32 %v8005, 0.2
    %v8518 = vmul.f32 %v8006, 0.2
    %v8519 = vmul.f32 %v8007, 0.2
    %v8520 = vmul.f32 %v8008, 0.2
    %v8521 = vmul.f32 %v8009, 0.2
    %v8522 = vmul.f32 %v8010, 0.2
    %v8523 = vmul.f32 %v8011, 0.2
    %v8524 = vmul.f32 %v8012, 0.2
    %v8525 = vmul.f32 %v8013, 0.2
    %v8526 = vmul.f32 %v8014, 0.2
    %v8527 = vmul.f32 %v8015, 0.2
    %v8528 = vmul.f32 %v8016, 0.2
    %v8529 = vmul.f32 %v8017, 0.2
    %v8530 = vmul.f32 %v8018, 0.2
    %v8531 = vmul.f32 %v8019, 0.2
    %v8532 = vmul.f32 %v8020, 0.2
    %v8533 = vmul.f32 %v8021, 0.2
    %v8534 = vmul.f32 %v8022, 0.2
    %v8535 = vmul.f32 %v8023, 0.2
    %v8536 = vmul.f32 %v8024, 0.2
    %v8537 = vmul.f32 %v8025, 0.2
    %v8538 = vmul.f32 %v8026, 0.2
    %v8539 = vmul.f32 %v8027, 0.2
    %v8540 = vmul.f32 %v8028, 0.2
    %v8541 = vmul.f32 %v8029, 0.2
    %v8542 = vmul.f32 %v8030, 0.2
    %v8543 = vmul.f32 %v8031, 0.2
    %v8544 = vmul.f32 %v8032, 0.2
    %v8545 = vmul.f32 %v8033, 0.2
    %v8546 = vmul.f32 %v8034, 0.2
    %v8547 = vmul.f32 %v8035, 0.2
    %v8548 = vmul.f32 %v8036, 0.2
    %v8549 = vmul.f32 %v8037, 0.2
    %v8550 = vmul.f32 %v8038, 0.2
    %v8551 = vmul.f32 %v8039, 0.2
    %v8552 = vmul.f32 %v8040, 0.2
    %v8553 = vmul.f32 %v8041, 0.2
    %v8554 = vmul.f32 %v8042, 0.2
    %v8555 = vmul.f32 %v8043, 0.2
    %v8556 = vmul.f32 %v8044, 0.2
    %v8557 = vmul.f32 %v8045, 0.2
    %v8558 = vmul.f32 %v8046, 0.2
    %v8559 = vmul.f32 %v8047, 0.2
    %v8560 = vmul.f32 %v8048, 0.2
    %v8561 = vmul.f32 %v8049, 0.2
    %v8562 = vmul.f32 %v8050, 0.2
    %v8563 = vmul.f32 %v8051, 0.2
    %v8564 = vmul.f32 %v8052, 0.2
    %v8565 = vmul.f32 %v8053, 0.2
    %v8566 = vmul.f32 %v8054, 0.2
    %v8567 = vmul.f32 %v8055, 0.2
    %v8568 = vmul.f32 %v8056, 0.2
    %v8569 = vmul.f32 %v8057, 0.2
    %v8570 = vmul.f32 %v8058, 0.2
    %v8571 = vmul.f32 %v8059, 0.2
    %v8572 = vmul.f32 %v8060, 0.2
    %v8573 = vmul.f32 %v8061, 0.2
    %v8574 = vmul.f32 %v8062, 0.2
    %v8575 = vmul.f32 %v8063, 0.2
    %v8576 = vmul.f32 %v8064, 0.2
    %v8577 = vmul.f32 %v8065, 0.2
    %v8578 = vmul.f32 %v8066, 0.2
    %v8579 = vmul.f32 %v8067, 0.2
    %v8580 = vmul.f32 %v8068, 0.2
    %v8581 = vmul.f32 %v8069, 0.2
    %v8582 = vmul.f32 %v8070, 0.2
    %v8583 = vmul.f32 %v8071, 0.2
    %v8584 = vmul.f32 %v8072, 0.2
    %v8585 = vmul.f32 %v8073, 0.2
    %v8586 = vmul.f32 %v8074, 0.2
    %v8587 = vmul.f32 %v8075, 0.2
    %v8588 = vmul.f32 %v8076, 0.2
    %v8589 = vmul.f32 %v8077, 0.2
    %v8590 = vmul.f32 %v8078, 0.2
    %v8591 = vmul.f32 %v8079, 0.2
    %v8592 = vmul.f32 %v8080, 0.2
    %v8593 = vmul.f32 %v8081, 0.2
    %v8594 = vmul.f32 %v8082, 0.2
    %v8595 = vmul.f32 %v8083, 0.2
    %v8596 = vmul.f32 %v8084, 0.2
    %v8597 = vmul.f32 %v8085, 0.2
    %v8598 = vmul.f32 %v8086, 0.2
    %v8599 = vmul.f32 %v8087, 0.2
    %v8600 = vmul.f32 %v8088, 0.2
    %v8601 = vmul.f32 %v8089, 0.2
    %v8602 = vmul.f32 %v8090, 0.2
    %v8603 = vmul.f32 %v8091, 0.2
    %v8604 = vmul.f32 %v8092, 0.2
    %v8605 = vmul.f32 %v8093, 0.2
    %v8606 = vmul.f32 %v8094, 0.2
    %v8607 = vmul.f32 %v8095, 0.2
    %v8608 = vmul.f32 %v8096, 0.2
    %v8609 = vmul.f32 %v8097, 0.2
    %v8610 = vmul.f32 %v8098, 0.2
    %v8611 = vmul.f32 %v8099, 0.2
    %v8612 = vmul.f32 %v8100, 0.2
    %v8613 = vmul.f32 %v8101, 0.2
    %v8614 = vmul.f32 %v8102, 0.2
    %v8615 = vmul.f32 %v8103, 0.2
    %v8616 = vmul.f32 %v8104, 0.2
    %v8617 = vmul.f32 %v8105, 0.2
    %v8618 = vmul.f32 %v8106, 0.2
    %v8619 = vmul.f32 %v8107, 0.2
    %v8620 = vmul.f32 %v8108, 0.2
    %v8621 = vmul.f32 %v8109, 0.2
    %v8622 = vmul.f32 %v8110, 0.2
    %v8623 = vmul.f32 %v8111, 0.2
    %v8624 = vmul.f32 %v8112, 0.2
    %v8625 = vmul.f32 %v8113, 0.2
    %v8626 = vmul.f32 %v8114, 0.2
    %v8627 = vmul.f32 %v8115, 0.2
    %v8628 = vmul.f32 %v8116, 0.2
    %v8629 = vmul.f32 %v8117, 0.2
    %v8630 = vmul.f32 %v8118, 0.2
    %v8631 = vmul.f32 %v8119, 0.2
    %v8632 = vmul.f32 %v8120, 0.2
    %v8633 = vmul.f32 %v8121, 0.2
    %v8634 = vmul.f32 %v8122, 0.2
    %v8635 = vmul.f32 %v8123, 0.2
    %v8636 = vmul.f32 %v8124, 0.2
    %v8637 = vmul.f32 %v8125, 0.2
    %v8638 = vmul.f32 %v8126, 0.2
    %v8639 = vmul.f32 %v8127, 0.2
    %v8640 = vmul.f32 %v8128, 0.2
    %v8641 = vmul.f32 %v8129, 0.2
    %v8642 = vmul.f32 %v8130, 0.2
    %v8643 = vmul.f32 %v8131, 0.2
    %v8644 = vmul.f32 %v8132, 0.2
    %v8645 = vmul.f32 %v8133, 0.2
    %v8646 = vmul.f32 %v8134, 0.2
    %v8647 = vmul.f32 %v8135, 0.2
    %v8648 = vmul.f32 %v8136, 0.2
    %v8649 = vmul.f32 %v8137, 0.2
    %v8650 = vmul.f32 %v8138, 0.2
    %v8651 = vmul.f32 %v8139, 0.2
    %v8652 = vmul.f32 %v8140, 0.2
    %v8653 = vmul.f32 %v8141, 0.2
    %v8654 = vmul.f32 %v8142, 0.2
    %v8655 = vmul.f32 %v8143, 0.2
    %v8656 = vmul.f32 %v8144, 0.2
    %v8657 = vmul.f32 %v8145, 0.2
    %v8658 = vmul.f32 %v8146, 0.2
    %v8659 = vmul.f32 %v8147, 0.2
    %v8660 = vmul.f32 %v8148, 0.2
    %v8661 = vmul.f32 %v8149, 0.2
    %v8662 = vmul.f32 %v8150, 0.2
    %v8663 = vmul.f32 %v8151, 0.2
    %v8664 = vmul.f32 %v8152, 0.2
    %v8665 = vmul.f32 %v8153, 0.2
    %v8666 = vmul.f32 %v8154, 0.2
    %v8667 = vmul.f32 %v8155, 0.2
    %v8668 = vmul.f32 %v8156, 0.2
    %v8669 = vmul.f32 %v8157, 0.2
    %v8670 = vmul.f32 %v8158, 0.2
    %v8671 = vmul.f32 %v8159, 0.2
    %v8672 = vmul.f32 %v8160, 0.2
    %v8673 = vmul.f32 %v8161, 0.2
    %v8674 = vmul.f32 %v8162, 0.2
    %v8675 = vsel %vm8163, %v7907, %v8419
    %v8676 = vsel %vm8164, %v7908, %v8420
    %v8677 = vsel %vm8165, %v7909, %v8421
    %v8678 = vsel %vm8166, %v7910, %v8422
    %v8679 = vsel %vm8167, %v7911, %v8423
    %v8680 = vsel %vm8168, %v7912, %v8424
    %v8681 = vsel %vm8169, %v7913, %v8425
    %v8682 = vsel %vm8170, %v7914, %v8426
    %v8683 = vsel %vm8171, %v7915, %v8427
    %v8684 = vsel %vm8172, %v7916, %v8428
    %v8685 = vsel %vm8173, %v7917, %v8429
    %v8686 = vsel %vm8174, %v7918, %v8430
    %v8687 = vsel %vm8175, %v7919, %v8431
    %v8688 = vsel %vm8176, %v7920, %v8432
    %v8689 = vsel %vm8177, %v7921, %v8433
    %v8690 = vsel %vm8178, %v7922, %v8434
    %v8691 = vsel %vm8179, %v7923, %v8435
    %v8692 = vsel %vm8180, %v7924, %v8436
    %v8693 = vsel %vm8181, %v7925, %v8437
    %v8694 = vsel %vm8182, %v7926, %v8438
    %v8695 = vsel %vm8183, %v7927, %v8439
    %v8696 = vsel %vm8184, %v7928, %v8440
    %v8697 = vsel %vm8185, %v7929, %v8441
    %v8698 = vsel %vm8186, %v7930, %v8442
    %v8699 = vsel %vm8187, %v7931, %v8443
    %v8700 = vsel %vm8188, %v7932, %v8444
    %v8701 = vsel %vm8189, %v7933, %v8445
    %v8702 = vsel %vm8190, %v7934, %v8446
    %v8703 = vsel %vm8191, %v7935, %v8447
    %v8704 = vsel %vm8192, %v7936, %v8448
    %v8705 = vsel %vm8193, %v7937, %v8449
    %v8706 = vsel %vm8194, %v7938, %v8450
    %v8707 = vsel %vm8195, %v7939, %v8451
    %v8708 = vsel %vm8196, %v7940, %v8452
    %v8709 = vsel %vm8197, %v7941, %v8453
    %v8710 = vsel %vm8198, %v7942, %v8454
    %v8711 = vsel %vm8199, %v7943, %v8455
    %v8712 = vsel %vm8200, %v7944, %v8456
    %v8713 = vsel %vm8201, %v7945, %v8457
    %v8714 = vsel %vm8202, %v7946, %v8458
    %v8715 = vsel %vm8203, %v7947, %v8459
    %v8716 = vsel %vm8204, %v7948, %v8460
    %v8717 = vsel %vm8205, %v7949, %v8461
    %v8718 = vsel %vm8206, %v7950, %v8462
    %v8719 = vsel %vm8207, %v7951, %v8463
    %v8720 = vsel %vm8208, %v7952, %v8464
    %v8721 = vsel %vm8209, %v7953, %v8465
    %v8722 = vsel %vm8210, %v7954, %v8466
    %v8723 = vsel %vm8211, %v7955, %v8467
    %v8724 = vsel %vm8212, %v7956, %v8468
    %v8725 = vsel %vm8213, %v7957, %v8469
    %v8726 = vsel %vm8214, %v7958, %v8470
    %v8727 = vsel %vm8215, %v7959, %v8471
    %v8728 = vsel %vm8216, %v7960, %v8472
    %v8729 = vsel %vm8217, %v7961, %v8473
    %v8730 = vsel %vm8218, %v7962, %v8474
    %v8731 = vsel %vm8219, %v7963, %v8475
    %v8732 = vsel %vm8220, %v7964, %v8476
    %v8733 = vsel %vm8221, %v7965, %v8477
    %v8734 = vsel %vm8222, %v7966, %v8478
    %v8735 = vsel %vm8223, %v7967, %v8479
    %v8736 = vsel %vm8224, %v7968, %v8480
    %v8737 = vsel %vm8225, %v7969, %v8481
    %v8738 = vsel %vm8226, %v7970, %v8482
    %v8739 = vsel %vm8227, %v7971, %v8483
    %v8740 = vsel %vm8228, %v7972, %v8484
    %v8741 = vsel %vm8229, %v7973, %v8485
    %v8742 = vsel %vm8230, %v7974, %v8486
    %v8743 = vsel %vm8231, %v7975, %v8487
    %v8744 = vsel %vm8232, %v7976, %v8488
    %v8745 = vsel %vm8233, %v7977, %v8489
    %v8746 = vsel %vm8234, %v7978, %v8490
    %v8747 = vsel %vm8235, %v7979, %v8491
    %v8748 = vsel %vm8236, %v7980, %v8492
    %v8749 = vsel %vm8237, %v7981, %v8493
    %v8750 = vsel %vm8238, %v7982, %v8494
    %v8751 = vsel %vm8239, %v7983, %v8495
    %v8752 = vsel %vm8240, %v7984, %v8496
    %v8753 = vsel %vm8241, %v7985, %v8497
    %v8754 = vsel %vm8242, %v7986, %v8498
    %v8755 = vsel %vm8243, %v7987, %v8499
    %v8756 = vsel %vm8244, %v7988, %v8500
    %v8757 = vsel %vm8245, %v7989, %v8501
    %v8758 = vsel %vm8246, %v7990, %v8502
    %v8759 = vsel %vm8247, %v7991, %v8503
    %v8760 = vsel %vm8248, %v7992, %v8504
    %v8761 = vsel %vm8249, %v7993, %v8505
    %v8762 = vsel %vm8250, %v7994, %v8506
    %v8763 = vsel %vm8251, %v7995, %v8507
    %v8764 = vsel %vm8252, %v7996, %v8508
    %v8765 = vsel %vm8253, %v7997, %v8509
    %v8766 = vsel %vm8254, %v7998, %v8510
    %v8767 = vsel %vm8255, %v7999, %v8511
    %v8768 = vsel %vm8256, %v8000, %v8512
    %v8769 = vsel %vm8257, %v8001, %v8513
    %v8770 = vsel %vm8258, %v8002, %v8514
    %v8771 = vsel %vm8259, %v8003, %v8515
    %v8772 = vsel %vm8260, %v8004, %v8516
    %v8773 = vsel %vm8261, %v8005, %v8517
    %v8774 = vsel %vm8262, %v8006, %v8518
    %v8775 = vsel %vm8263, %v8007, %v8519
    %v8776 = vsel %vm8264, %v8008, %v8520
    %v8777 = vsel %vm8265, %v8009, %v8521
    %v8778 = vsel %vm8266, %v8010, %v8522
    %v8779 = vsel %vm8267, %v8011, %v8523
    %v8780 = vsel %vm8268, %v8012, %v8524
    %v8781 = vsel %vm8269, %v8013, %v8525
    %v8782 = vsel %vm8270, %v8014, %v8526
    %v8783 = vsel %vm8271, %v8015, %v8527
    %v8784 = vsel %vm8272, %v8016, %v8528
    %v8785 = vsel %vm8273, %v8017, %v8529
    %v8786 = vsel %vm8274, %v8018, %v8530
    %v8787 = vsel %vm8275, %v8019, %v8531
    %v8788 = vsel %vm8276, %v8020, %v8532
    %v8789 = vsel %vm8277, %v8021, %v8533
    %v8790 = vsel %vm8278, %v8022, %v8534
    %v8791 = vsel %vm8279, %v8023, %v8535
    %v8792 = vsel %vm8280, %v8024, %v8536
    %v8793 = vsel %vm8281, %v8025, %v8537
    %v8794 = vsel %vm8282, %v8026, %v8538
    %v8795 = vsel %vm8283, %v8027, %v8539
    %v8796 = vsel %vm8284, %v8028, %v8540
    %v8797 = vsel %vm8285, %v8029, %v8541
    %v8798 = vsel %vm8286, %v8030, %v8542
    %v8799 = vsel %vm8287, %v8031, %v8543
    %v8800 = vsel %vm8288, %v8032, %v8544
    %v8801 = vsel %vm8289, %v8033, %v8545
    %v8802 = vsel %vm8290, %v8034, %v8546
    %v8803 = vsel %vm8291, %v8035, %v8547
    %v8804 = vsel %vm8292, %v8036, %v8548
    %v8805 = vsel %vm8293, %v8037, %v8549
    %v8806 = vsel %vm8294, %v8038, %v8550
    %v8807 = vsel %vm8295, %v8039, %v8551
    %v8808 = vsel %vm8296, %v8040, %v8552
    %v8809 = vsel %vm8297, %v8041, %v8553
    %v8810 = vsel %vm8298, %v8042, %v8554
    %v8811 = vsel %vm8299, %v8043, %v8555
    %v8812 = vsel %vm8300, %v8044, %v8556
    %v8813 = vsel %vm8301, %v8045, %v8557
    %v8814 = vsel %vm8302, %v8046, %v8558
    %v8815 = vsel %vm8303, %v8047, %v8559
    %v8816 = vsel %vm8304, %v8048, %v8560
    %v8817 = vsel %vm8305, %v8049, %v8561
    %v8818 = vsel %vm8306, %v8050, %v8562
    %v8819 = vsel %vm8307, %v8051, %v8563
    %v8820 = vsel %vm8308, %v8052, %v8564
    %v8821 = vsel %vm8309, %v8053, %v8565
    %v8822 = vsel %vm8310, %v8054, %v8566
    %v8823 = vsel %vm8311, %v8055, %v8567
    %v8824 = vsel %vm8312, %v8056, %v8568
    %v8825 = vsel %vm8313, %v8057, %v8569
    %v8826 = vsel %vm8314, %v8058, %v8570
    %v8827 = vsel %vm8315, %v8059, %v8571
    %v8828 = vsel %vm8316, %v8060, %v8572
    %v8829 = vsel %vm8317, %v8061, %v8573
    %v8830 = vsel %vm8318, %v8062, %v8574
    %v8831 = vsel %vm8319, %v8063, %v8575
    %v8832 = vsel %vm8320, %v8064, %v8576
    %v8833 = vsel %vm8321, %v8065, %v8577
    %v8834 = vsel %vm8322, %v8066, %v8578
    %v8835 = vsel %vm8323, %v8067, %v8579
    %v8836 = vsel %vm8324, %v8068, %v8580
    %v8837 = vsel %vm8325, %v8069, %v8581
    %v8838 = vsel %vm8326, %v8070, %v8582
    %v8839 = vsel %vm8327, %v8071, %v8583
    %v8840 = vsel %vm8328, %v8072, %v8584
    %v8841 = vsel %vm8329, %v8073, %v8585
    %v8842 = vsel %vm8330, %v8074, %v8586
    %v8843 = vsel %vm8331, %v8075, %v8587
    %v8844 = vsel %vm8332, %v8076, %v8588
    %v8845 = vsel %vm8333, %v8077, %v8589
    %v8846 = vsel %vm8334, %v8078, %v8590
    %v8847 = vsel %vm8335, %v8079, %v8591
    %v8848 = vsel %vm8336, %v8080, %v8592
    %v8849 = vsel %vm8337, %v8081, %v8593
    %v8850 = vsel %vm8338, %v8082, %v8594
    %v8851 = vsel %vm8339, %v8083, %v8595
    %v8852 = vsel %vm8340, %v8084, %v8596
    %v8853 = vsel %vm8341, %v8085, %v8597
    %v8854 = vsel %vm8342, %v8086, %v8598
    %v8855 = vsel %vm8343, %v8087, %v8599
    %v8856 = vsel %vm8344, %v8088, %v8600
    %v8857 = vsel %vm8345, %v8089, %v8601
    %v8858 = vsel %vm8346, %v8090, %v8602
    %v8859 = vsel %vm8347, %v8091, %v8603
    %v8860 = vsel %vm8348, %v8092, %v8604
    %v8861 = vsel %vm8349, %v8093, %v8605
    %v8862 = vsel %vm8350, %v8094, %v8606
    %v8863 = vsel %vm8351, %v8095, %v8607
    %v8864 = vsel %vm8352, %v8096, %v8608
    %v8865 = vsel %vm8353, %v8097, %v8609
    %v8866 = vsel %vm8354, %v8098, %v8610
    %v8867 = vsel %vm8355, %v8099, %v8611
    %v8868 = vsel %vm8356, %v8100, %v8612
    %v8869 = vsel %vm8357, %v8101, %v8613
    %v8870 = vsel %vm8358, %v8102, %v8614
    %v8871 = vsel %vm8359, %v8103, %v8615
    %v8872 = vsel %vm8360, %v8104, %v8616
    %v8873 = vsel %vm8361, %v8105, %v8617
    %v8874 = vsel %vm8362, %v8106, %v8618
    %v8875 = vsel %vm8363, %v8107, %v8619
    %v8876 = vsel %vm8364, %v8108, %v8620
    %v8877 = vsel %vm8365, %v8109, %v8621
    %v8878 = vsel %vm8366, %v8110, %v8622
    %v8879 = vsel %vm8367, %v8111, %v8623
    %v8880 = vsel %vm8368, %v8112, %v8624
    %v8881 = vsel %vm8369, %v8113, %v8625
    %v8882 = vsel %vm8370, %v8114, %v8626
    %v8883 = vsel %vm8371, %v8115, %v8627
    %v8884 = vsel %vm8372, %v8116, %v8628
    %v8885 = vsel %vm8373, %v8117, %v8629
    %v8886 = vsel %vm8374, %v8118, %v8630
    %v8887 = vsel %vm8375, %v8119, %v8631
    %v8888 = vsel %vm8376, %v8120, %v8632
    %v8889 = vsel %vm8377, %v8121, %v8633
    %v8890 = vsel %vm8378, %v8122, %v8634
    %v8891 = vsel %vm8379, %v8123, %v8635
    %v8892 = vsel %vm8380, %v8124, %v8636
    %v8893 = vsel %vm8381, %v8125, %v8637
    %v8894 = vsel %vm8382, %v8126, %v8638
    %v8895 = vsel %vm8383, %v8127, %v8639
    %v8896 = vsel %vm8384, %v8128, %v8640
    %v8897 = vsel %vm8385, %v8129, %v8641
    %v8898 = vsel %vm8386, %v8130, %v8642
    %v8899 = vsel %vm8387, %v8131, %v8643
    %v8900 = vsel %vm8388, %v8132, %v8644
    %v8901 = vsel %vm8389, %v8133, %v8645
    %v8902 = vsel %vm8390, %v8134, %v8646
    %v8903 = vsel %vm8391, %v8135, %v8647
    %v8904 = vsel %vm8392, %v8136, %v8648
    %v8905 = vsel %vm8393, %v8137, %v8649
    %v8906 = vsel %vm8394, %v8138, %v8650
    %v8907 = vsel %vm8395, %v8139, %v8651
    %v8908 = vsel %vm8396, %v8140, %v8652
    %v8909 = vsel %vm8397, %v8141, %v8653
    %v8910 = vsel %vm8398, %v8142, %v8654
    %v8911 = vsel %vm8399, %v8143, %v8655
    %v8912 = vsel %vm8400, %v8144, %v8656
    %v8913 = vsel %vm8401, %v8145, %v8657
    %v8914 = vsel %vm8402, %v8146, %v8658
    %v8915 = vsel %vm8403, %v8147, %v8659
    %v8916 = vsel %vm8404, %v8148, %v8660
    %v8917 = vsel %vm8405, %v8149, %v8661
    %v8918 = vsel %vm8406, %v8150, %v8662
    %v8919 = vsel %vm8407, %v8151, %v8663
    %v8920 = vsel %vm8408, %v8152, %v8664
    %v8921 = vsel %vm8409, %v8153, %v8665
    %v8922 = vsel %vm8410, %v8154, %v8666
    %v8923 = vsel %vm8411, %v8155, %v8667
    %v8924 = vsel %vm8412, %v8156, %v8668
    %v8925 = vsel %vm8413, %v8157, %v8669
    %v8926 = vsel %vm8414, %v8158, %v8670
    %v8927 = vsel %vm8415, %v8159, %v8671
    %v8928 = vsel %vm8416, %v8160, %v8672
    %v8929 = vsel %vm8417, %v8161, %v8673
    %v8930 = vsel %vm8418, %v8162, %v8674
    %v8931 = vpack.c.bf16 %v8683, %v8675
    %v8932 = vpack.c.bf16 %v8684, %v8676
    %v8933 = vpack.c.bf16 %v8685, %v8677
    %v8934 = vpack.c.bf16 %v8686, %v8678
    %v8935 = vpack.c.bf16 %v8687, %v8679
    %v8936 = vpack.c.bf16 %v8688, %v8680
    %v8937 = vpack.c.bf16 %v8689, %v8681
    %v8938 = vpack.c.bf16 %v8690, %v8682
    %v8939 = vpack.c.bf16 %v8699, %v8691
    %v8940 = vpack.c.bf16 %v8700, %v8692
    %v8941 = vpack.c.bf16 %v8701, %v8693
    %v8942 = vpack.c.bf16 %v8702, %v8694
    %v8943 = vpack.c.bf16 %v8703, %v8695
    %v8944 = vpack.c.bf16 %v8704, %v8696
    %v8945 = vpack.c.bf16 %v8705, %v8697
    %v8946 = vpack.c.bf16 %v8706, %v8698
    %v8947 = vpack.c.bf16 %v8715, %v8707
    %v8948 = vpack.c.bf16 %v8716, %v8708
    %v8949 = vpack.c.bf16 %v8717, %v8709
    %v8950 = vpack.c.bf16 %v8718, %v8710
    %v8951 = vpack.c.bf16 %v8719, %v8711
    %v8952 = vpack.c.bf16 %v8720, %v8712
    %v8953 = vpack.c.bf16 %v8721, %v8713
    %v8954 = vpack.c.bf16 %v8722, %v8714
    %v8955 = vpack.c.bf16 %v8731, %v8723
    %v8956 = vpack.c.bf16 %v8732, %v8724
    %v8957 = vpack.c.bf16 %v8733, %v8725
    %v8958 = vpack.c.bf16 %v8734, %v8726
    %v8959 = vpack.c.bf16 %v8735, %v8727
    %v8960 = vpack.c.bf16 %v8736, %v8728
    %v8961 = vpack.c.bf16 %v8737, %v8729
    %v8962 = vpack.c.bf16 %v8738, %v8730
    %v8963 = vpack.c.bf16 %v8747, %v8739
    %v8964 = vpack.c.bf16 %v8748, %v8740
    %v8965 = vpack.c.bf16 %v8749, %v8741
    %v8966 = vpack.c.bf16 %v8750, %v8742
    %v8967 = vpack.c.bf16 %v8751, %v8743
    %v8968 = vpack.c.bf16 %v8752, %v8744
    %v8969 = vpack.c.bf16 %v8753, %v8745
    %v8970 = vpack.c.bf16 %v8754, %v8746
    %v8971 = vpack.c.bf16 %v8763, %v8755
    %v8972 = vpack.c.bf16 %v8764, %v8756
    %v8973 = vpack.c.bf16 %v8765, %v8757
    %v8974 = vpack.c.bf16 %v8766, %v8758
    %v8975 = vpack.c.bf16 %v8767, %v8759
    %v8976 = vpack.c.bf16 %v8768, %v8760
    %v8977 = vpack.c.bf16 %v8769, %v8761
    %v8978 = vpack.c.bf16 %v8770, %v8762
    %v8979 = vpack.c.bf16 %v8779, %v8771
    %v8980 = vpack.c.bf16 %v8780, %v8772
    %v8981 = vpack.c.bf16 %v8781, %v8773
    %v8982 = vpack.c.bf16 %v8782, %v8774
    %v8983 = vpack.c.bf16 %v8783, %v8775
    %v8984 = vpack.c.bf16 %v8784, %v8776
    %v8985 = vpack.c.bf16 %v8785, %v8777
    %v8986 = vpack.c.bf16 %v8786, %v8778
    %v8987 = vpack.c.bf16 %v8795, %v8787
    %v8988 = vpack.c.bf16 %v8796, %v8788
    %v8989 = vpack.c.bf16 %v8797, %v8789
    %v8990 = vpack.c.bf16 %v8798, %v8790
    %v8991 = vpack.c.bf16 %v8799, %v8791
    %v8992 = vpack.c.bf16 %v8800, %v8792
    %v8993 = vpack.c.bf16 %v8801, %v8793
    %v8994 = vpack.c.bf16 %v8802, %v8794
    %v8995 = vpack.c.bf16 %v8811, %v8803
    %v8996 = vpack.c.bf16 %v8812, %v8804
    %v8997 = vpack.c.bf16 %v8813, %v8805
    %v8998 = vpack.c.bf16 %v8814, %v8806
    %v8999 = vpack.c.bf16 %v8815, %v8807
    %v9000 = vpack.c.bf16 %v8816, %v8808
    %v9001 = vpack.c.bf16 %v8817, %v8809
    %v9002 = vpack.c.bf16 %v8818, %v8810
    %v9003 = vpack.c.bf16 %v8827, %v8819
    %v9004 = vpack.c.bf16 %v8828, %v8820
    %v9005 = vpack.c.bf16 %v8829, %v8821
    %v9006 = vpack.c.bf16 %v8830, %v8822
    %v9007 = vpack.c.bf16 %v8831, %v8823
    %v9008 = vpack.c.bf16 %v8832, %v8824
    %v9009 = vpack.c.bf16 %v8833, %v8825
    %v9010 = vpack.c.bf16 %v8834, %v8826
    %v9011 = vpack.c.bf16 %v8843, %v8835
    %v9012 = vpack.c.bf16 %v8844, %v8836
    %v9013 = vpack.c.bf16 %v8845, %v8837
    %v9014 = vpack.c.bf16 %v8846, %v8838
    %v9015 = vpack.c.bf16 %v8847, %v8839
    %v9016 = vpack.c.bf16 %v8848, %v8840
    %v9017 = vpack.c.bf16 %v8849, %v8841
    %v9018 = vpack.c.bf16 %v8850, %v8842
    %v9019 = vpack.c.bf16 %v8859, %v8851
    %v9020 = vpack.c.bf16 %v8860, %v8852
    %v9021 = vpack.c.bf16 %v8861, %v8853
    %v9022 = vpack.c.bf16 %v8862, %v8854
    %v9023 = vpack.c.bf16 %v8863, %v8855
    %v9024 = vpack.c.bf16 %v8864, %v8856
    %v9025 = vpack.c.bf16 %v8865, %v8857
    %v9026 = vpack.c.bf16 %v8866, %v8858
    %v9027 = vpack.c.bf16 %v8875, %v8867
    %v9028 = vpack.c.bf16 %v8876, %v8868
    %v9029 = vpack.c.bf16 %v8877, %v8869
    %v9030 = vpack.c.bf16 %v8878, %v8870
    %v9031 = vpack.c.bf16 %v8879, %v8871
    %v9032 = vpack.c.bf16 %v8880, %v8872
    %v9033 = vpack.c.bf16 %v8881, %v8873
    %v9034 = vpack.c.bf16 %v8882, %v8874
    %v9035 = vpack.c.bf16 %v8891, %v8883
    %v9036 = vpack.c.bf16 %v8892, %v8884
    %v9037 = vpack.c.bf16 %v8893, %v8885
    %v9038 = vpack.c.bf16 %v8894, %v8886
    %v9039 = vpack.c.bf16 %v8895, %v8887
    %v9040 = vpack.c.bf16 %v8896, %v8888
    %v9041 = vpack.c.bf16 %v8897, %v8889
    %v9042 = vpack.c.bf16 %v8898, %v8890
    %v9043 = vpack.c.bf16 %v8907, %v8899
    %v9044 = vpack.c.bf16 %v8908, %v8900
    %v9045 = vpack.c.bf16 %v8909, %v8901
    %v9046 = vpack.c.bf16 %v8910, %v8902
    %v9047 = vpack.c.bf16 %v8911, %v8903
    %v9048 = vpack.c.bf16 %v8912, %v8904
    %v9049 = vpack.c.bf16 %v8913, %v8905
    %v9050 = vpack.c.bf16 %v8914, %v8906
    %v9051 = vpack.c.bf16 %v8923, %v8915
    %v9052 = vpack.c.bf16 %v8924, %v8916
    %v9053 = vpack.c.bf16 %v8925, %v8917
    %v9054 = vpack.c.bf16 %v8926, %v8918
    %v9055 = vpack.c.bf16 %v8927, %v8919
    %v9056 = vpack.c.bf16 %v8928, %v8920
    %v9057 = vpack.c.bf16 %v8929, %v8921
    %v9058 = vpack.c.bf16 %v8930, %v8922
    %v9059 = vld [vmem:[#allocation2] sm:$0xf]
    %v9060 = vld [vmem:[#allocation2 + $0x4] sm:$0xf]
    %v9061 = vld [vmem:[#allocation2 + $0x8] sm:$0xf]
    %v9062 = vld [vmem:[#allocation2 + $0xc] sm:$0xf]
    %v9063 = vld [vmem:[#allocation2 + $0x10] sm:$0xf]
    %v9064 = vld [vmem:[#allocation2 + $0x14] sm:$0xf]
    %v9065 = vld [vmem:[#allocation2 + $0x18] sm:$0xf]
    %v9066 = vld [vmem:[#allocation2 + $0x1c] sm:$0xf]
    %v9067 = vld [vmem:[#allocation2 + $0x20] sm:$0xf]
    %v9068 = vld [vmem:[#allocation2 + $0x24] sm:$0xf]
    %v9069 = vld [vmem:[#allocation2 + $0x28] sm:$0xf]
    %v9070 = vld [vmem:[#allocation2 + $0x2c] sm:$0xf]
    %v9071 = vld [vmem:[#allocation2 + $0x30] sm:$0xf]
    %v9072 = vld [vmem:[#allocation2 + $0x34] sm:$0xf]
    %v9073 = vld [vmem:[#allocation2 + $0x38] sm:$0xf]
    %v9074 = vld [vmem:[#allocation2 + $0x3c] sm:$0xf]
    %v9075 = vld [vmem:[#allocation2 + $0x40] sm:$0xf]
    %v9076 = vld [vmem:[#allocation2 + $0x44] sm:$0xf]
    %v9077 = vld [vmem:[#allocation2 + $0x48] sm:$0xf]
    %v9078 = vld [vmem:[#allocation2 + $0x4c] sm:$0xf]
    %v9079 = vld [vmem:[#allocation2 + $0x50] sm:$0xf]
    %v9080 = vld [vmem:[#allocation2 + $0x54] sm:$0xf]
    %v9081 = vld [vmem:[#allocation2 + $0x58] sm:$0xf]
    %v9082 = vld [vmem:[#allocation2 + $0x5c] sm:$0xf]
    %v9083 = vld [vmem:[#allocation2 + $0x60] sm:$0xf]
    %v9084 = vld [vmem:[#allocation2 + $0x64] sm:$0xf]
    %v9085 = vld [vmem:[#allocation2 + $0x68] sm:$0xf]
    %v9086 = vld [vmem:[#allocation2 + $0x6c] sm:$0xf]
    %v9087 = vld [vmem:[#allocation2 + $0x70] sm:$0xf]
    %v9088 = vld [vmem:[#allocation2 + $0x74] sm:$0xf]
    %v9089 = vld [vmem:[#allocation2 + $0x78] sm:$0xf]
    %v9090 = vld [vmem:[#allocation2 + $0x7c] sm:$0xf]
    %v9091 = vld [vmem:[#allocation2 + $0x80] sm:$0xf]
    %v9092 = vld [vmem:[#allocation2 + $0x84] sm:$0xf]
    %v9093 = vld [vmem:[#allocation2 + $0x88] sm:$0xf]
    %v9094 = vld [vmem:[#allocation2 + $0x8c] sm:$0xf]
    %v9095 = vld [vmem:[#allocation2 + $0x90] sm:$0xf]
    %v9096 = vld [vmem:[#allocation2 + $0x94] sm:$0xf]
    %v9097 = vld [vmem:[#allocation2 + $0x98] sm:$0xf]
    %v9098 = vld [vmem:[#allocation2 + $0x9c] sm:$0xf]
    %v9099 = vld [vmem:[#allocation2 + $0xa0] sm:$0xf]
    %v9100 = vld [vmem:[#allocation2 + $0xa4] sm:$0xf]
    %v9101 = vld [vmem:[#allocation2 + $0xa8] sm:$0xf]
    %v9102 = vld [vmem:[#allocation2 + $0xac] sm:$0xf]
    %v9103 = vld [vmem:[#allocation2 + $0xb0] sm:$0xf]
    %v9104 = vld [vmem:[#allocation2 + $0xb4] sm:$0xf]
    %v9105 = vld [vmem:[#allocation2 + $0xb8] sm:$0xf]
    %v9106 = vld [vmem:[#allocation2 + $0xbc] sm:$0xf]
    %v9107 = vld [vmem:[#allocation2 + $0xc0] sm:$0xf]
    %v9108 = vld [vmem:[#allocation2 + $0xc4] sm:$0xf]
    %v9109 = vld [vmem:[#allocation2 + $0xc8] sm:$0xf]
    %v9110 = vld [vmem:[#allocation2 + $0xcc] sm:$0xf]
    %v9111 = vld [vmem:[#allocation2 + $0xd0] sm:$0xf]
    %v9112 = vld [vmem:[#allocation2 + $0xd4] sm:$0xf]
    %v9113 = vld [vmem:[#allocation2 + $0xd8] sm:$0xf]
    %v9114 = vld [vmem:[#allocation2 + $0xdc] sm:$0xf]
    %v9115 = vld [vmem:[#allocation2 + $0xe0] sm:$0xf]
    %v9116 = vld [vmem:[#allocation2 + $0xe4] sm:$0xf]
    %v9117 = vld [vmem:[#allocation2 + $0xe8] sm:$0xf]
    %v9118 = vld [vmem:[#allocation2 + $0xec] sm:$0xf]
    %v9119 = vld [vmem:[#allocation2 + $0xf0] sm:$0xf]
    %v9120 = vld [vmem:[#allocation2 + $0xf4] sm:$0xf]
    %v9121 = vld [vmem:[#allocation2 + $0xf8] sm:$0xf]
    %v9122 = vld [vmem:[#allocation2 + $0xfc] sm:$0xf]
    %v9123 = vld [vmem:[#allocation2 + $0x100] sm:$0xf]
    %v9124 = vld [vmem:[#allocation2 + $0x104] sm:$0xf]
    %v9125 = vld [vmem:[#allocation2 + $0x108] sm:$0xf]
    %v9126 = vld [vmem:[#allocation2 + $0x10c] sm:$0xf]
    %v9127 = vld [vmem:[#allocation2 + $0x110] sm:$0xf]
    %v9128 = vld [vmem:[#allocation2 + $0x114] sm:$0xf]
    %v9129 = vld [vmem:[#allocation2 + $0x118] sm:$0xf]
    %v9130 = vld [vmem:[#allocation2 + $0x11c] sm:$0xf]
    %v9131 = vld [vmem:[#allocation2 + $0x120] sm:$0xf]
    %v9132 = vld [vmem:[#allocation2 + $0x124] sm:$0xf]
    %v9133 = vld [vmem:[#allocation2 + $0x128] sm:$0xf]
    %v9134 = vld [vmem:[#allocation2 + $0x12c] sm:$0xf]
    %v9135 = vld [vmem:[#allocation2 + $0x130] sm:$0xf]
    %v9136 = vld [vmem:[#allocation2 + $0x134] sm:$0xf]
    %v9137 = vld [vmem:[#allocation2 + $0x138] sm:$0xf]
    %v9138 = vld [vmem:[#allocation2 + $0x13c] sm:$0xf]
    %v9139 = vld [vmem:[#allocation2 + $0x140] sm:$0xf]
    %v9140 = vld [vmem:[#allocation2 + $0x144] sm:$0xf]
    %v9141 = vld [vmem:[#allocation2 + $0x148] sm:$0xf]
    %v9142 = vld [vmem:[#allocation2 + $0x14c] sm:$0xf]
    %v9143 = vld [vmem:[#allocation2 + $0x150] sm:$0xf]
    %v9144 = vld [vmem:[#allocation2 + $0x154] sm:$0xf]
    %v9145 = vld [vmem:[#allocation2 + $0x158] sm:$0xf]
    %v9146 = vld [vmem:[#allocation2 + $0x15c] sm:$0xf]
    %v9147 = vld [vmem:[#allocation2 + $0x160] sm:$0xf]
    %v9148 = vld [vmem:[#allocation2 + $0x164] sm:$0xf]
    %v9149 = vld [vmem:[#allocation2 + $0x168] sm:$0xf]
    %v9150 = vld [vmem:[#allocation2 + $0x16c] sm:$0xf]
    %v9151 = vld [vmem:[#allocation2 + $0x170] sm:$0xf]
    %v9152 = vld [vmem:[#allocation2 + $0x174] sm:$0xf]
    %v9153 = vld [vmem:[#allocation2 + $0x178] sm:$0xf]
    %v9154 = vld [vmem:[#allocation2 + $0x17c] sm:$0xf]
    %v9155 = vld [vmem:[#allocation2 + $0x180] sm:$0xf]
    %v9156 = vld [vmem:[#allocation2 + $0x184] sm:$0xf]
    %v9157 = vld [vmem:[#allocation2 + $0x188] sm:$0xf]
    %v9158 = vld [vmem:[#allocation2 + $0x18c] sm:$0xf]
    %v9159 = vld [vmem:[#allocation2 + $0x190] sm:$0xf]
    %v9160 = vld [vmem:[#allocation2 + $0x194] sm:$0xf]
    %v9161 = vld [vmem:[#allocation2 + $0x198] sm:$0xf]
    %v9162 = vld [vmem:[#allocation2 + $0x19c] sm:$0xf]
    %v9163 = vld [vmem:[#allocation2 + $0x1a0] sm:$0xf]
    %v9164 = vld [vmem:[#allocation2 + $0x1a4] sm:$0xf]
    %v9165 = vld [vmem:[#allocation2 + $0x1a8] sm:$0xf]
    %v9166 = vld [vmem:[#allocation2 + $0x1ac] sm:$0xf]
    %v9167 = vld [vmem:[#allocation2 + $0x1b0] sm:$0xf]
    %v9168 = vld [vmem:[#allocation2 + $0x1b4] sm:$0xf]
    %v9169 = vld [vmem:[#allocation2 + $0x1b8] sm:$0xf]
    %v9170 = vld [vmem:[#allocation2 + $0x1bc] sm:$0xf]
    %v9171 = vld [vmem:[#allocation2 + $0x1c0] sm:$0xf]
    %v9172 = vld [vmem:[#allocation2 + $0x1c4] sm:$0xf]
    %v9173 = vld [vmem:[#allocation2 + $0x1c8] sm:$0xf]
    %v9174 = vld [vmem:[#allocation2 + $0x1cc] sm:$0xf]
    %v9175 = vld [vmem:[#allocation2 + $0x1d0] sm:$0xf]
    %v9176 = vld [vmem:[#allocation2 + $0x1d4] sm:$0xf]
    %v9177 = vld [vmem:[#allocation2 + $0x1d8] sm:$0xf]
    %v9178 = vld [vmem:[#allocation2 + $0x1dc] sm:$0xf]
    %v9179 = vld [vmem:[#allocation2 + $0x1e0] sm:$0xf]
    %v9180 = vld [vmem:[#allocation2 + $0x1e4] sm:$0xf]
    %v9181 = vld [vmem:[#allocation2 + $0x1e8] sm:$0xf]
    %v9182 = vld [vmem:[#allocation2 + $0x1ec] sm:$0xf]
    %v9183 = vld [vmem:[#allocation2 + $0x1f0] sm:$0xf]
    %v9184 = vld [vmem:[#allocation2 + $0x1f4] sm:$0xf]
    %v9185 = vld [vmem:[#allocation2 + $0x1f8] sm:$0xf]
    %v9186 = vld [vmem:[#allocation2 + $0x1fc] sm:$0xf]
    %v9187 = vld [vmem:[%s6 + $0x1c] sm:$0x1]
    %v9189 = vlaneseq
    %v9190 = vshrl.u32 %v9189, 7
    %v9191 = vsub.s32 0, %v9190
    %v9192 = vrot.slane %v9187, %v9191
    %v9322 = vunpack.c.l.b16 %v9059
    %v9323 = vunpack.c.l.b16 %v9060
    %v9324 = vunpack.c.l.b16 %v9061
    %v9325 = vunpack.c.l.b16 %v9062
    %v9326 = vunpack.c.l.b16 %v9063
    %v9327 = vunpack.c.l.b16 %v9064
    %v9328 = vunpack.c.l.b16 %v9065
    %v9329 = vunpack.c.l.b16 %v9066
    %v9330 = vunpack.c.l.b16 %v9067
    %v9331 = vunpack.c.l.b16 %v9068
    %v9332 = vunpack.c.l.b16 %v9069
    %v9333 = vunpack.c.l.b16 %v9070
    %v9334 = vunpack.c.l.b16 %v9071
    %v9335 = vunpack.c.l.b16 %v9072
    %v9336 = vunpack.c.l.b16 %v9073
    %v9337 = vunpack.c.l.b16 %v9074
    %v9338 = vunpack.c.l.b16 %v9075
    %v9339 = vunpack.c.l.b16 %v9076
    %v9340 = vunpack.c.l.b16 %v9077
    %v9341 = vunpack.c.l.b16 %v9078
    %v9342 = vunpack.c.l.b16 %v9079
    %v9343 = vunpack.c.l.b16 %v9080
    %v9344 = vunpack.c.l.b16 %v9081
    %v9345 = vunpack.c.l.b16 %v9082
    %v9346 = vunpack.c.l.b16 %v9083
    %v9347 = vunpack.c.l.b16 %v9084
    %v9348 = vunpack.c.l.b16 %v9085
    %v9349 = vunpack.c.l.b16 %v9086
    %v9350 = vunpack.c.l.b16 %v9087
    %v9351 = vunpack.c.l.b16 %v9088
    %v9352 = vunpack.c.l.b16 %v9089
    %v9353 = vunpack.c.l.b16 %v9090
    %v9354 = vunpack.c.l.b16 %v9091
    %v9355 = vunpack.c.l.b16 %v9092
    %v9356 = vunpack.c.l.b16 %v9093
    %v9357 = vunpack.c.l.b16 %v9094
    %v9358 = vunpack.c.l.b16 %v9095
    %v9359 = vunpack.c.l.b16 %v9096
    %v9360 = vunpack.c.l.b16 %v9097
    %v9361 = vunpack.c.l.b16 %v9098
    %v9362 = vunpack.c.l.b16 %v9099
    %v9363 = vunpack.c.l.b16 %v9100
    %v9364 = vunpack.c.l.b16 %v9101
    %v9365 = vunpack.c.l.b16 %v9102
    %v9366 = vunpack.c.l.b16 %v9103
    %v9367 = vunpack.c.l.b16 %v9104
    %v9368 = vunpack.c.l.b16 %v9105
    %v9369 = vunpack.c.l.b16 %v9106
    %v9370 = vunpack.c.l.b16 %v9107
    %v9371 = vunpack.c.l.b16 %v9108
    %v9372 = vunpack.c.l.b16 %v9109
    %v9373 = vunpack.c.l.b16 %v9110
    %v9374 = vunpack.c.l.b16 %v9111
    %v9375 = vunpack.c.l.b16 %v9112
    %v9376 = vunpack.c.l.b16 %v9113
    %v9377 = vunpack.c.l.b16 %v9114
    %v9378 = vunpack.c.l.b16 %v9115
    %v9379 = vunpack.c.l.b16 %v9116
    %v9380 = vunpack.c.l.b16 %v9117
    %v9381 = vunpack.c.l.b16 %v9118
    %v9382 = vunpack.c.l.b16 %v9119
    %v9383 = vunpack.c.l.b16 %v9120
    %v9384 = vunpack.c.l.b16 %v9121
    %v9385 = vunpack.c.l.b16 %v9122
    %v9386 = vunpack.c.l.b16 %v9123
    %v9387 = vunpack.c.l.b16 %v9124
    %v9388 = vunpack.c.l.b16 %v9125
    %v9389 = vunpack.c.l.b16 %v9126
    %v9390 = vunpack.c.l.b16 %v9127
    %v9391 = vunpack.c.l.b16 %v9128
    %v9392 = vunpack.c.l.b16 %v9129
    %v9393 = vunpack.c.l.b16 %v9130
    %v9394 = vunpack.c.l.b16 %v9131
    %v9395 = vunpack.c.l.b16 %v9132
    %v9396 = vunpack.c.l.b16 %v9133
    %v9397 = vunpack.c.l.b16 %v9134
    %v9398 = vunpack.c.l.b16 %v9135
    %v9399 = vunpack.c.l.b16 %v9136
    %v9400 = vunpack.c.l.b16 %v9137
    %v9401 = vunpack.c.l.b16 %v9138
    %v9402 = vunpack.c.l.b16 %v9139
    %v9403 = vunpack.c.l.b16 %v9140
    %v9404 = vunpack.c.l.b16 %v9141
    %v9405 = vunpack.c.l.b16 %v9142
    %v9406 = vunpack.c.l.b16 %v9143
    %v9407 = vunpack.c.l.b16 %v9144
    %v9408 = vunpack.c.l.b16 %v9145
    %v9409 = vunpack.c.l.b16 %v9146
    %v9410 = vunpack.c.l.b16 %v9147
    %v9411 = vunpack.c.l.b16 %v9148
    %v9412 = vunpack.c.l.b16 %v9149
    %v9413 = vunpack.c.l.b16 %v9150
    %v9414 = vunpack.c.l.b16 %v9151
    %v9415 = vunpack.c.l.b16 %v9152
    %v9416 = vunpack.c.l.b16 %v9153
    %v9417 = vunpack.c.l.b16 %v9154
    %v9418 = vunpack.c.l.b16 %v9155
    %v9419 = vunpack.c.l.b16 %v9156
    %v9420 = vunpack.c.l.b16 %v9157
    %v9421 = vunpack.c.l.b16 %v9158
    %v9422 = vunpack.c.l.b16 %v9159
    %v9423 = vunpack.c.l.b16 %v9160
    %v9424 = vunpack.c.l.b16 %v9161
    %v9425 = vunpack.c.l.b16 %v9162
    %v9426 = vunpack.c.l.b16 %v9163
    %v9427 = vunpack.c.l.b16 %v9164
    %v9428 = vunpack.c.l.b16 %v9165
    %v9429 = vunpack.c.l.b16 %v9166
    %v9430 = vunpack.c.l.b16 %v9167
    %v9431 = vunpack.c.l.b16 %v9168
    %v9432 = vunpack.c.l.b16 %v9169
    %v9433 = vunpack.c.l.b16 %v9170
    %v9434 = vunpack.c.l.b16 %v9171
    %v9435 = vunpack.c.l.b16 %v9172
    %v9436 = vunpack.c.l.b16 %v9173
    %v9437 = vunpack.c.l.b16 %v9174
    %v9438 = vunpack.c.l.b16 %v9175
    %v9439 = vunpack.c.l.b16 %v9176
    %v9440 = vunpack.c.l.b16 %v9177
    %v9441 = vunpack.c.l.b16 %v9178
    %v9442 = vunpack.c.l.b16 %v9179
    %v9443 = vunpack.c.l.b16 %v9180
    %v9444 = vunpack.c.l.b16 %v9181
    %v9445 = vunpack.c.l.b16 %v9182
    %v9446 = vunpack.c.l.b16 %v9183
    %v9447 = vunpack.c.l.b16 %v9184
    %v9448 = vunpack.c.l.b16 %v9185
    %v9449 = vunpack.c.l.b16 %v9186
    %v9450 = vpack.c.b16 %v9323, %v9322
    %v9451 = vpack.c.b16 %v9325, %v9324
    %v9452 = vpack.c.b16 %v9327, %v9326
    %v9453 = vpack.c.b16 %v9329, %v9328
    %v9454 = vpack.c.b16 %v9331, %v9330
    %v9455 = vpack.c.b16 %v9333, %v9332
    %v9456 = vpack.c.b16 %v9335, %v9334
    %v9457 = vpack.c.b16 %v9337, %v9336
    %v9458 = vpack.c.b16 %v9339, %v9338
    %v9459 = vpack.c.b16 %v9341, %v9340
    %v9460 = vpack.c.b16 %v9343, %v9342
    %v9461 = vpack.c.b16 %v9345, %v9344
    %v9462 = vpack.c.b16 %v9347, %v9346
    %v9463 = vpack.c.b16 %v9349, %v9348
    %v9464 = vpack.c.b16 %v9351, %v9350
    %v9465 = vpack.c.b16 %v9353, %v9352
    %v9466 = vpack.c.b16 %v9355, %v9354
    %v9467 = vpack.c.b16 %v9357, %v9356
    %v9468 = vpack.c.b16 %v9359, %v9358
    %v9469 = vpack.c.b16 %v9361, %v9360
    %v9470 = vpack.c.b16 %v9363, %v9362
    %v9471 = vpack.c.b16 %v9365, %v9364
    %v9472 = vpack.c.b16 %v9367, %v9366
    %v9473 = vpack.c.b16 %v9369, %v9368
    %v9474 = vpack.c.b16 %v9371, %v9370
    %v9475 = vpack.c.b16 %v9373, %v9372
    %v9476 = vpack.c.b16 %v9375, %v9374
    %v9477 = vpack.c.b16 %v9377, %v9376
    %v9478 = vpack.c.b16 %v9379, %v9378
    %v9479 = vpack.c.b16 %v9381, %v9380
    %v9480 = vpack.c.b16 %v9383, %v9382
    %v9481 = vpack.c.b16 %v9385, %v9384
    %v9482 = vpack.c.b16 %v9387, %v9386
    %v9483 = vpack.c.b16 %v9389, %v9388
    %v9484 = vpack.c.b16 %v9391, %v9390
    %v9485 = vpack.c.b16 %v9393, %v9392
    %v9486 = vpack.c.b16 %v9395, %v9394
    %v9487 = vpack.c.b16 %v9397, %v9396
    %v9488 = vpack.c.b16 %v9399, %v9398
    %v9489 = vpack.c.b16 %v9401, %v9400
    %v9490 = vpack.c.b16 %v9403, %v9402
    %v9491 = vpack.c.b16 %v9405, %v9404
    %v9492 = vpack.c.b16 %v9407, %v9406
    %v9493 = vpack.c.b16 %v9409, %v9408
    %v9494 = vpack.c.b16 %v9411, %v9410
    %v9495 = vpack.c.b16 %v9413, %v9412
    %v9496 = vpack.c.b16 %v9415, %v9414
    %v9497 = vpack.c.b16 %v9417, %v9416
    %v9498 = vpack.c.b16 %v9419, %v9418
    %v9499 = vpack.c.b16 %v9421, %v9420
    %v9500 = vpack.c.b16 %v9423, %v9422
    %v9501 = vpack.c.b16 %v9425, %v9424
    %v9502 = vpack.c.b16 %v9427, %v9426
    %v9503 = vpack.c.b16 %v9429, %v9428
    %v9504 = vpack.c.b16 %v9431, %v9430
    %v9505 = vpack.c.b16 %v9433, %v9432
    %v9506 = vpack.c.b16 %v9435, %v9434
    %v9507 = vpack.c.b16 %v9437, %v9436
    %v9508 = vpack.c.b16 %v9439, %v9438
    %v9509 = vpack.c.b16 %v9441, %v9440
    %v9510 = vpack.c.b16 %v9443, %v9442
    %v9511 = vpack.c.b16 %v9445, %v9444
    %v9512 = vpack.c.b16 %v9447, %v9446
    %v9513 = vpack.c.b16 %v9449, %v9448
    %9578 = vmatprep.subr.bf16.mxu0 0
    %9579 = vmatpush1.bf16.msra.mxu0 %v9457
    %9580 = vmatprep.subr.bf16.mxu0 0
    %9581 = vmatpush1.bf16.msra.mxu0 %v9456
    %9582 = vmatprep.subr.bf16.mxu0 0
    %9583 = vmatpush1.bf16.msra.mxu0 %v9455
    %9584 = vmatprep.subr.bf16.mxu0 0
    %9585 = vmatpush1.bf16.msra.mxu0 %v9454
    %9586 = vmatprep.subr.bf16.mxu0 0
    %9587 = vmatpush1.bf16.msra.mxu0 %v9453
    %9588 = vmatprep.subr.bf16.mxu0 0
    %9589 = vmatpush1.bf16.msra.mxu0 %v9452
    %9590 = vmatprep.subr.bf16.mxu0 0
    %9591 = vmatpush1.bf16.msra.mxu0 %v9451
    %9592 = vmatprep.subr.bf16.mxu0 0
    %9593 = vmatpush1.bf16.msra.mxu0 %v9450
    %9594 = vmatprep.subr.bf16.mxu0 0
    %9595 = vmatpush2.bf16.msra.mxu0 %v9465
    %9596 = vmatprep.subr.bf16.mxu0 0
    %9597 = vmatpush2.bf16.msra.mxu0 %v9464
    %9598 = vmatprep.subr.bf16.mxu0 0
    %9599 = vmatpush2.bf16.msra.mxu0 %v9463
    %9600 = vmatprep.subr.bf16.mxu0 0
    %9601 = vmatpush2.bf16.msra.mxu0 %v9462
    %9602 = vmatprep.subr.bf16.mxu0 0
    %9603 = vmatpush2.bf16.msra.mxu0 %v9461
    %9604 = vmatprep.subr.bf16.mxu0 0
    %9605 = vmatpush2.bf16.msra.mxu0 %v9460
    %9606 = vmatprep.subr.bf16.mxu0 0
    %9607 = vmatpush2.bf16.msra.mxu0 %v9459
    %9608 = vmatprep.subr.bf16.mxu0 0
    %9609 = vmatpush2.bf16.msra.mxu0 %v9458
    %9610 = vmatprep.mubr.bf16.mxu0 %v8932
    %9611 = vmatmul.mubr.bf16.gmra.mxu0 %v8931
    %v9612 = vpop.f32.mrf.mxu0
    %v9613 = vadd.f32 %v9192, %v9612
    %v9614 = vpop.f32.mrf.mxu0
    %v9615 = vpop.f32.mrf.mxu0
    %v9616 = vadd.f32 %v9192, %v9615
    %v9617 = vpop.f32.mrf.mxu0
    %9618 = vmatprep.mubr.bf16.mxu0 %v8940
    %9619 = vmatmul.mubr.bf16.gmra.mxu0 %v8939
    %v9620 = vpop.f32.mrf.mxu0
    %v9621 = vadd.f32 %v9192, %v9620
    %v9622 = vpop.f32.mrf.mxu0
    %v9623 = vpop.f32.mrf.mxu0
    %v9624 = vadd.f32 %v9192, %v9623
    %v9625 = vpop.f32.mrf.mxu0
    %9626 = vmatprep.mubr.bf16.mxu0 %v8948
    %9627 = vmatmul.mubr.bf16.gmra.mxu0 %v8947
    %v9628 = vpop.f32.mrf.mxu0
    %v9629 = vadd.f32 %v9192, %v9628
    %v9630 = vpop.f32.mrf.mxu0
    %v9631 = vpop.f32.mrf.mxu0
    %v9632 = vadd.f32 %v9192, %v9631
    %v9633 = vpop.f32.mrf.mxu0
    %9634 = vmatprep.mubr.bf16.mxu0 %v8956
    %9635 = vmatmul.mubr.bf16.gmra.mxu0 %v8955
    %v9636 = vpop.f32.mrf.mxu0
    %v9637 = vadd.f32 %v9192, %v9636
    %v9638 = vpop.f32.mrf.mxu0
    %v9639 = vpop.f32.mrf.mxu0
    %v9640 = vadd.f32 %v9192, %v9639
    %v9641 = vpop.f32.mrf.mxu0
    %9642 = vmatprep.mubr.bf16.mxu0 %v8964
    %9643 = vmatmul.mubr.bf16.gmra.mxu0 %v8963
    %v9644 = vpop.f32.mrf.mxu0
    %v9645 = vadd.f32 %v9192, %v9644
    %v9646 = vpop.f32.mrf.mxu0
    %v9647 = vpop.f32.mrf.mxu0
    %v9648 = vadd.f32 %v9192, %v9647
    %v9649 = vpop.f32.mrf.mxu0
    %9650 = vmatprep.mubr.bf16.mxu0 %v8972
    %9651 = vmatmul.mubr.bf16.gmra.mxu0 %v8971
    %v9652 = vpop.f32.mrf.mxu0
    %v9653 = vadd.f32 %v9192, %v9652
    %v9654 = vpop.f32.mrf.mxu0
    %v9655 = vpop.f32.mrf.mxu0
    %v9656 = vadd.f32 %v9192, %v9655
    %v9657 = vpop.f32.mrf.mxu0
    %9658 = vmatprep.mubr.bf16.mxu0 %v8980
    %9659 = vmatmul.mubr.bf16.gmra.mxu0 %v8979
    %v9660 = vpop.f32.mrf.mxu0
    %v9661 = vadd.f32 %v9192, %v9660
    %v9662 = vpop.f32.mrf.mxu0
    %v9663 = vpop.f32.mrf.mxu0
    %v9664 = vadd.f32 %v9192, %v9663
    %v9665 = vpop.f32.mrf.mxu0
    %9666 = vmatprep.mubr.bf16.mxu0 %v8988
    %9667 = vmatmul.mubr.bf16.gmra.mxu0 %v8987
    %v9668 = vpop.f32.mrf.mxu0
    %v9669 = vadd.f32 %v9192, %v9668
    %v9670 = vpop.f32.mrf.mxu0
    %v9671 = vpop.f32.mrf.mxu0
    %v9672 = vadd.f32 %v9192, %v9671
    %v9673 = vpop.f32.mrf.mxu0
    %9674 = vmatprep.mubr.bf16.mxu0 %v8996
    %9675 = vmatmul.mubr.bf16.gmra.mxu0 %v8995
    %v9676 = vpop.f32.mrf.mxu0
    %v9677 = vadd.f32 %v9192, %v9676
    %v9678 = vpop.f32.mrf.mxu0
    %v9679 = vpop.f32.mrf.mxu0
    %v9680 = vadd.f32 %v9192, %v9679
    %v9681 = vpop.f32.mrf.mxu0
    %9682 = vmatprep.mubr.bf16.mxu0 %v9004
    %9683 = vmatmul.mubr.bf16.gmra.mxu0 %v9003
    %v9684 = vpop.f32.mrf.mxu0
    %v9685 = vadd.f32 %v9192, %v9684
    %v9686 = vpop.f32.mrf.mxu0
    %v9687 = vpop.f32.mrf.mxu0
    %v9688 = vadd.f32 %v9192, %v9687
    %v9689 = vpop.f32.mrf.mxu0
    %9690 = vmatprep.mubr.bf16.mxu0 %v9012
    %9691 = vmatmul.mubr.bf16.gmra.mxu0 %v9011
    %v9692 = vpop.f32.mrf.mxu0
    %v9693 = vadd.f32 %v9192, %v9692
    %v9694 = vpop.f32.mrf.mxu0
    %v9695 = vpop.f32.mrf.mxu0
    %v9696 = vadd.f32 %v9192, %v9695
    %v9697 = vpop.f32.mrf.mxu0
    %9698 = vmatprep.mubr.bf16.mxu0 %v9020
    %9699 = vmatmul.mubr.bf16.gmra.mxu0 %v9019
    %v9700 = vpop.f32.mrf.mxu0
    %v9701 = vadd.f32 %v9192, %v9700
    %v9702 = vpop.f32.mrf.mxu0
    %v9703 = vpop.f32.mrf.mxu0
    %v9704 = vadd.f32 %v9192, %v9703
    %v9705 = vpop.f32.mrf.mxu0
    %9706 = vmatprep.mubr.bf16.mxu0 %v9028
    %9707 = vmatmul.mubr.bf16.gmra.mxu0 %v9027
    %v9708 = vpop.f32.mrf.mxu0
    %v9709 = vadd.f32 %v9192, %v9708
    %v9710 = vpop.f32.mrf.mxu0
    %v9711 = vpop.f32.mrf.mxu0
    %v9712 = vadd.f32 %v9192, %v9711
    %v9713 = vpop.f32.mrf.mxu0
    %9714 = vmatprep.mubr.bf16.mxu0 %v9036
    %9715 = vmatmul.mubr.bf16.gmra.mxu0 %v9035
    %v9716 = vpop.f32.mrf.mxu0
    %v9717 = vadd.f32 %v9192, %v9716
    %v9718 = vpop.f32.mrf.mxu0
    %v9719 = vpop.f32.mrf.mxu0
    %v9720 = vadd.f32 %v9192, %v9719
    %v9721 = vpop.f32.mrf.mxu0
    %9722 = vmatprep.mubr.bf16.mxu0 %v9044
    %9723 = vmatmul.mubr.bf16.gmra.mxu0 %v9043
    %v9724 = vpop.f32.mrf.mxu0
    %v9725 = vadd.f32 %v9192, %v9724
    %v9726 = vpop.f32.mrf.mxu0
    %v9727 = vpop.f32.mrf.mxu0
    %v9728 = vadd.f32 %v9192, %v9727
    %v9729 = vpop.f32.mrf.mxu0
    %9730 = vmatprep.mubr.bf16.mxu0 %v9052
    %9731 = vmatmul.mubr.bf16.gmra.mxu0 %v9051
    %v9732 = vpop.f32.mrf.mxu0
    %v9733 = vadd.f32 %v9192, %v9732
    %v9734 = vpop.f32.mrf.mxu0
    %v9735 = vpop.f32.mrf.mxu0
    %v9736 = vadd.f32 %v9192, %v9735
    %v9737 = vpop.f32.mrf.mxu0
    %9738 = vdwg.mxu0
    %9739 = vmatprep.subr.bf16.mxu0 0
    %9740 = vmatpush1.bf16.msra.mxu0 %v9473
    %9741 = vmatprep.subr.bf16.mxu0 0
    %9742 = vmatpush1.bf16.msra.mxu0 %v9472
    %9743 = vmatprep.subr.bf16.mxu0 0
    %9744 = vmatpush1.bf16.msra.mxu0 %v9471
    %9745 = vmatprep.subr.bf16.mxu0 0
    %9746 = vmatpush1.bf16.msra.mxu0 %v9470
    %9747 = vmatprep.subr.bf16.mxu0 0
    %9748 = vmatpush1.bf16.msra.mxu0 %v9469
    %9749 = vmatprep.subr.bf16.mxu0 0
    %9750 = vmatpush1.bf16.msra.mxu0 %v9468
    %9751 = vmatprep.subr.bf16.mxu0 0
    %9752 = vmatpush1.bf16.msra.mxu0 %v9467
    %9753 = vmatprep.subr.bf16.mxu0 0
    %9754 = vmatpush1.bf16.msra.mxu0 %v9466
    %9755 = vmatprep.subr.bf16.mxu0 0
    %9756 = vmatpush2.bf16.msra.mxu0 %v9481
    %9757 = vmatprep.subr.bf16.mxu0 0
    %9758 = vmatpush2.bf16.msra.mxu0 %v9480
    %9759 = vmatprep.subr.bf16.mxu0 0
    %9760 = vmatpush2.bf16.msra.mxu0 %v9479
    %9761 = vmatprep.subr.bf16.mxu0 0
    %9762 = vmatpush2.bf16.msra.mxu0 %v9478
    %9763 = vmatprep.subr.bf16.mxu0 0
    %9764 = vmatpush2.bf16.msra.mxu0 %v9477
    %9765 = vmatprep.subr.bf16.mxu0 0
    %9766 = vmatpush2.bf16.msra.mxu0 %v9476
    %9767 = vmatprep.subr.bf16.mxu0 0
    %9768 = vmatpush2.bf16.msra.mxu0 %v9475
    %9769 = vmatprep.subr.bf16.mxu0 0
    %9770 = vmatpush2.bf16.msra.mxu0 %v9474
    %9771 = vmatprep.mubr.bf16.mxu0 %v8934
    %9772 = vmatmul.mubr.bf16.gmra.mxu0 %v8933
    %v9773 = vpop.f32.mrf.mxu0
    %v9774 = vadd.f32 %v9613, %v9773
    %v9775 = vpop.f32.mrf.mxu0
    %v9776 = vpop.f32.mrf.mxu0
    %v9777 = vadd.f32 %v9616, %v9776
    %v9778 = vpop.f32.mrf.mxu0
    %9779 = vmatprep.mubr.bf16.mxu0 %v8942
    %9780 = vmatmul.mubr.bf16.gmra.mxu0 %v8941
    %v9781 = vpop.f32.mrf.mxu0
    %v9782 = vadd.f32 %v9621, %v9781
    %v9783 = vpop.f32.mrf.mxu0
    %v9784 = vpop.f32.mrf.mxu0
    %v9785 = vadd.f32 %v9624, %v9784
    %v9786 = vpop.f32.mrf.mxu0
    %9787 = vmatprep.mubr.bf16.mxu0 %v8950
    %9788 = vmatmul.mubr.bf16.gmra.mxu0 %v8949
    %v9789 = vpop.f32.mrf.mxu0
    %v9790 = vadd.f32 %v9629, %v9789
    %v9791 = vpop.f32.mrf.mxu0
    %v9792 = vpop.f32.mrf.mxu0
    %v9793 = vadd.f32 %v9632, %v9792
    %v9794 = vpop.f32.mrf.mxu0
    %9795 = vmatprep.mubr.bf16.mxu0 %v8958
    %9796 = vmatmul.mubr.bf16.gmra.mxu0 %v8957
    %v9797 = vpop.f32.mrf.mxu0
    %v9798 = vadd.f32 %v9637, %v9797
    %v9799 = vpop.f32.mrf.mxu0
    %v9800 = vpop.f32.mrf.mxu0
    %v9801 = vadd.f32 %v9640, %v9800
    %v9802 = vpop.f32.mrf.mxu0
    %9803 = vmatprep.mubr.bf16.mxu0 %v8966
    %9804 = vmatmul.mubr.bf16.gmra.mxu0 %v8965
    %v9805 = vpop.f32.mrf.mxu0
    %v9806 = vadd.f32 %v9645, %v9805
    %v9807 = vpop.f32.mrf.mxu0
    %v9808 = vpop.f32.mrf.mxu0
    %v9809 = vadd.f32 %v9648, %v9808
    %v9810 = vpop.f32.mrf.mxu0
    %9811 = vmatprep.mubr.bf16.mxu0 %v8974
    %9812 = vmatmul.mubr.bf16.gmra.mxu0 %v8973
    %v9813 = vpop.f32.mrf.mxu0
    %v9814 = vadd.f32 %v9653, %v9813
    %v9815 = vpop.f32.mrf.mxu0
    %v9816 = vpop.f32.mrf.mxu0
    %v9817 = vadd.f32 %v9656, %v9816
    %v9818 = vpop.f32.mrf.mxu0
    %9819 = vmatprep.mubr.bf16.mxu0 %v8982
    %9820 = vmatmul.mubr.bf16.gmra.mxu0 %v8981
    %v9821 = vpop.f32.mrf.mxu0
    %v9822 = vadd.f32 %v9661, %v9821
    %v9823 = vpop.f32.mrf.mxu0
    %v9824 = vpop.f32.mrf.mxu0
    %v9825 = vadd.f32 %v9664, %v9824
    %v9826 = vpop.f32.mrf.mxu0
    %9827 = vmatprep.mubr.bf16.mxu0 %v8990
    %9828 = vmatmul.mubr.bf16.gmra.mxu0 %v8989
    %v9829 = vpop.f32.mrf.mxu0
    %v9830 = vadd.f32 %v9669, %v9829
    %v9831 = vpop.f32.mrf.mxu0
    %v9832 = vpop.f32.mrf.mxu0
    %v9833 = vadd.f32 %v9672, %v9832
    %v9834 = vpop.f32.mrf.mxu0
    %9835 = vmatprep.mubr.bf16.mxu0 %v8998
    %9836 = vmatmul.mubr.bf16.gmra.mxu0 %v8997
    %v9837 = vpop.f32.mrf.mxu0
    %v9838 = vadd.f32 %v9677, %v9837
    %v9839 = vpop.f32.mrf.mxu0
    %v9840 = vpop.f32.mrf.mxu0
    %v9841 = vadd.f32 %v9680, %v9840
    %v9842 = vpop.f32.mrf.mxu0
    %9843 = vmatprep.mubr.bf16.mxu0 %v9006
    %9844 = vmatmul.mubr.bf16.gmra.mxu0 %v9005
    %v9845 = vpop.f32.mrf.mxu0
    %v9846 = vadd.f32 %v9685, %v9845
    %v9847 = vpop.f32.mrf.mxu0
    %v9848 = vpop.f32.mrf.mxu0
    %v9849 = vadd.f32 %v9688, %v9848
    %v9850 = vpop.f32.mrf.mxu0
    %9851 = vmatprep.mubr.bf16.mxu0 %v9014
    %9852 = vmatmul.mubr.bf16.gmra.mxu0 %v9013
    %v9853 = vpop.f32.mrf.mxu0
    %v9854 = vadd.f32 %v9693, %v9853
    %v9855 = vpop.f32.mrf.mxu0
    %v9856 = vpop.f32.mrf.mxu0
    %v9857 = vadd.f32 %v9696, %v9856
    %v9858 = vpop.f32.mrf.mxu0
    %9859 = vmatprep.mubr.bf16.mxu0 %v9022
    %9860 = vmatmul.mubr.bf16.gmra.mxu0 %v9021
    %v9861 = vpop.f32.mrf.mxu0
    %v9862 = vadd.f32 %v9701, %v9861
    %v9863 = vpop.f32.mrf.mxu0
    %v9864 = vpop.f32.mrf.mxu0
    %v9865 = vadd.f32 %v9704, %v9864
    %v9866 = vpop.f32.mrf.mxu0
    %9867 = vmatprep.mubr.bf16.mxu0 %v9030
    %9868 = vmatmul.mubr.bf16.gmra.mxu0 %v9029
    %v9869 = vpop.f32.mrf.mxu0
    %v9870 = vadd.f32 %v9709, %v9869
    %v9871 = vpop.f32.mrf.mxu0
    %v9872 = vpop.f32.mrf.mxu0
    %v9873 = vadd.f32 %v9712, %v9872
    %v9874 = vpop.f32.mrf.mxu0
    %9875 = vmatprep.mubr.bf16.mxu0 %v9038
    %9876 = vmatmul.mubr.bf16.gmra.mxu0 %v9037
    %v9877 = vpop.f32.mrf.mxu0
    %v9878 = vadd.f32 %v9717, %v9877
    %v9879 = vpop.f32.mrf.mxu0
    %v9880 = vpop.f32.mrf.mxu0
    %v9881 = vadd.f32 %v9720, %v9880
    %v9882 = vpop.f32.mrf.mxu0
    %9883 = vmatprep.mubr.bf16.mxu0 %v9046
    %9884 = vmatmul.mubr.bf16.gmra.mxu0 %v9045
    %v9885 = vpop.f32.mrf.mxu0
    %v9886 = vadd.f32 %v9725, %v9885
    %v9887 = vpop.f32.mrf.mxu0
    %v9888 = vpop.f32.mrf.mxu0
    %v9889 = vadd.f32 %v9728, %v9888
    %v9890 = vpop.f32.mrf.mxu0
    %9891 = vmatprep.mubr.bf16.mxu0 %v9054
    %9892 = vmatmul.mubr.bf16.gmra.mxu0 %v9053
    %v9893 = vpop.f32.mrf.mxu0
    %v9894 = vadd.f32 %v9733, %v9893
    %v9895 = vpop.f32.mrf.mxu0
    %v9896 = vpop.f32.mrf.mxu0
    %v9897 = vadd.f32 %v9736, %v9896
    %v9898 = vpop.f32.mrf.mxu0
    %9899 = vdwg.mxu0
    %9900 = vmatprep.subr.bf16.mxu0 0
    %9901 = vmatpush1.bf16.msra.mxu0 %v9489
    %9902 = vmatprep.subr.bf16.mxu0 0
    %9903 = vmatpush1.bf16.msra.mxu0 %v9488
    %9904 = vmatprep.subr.bf16.mxu0 0
    %9905 = vmatpush1.bf16.msra.mxu0 %v9487
    %9906 = vmatprep.subr.bf16.mxu0 0
    %9907 = vmatpush1.bf16.msra.mxu0 %v9486
    %9908 = vmatprep.subr.bf16.mxu0 0
    %9909 = vmatpush1.bf16.msra.mxu0 %v9485
    %9910 = vmatprep.subr.bf16.mxu0 0
    %9911 = vmatpush1.bf16.msra.mxu0 %v9484
    %9912 = vmatprep.subr.bf16.mxu0 0
    %9913 = vmatpush1.bf16.msra.mxu0 %v9483
    %9914 = vmatprep.subr.bf16.mxu0 0
    %9915 = vmatpush1.bf16.msra.mxu0 %v9482
    %9916 = vmatprep.subr.bf16.mxu0 0
    %9917 = vmatpush2.bf16.msra.mxu0 %v9497
    %9918 = vmatprep.subr.bf16.mxu0 0
    %9919 = vmatpush2.bf16.msra.mxu0 %v9496
    %9920 = vmatprep.subr.bf16.mxu0 0
    %9921 = vmatpush2.bf16.msra.mxu0 %v9495
    %9922 = vmatprep.subr.bf16.mxu0 0
    %9923 = vmatpush2.bf16.msra.mxu0 %v9494
    %9924 = vmatprep.subr.bf16.mxu0 0
    %9925 = vmatpush2.bf16.msra.mxu0 %v9493
    %9926 = vmatprep.subr.bf16.mxu0 0
    %9927 = vmatpush2.bf16.msra.mxu0 %v9492
    %9928 = vmatprep.subr.bf16.mxu0 0
    %9929 = vmatpush2.bf16.msra.mxu0 %v9491
    %9930 = vmatprep.subr.bf16.mxu0 0
    %9931 = vmatpush2.bf16.msra.mxu0 %v9490
    %9932 = vmatprep.mubr.bf16.mxu0 %v8936
    %9933 = vmatmul.mubr.bf16.gmra.mxu0 %v8935
    %v9934 = vpop.f32.mrf.mxu0
    %v9935 = vadd.f32 %v9774, %v9934
    %v9936 = vpop.f32.mrf.mxu0
    %v9937 = vpop.f32.mrf.mxu0
    %v9938 = vadd.f32 %v9777, %v9937
    %v9939 = vpop.f32.mrf.mxu0
    %9940 = vmatprep.mubr.bf16.mxu0 %v8944
    %9941 = vmatmul.mubr.bf16.gmra.mxu0 %v8943
    %v9942 = vpop.f32.mrf.mxu0
    %v9943 = vadd.f32 %v9782, %v9942
    %v9944 = vpop.f32.mrf.mxu0
    %v9945 = vpop.f32.mrf.mxu0
    %v9946 = vadd.f32 %v9785, %v9945
    %v9947 = vpop.f32.mrf.mxu0
    %9948 = vmatprep.mubr.bf16.mxu0 %v8952
    %9949 = vmatmul.mubr.bf16.gmra.mxu0 %v8951
    %v9950 = vpop.f32.mrf.mxu0
    %v9951 = vadd.f32 %v9790, %v9950
    %v9952 = vpop.f32.mrf.mxu0
    %v9953 = vpop.f32.mrf.mxu0
    %v9954 = vadd.f32 %v9793, %v9953
    %v9955 = vpop.f32.mrf.mxu0
    %9956 = vmatprep.mubr.bf16.mxu0 %v8960
    %9957 = vmatmul.mubr.bf16.gmra.mxu0 %v8959
    %v9958 = vpop.f32.mrf.mxu0
    %v9959 = vadd.f32 %v9798, %v9958
    %v9960 = vpop.f32.mrf.mxu0
    %v9961 = vpop.f32.mrf.mxu0
    %v9962 = vadd.f32 %v9801, %v9961
    %v9963 = vpop.f32.mrf.mxu0
    %9964 = vmatprep.mubr.bf16.mxu0 %v8968
    %9965 = vmatmul.mubr.bf16.gmra.mxu0 %v8967
    %v9966 = vpop.f32.mrf.mxu0
    %v9967 = vadd.f32 %v9806, %v9966
    %v9968 = vpop.f32.mrf.mxu0
    %v9969 = vpop.f32.mrf.mxu0
    %v9970 = vadd.f32 %v9809, %v9969
    %v9971 = vpop.f32.mrf.mxu0
    %9972 = vmatprep.mubr.bf16.mxu0 %v8976
    %9973 = vmatmul.mubr.bf16.gmra.mxu0 %v8975
    %v9974 = vpop.f32.mrf.mxu0
    %v9975 = vadd.f32 %v9814, %v9974
    %v9976 = vpop.f32.mrf.mxu0
    %v9977 = vpop.f32.mrf.mxu0
    %v9978 = vadd.f32 %v9817, %v9977
    %v9979 = vpop.f32.mrf.mxu0
    %9980 = vmatprep.mubr.bf16.mxu0 %v8984
    %9981 = vmatmul.mubr.bf16.gmra.mxu0 %v8983
    %v9982 = vpop.f32.mrf.mxu0
    %v9983 = vadd.f32 %v9822, %v9982
    %v9984 = vpop.f32.mrf.mxu0
    %v9985 = vpop.f32.mrf.mxu0
    %v9986 = vadd.f32 %v9825, %v9985
    %v9987 = vpop.f32.mrf.mxu0
    %9988 = vmatprep.mubr.bf16.mxu0 %v8992
    %9989 = vmatmul.mubr.bf16.gmra.mxu0 %v8991
    %v9990 = vpop.f32.mrf.mxu0
    %v9991 = vadd.f32 %v9830, %v9990
    %v9992 = vpop.f32.mrf.mxu0
    %v9993 = vpop.f32.mrf.mxu0
    %v9994 = vadd.f32 %v9833, %v9993
    %v9995 = vpop.f32.mrf.mxu0
    %9996 = vmatprep.mubr.bf16.mxu0 %v9000
    %9997 = vmatmul.mubr.bf16.gmra.mxu0 %v8999
    %v9998 = vpop.f32.mrf.mxu0
    %v9999 = vadd.f32 %v9838, %v9998
    %v10000 = vpop.f32.mrf.mxu0
    %v10001 = vpop.f32.mrf.mxu0
    %v10002 = vadd.f32 %v9841, %v10001
    %v10003 = vpop.f32.mrf.mxu0
    %10004 = vmatprep.mubr.bf16.mxu0 %v9008
    %10005 = vmatmul.mubr.bf16.gmra.mxu0 %v9007
    %v10006 = vpop.f32.mrf.mxu0
    %v10007 = vadd.f32 %v9846, %v10006
    %v10008 = vpop.f32.mrf.mxu0
    %v10009 = vpop.f32.mrf.mxu0
    %v10010 = vadd.f32 %v9849, %v10009
    %v10011 = vpop.f32.mrf.mxu0
    %10012 = vmatprep.mubr.bf16.mxu0 %v9016
    %10013 = vmatmul.mubr.bf16.gmra.mxu0 %v9015
    %v10014 = vpop.f32.mrf.mxu0
    %v10015 = vadd.f32 %v9854, %v10014
    %v10016 = vpop.f32.mrf.mxu0
    %v10017 = vpop.f32.mrf.mxu0
    %v10018 = vadd.f32 %v9857, %v10017
    %v10019 = vpop.f32.mrf.mxu0
    %10020 = vmatprep.mubr.bf16.mxu0 %v9024
    %10021 = vmatmul.mubr.bf16.gmra.mxu0 %v9023
    %v10022 = vpop.f32.mrf.mxu0
    %v10023 = vadd.f32 %v9862, %v10022
    %v10024 = vpop.f32.mrf.mxu0
    %v10025 = vpop.f32.mrf.mxu0
    %v10026 = vadd.f32 %v9865, %v10025
    %v10027 = vpop.f32.mrf.mxu0
    %10028 = vmatprep.mubr.bf16.mxu0 %v9032
    %10029 = vmatmul.mubr.bf16.gmra.mxu0 %v9031
    %v10030 = vpop.f32.mrf.mxu0
    %v10031 = vadd.f32 %v9870, %v10030
    %v10032 = vpop.f32.mrf.mxu0
    %v10033 = vpop.f32.mrf.mxu0
    %v10034 = vadd.f32 %v9873, %v10033
    %v10035 = vpop.f32.mrf.mxu0
    %10036 = vmatprep.mubr.bf16.mxu0 %v9040
    %10037 = vmatmul.mubr.bf16.gmra.mxu0 %v9039
    %v10038 = vpop.f32.mrf.mxu0
    %v10039 = vadd.f32 %v9878, %v10038
    %v10040 = vpop.f32.mrf.mxu0
    %v10041 = vpop.f32.mrf.mxu0
    %v10042 = vadd.f32 %v9881, %v10041
    %v10043 = vpop.f32.mrf.mxu0
    %10044 = vmatprep.mubr.bf16.mxu0 %v9048
    %10045 = vmatmul.mubr.bf16.gmra.mxu0 %v9047
    %v10046 = vpop.f32.mrf.mxu0
    %v10047 = vadd.f32 %v9886, %v10046
    %v10048 = vpop.f32.mrf.mxu0
    %v10049 = vpop.f32.mrf.mxu0
    %v10050 = vadd.f32 %v9889, %v10049
    %v10051 = vpop.f32.mrf.mxu0
    %10052 = vmatprep.mubr.bf16.mxu0 %v9056
    %10053 = vmatmul.mubr.bf16.gmra.mxu0 %v9055
    %v10054 = vpop.f32.mrf.mxu0
    %v10055 = vadd.f32 %v9894, %v10054
    %v10056 = vpop.f32.mrf.mxu0
    %v10057 = vpop.f32.mrf.mxu0
    %v10058 = vadd.f32 %v9897, %v10057
    %v10059 = vpop.f32.mrf.mxu0
    %10060 = vdwg.mxu0
    %10061 = vmatprep.subr.bf16.mxu0 0
    %10062 = vmatpush1.bf16.msra.mxu0 %v9505
    %10063 = vmatprep.subr.bf16.mxu0 0
    %10064 = vmatpush1.bf16.msra.mxu0 %v9504
    %10065 = vmatprep.subr.bf16.mxu0 0
    %10066 = vmatpush1.bf16.msra.mxu0 %v9503
    %10067 = vmatprep.subr.bf16.mxu0 0
    %10068 = vmatpush1.bf16.msra.mxu0 %v9502
    %10069 = vmatprep.subr.bf16.mxu0 0
    %10070 = vmatpush1.bf16.msra.mxu0 %v9501
    %10071 = vmatprep.subr.bf16.mxu0 0
    %10072 = vmatpush1.bf16.msra.mxu0 %v9500
    %10073 = vmatprep.subr.bf16.mxu0 0
    %10074 = vmatpush1.bf16.msra.mxu0 %v9499
    %10075 = vmatprep.subr.bf16.mxu0 0
    %10076 = vmatpush1.bf16.msra.mxu0 %v9498
    %10077 = vmatprep.subr.bf16.mxu0 0
    %10078 = vmatpush2.bf16.msra.mxu0 %v9513
    %10079 = vmatprep.subr.bf16.mxu0 0
    %10080 = vmatpush2.bf16.msra.mxu0 %v9512
    %10081 = vmatprep.subr.bf16.mxu0 0
    %10082 = vmatpush2.bf16.msra.mxu0 %v9511
    %10083 = vmatprep.subr.bf16.mxu0 0
    %10084 = vmatpush2.bf16.msra.mxu0 %v9510
    %10085 = vmatprep.subr.bf16.mxu0 0
    %10086 = vmatpush2.bf16.msra.mxu0 %v9509
    %10087 = vmatprep.subr.bf16.mxu0 0
    %10088 = vmatpush2.bf16.msra.mxu0 %v9508
    %10089 = vmatprep.subr.bf16.mxu0 0
    %10090 = vmatpush2.bf16.msra.mxu0 %v9507
    %10091 = vmatprep.subr.bf16.mxu0 0
    %10092 = vmatpush2.bf16.msra.mxu0 %v9506
    %10093 = vmatprep.mubr.bf16.mxu0 %v8938
    %10094 = vmatmul.mubr.bf16.gmra.mxu0 %v8937
    %v10095 = vpop.f32.mrf.mxu0
    %v10096 = vadd.f32 %v9935, %v10095
    %v10097 = vpop.f32.mrf.mxu0
    %v10098 = vpop.f32.mrf.mxu0
    %v10099 = vadd.f32 %v9938, %v10098
    %v10100 = vpop.f32.mrf.mxu0
    %10101 = vmatprep.mubr.bf16.mxu0 %v8946
    %10102 = vmatmul.mubr.bf16.gmra.mxu0 %v8945
    %v10103 = vpop.f32.mrf.mxu0
    %v10104 = vadd.f32 %v9943, %v10103
    %v10105 = vpop.f32.mrf.mxu0
    %v10106 = vpop.f32.mrf.mxu0
    %v10107 = vadd.f32 %v9946, %v10106
    %v10108 = vpop.f32.mrf.mxu0
    %10109 = vmatprep.mubr.bf16.mxu0 %v8954
    %10110 = vmatmul.mubr.bf16.gmra.mxu0 %v8953
    %v10111 = vpop.f32.mrf.mxu0
    %v10112 = vadd.f32 %v9951, %v10111
    %v10113 = vpop.f32.mrf.mxu0
    %v10114 = vpop.f32.mrf.mxu0
    %v10115 = vadd.f32 %v9954, %v10114
    %v10116 = vpop.f32.mrf.mxu0
    %10117 = vmatprep.mubr.bf16.mxu0 %v8962
    %10118 = vmatmul.mubr.bf16.gmra.mxu0 %v8961
    %v10119 = vpop.f32.mrf.mxu0
    %v10120 = vadd.f32 %v9959, %v10119
    %v10121 = vpop.f32.mrf.mxu0
    %v10122 = vpop.f32.mrf.mxu0
    %v10123 = vadd.f32 %v9962, %v10122
    %v10124 = vpop.f32.mrf.mxu0
    %10125 = vmatprep.mubr.bf16.mxu0 %v8970
    %10126 = vmatmul.mubr.bf16.gmra.mxu0 %v8969
    %v10127 = vpop.f32.mrf.mxu0
    %v10128 = vadd.f32 %v9967, %v10127
    %v10129 = vpop.f32.mrf.mxu0
    %v10130 = vpop.f32.mrf.mxu0
    %v10131 = vadd.f32 %v9970, %v10130
    %v10132 = vpop.f32.mrf.mxu0
    %10133 = vmatprep.mubr.bf16.mxu0 %v8978
    %10134 = vmatmul.mubr.bf16.gmra.mxu0 %v8977
    %v10135 = vpop.f32.mrf.mxu0
    %v10136 = vadd.f32 %v9975, %v10135
    %v10137 = vpop.f32.mrf.mxu0
    %v10138 = vpop.f32.mrf.mxu0
    %v10139 = vadd.f32 %v9978, %v10138
    %v10140 = vpop.f32.mrf.mxu0
    %10141 = vmatprep.mubr.bf16.mxu0 %v8986
    %10142 = vmatmul.mubr.bf16.gmra.mxu0 %v8985
    %v10143 = vpop.f32.mrf.mxu0
    %v10144 = vadd.f32 %v9983, %v10143
    %v10145 = vpop.f32.mrf.mxu0
    %v10146 = vpop.f32.mrf.mxu0
    %v10147 = vadd.f32 %v9986, %v10146
    %v10148 = vpop.f32.mrf.mxu0
    %10149 = vmatprep.mubr.bf16.mxu0 %v8994
    %10150 = vmatmul.mubr.bf16.gmra.mxu0 %v8993
    %v10151 = vpop.f32.mrf.mxu0
    %v10152 = vadd.f32 %v9991, %v10151
    %v10153 = vpop.f32.mrf.mxu0
    %v10154 = vpop.f32.mrf.mxu0
    %v10155 = vadd.f32 %v9994, %v10154
    %v10156 = vpop.f32.mrf.mxu0
    %10157 = vmatprep.mubr.bf16.mxu0 %v9002
    %10158 = vmatmul.mubr.bf16.gmra.mxu0 %v9001
    %v10159 = vpop.f32.mrf.mxu0
    %v10160 = vadd.f32 %v9999, %v10159
    %v10161 = vpop.f32.mrf.mxu0
    %v10162 = vpop.f32.mrf.mxu0
    %v10163 = vadd.f32 %v10002, %v10162
    %v10164 = vpop.f32.mrf.mxu0
    %10165 = vmatprep.mubr.bf16.mxu0 %v9010
    %10166 = vmatmul.mubr.bf16.gmra.mxu0 %v9009
    %v10167 = vpop.f32.mrf.mxu0
    %v10168 = vadd.f32 %v10007, %v10167
    %v10169 = vpop.f32.mrf.mxu0
    %v10170 = vpop.f32.mrf.mxu0
    %v10171 = vadd.f32 %v10010, %v10170
    %v10172 = vpop.f32.mrf.mxu0
    %10173 = vmatprep.mubr.bf16.mxu0 %v9018
    %10174 = vmatmul.mubr.bf16.gmra.mxu0 %v9017
    %v10175 = vpop.f32.mrf.mxu0
    %v10176 = vadd.f32 %v10015, %v10175
    %v10177 = vpop.f32.mrf.mxu0
    %v10178 = vpop.f32.mrf.mxu0
    %v10179 = vadd.f32 %v10018, %v10178
    %v10180 = vpop.f32.mrf.mxu0
    %10181 = vmatprep.mubr.bf16.mxu0 %v9026
    %10182 = vmatmul.mubr.bf16.gmra.mxu0 %v9025
    %v10183 = vpop.f32.mrf.mxu0
    %v10184 = vadd.f32 %v10023, %v10183
    %v10185 = vpop.f32.mrf.mxu0
    %v10186 = vpop.f32.mrf.mxu0
    %v10187 = vadd.f32 %v10026, %v10186
    %v10188 = vpop.f32.mrf.mxu0
    %10189 = vmatprep.mubr.bf16.mxu0 %v9034
    %10190 = vmatmul.mubr.bf16.gmra.mxu0 %v9033
    %v10191 = vpop.f32.mrf.mxu0
    %v10192 = vadd.f32 %v10031, %v10191
    %v10193 = vpop.f32.mrf.mxu0
    %v10194 = vpop.f32.mrf.mxu0
    %v10195 = vadd.f32 %v10034, %v10194
    %v10196 = vpop.f32.mrf.mxu0
    %10197 = vmatprep.mubr.bf16.mxu0 %v9042
    %10198 = vmatmul.mubr.bf16.gmra.mxu0 %v9041
    %v10199 = vpop.f32.mrf.mxu0
    %v10200 = vadd.f32 %v10039, %v10199
    %v10201 = vpop.f32.mrf.mxu0
    %v10202 = vpop.f32.mrf.mxu0
    %v10203 = vadd.f32 %v10042, %v10202
    %v10204 = vpop.f32.mrf.mxu0
    %10205 = vmatprep.mubr.bf16.mxu0 %v9050
    %10206 = vmatmul.mubr.bf16.gmra.mxu0 %v9049
    %v10207 = vpop.f32.mrf.mxu0
    %v10208 = vadd.f32 %v10047, %v10207
    %v10209 = vpop.f32.mrf.mxu0
    %v10210 = vpop.f32.mrf.mxu0
    %v10211 = vadd.f32 %v10050, %v10210
    %v10212 = vpop.f32.mrf.mxu0
    %10213 = vmatprep.mubr.bf16.mxu0 %v9058
    %10214 = vmatmul.mubr.bf16.gmra.mxu0 %v9057
    %v10215 = vpop.f32.mrf.mxu0
    %v10216 = vadd.f32 %v10055, %v10215
    %v10217 = vpop.f32.mrf.mxu0
    %v10218 = vpop.f32.mrf.mxu0
    %v10219 = vadd.f32 %v10058, %v10218
    %v10220 = vpop.f32.mrf.mxu0
    %10221 = vdwg.mxu0
    %v10222 = vtanh.pop %v10096
    %v10223 = vtanh.pop %v10099
    %v10224 = vtanh.pop %v10104
    %v10225 = vtanh.pop %v10107
    %v10226 = vtanh.pop %v10112
    %v10227 = vtanh.pop %v10115
    %v10228 = vtanh.pop %v10120
    %v10229 = vtanh.pop %v10123
    %v10230 = vtanh.pop %v10128
    %v10231 = vtanh.pop %v10131
    %v10232 = vtanh.pop %v10136
    %v10233 = vtanh.pop %v10139
    %v10234 = vtanh.pop %v10144
    %v10235 = vtanh.pop %v10147
    %v10236 = vtanh.pop %v10152
    %v10237 = vtanh.pop %v10155
    %v10238 = vtanh.pop %v10160
    %v10239 = vtanh.pop %v10163
    %v10240 = vtanh.pop %v10168
    %v10241 = vtanh.pop %v10171
    %v10242 = vtanh.pop %v10176
    %v10243 = vtanh.pop %v10179
    %v10244 = vtanh.pop %v10184
    %v10245 = vtanh.pop %v10187
    %v10246 = vtanh.pop %v10192
    %v10247 = vtanh.pop %v10195
    %v10248 = vtanh.pop %v10200
    %v10249 = vtanh.pop %v10203
    %v10250 = vtanh.pop %v10208
    %v10251 = vtanh.pop %v10211
    %v10252 = vtanh.pop %v10216
    %v10253 = vtanh.pop %v10219
    %10254 = vst [vmem:[%s7] sm:$0xff] %v10222
    %10255 = vst [vmem:[%s7 + $0x8] sm:$0xff] %v10223
    %10256 = vst [vmem:[%s7 + $0x10] sm:$0xff] %v10224
    %10257 = vst [vmem:[%s7 + $0x18] sm:$0xff] %v10225
    %10258 = vst [vmem:[%s7 + $0x20] sm:$0xff] %v10226
    %10259 = vst [vmem:[%s7 + $0x28] sm:$0xff] %v10227
    %10260 = vst [vmem:[%s7 + $0x30] sm:$0xff] %v10228
    %10261 = vst [vmem:[%s7 + $0x38] sm:$0xff] %v10229
    %10262 = vst [vmem:[%s7 + $0x40] sm:$0xff] %v10230
    %10263 = vst [vmem:[%s7 + $0x48] sm:$0xff] %v10231
    %10264 = vst [vmem:[%s7 + $0x50] sm:$0xff] %v10232
    %10265 = vst [vmem:[%s7 + $0x58] sm:$0xff] %v10233
    %10266 = vst [vmem:[%s7 + $0x60] sm:$0xff] %v10234
    %10267 = vst [vmem:[%s7 + $0x68] sm:$0xff] %v10235
    %10268 = vst [vmem:[%s7 + $0x70] sm:$0xff] %v10236
    %10269 = vst [vmem:[%s7 + $0x78] sm:$0xff] %v10237
    %10270 = vst [vmem:[%s7 + $0x80] sm:$0xff] %v10238
    %10271 = vst [vmem:[%s7 + $0x88] sm:$0xff] %v10239
    %10272 = vst [vmem:[%s7 + $0x90] sm:$0xff] %v10240
    %10273 = vst [vmem:[%s7 + $0x98] sm:$0xff] %v10241
    %10274 = vst [vmem:[%s7 + $0xa0] sm:$0xff] %v10242
    %10275 = vst [vmem:[%s7 + $0xa8] sm:$0xff] %v10243
    %10276 = vst [vmem:[%s7 + $0xb0] sm:$0xff] %v10244
    %10277 = vst [vmem:[%s7 + $0xb8] sm:$0xff] %v10245
    %10278 = vst [vmem:[%s7 + $0xc0] sm:$0xff] %v10246
    %10279 = vst [vmem:[%s7 + $0xc8] sm:$0xff] %v10247
    %10280 = vst [vmem:[%s7 + $0xd0] sm:$0xff] %v10248
    %10281 = vst [vmem:[%s7 + $0xd8] sm:$0xff] %v10249
    %10282 = vst [vmem:[%s7 + $0xe0] sm:$0xff] %v10250
    %10283 = vst [vmem:[%s7 + $0xe8] sm:$0xff] %v10251
    %10284 = vst [vmem:[%s7 + $0xf0] sm:$0xff] %v10252
    %10285 = vst [vmem:[%s7 + $0xf8] sm:$0xff] %v10253
    // Predicated region
    $region34: #{generator_forward.1} parent=1 // pred_check
      _
    $region35: #{generator_forward.1} parent=1 // pred_check_branch
      %10287 = sbr.rel (0) target = $region37
    $region36: #{generator_forward.1} parent=1 // pred_region
      _
    $region37: #{generator_forward.1} parent=1 // pred_fallthru
      _
    // Predicated region
    $region38: #{generator_forward.1} parent=1 // pred_check
      _
    $region39: #{generator_forward.1} parent=1 // pred_check_branch
      %10289 = sbr.rel (0) target = $region41
    $region40: #{generator_forward.1} parent=1 // pred_region
      _
    $region41: #{generator_forward.1} parent=1 // pred_fallthru
      _
    %10290 = vsyncpa [#allocation3], 1

</llo_original>
